<compile_context>
chip_gen: v6e
topology: v6e:2x2x1
jax: 0.10.0
libtpu: 0.0.40
codegen_flags: <defaults>
</compile_context>

<pallas_src>
import numpy as np

import jax
import jax.numpy as jnp
from jax import lax
from jax.experimental import pallas as pl
from jax.experimental.pallas import tpu as pltpu


# Model geometry (fixed by the PyTorch module).
_K = 5                      # conv kernel size
_C1, _C2 = 20, 50           # conv out channels
_H0 = _W0 = 28              # input spatial
_H1 = _W1 = 24              # conv1 out spatial
_HP1 = _WP1 = 12            # pool1 out spatial
_H2 = _W2 = 8               # conv2 out spatial
_HP2 = _WP2 = 4             # pool2 out spatial
_F1, _F2 = 500, 10          # fc sizes

_NB = 8                     # batch block (== f32 sublane tile -> clean reshapes)
_L1 = 256                   # padded lane width of pool1 acts (12*20=240 valid)
_L2 = 256                   # padded lane width of pool2 acts (4*50=200 valid)
_LF1 = 512                  # padded fc1 width (500 valid)
_LF2 = 128                  # padded logits width (10 valid)


# ---------------------------------------------------------------------------
# Fused kernel: conv1+pool1 -> conv2+pool2 -> fc1 -> fc2, one batch block/step.
# ---------------------------------------------------------------------------
def _examplenet_kernel(x_ref, w1_ref, b1_ref, w2_ref, b2_ref,
                       wf1_ref, bf1_ref, wf2_ref, bf2_ref, o_ref):
    f32, bf16 = jnp.float32, jnp.bfloat16
    x = x_ref[...]                              # (28, NB, 28) f32: (h, n, w)
    nb = x.shape[1]

    # ---- conv1 (+ fused 2x2 max-pool). 5 accumulating banded taps; even/odd
    # output columns live in lane halves [0:256) / [256:512).  The kh row
    # shift is a leading-dim slice; the merge into sublanes is tile-aligned.
    acc = None
    for kh in range(_K):
        xs = x[kh:kh + _H1].reshape(_H1 * nb, _W0).astype(bf16)
        d = jnp.dot(xs, w1_ref[kh], preferred_element_type=f32)   # (24*NB, 512)
        acc = d if acc is None else acc + d
    yw = jnp.maximum(acc[:, :_L1], acc[:, _L1:])          # W-pool  (24*NB, 256)
    yh = yw.reshape(_HP1, 2, nb, _L1)
    hp = jnp.maximum(yh[:, 0], yh[:, 1])                  # H-pool  (12, NB, 256)
    p1 = jnp.maximum(hp + b1_ref[...], 0.0)               # bias + ReLU (f32)

    # ---- conv2 (+ fused 2x2 max-pool): the 5 kh taps are stacked along the
    # contraction dim via an aligned 256-lane concat -> a single 1280-deep dot.
    a2 = jnp.concatenate([p1[kh:kh + _H2] for kh in range(_K)], axis=-1)
    a2 = a2.reshape(_H2 * nb, _K * _L1).astype(bf16)      # (8*NB, 1280)
    y2 = jnp.dot(a2, w2_ref[...], preferred_element_type=f32)     # (8*NB, 512)
    yw2 = jnp.maximum(y2[:, :_L2], y2[:, _L2:])
    yh2 = yw2.reshape(_HP2, 2, nb, _L2)
    hp2 = jnp.maximum(yh2[:, 0], yh2[:, 1])               # (4, NB, 256)
    p2 = jnp.maximum(hp2 + b2_ref[...], 0.0)

    # ---- fc1 (no ReLU in the classifier): lane-concat the 4 pooled rows into
    # one (NB, 1024) slab; the weight was pre-permuted to this layout / the
    # PyTorch NCHW flatten order and padded 500 -> 512 output lanes.
    fin = jnp.concatenate([p2[h] for h in range(_HP2)], axis=-1).astype(bf16)
    h1 = jnp.dot(fin, wf1_ref[...], preferred_element_type=f32) + bf1_ref[...]

    # ---- fc2 (padded to 128 output lanes -> unmasked lane-dense stores)
    logits = jnp.dot(h1.astype(bf16), wf2_ref[...], preferred_element_type=f32)
    o_ref[...] = (logits + bf2_ref[...]).astype(o_ref.dtype)


def example_net_forward(x, prep):
    """x: (N, 1, 28, 28) float32; prep: output of prepare_params(params)."""
    N, cin, H, W = x.shape
    assert (cin, H, W) == (1, _H0, _W0)
    nblk = pl.cdiv(N, _NB)
    npad = nblk * _NB
    xt = jnp.transpose(x[:, 0], (1, 0, 2))                # (28, N, 28) f32
    if npad != N:
        xt = jnp.pad(xt, ((0, 0), (0, npad - N), (0, 0)))

    out = pl.pallas_call(
        _examplenet_kernel,
        out_shape=jax.ShapeDtypeStruct((npad, _LF2), jnp.float32),
        grid=(nblk,),
        in_specs=[
            pl.BlockSpec((_H0, _NB, _W0), lambda i: (0, i, 0)),     # x block
            # weights/biases: full-array blocks, constant index_map (resident)
            pl.BlockSpec(prep["w1"].shape, lambda i: (0, 0, 0)),
            pl.BlockSpec(prep["b1"].shape, lambda i: (0, 0)),
            pl.BlockSpec(prep["w2"].shape, lambda i: (0, 0)),
            pl.BlockSpec(prep["b2"].shape, lambda i: (0, 0)),
            pl.BlockSpec(prep["wf1"].shape, lambda i: (0, 0)),
            pl.BlockSpec(prep["bf1"].shape, lambda i: (0, 0)),
            pl.BlockSpec(prep["wf2"].shape, lambda i: (0, 0)),
            pl.BlockSpec(prep["bf2"].shape, lambda i: (0, 0)),
        ],
        out_specs=pl.BlockSpec((_NB, _LF2), lambda i: (i, 0)),
        compiler_params=pltpu.CompilerParams(
            dimension_semantics=("parallel",),
            vmem_limit_bytes=32 * 1024 * 1024),
    )(xt, prep["w1"], prep["b1"], prep["w2"], prep["b2"],
      prep["wf1"], prep["bf1"], prep["wf2"], prep["bf2"])
    return out[:N, :_F2]


# ---------------------------------------------------------------------------
# One-time, batch-independent host-side weight preparation.
# ---------------------------------------------------------------------------
def prepare_params(params):
    f32 = np.float32
    w1 = np.asarray(params["conv1_w"], f32)   # (20, 1, 5, 5)
    b1 = np.asarray(params["conv1_b"], f32)
    w2 = np.asarray(params["conv2_w"], f32)   # (50, 20, 5, 5)
    b2 = np.asarray(params["conv2_b"], f32)
    fw1 = np.asarray(params["fc1_w"], f32)    # (500, 800)
    fb1 = np.asarray(params["fc1_b"], f32)
    fw2 = np.asarray(params["fc2_w"], f32)    # (10, 500)
    fb2 = np.asarray(params["fc2_b"], f32)

    # conv1: one (28, 512) banded matrix per kernel row kh.
    #   rows: input column w_in; cols: even half j*20+co -> output col 2j,
    #   odd half 256+j*20+co -> output col 2j+1 (j = pool1 column).
    W1 = np.zeros((_K, _W0, 2 * _L1), f32)
    for kh in range(_K):
        for j in range(_WP1):
            for kw in range(_K):
                W1[kh, 2 * j + kw, j * _C1:(j + 1) * _C1] = w1[:, 0, kh, kw]
                W1[kh, 2 * j + 1 + kw,
                   _L1 + j * _C1:_L1 + (j + 1) * _C1] = w1[:, 0, kh, kw]

    # conv2: 5 kh taps stacked along the contraction dim -> (1280, 512).
    #   rows: kh*256 + j*20 + c1 ; cols: even half v*50+c2 -> col 2v, odd -> 2v+1.
    W2 = np.zeros((_K, _L1, 2 * _L2), f32)
    for kh in range(_K):
        for v in range(_WP2):
            for kw in range(_K):
                je, jo = 2 * v + kw, 2 * v + 1 + kw
                W2[kh, je * _C1:(je + 1) * _C1,
                   v * _C2:(v + 1) * _C2] = w2[:, :, kh, kw].T
                W2[kh, jo * _C1:(jo + 1) * _C1,
                   _L2 + v * _C2:_L2 + (v + 1) * _C2] = w2[:, :, kh, kw].T
    W2 = W2.reshape(_K * _L1, 2 * _L2)

    # fc1: permute to the kernel's (h, lane=v*50+c2) layout matching PyTorch's
    # NCHW flatten (index c2*16 + h*4 + v); stack the 4 h-slabs; pad 500 -> 512.
    Wf1 = np.zeros((_HP2, _L2, _LF1), f32)
    t = fw1.reshape(_F1, _C2, _HP2, _WP2).transpose(2, 3, 1, 0)   # (h, v, c2, f)
    Wf1[:, :_WP2 * _C2, :_F1] = t.reshape(_HP2, _WP2 * _C2, _F1)
    Wf1 = Wf1.reshape(_HP2 * _L2, _LF1)

    # fc2: transpose + pad to a lane-dense (512, 128) slab.
    Wf2 = np.zeros((_LF1, _LF2), f32)
    Wf2[:_F1, :_F2] = fw2.T

    # Biases pre-broadcast over the NB sublanes, padded lanes set to 0.
    b1row = np.zeros((_NB, _L1), f32); b1row[:, :_WP1 * _C1] = np.tile(b1, _WP1)
    b2row = np.zeros((_NB, _L2), f32); b2row[:, :_WP2 * _C2] = np.tile(b2, _WP2)
    bf1p = np.zeros((_NB, _LF1), f32); bf1p[:, :_F1] = fb1
    bf2p = np.zeros((_NB, _LF2), f32); bf2p[:, :_F2] = fb2

    bf16 = jnp.bfloat16
    return {
        "w1": jnp.asarray(W1, bf16), "b1": jnp.asarray(b1row),
        "w2": jnp.asarray(W2, bf16), "b2": jnp.asarray(b2row),
        "wf1": jnp.asarray(Wf1, bf16), "bf1": jnp.asarray(bf1p),
        "wf2": jnp.asarray(Wf2, bf16), "bf2": jnp.asarray(bf2p),
    }


# ---------------------------------------------------------------------------
# Reference (pure JAX, f32) + params
# ---------------------------------------------------------------------------
def _reference_forward(x, params):
    hp = lax.Precision.HIGHEST
    dn = ("NCHW", "OIHW", "NCHW")
    y = lax.conv_general_dilated(x, params["conv1_w"], (1, 1), "VALID",
                                 dimension_numbers=dn, precision=hp)
    y = jnp.maximum(y + params["conv1_b"][None, :, None, None], 0.0)
    n, c, h, w = y.shape
    y = y.reshape(n, c, h // 2, 2, w // 2, 2).max(axis=(3, 5))
    y = lax.conv_general_dilated(y, params["conv2_w"], (1, 1), "VALID",
                                 dimension_numbers=dn, precision=hp)
    y = jnp.maximum(y + params["conv2_b"][None, :, None, None], 0.0)
    n, c, h, w = y.shape
    y = y.reshape(n, c, h // 2, 2, w // 2, 2).max(axis=(3, 5))
    y = y.reshape(n, -1)
    y = jnp.dot(y, params["fc1_w"].T, precision=hp) + params["fc1_b"]
    y = jnp.dot(y, params["fc2_w"].T, precision=hp) + params["fc2_b"]
    return y


def init_params(key):
    ks = jax.random.split(key, 8)
    scale = 0.05
    return {
        "conv1_w": scale * jax.random.normal(ks[0], (_C1, 1, _K, _K), jnp.float32),
        "conv1_b": scale * jax.random.normal(ks[1], (_C1,), jnp.float32),
        "conv2_w": scale * jax.random.normal(ks[2], (_C2, _C1, _K, _K), jnp.float32),
        "conv2_b": scale * jax.random.normal(ks[3], (_C2,), jnp.float32),
        "fc1_w": scale * jax.random.normal(ks[4], (_F1, _HP2 * _WP2 * _C2), jnp.float32),
        "fc1_b": scale * jax.random.normal(ks[5], (_F1,), jnp.float32),
        "fc2_w": scale * jax.random.normal(ks[6], (_F2, _F1), jnp.float32),
        "fc2_b": scale * jax.random.normal(ks[7], (_F2,), jnp.float32),
    }


if __name__ == "__main__":
    key = jax.random.PRNGKey(0)
    pkey, xkey = jax.random.split(key)
    params = init_params(pkey)
    batch = 2
    # 28x28 input is required by the classifier's 4*4*50 flatten.
    x = jax.random.normal(xkey, (batch, 1, _H0, _W0), jnp.float32)

    prep = prepare_params(params)            # one-time, batch-independent prep
    fwd = jax.jit(example_net_forward)
    out = jax.block_until_ready(fwd(x, prep))
    assert out.shape == (batch, _F2), out.shape

    ref = jax.block_until_ready(jax.jit(_reference_forward)(x, params))
    max_err = float(jnp.max(jnp.abs(out - ref)))
    # bf16 GEMM inputs with f32 accumulation -> small deviation from the f32 ref.
    assert max_err < 8e-2, f"kernel/reference mismatch: max abs err {max_err}"

    print("KERNEL_OK")
</pallas_src>

<mosaic_0001>
module attributes {stable_mosaic.version = 11 : i64} {
  func.func @_examplenet_kernel(%arg0: i32, %arg1: memref<28x8x28xf32, #tpu.memory_space<vmem>>, %arg2: memref<5x28x512xbf16, #tpu.memory_space<vmem>>, %arg3: memref<8x256xf32, #tpu.memory_space<vmem>>, %arg4: memref<1280x512xbf16, #tpu.memory_space<vmem>>, %arg5: memref<8x256xf32, #tpu.memory_space<vmem>>, %arg6: memref<1024x512xbf16, #tpu.memory_space<vmem>>, %arg7: memref<8x512xf32, #tpu.memory_space<vmem>>, %arg8: memref<512x128xbf16, #tpu.memory_space<vmem>>, %arg9: memref<8x128xf32, #tpu.memory_space<vmem>>, %arg10: memref<8x128xf32, #tpu.memory_space<vmem>>) attributes {dimension_semantics = [#tpu.dimension_semantics<parallel>], iteration_bounds = array<i64: 1>, scalar_prefetch = 0 : i64, scratch_operands = 0 : i64, tpu.core_type = #tpu.core_type<tc>, window_params = [{transform_indices = @transform_0, window_bounds = array<i64: 28, 8, 28>}, {pipeline_mode = #tpu.pipeline_mode<synchronous>, transform_indices = @transform_1, window_bounds = array<i64: 5, 28, 512>}, {pipeline_mode = #tpu.pipeline_mode<synchronous>, transform_indices = @transform_2, window_bounds = array<i64: 8, 256>}, {pipeline_mode = #tpu.pipeline_mode<synchronous>, transform_indices = @transform_3, window_bounds = array<i64: 1280, 512>}, {pipeline_mode = #tpu.pipeline_mode<synchronous>, transform_indices = @transform_4, window_bounds = array<i64: 8, 256>}, {pipeline_mode = #tpu.pipeline_mode<synchronous>, transform_indices = @transform_5, window_bounds = array<i64: 1024, 512>}, {pipeline_mode = #tpu.pipeline_mode<synchronous>, transform_indices = @transform_6, window_bounds = array<i64: 8, 512>}, {pipeline_mode = #tpu.pipeline_mode<synchronous>, transform_indices = @transform_7, window_bounds = array<i64: 512, 128>}, {pipeline_mode = #tpu.pipeline_mode<synchronous>, transform_indices = @transform_8, window_bounds = array<i64: 8, 128>}, {transform_indices = @transform_9, window_bounds = array<i64: 8, 128>}]} {
    %c0 = arith.constant 0 : index
    %c0_0 = arith.constant 0 : index
    %c0_1 = arith.constant 0 : index
    %0 = vector.load %arg1[%c0, %c0_0, %c0_1] : memref<28x8x28xf32, #tpu.memory_space<vmem>>, vector<28x8x28xf32>
    %1 = vector.extract_strided_slice %0 {offsets = [0, 0, 0], sizes = [24, 8, 28], strides = [1, 1, 1]} : vector<28x8x28xf32> to vector<24x8x28xf32>
    %2 = vector.shape_cast %1 : vector<24x8x28xf32> to vector<192x28xf32>
    %3 = arith.truncf %2 : vector<192x28xf32> to vector<192x28xbf16>
    %c0_2 = arith.constant 0 : index
    %c0_3 = arith.constant 0 : index
    %c0_4 = arith.constant 0 : index
    %4 = vector.load %arg2[%c0_2, %c0_3, %c0_4] : memref<5x28x512xbf16, #tpu.memory_space<vmem>>, vector<1x28x512xbf16>
    %5 = vector.shape_cast %4 : vector<1x28x512xbf16> to vector<28x512xbf16>
    %cst = arith.constant dense<0.000000e+00> : vector<192x512xf32>
    %6 = tpu.matmul %3, %5, %cst {dimension_numbers = #tpu.dot_dimension_numbers<[1], [0], [0], [1], [0, 0, 1, 1], [], []>} : vector<192x28xbf16>, vector<28x512xbf16>, vector<192x512xf32> -> vector<192x512xf32>
    %7 = vector.extract_strided_slice %0 {offsets = [1, 0, 0], sizes = [24, 8, 28], strides = [1, 1, 1]} : vector<28x8x28xf32> to vector<24x8x28xf32>
    %8 = vector.shape_cast %7 : vector<24x8x28xf32> to vector<192x28xf32>
    %9 = arith.truncf %8 : vector<192x28xf32> to vector<192x28xbf16>
    %c1 = arith.constant 1 : index
    %c0_5 = arith.constant 0 : index
    %c0_6 = arith.constant 0 : index
    %10 = vector.load %arg2[%c1, %c0_5, %c0_6] : memref<5x28x512xbf16, #tpu.memory_space<vmem>>, vector<1x28x512xbf16>
    %11 = vector.shape_cast %10 : vector<1x28x512xbf16> to vector<28x512xbf16>
    %cst_7 = arith.constant dense<0.000000e+00> : vector<192x512xf32>
    %12 = tpu.matmul %9, %11, %cst_7 {dimension_numbers = #tpu.dot_dimension_numbers<[1], [0], [0], [1], [0, 0, 1, 1], [], []>} : vector<192x28xbf16>, vector<28x512xbf16>, vector<192x512xf32> -> vector<192x512xf32>
    %13 = arith.addf %6, %12 : vector<192x512xf32>
    %14 = vector.extract_strided_slice %0 {offsets = [2, 0, 0], sizes = [24, 8, 28], strides = [1, 1, 1]} : vector<28x8x28xf32> to vector<24x8x28xf32>
    %15 = vector.shape_cast %14 : vector<24x8x28xf32> to vector<192x28xf32>
    %16 = arith.truncf %15 : vector<192x28xf32> to vector<192x28xbf16>
    %c2 = arith.constant 2 : index
    %c0_8 = arith.constant 0 : index
    %c0_9 = arith.constant 0 : index
    %17 = vector.load %arg2[%c2, %c0_8, %c0_9] : memref<5x28x512xbf16, #tpu.memory_space<vmem>>, vector<1x28x512xbf16>
    %18 = vector.shape_cast %17 : vector<1x28x512xbf16> to vector<28x512xbf16>
    %cst_10 = arith.constant dense<0.000000e+00> : vector<192x512xf32>
    %19 = tpu.matmul %16, %18, %cst_10 {dimension_numbers = #tpu.dot_dimension_numbers<[1], [0], [0], [1], [0, 0, 1, 1], [], []>} : vector<192x28xbf16>, vector<28x512xbf16>, vector<192x512xf32> -> vector<192x512xf32>
    %20 = arith.addf %13, %19 : vector<192x512xf32>
    %21 = vector.extract_strided_slice %0 {offsets = [3, 0, 0], sizes = [24, 8, 28], strides = [1, 1, 1]} : vector<28x8x28xf32> to vector<24x8x28xf32>
    %22 = vector.shape_cast %21 : vector<24x8x28xf32> to vector<192x28xf32>
    %23 = arith.truncf %22 : vector<192x28xf32> to vector<192x28xbf16>
    %c3 = arith.constant 3 : index
    %c0_11 = arith.constant 0 : index
    %c0_12 = arith.constant 0 : index
    %24 = vector.load %arg2[%c3, %c0_11, %c0_12] : memref<5x28x512xbf16, #tpu.memory_space<vmem>>, vector<1x28x512xbf16>
    %25 = vector.shape_cast %24 : vector<1x28x512xbf16> to vector<28x512xbf16>
    %cst_13 = arith.constant dense<0.000000e+00> : vector<192x512xf32>
    %26 = tpu.matmul %23, %25, %cst_13 {dimension_numbers = #tpu.dot_dimension_numbers<[1], [0], [0], [1], [0, 0, 1, 1], [], []>} : vector<192x28xbf16>, vector<28x512xbf16>, vector<192x512xf32> -> vector<192x512xf32>
    %27 = arith.addf %20, %26 : vector<192x512xf32>
    %28 = vector.extract_strided_slice %0 {offsets = [4, 0, 0], sizes = [24, 8, 28], strides = [1, 1, 1]} : vector<28x8x28xf32> to vector<24x8x28xf32>
    %29 = vector.shape_cast %28 : vector<24x8x28xf32> to vector<192x28xf32>
    %30 = arith.truncf %29 : vector<192x28xf32> to vector<192x28xbf16>
    %c4 = arith.constant 4 : index
    %c0_14 = arith.constant 0 : index
    %c0_15 = arith.constant 0 : index
    %31 = vector.load %arg2[%c4, %c0_14, %c0_15] : memref<5x28x512xbf16, #tpu.memory_space<vmem>>, vector<1x28x512xbf16>
    %32 = vector.shape_cast %31 : vector<1x28x512xbf16> to vector<28x512xbf16>
    %cst_16 = arith.constant dense<0.000000e+00> : vector<192x512xf32>
    %33 = tpu.matmul %30, %32, %cst_16 {dimension_numbers = #tpu.dot_dimension_numbers<[1], [0], [0], [1], [0, 0, 1, 1], [], []>} : vector<192x28xbf16>, vector<28x512xbf16>, vector<192x512xf32> -> vector<192x512xf32>
    %34 = arith.addf %27, %33 : vector<192x512xf32>
    %35 = vector.extract_strided_slice %34 {offsets = [0, 0], sizes = [192, 256], strides = [1, 1]} : vector<192x512xf32> to vector<192x256xf32>
    %36 = vector.extract_strided_slice %34 {offsets = [0, 256], sizes = [192, 256], strides = [1, 1]} : vector<192x512xf32> to vector<192x256xf32>
    %37 = arith.maximumf %35, %36 : vector<192x256xf32>
    %38 = vector.shape_cast %37 : vector<192x256xf32> to vector<12x2x8x256xf32>
    %39 = vector.extract_strided_slice %38 {offsets = [0, 0, 0, 0], sizes = [12, 1, 8, 256], strides = [1, 1, 1, 1]} : vector<12x2x8x256xf32> to vector<12x1x8x256xf32>
    %40 = vector.shape_cast %39 : vector<12x1x8x256xf32> to vector<12x8x256xf32>
    %41 = vector.extract_strided_slice %38 {offsets = [0, 1, 0, 0], sizes = [12, 1, 8, 256], strides = [1, 1, 1, 1]} : vector<12x2x8x256xf32> to vector<12x1x8x256xf32>
    %42 = vector.shape_cast %41 : vector<12x1x8x256xf32> to vector<12x8x256xf32>
    %43 = arith.maximumf %40, %42 : vector<12x8x256xf32>
    %c0_17 = arith.constant 0 : index
    %c0_18 = arith.constant 0 : index
    %44 = vector.load %arg3[%c0_17, %c0_18] : memref<8x256xf32, #tpu.memory_space<vmem>>, vector<8x256xf32>
    %45 = vector.shape_cast %44 : vector<8x256xf32> to vector<1x8x256xf32>
    %46 = vector.broadcast %45 : vector<1x8x256xf32> to vector<12x8x256xf32>
    %47 = arith.addf %43, %46 : vector<12x8x256xf32>
    %cst_19 = arith.constant 0.000000e+00 : f32
    %48 = vector.broadcast %cst_19 : f32 to vector<12x8x256xf32>
    %49 = arith.maximumf %47, %48 : vector<12x8x256xf32>
    %50 = vector.extract_strided_slice %49 {offsets = [0, 0, 0], sizes = [8, 8, 256], strides = [1, 1, 1]} : vector<12x8x256xf32> to vector<8x8x256xf32>
    %51 = vector.extract_strided_slice %49 {offsets = [1, 0, 0], sizes = [8, 8, 256], strides = [1, 1, 1]} : vector<12x8x256xf32> to vector<8x8x256xf32>
    %52 = vector.extract_strided_slice %49 {offsets = [2, 0, 0], sizes = [8, 8, 256], strides = [1, 1, 1]} : vector<12x8x256xf32> to vector<8x8x256xf32>
    %53 = vector.extract_strided_slice %49 {offsets = [3, 0, 0], sizes = [8, 8, 256], strides = [1, 1, 1]} : vector<12x8x256xf32> to vector<8x8x256xf32>
    %54 = vector.extract_strided_slice %49 {offsets = [4, 0, 0], sizes = [8, 8, 256], strides = [1, 1, 1]} : vector<12x8x256xf32> to vector<8x8x256xf32>
    %55 = tpu.concatenate %50, %51, %52, %53, %54 in 2 : vector<8x8x256xf32>, vector<8x8x256xf32>, vector<8x8x256xf32>, vector<8x8x256xf32>, vector<8x8x256xf32> -> vector<8x8x1280xf32>
    %56 = vector.shape_cast %55 : vector<8x8x1280xf32> to vector<64x1280xf32>
    %57 = arith.truncf %56 : vector<64x1280xf32> to vector<64x1280xbf16>
    %c0_20 = arith.constant 0 : index
    %c0_21 = arith.constant 0 : index
    %58 = vector.load %arg4[%c0_20, %c0_21] : memref<1280x512xbf16, #tpu.memory_space<vmem>>, vector<1280x512xbf16>
    %cst_22 = arith.constant dense<0.000000e+00> : vector<64x512xf32>
    %59 = tpu.matmul %57, %58, %cst_22 {dimension_numbers = #tpu.dot_dimension_numbers<[1], [0], [0], [1], [0, 0, 1, 1], [], []>} : vector<64x1280xbf16>, vector<1280x512xbf16>, vector<64x512xf32> -> vector<64x512xf32>
    %60 = vector.extract_strided_slice %59 {offsets = [0, 0], sizes = [64, 256], strides = [1, 1]} : vector<64x512xf32> to vector<64x256xf32>
    %61 = vector.extract_strided_slice %59 {offsets = [0, 256], sizes = [64, 256], strides = [1, 1]} : vector<64x512xf32> to vector<64x256xf32>
    %62 = arith.maximumf %60, %61 : vector<64x256xf32>
    %63 = vector.shape_cast %62 : vector<64x256xf32> to vector<4x2x8x256xf32>
    %64 = vector.extract_strided_slice %63 {offsets = [0, 0, 0, 0], sizes = [4, 1, 8, 256], strides = [1, 1, 1, 1]} : vector<4x2x8x256xf32> to vector<4x1x8x256xf32>
    %65 = vector.shape_cast %64 : vector<4x1x8x256xf32> to vector<4x8x256xf32>
    %66 = vector.extract_strided_slice %63 {offsets = [0, 1, 0, 0], sizes = [4, 1, 8, 256], strides = [1, 1, 1, 1]} : vector<4x2x8x256xf32> to vector<4x1x8x256xf32>
    %67 = vector.shape_cast %66 : vector<4x1x8x256xf32> to vector<4x8x256xf32>
    %68 = arith.maximumf %65, %67 : vector<4x8x256xf32>
    %c0_23 = arith.constant 0 : index
    %c0_24 = arith.constant 0 : index
    %69 = vector.load %arg5[%c0_23, %c0_24] : memref<8x256xf32, #tpu.memory_space<vmem>>, vector<8x256xf32>
    %70 = vector.shape_cast %69 : vector<8x256xf32> to vector<1x8x256xf32>
    %71 = vector.broadcast %70 : vector<1x8x256xf32> to vector<4x8x256xf32>
    %72 = arith.addf %68, %71 : vector<4x8x256xf32>
    %cst_25 = arith.constant 0.000000e+00 : f32
    %73 = vector.broadcast %cst_25 : f32 to vector<4x8x256xf32>
    %74 = arith.maximumf %72, %73 : vector<4x8x256xf32>
    %75 = vector.extract_strided_slice %74 {offsets = [0, 0, 0], sizes = [1, 8, 256], strides = [1, 1, 1]} : vector<4x8x256xf32> to vector<1x8x256xf32>
    %76 = vector.shape_cast %75 : vector<1x8x256xf32> to vector<8x256xf32>
    %77 = vector.extract_strided_slice %74 {offsets = [1, 0, 0], sizes = [1, 8, 256], strides = [1, 1, 1]} : vector<4x8x256xf32> to vector<1x8x256xf32>
    %78 = vector.shape_cast %77 : vector<1x8x256xf32> to vector<8x256xf32>
    %79 = vector.extract_strided_slice %74 {offsets = [2, 0, 0], sizes = [1, 8, 256], strides = [1, 1, 1]} : vector<4x8x256xf32> to vector<1x8x256xf32>
    %80 = vector.shape_cast %79 : vector<1x8x256xf32> to vector<8x256xf32>
    %81 = vector.extract_strided_slice %74 {offsets = [3, 0, 0], sizes = [1, 8, 256], strides = [1, 1, 1]} : vector<4x8x256xf32> to vector<1x8x256xf32>
    %82 = vector.shape_cast %81 : vector<1x8x256xf32> to vector<8x256xf32>
    %83 = tpu.concatenate %76, %78, %80, %82 in 1 : vector<8x256xf32>, vector<8x256xf32>, vector<8x256xf32>, vector<8x256xf32> -> vector<8x1024xf32>
    %84 = arith.truncf %83 : vector<8x1024xf32> to vector<8x1024xbf16>
    %c0_26 = arith.constant 0 : index
    %c0_27 = arith.constant 0 : index
    %85 = vector.load %arg6[%c0_26, %c0_27] : memref<1024x512xbf16, #tpu.memory_space<vmem>>, vector<1024x512xbf16>
    %cst_28 = arith.constant dense<0.000000e+00> : vector<8x512xf32>
    %86 = tpu.matmul %84, %85, %cst_28 {dimension_numbers = #tpu.dot_dimension_numbers<[1], [0], [0], [1], [0, 0, 1, 1], [], []>} : vector<8x1024xbf16>, vector<1024x512xbf16>, vector<8x512xf32> -> vector<8x512xf32>
    %c0_29 = arith.constant 0 : index
    %c0_30 = arith.constant 0 : index
    %87 = vector.load %arg7[%c0_29, %c0_30] : memref<8x512xf32, #tpu.memory_space<vmem>>, vector<8x512xf32>
    %88 = arith.addf %86, %87 : vector<8x512xf32>
    %89 = arith.truncf %88 : vector<8x512xf32> to vector<8x512xbf16>
    %c0_31 = arith.constant 0 : index
    %c0_32 = arith.constant 0 : index
    %90 = vector.load %arg8[%c0_31, %c0_32] : memref<512x128xbf16, #tpu.memory_space<vmem>>, vector<512x128xbf16>
    %cst_33 = arith.constant dense<0.000000e+00> : vector<8x128xf32>
    %91 = tpu.matmul %89, %90, %cst_33 {dimension_numbers = #tpu.dot_dimension_numbers<[1], [0], [0], [1], [0, 0, 1, 1], [], []>} : vector<8x512xbf16>, vector<512x128xbf16>, vector<8x128xf32> -> vector<8x128xf32>
    %c0_34 = arith.constant 0 : index
    %c0_35 = arith.constant 0 : index
    %92 = vector.load %arg9[%c0_34, %c0_35] : memref<8x128xf32, #tpu.memory_space<vmem>>, vector<8x128xf32>
    %93 = arith.addf %91, %92 : vector<8x128xf32>
    %c0_36 = arith.constant 0 : index
    %c0_37 = arith.constant 0 : index
    %94 = vector.load %arg10[%c0_36, %c0_37] : memref<8x128xf32, #tpu.memory_space<vmem>>, vector<8x128xf32>
    tpu.vector_store %arg10[%c0_36, %c0_37], %93 {strides = array<i32>} : memref<8x128xf32, #tpu.memory_space<vmem>>, vector<8x128xf32>,
    return
  }
  func.func @transform_0(%arg0: i32) -> (i32, i32, i32) {
    %c0_i32 = arith.constant 0 : i32
    %c0_i32_0 = arith.constant 0 : i32
    %c0_i32_1 = arith.constant 0 : i32
    return %c0_i32, %arg0, %c0_i32_0 : i32, i32, i32
  }
  func.func @transform_1(%arg0: i32) -> (i32, i32, i32) {
    %c0_i32 = arith.constant 0 : i32
    %c0_i32_0 = arith.constant 0 : i32
    %c0_i32_1 = arith.constant 0 : i32
    %c0_i32_2 = arith.constant 0 : i32
    return %c0_i32, %c0_i32_0, %c0_i32_1 : i32, i32, i32
  }
  func.func @transform_2(%arg0: i32) -> (i32, i32) {
    %c0_i32 = arith.constant 0 : i32
    %c0_i32_0 = arith.constant 0 : i32
    %c0_i32_1 = arith.constant 0 : i32
    return %c0_i32, %c0_i32_0 : i32, i32
  }
  func.func @transform_3(%arg0: i32) -> (i32, i32) {
    %c0_i32 = arith.constant 0 : i32
    %c0_i32_0 = arith.constant 0 : i32
    %c0_i32_1 = arith.constant 0 : i32
    return %c0_i32, %c0_i32_0 : i32, i32
  }
  func.func @transform_4(%arg0: i32) -> (i32, i32) {
    %c0_i32 = arith.constant 0 : i32
    %c0_i32_0 = arith.constant 0 : i32
    %c0_i32_1 = arith.constant 0 : i32
    return %c0_i32, %c0_i32_0 : i32, i32
  }
  func.func @transform_5(%arg0: i32) -> (i32, i32) {
    %c0_i32 = arith.constant 0 : i32
    %c0_i32_0 = arith.constant 0 : i32
    %c0_i32_1 = arith.constant 0 : i32
    return %c0_i32, %c0_i32_0 : i32, i32
  }
  func.func @transform_6(%arg0: i32) -> (i32, i32) {
    %c0_i32 = arith.constant 0 : i32
    %c0_i32_0 = arith.constant 0 : i32
    %c0_i32_1 = arith.constant 0 : i32
    return %c0_i32, %c0_i32_0 : i32, i32
  }
  func.func @transform_7(%arg0: i32) -> (i32, i32) {
    %c0_i32 = arith.constant 0 : i32
    %c0_i32_0 = arith.constant 0 : i32
    %c0_i32_1 = arith.constant 0 : i32
    return %c0_i32, %c0_i32_0 : i32, i32
  }
  func.func @transform_8(%arg0: i32) -> (i32, i32) {
    %c0_i32 = arith.constant 0 : i32
    %c0_i32_0 = arith.constant 0 : i32
    %c0_i32_1 = arith.constant 0 : i32
    return %c0_i32, %c0_i32_0 : i32, i32
  }
  func.func @transform_9(%arg0: i32) -> (i32, i32) {
    %c0_i32 = arith.constant 0 : i32
    %c0_i32_0 = arith.constant 0 : i32
    return %arg0, %c0_i32 : i32, i32
  }
}

</mosaic_0001>

<llo_original>
// kernel: example_net_forward.1
$region0: #{example_net_forward.1}
  #allocation0 [shape = 'u32[]', space=smem, size = 0x4, offset = 0x4, fixed_abs, tag = 'smem constant byte address 0x4 - core index']
  #allocation1 [shape = 'u32[144,128]{1,0:T(1,128)}', space=vmem, size = 0x12000, scoped, tag = 'internal scratch']
  %s0 = inlined_call_operand.vmem [shape: f32[28,8,28], index: 0, kind: input, shape index: {}]
  %s1 = inlined_call_operand.hbm [shape: bf16[5,28,512], index: 1, kind: input, shape index: {}]
  %s2 = inlined_call_operand.hbm [shape: f32[8,256], index: 2, kind: input, shape index: {}]
  %s3 = inlined_call_operand.hbm [shape: bf16[1280,512], index: 3, kind: input, shape index: {}]
  %s4 = inlined_call_operand.hbm [shape: f32[8,256], index: 4, kind: input, shape index: {}]
  %s5 = inlined_call_operand.hbm [shape: bf16[1024,512], index: 5, kind: input, shape index: {}]
  %s6 = inlined_call_operand.hbm [shape: f32[8,512], index: 6, kind: input, shape index: {}]
  %s7 = inlined_call_operand.hbm [shape: bf16[512,128], index: 7, kind: input, shape index: {}]
  %s8 = inlined_call_operand.hbm [shape: f32[8,128], index: 8, kind: input, shape index: {}]
  %s9 = inlined_call_operand.vmem [shape: f32[8,128], index: 9, kind: output, shape index: {}]
  %s10 = sld [smem:[#allocation0]]
  $region78: #{example_net_forward.1} parent=0
    _
  %s12 = ssub.s32 1, %s10
  %s13 = scalar_select 0, %s12, %s10
  $region1: #{example_net_forward.1} parent=0
    #allocation2 [shape = 'u8[163840]{0}', space=vmem, size = 0x28000, scoped, tag = 'input window, operand 1, single buffered']
    #allocation3 [shape = 's32[1]{0}', space=sflag, size = 0x4, scoped, tag = 'scoped memory for example_net_forward.1']
    #allocation4 [shape = 'u8[8192]{0}', space=vmem, size = 0x2000, scoped, tag = 'input window, operand 2, single buffered']
    #allocation5 [shape = 's32[1]{0}', space=sflag, size = 0x4, scoped, tag = 'scoped memory for example_net_forward.1']
    #allocation6 [shape = 'u8[1310720]{0}', space=vmem, size = 0x140000, scoped, tag = 'input window, operand 3, single buffered']
    #allocation7 [shape = 'u8[8192]{0}', space=vmem, size = 0x2000, scoped, tag = 'input window, operand 4, single buffered']
    #allocation8 [shape = 's32[1]{0}', space=sflag, size = 0x4, scoped, tag = 'scoped memory for example_net_forward.1']
    #allocation9 [shape = 'u8[1048576]{0}', space=vmem, size = 0x100000, scoped, tag = 'input window, operand 5, single buffered']
    #allocation10 [shape = 'u8[16384]{0}', space=vmem, size = 0x4000, scoped, tag = 'input window, operand 6, single buffered']
    #allocation11 [shape = 's32[1]{0}', space=sflag, size = 0x4, scoped, tag = 'scoped memory for example_net_forward.1']
    #allocation12 [shape = 'u8[131072]{0}', space=vmem, size = 0x20000, scoped, tag = 'input window, operand 7, single buffered']
    #allocation13 [shape = 'u8[4096]{0}', space=vmem, size = 0x1000, scoped, tag = 'input window, operand 8, single buffered']
    #allocation14 [shape = 's32[1]{0}', space=sflag, size = 0x4, scoped, tag = 'scoped memory for example_net_forward.1']
    %14 = vsyncpa [#allocation3], 0
    %15 = vsyncpa [#allocation5], 0
    %16 = vsyncpa [#allocation8], 0
    %17 = vsyncpa [#allocation11], 0
    %18 = vsyncpa [#allocation14], 0
    // Predicated region
    $region2: #{example_net_forward.1} parent=1 // pred_check
      _
    $region3: #{example_net_forward.1} parent=1 // pred_check_branch
      %20 = sbr.rel (0) target = $region5
    $region4: #{example_net_forward.1} parent=1 // pred_region
      _
    $region5: #{example_net_forward.1} parent=1 // pred_fallthru
      _
    // Predicated region
    $region6: #{example_net_forward.1} parent=1 // pred_check
      _
    $region7: #{example_net_forward.1} parent=1 // pred_check_branch
      %22 = sbr.rel (0) target = $region9
    $region8: #{example_net_forward.1} parent=1 // pred_region
      %s24 = ssub.s32 5120, 5120
      %25 = vsyncadd [#allocation3], %s24
      %s26 = sshll.u32 [#allocation2], 4
      %s27 = int_to_ptr.vmem [resolvable:$true] %s26
      %32 = dma.hbm_to_vmem [thread:$0]  %s1, 5120, %s27, [#allocation3], 256, 256, 16
    $region9: #{example_net_forward.1} parent=1 // pred_fallthru
      _
    // Predicated region
    $region10: #{example_net_forward.1} parent=1 // pred_check
      _
    $region11: #{example_net_forward.1} parent=1 // pred_check_branch
      %34 = sbr.rel (0) target = $region13
    $region12: #{example_net_forward.1} parent=1 // pred_region
      %s36 = ssub.s32 256, 256
      %37 = vsyncadd [#allocation5], %s36
      %s39 = sshll.u32 [#allocation4], 4
      %s40 = int_to_ptr.vmem [resolvable:$true] %s39
      %42 = dma.hbm_to_vmem [thread:$0]  %s2, 256, %s40, [#allocation5]
    $region13: #{example_net_forward.1} parent=1 // pred_fallthru
      _
    // Predicated region
    $region14: #{example_net_forward.1} parent=1 // pred_check
      _
    $region15: #{example_net_forward.1} parent=1 // pred_check_branch
      %44 = sbr.rel (0) target = $region17
    $region16: #{example_net_forward.1} parent=1 // pred_region
      %s46 = ssub.s32 40960, 40960
      %47 = vsyncadd [#allocation5], %s46
      %s48 = sshll.u32 [#allocation6], 4
      %s49 = int_to_ptr.vmem [resolvable:$true] %s48
      %54 = dma.hbm_to_vmem [thread:$0]  %s3, 40960, %s49, [#allocation5], 256, 256, 16
    $region17: #{example_net_forward.1} parent=1 // pred_fallthru
      _
    // Predicated region
    $region18: #{example_net_forward.1} parent=1 // pred_check
      _
    $region19: #{example_net_forward.1} parent=1 // pred_check_branch
      %56 = sbr.rel (0) target = $region21
    $region20: #{example_net_forward.1} parent=1 // pred_region
      %s58 = ssub.s32 256, 256
      %59 = vsyncadd [#allocation8], %s58
      %s61 = sshll.u32 [#allocation7], 4
      %s62 = int_to_ptr.vmem [resolvable:$true] %s61
      %64 = dma.hbm_to_vmem [thread:$0]  %s4, 256, %s62, [#allocation8]
    $region21: #{example_net_forward.1} parent=1 // pred_fallthru
      _
    // Predicated region
    $region22: #{example_net_forward.1} parent=1 // pred_check
      _
    $region23: #{example_net_forward.1} parent=1 // pred_check_branch
      %66 = sbr.rel (0) target = $region25
    $region24: #{example_net_forward.1} parent=1 // pred_region
      %s68 = ssub.s32 32768, 32768
      %69 = vsyncadd [#allocation8], %s68
      %s70 = sshll.u32 [#allocation9], 4
      %s71 = int_to_ptr.vmem [resolvable:$true] %s70
      %76 = dma.hbm_to_vmem [thread:$0]  %s5, 32768, %s71, [#allocation8], 256, 256, 16
    $region25: #{example_net_forward.1} parent=1 // pred_fallthru
      _
    // Predicated region
    $region26: #{example_net_forward.1} parent=1 // pred_check
      _
    $region27: #{example_net_forward.1} parent=1 // pred_check_branch
      %78 = sbr.rel (0) target = $region29
    $region28: #{example_net_forward.1} parent=1 // pred_region
      %s80 = ssub.s32 512, 512
      %81 = vsyncadd [#allocation11], %s80
      %s83 = sshll.u32 [#allocation10], 4
      %s84 = int_to_ptr.vmem [resolvable:$true] %s83
      %86 = dma.hbm_to_vmem [thread:$0]  %s6, 512, %s84, [#allocation11]
    $region29: #{example_net_forward.1} parent=1 // pred_fallthru
      _
    // Predicated region
    $region30: #{example_net_forward.1} parent=1 // pred_check
      _
    $region31: #{example_net_forward.1} parent=1 // pred_check_branch
      %88 = sbr.rel (0) target = $region33
    $region32: #{example_net_forward.1} parent=1 // pred_region
      %s90 = ssub.s32 4096, 4096
      %91 = vsyncadd [#allocation11], %s90
      %s92 = sshll.u32 [#allocation12], 4
      %s93 = int_to_ptr.vmem [resolvable:$true] %s92
      %98 = dma.hbm_to_vmem [thread:$0]  %s7, 4096, %s93, [#allocation11], 64, 64, 4
    $region33: #{example_net_forward.1} parent=1 // pred_fallthru
      _
    // Predicated region
    $region34: #{example_net_forward.1} parent=1 // pred_check
      _
    $region35: #{example_net_forward.1} parent=1 // pred_check_branch
      %100 = sbr.rel (0) target = $region37
    $region36: #{example_net_forward.1} parent=1 // pred_region
      %s102 = ssub.s32 128, 128
      %103 = vsyncadd [#allocation14], %s102
      %s105 = sshll.u32 [#allocation13], 4
      %s106 = int_to_ptr.vmem [resolvable:$true] %s105
      %108 = dma.hbm_to_vmem [thread:$0]  %s8, 128, %s106, [#allocation14]
    $region37: #{example_net_forward.1} parent=1 // pred_fallthru
      _
    // Predicated region
    $region38: #{example_net_forward.1} parent=1 // pred_check
      _
    $region39: #{example_net_forward.1} parent=1 // pred_check_branch
      %110 = sbr.rel (0) target = $region41
    $region40: #{example_net_forward.1} parent=1 // pred_region
      %111 = dma.done [#allocation3], 5120
    $region41: #{example_net_forward.1} parent=1 // pred_fallthru
      _
    // Predicated region
    $region42: #{example_net_forward.1} parent=1 // pred_check
      _
    $region43: #{example_net_forward.1} parent=1 // pred_check_branch
      %113 = sbr.rel (0) target = $region45
    $region44: #{example_net_forward.1} parent=1 // pred_region
      %114 = dma.done [#allocation5], 256
    $region45: #{example_net_forward.1} parent=1 // pred_fallthru
      _
    // Predicated region
    $region46: #{example_net_forward.1} parent=1 // pred_check
      _
    $region47: #{example_net_forward.1} parent=1 // pred_check_branch
      %116 = sbr.rel (0) target = $region49
    $region48: #{example_net_forward.1} parent=1 // pred_region
      %117 = dma.done [#allocation5], 40960
    $region49: #{example_net_forward.1} parent=1 // pred_fallthru
      _
    // Predicated region
    $region50: #{example_net_forward.1} parent=1 // pred_check
      _
    $region51: #{example_net_forward.1} parent=1 // pred_check_branch
      %119 = sbr.rel (0) target = $region53
    $region52: #{example_net_forward.1} parent=1 // pred_region
      %120 = dma.done [#allocation8], 256
    $region53: #{example_net_forward.1} parent=1 // pred_fallthru
      _
    // Predicated region
    $region54: #{example_net_forward.1} parent=1 // pred_check
      _
    $region55: #{example_net_forward.1} parent=1 // pred_check_branch
      %122 = sbr.rel (0) target = $region57
    $region56: #{example_net_forward.1} parent=1 // pred_region
      %123 = dma.done [#allocation8], 32768
    $region57: #{example_net_forward.1} parent=1 // pred_fallthru
      _
    // Predicated region
    $region58: #{example_net_forward.1} parent=1 // pred_check
      _
    $region59: #{example_net_forward.1} parent=1 // pred_check_branch
      %125 = sbr.rel (0) target = $region61
    $region60: #{example_net_forward.1} parent=1 // pred_region
      %126 = dma.done [#allocation11], 512
    $region61: #{example_net_forward.1} parent=1 // pred_fallthru
      _
    // Predicated region
    $region62: #{example_net_forward.1} parent=1 // pred_check
      _
    $region63: #{example_net_forward.1} parent=1 // pred_check_branch
      %128 = sbr.rel (0) target = $region65
    $region64: #{example_net_forward.1} parent=1 // pred_region
      %129 = dma.done [#allocation11], 4096
    $region65: #{example_net_forward.1} parent=1 // pred_fallthru
      _
    // Predicated region
    $region66: #{example_net_forward.1} parent=1 // pred_check
      _
    $region67: #{example_net_forward.1} parent=1 // pred_check_branch
      %131 = sbr.rel (0) target = $region69
    $region68: #{example_net_forward.1} parent=1 // pred_region
      %132 = dma.done [#allocation14], 128
    $region69: #{example_net_forward.1} parent=1 // pred_fallthru
      _
    %v134 = vld [vmem:[%s0] sm:$0xff]
    %v135 = vld [vmem:[%s0 + $0x8] sm:$0xff]
    %v136 = vld [vmem:[%s0 + $0x10] sm:$0xff]
    %v137 = vld [vmem:[%s0 + $0x18] sm:$0xff]
    %v138 = vld [vmem:[%s0 + $0x20] sm:$0xff]
    %v139 = vld [vmem:[%s0 + $0x28] sm:$0xff]
    %v140 = vld [vmem:[%s0 + $0x30] sm:$0xff]
    %v141 = vld [vmem:[%s0 + $0x38] sm:$0xff]
    %v142 = vld [vmem:[%s0 + $0x40] sm:$0xff]
    %v143 = vld [vmem:[%s0 + $0x48] sm:$0xff]
    %v144 = vld [vmem:[%s0 + $0x50] sm:$0xff]
    %v145 = vld [vmem:[%s0 + $0x58] sm:$0xff]
    %v146 = vld [vmem:[%s0 + $0x60] sm:$0xff]
    %v147 = vld [vmem:[%s0 + $0x68] sm:$0xff]
    %v148 = vld [vmem:[%s0 + $0x70] sm:$0xff]
    %v149 = vld [vmem:[%s0 + $0x78] sm:$0xff]
    %v150 = vld [vmem:[%s0 + $0x80] sm:$0xff]
    %v151 = vld [vmem:[%s0 + $0x88] sm:$0xff]
    %v152 = vld [vmem:[%s0 + $0x90] sm:$0xff]
    %v153 = vld [vmem:[%s0 + $0x98] sm:$0xff]
    %v154 = vld [vmem:[%s0 + $0xa0] sm:$0xff]
    %v155 = vld [vmem:[%s0 + $0xa8] sm:$0xff]
    %v156 = vld [vmem:[%s0 + $0xb0] sm:$0xff]
    %v157 = vld [vmem:[%s0 + $0xb8] sm:$0xff]
    %v158 = vld [vmem:[%s0 + $0xc0] sm:$0xff]
    %v159 = vld [vmem:[%s0 + $0xc8] sm:$0xff]
    %v160 = vld [vmem:[%s0 + $0xd0] sm:$0xff]
    %v161 = vld [vmem:[%s0 + $0xd8] sm:$0xff]
    %v162 = vpack.c.bf16 %v135, %v134
    %v163 = vpack.c.bf16 %v137, %v136
    %v164 = vpack.c.bf16 %v139, %v138
    %v165 = vpack.c.bf16 %v141, %v140
    %v166 = vpack.c.bf16 %v143, %v142
    %v167 = vpack.c.bf16 %v145, %v144
    %v168 = vpack.c.bf16 %v147, %v146
    %v169 = vpack.c.bf16 %v149, %v148
    %v170 = vpack.c.bf16 %v151, %v150
    %v171 = vpack.c.bf16 %v153, %v152
    %v172 = vpack.c.bf16 %v155, %v154
    %v173 = vpack.c.bf16 %v157, %v156
    %v174 = vld [vmem:[#allocation2] sm:$0xff]
    %v175 = vld [vmem:[#allocation2 + $0x8] sm:$0xff]
    %v176 = vld [vmem:[#allocation2 + $0x10] sm:$0xff]
    %v177 = vld [vmem:[#allocation2 + $0x18] sm:$0xff]
    %v178 = vld [vmem:[#allocation2 + $0x20] sm:$0xff]
    %v179 = vld [vmem:[#allocation2 + $0x28] sm:$0xff]
    %v180 = vld [vmem:[#allocation2 + $0x30] sm:$0x33]
    %v181 = vld [vmem:[#allocation2 + $0x38] sm:$0x33]
    %v182 = vpack.c.bf16 %v136, %v135
    %v183 = vpack.c.bf16 %v138, %v137
    %v184 = vpack.c.bf16 %v140, %v139
    %v185 = vpack.c.bf16 %v142, %v141
    %v186 = vpack.c.bf16 %v144, %v143
    %v187 = vpack.c.bf16 %v146, %v145
    %v188 = vpack.c.bf16 %v148, %v147
    %v189 = vpack.c.bf16 %v150, %v149
    %v190 = vpack.c.bf16 %v152, %v151
    %v191 = vpack.c.bf16 %v154, %v153
    %v192 = vpack.c.bf16 %v156, %v155
    %v193 = vpack.c.bf16 %v158, %v157
    %s194 = scalar_lea.vmem [#allocation2], 64
    %v195 = vld [vmem:[%s194] sm:$0xff]
    %v196 = vld [vmem:[%s194 + $0x8] sm:$0xff]
    %v197 = vld [vmem:[%s194 + $0x10] sm:$0xff]
    %v198 = vld [vmem:[%s194 + $0x18] sm:$0xff]
    %v199 = vld [vmem:[%s194 + $0x20] sm:$0xff]
    %v200 = vld [vmem:[%s194 + $0x28] sm:$0xff]
    %v201 = vld [vmem:[%s194 + $0x30] sm:$0x33]
    %v202 = vld [vmem:[%s194 + $0x38] sm:$0x33]
    %v211 = vunpack.c.l.b16 %v195
    %v212 = vunpack.c.h.b16 %v195
    %v213 = vunpack.c.l.b16 %v196
    %v214 = vunpack.c.h.b16 %v196
    %v215 = vunpack.c.l.b16 %v197
    %v216 = vunpack.c.h.b16 %v197
    %v217 = vunpack.c.l.b16 %v198
    %v218 = vunpack.c.h.b16 %v198
    %v219 = vunpack.c.l.b16 %v199
    %v220 = vunpack.c.h.b16 %v199
    %v221 = vunpack.c.l.b16 %v200
    %v222 = vunpack.c.h.b16 %v200
    %v223 = vunpack.c.l.b16 %v201
    %v224 = vunpack.c.h.b16 %v201
    %v225 = vunpack.c.l.b16 %v202
    %v226 = vunpack.c.h.b16 %v202
    %v227 = vpack.c.b16 %v215, %v211
    %v228 = vpack.c.b16 %v216, %v212
    %v229 = vpack.c.b16 %v217, %v213
    %v230 = vpack.c.b16 %v218, %v214
    %v231 = vpack.c.b16 %v223, %v219
    %v232 = vpack.c.b16 %v224, %v220
    %v233 = vpack.c.b16 %v225, %v221
    %v234 = vpack.c.b16 %v226, %v222
    %vm239 = vcmask 228352
    %v241 = vsel %vm239, %v182, 0
    %v244 = vsel %vm239, %v183, 0
    %v247 = vsel %vm239, %v184, 0
    %v250 = vsel %vm239, %v185, 0
    %v253 = vsel %vm239, %v186, 0
    %v256 = vsel %vm239, %v187, 0
    %v259 = vsel %vm239, %v188, 0
    %v262 = vsel %vm239, %v189, 0
    %v265 = vsel %vm239, %v190, 0
    %v268 = vsel %vm239, %v191, 0
    %v271 = vsel %vm239, %v192, 0
    %v274 = vsel %vm239, %v193, 0
    %vm276 = vcmask 1045504
    %v278 = vsel %vm276, %v231, 0
    %v281 = vsel %vm276, %v232, 0
    %v284 = vsel %vm276, %v233, 0
    %v287 = vsel %vm276, %v234, 0
    %289 = vmatprep.subr.bf16.mxu0 0
    %290 = vmatpush1.bf16.msra.mxu0 0
    %291 = vmatprep.subr.bf16.mxu0 0
    %292 = vmatpush1.bf16.msra.mxu0 0
    %293 = vmatprep.subr.bf16.mxu0 0
    %294 = vmatpush1.bf16.msra.mxu0 0
    %295 = vmatprep.subr.bf16.mxu0 0
    %296 = vmatpush1.bf16.msra.mxu0 0
    %297 = vmatprep.subr.bf16.mxu0 0
    %298 = vmatpush1.bf16.msra.mxu0 0
    %299 = vmatprep.subr.bf16.mxu0 0
    %300 = vmatpush1.bf16.msra.mxu0 0
    %301 = vmatprep.subr.bf16.mxu0 %v281
    %302 = vmatpush1.bf16.msra.mxu0 %v278
    %303 = vmatprep.subr.bf16.mxu0 %v228
    %304 = vmatpush1.bf16.msra.mxu0 %v227
    %305 = vmatprep.subr.bf16.mxu0 0
    %306 = vmatpush2.bf16.msra.mxu0 0
    %307 = vmatprep.subr.bf16.mxu0 0
    %308 = vmatpush2.bf16.msra.mxu0 0
    %309 = vmatprep.subr.bf16.mxu0 0
    %310 = vmatpush2.bf16.msra.mxu0 0
    %311 = vmatprep.subr.bf16.mxu0 0
    %312 = vmatpush2.bf16.msra.mxu0 0
    %313 = vmatprep.subr.bf16.mxu0 0
    %314 = vmatpush2.bf16.msra.mxu0 0
    %315 = vmatprep.subr.bf16.mxu0 0
    %316 = vmatpush2.bf16.msra.mxu0 0
    %317 = vmatprep.subr.bf16.mxu0 0
    %318 = vmatpush2.bf16.msra.mxu0 0
    %319 = vmatprep.subr.bf16.mxu0 0
    %320 = vmatpush2.bf16.msra.mxu0 0
    %321 = vmatprep.mubr.bf16.mxu0 0
    %322 = vmatmul.mubr.bf16.gmra.mxu0 %v241
    %v323 = vpop.f32.mrf.mxu0
    %v324 = vadd.f32 0.0, %v323
    %v325 = vpop.f32.mrf.mxu0
    %v326 = vadd.f32 0.0, %v325
    %v327 = vpop.f32.mrf.mxu0
    %v328 = vadd.f32 0.0, %v327
    %v329 = vpop.f32.mrf.mxu0
    %v330 = vadd.f32 0.0, %v329
    %331 = vmatprep.mubr.bf16.mxu0 0
    %332 = vmatmul.mubr.bf16.gmra.mxu0 %v244
    %v333 = vpop.f32.mrf.mxu0
    %v334 = vadd.f32 0.0, %v333
    %v335 = vpop.f32.mrf.mxu0
    %v336 = vadd.f32 0.0, %v335
    %v337 = vpop.f32.mrf.mxu0
    %v338 = vadd.f32 0.0, %v337
    %v339 = vpop.f32.mrf.mxu0
    %v340 = vadd.f32 0.0, %v339
    %341 = vmatprep.mubr.bf16.mxu0 0
    %342 = vmatmul.mubr.bf16.gmra.mxu0 %v247
    %v343 = vpop.f32.mrf.mxu0
    %v344 = vadd.f32 0.0, %v343
    %v345 = vpop.f32.mrf.mxu0
    %v346 = vadd.f32 0.0, %v345
    %v347 = vpop.f32.mrf.mxu0
    %v348 = vadd.f32 0.0, %v347
    %v349 = vpop.f32.mrf.mxu0
    %v350 = vadd.f32 0.0, %v349
    %351 = vmatprep.mubr.bf16.mxu0 0
    %352 = vmatmul.mubr.bf16.gmra.mxu0 %v250
    %v353 = vpop.f32.mrf.mxu0
    %v354 = vadd.f32 0.0, %v353
    %v355 = vpop.f32.mrf.mxu0
    %v356 = vadd.f32 0.0, %v355
    %v357 = vpop.f32.mrf.mxu0
    %v358 = vadd.f32 0.0, %v357
    %v359 = vpop.f32.mrf.mxu0
    %v360 = vadd.f32 0.0, %v359
    %361 = vmatprep.mubr.bf16.mxu0 0
    %362 = vmatmul.mubr.bf16.gmra.mxu0 %v253
    %v363 = vpop.f32.mrf.mxu0
    %v364 = vadd.f32 0.0, %v363
    %v365 = vpop.f32.mrf.mxu0
    %v366 = vadd.f32 0.0, %v365
    %v367 = vpop.f32.mrf.mxu0
    %v368 = vadd.f32 0.0, %v367
    %v369 = vpop.f32.mrf.mxu0
    %v370 = vadd.f32 0.0, %v369
    %371 = vmatprep.mubr.bf16.mxu0 0
    %372 = vmatmul.mubr.bf16.gmra.mxu0 %v256
    %v373 = vpop.f32.mrf.mxu0
    %v374 = vadd.f32 0.0, %v373
    %v375 = vpop.f32.mrf.mxu0
    %v376 = vadd.f32 0.0, %v375
    %v377 = vpop.f32.mrf.mxu0
    %v378 = vadd.f32 0.0, %v377
    %v379 = vpop.f32.mrf.mxu0
    %v380 = vadd.f32 0.0, %v379
    %381 = vmatprep.mubr.bf16.mxu0 0
    %382 = vmatmul.mubr.bf16.gmra.mxu0 %v259
    %v383 = vpop.f32.mrf.mxu0
    %v384 = vadd.f32 0.0, %v383
    %v385 = vpop.f32.mrf.mxu0
    %v386 = vadd.f32 0.0, %v385
    %v387 = vpop.f32.mrf.mxu0
    %v388 = vadd.f32 0.0, %v387
    %v389 = vpop.f32.mrf.mxu0
    %v390 = vadd.f32 0.0, %v389
    %391 = vmatprep.mubr.bf16.mxu0 0
    %392 = vmatmul.mubr.bf16.gmra.mxu0 %v262
    %v393 = vpop.f32.mrf.mxu0
    %v394 = vadd.f32 0.0, %v393
    %v395 = vpop.f32.mrf.mxu0
    %v396 = vadd.f32 0.0, %v395
    %v397 = vpop.f32.mrf.mxu0
    %v398 = vadd.f32 0.0, %v397
    %v399 = vpop.f32.mrf.mxu0
    %v400 = vadd.f32 0.0, %v399
    %401 = vmatprep.mubr.bf16.mxu0 0
    %402 = vmatmul.mubr.bf16.gmra.mxu0 %v265
    %v403 = vpop.f32.mrf.mxu0
    %v404 = vadd.f32 0.0, %v403
    %v405 = vpop.f32.mrf.mxu0
    %v406 = vadd.f32 0.0, %v405
    %v407 = vpop.f32.mrf.mxu0
    %v408 = vadd.f32 0.0, %v407
    %v409 = vpop.f32.mrf.mxu0
    %v410 = vadd.f32 0.0, %v409
    %411 = vmatprep.mubr.bf16.mxu0 0
    %412 = vmatmul.mubr.bf16.gmra.mxu0 %v268
    %v413 = vpop.f32.mrf.mxu0
    %v414 = vadd.f32 0.0, %v413
    %v415 = vpop.f32.mrf.mxu0
    %v416 = vadd.f32 0.0, %v415
    %v417 = vpop.f32.mrf.mxu0
    %v418 = vadd.f32 0.0, %v417
    %v419 = vpop.f32.mrf.mxu0
    %v420 = vadd.f32 0.0, %v419
    %421 = vmatprep.mubr.bf16.mxu0 0
    %422 = vmatmul.mubr.bf16.gmra.mxu0 %v271
    %v423 = vpop.f32.mrf.mxu0
    %v424 = vadd.f32 0.0, %v423
    %v425 = vpop.f32.mrf.mxu0
    %v426 = vadd.f32 0.0, %v425
    %v427 = vpop.f32.mrf.mxu0
    %v428 = vadd.f32 0.0, %v427
    %v429 = vpop.f32.mrf.mxu0
    %v430 = vadd.f32 0.0, %v429
    %431 = vmatprep.mubr.bf16.mxu0 0
    %432 = vmatmul.mubr.bf16.gmra.mxu0 %v274
    %v433 = vpop.f32.mrf.mxu0
    %v434 = vadd.f32 0.0, %v433
    %v435 = vpop.f32.mrf.mxu0
    %v436 = vadd.f32 0.0, %v435
    %v437 = vpop.f32.mrf.mxu0
    %v438 = vadd.f32 0.0, %v437
    %v439 = vpop.f32.mrf.mxu0
    %v440 = vadd.f32 0.0, %v439
    %441 = vdwg.mxu0
    %442 = vmatprep.subr.bf16.mxu0 0
    %443 = vmatpush1.bf16.msra.mxu0 0
    %444 = vmatprep.subr.bf16.mxu0 0
    %445 = vmatpush1.bf16.msra.mxu0 0
    %446 = vmatprep.subr.bf16.mxu0 0
    %447 = vmatpush1.bf16.msra.mxu0 0
    %448 = vmatprep.subr.bf16.mxu0 0
    %449 = vmatpush1.bf16.msra.mxu0 0
    %450 = vmatprep.subr.bf16.mxu0 0
    %451 = vmatpush1.bf16.msra.mxu0 0
    %452 = vmatprep.subr.bf16.mxu0 0
    %453 = vmatpush1.bf16.msra.mxu0 0
    %454 = vmatprep.subr.bf16.mxu0 %v287
    %455 = vmatpush1.bf16.msra.mxu0 %v284
    %456 = vmatprep.subr.bf16.mxu0 %v230
    %457 = vmatpush1.bf16.msra.mxu0 %v229
    %458 = vmatprep.subr.bf16.mxu0 0
    %459 = vmatpush2.bf16.msra.mxu0 0
    %460 = vmatprep.subr.bf16.mxu0 0
    %461 = vmatpush2.bf16.msra.mxu0 0
    %462 = vmatprep.subr.bf16.mxu0 0
    %463 = vmatpush2.bf16.msra.mxu0 0
    %464 = vmatprep.subr.bf16.mxu0 0
    %465 = vmatpush2.bf16.msra.mxu0 0
    %466 = vmatprep.subr.bf16.mxu0 0
    %467 = vmatpush2.bf16.msra.mxu0 0
    %468 = vmatprep.subr.bf16.mxu0 0
    %469 = vmatpush2.bf16.msra.mxu0 0
    %470 = vmatprep.subr.bf16.mxu0 0
    %471 = vmatpush2.bf16.msra.mxu0 0
    %472 = vmatprep.subr.bf16.mxu0 0
    %473 = vmatpush2.bf16.msra.mxu0 0
    %474 = vmatprep.mubr.bf16.mxu0 0
    %475 = vmatmul.mubr.bf16.gmra.mxu0 %v241
    %v476 = vpop.f32.mrf.mxu0
    %v477 = vadd.f32 0.0, %v476
    %v478 = vpop.f32.mrf.mxu0
    %v479 = vadd.f32 0.0, %v478
    %v480 = vpop.f32.mrf.mxu0
    %v481 = vadd.f32 0.0, %v480
    %v482 = vpop.f32.mrf.mxu0
    %v483 = vadd.f32 0.0, %v482
    %484 = vmatprep.mubr.bf16.mxu0 0
    %485 = vmatmul.mubr.bf16.gmra.mxu0 %v244
    %v486 = vpop.f32.mrf.mxu0
    %v487 = vadd.f32 0.0, %v486
    %v488 = vpop.f32.mrf.mxu0
    %v489 = vadd.f32 0.0, %v488
    %v490 = vpop.f32.mrf.mxu0
    %v491 = vadd.f32 0.0, %v490
    %v492 = vpop.f32.mrf.mxu0
    %v493 = vadd.f32 0.0, %v492
    %494 = vmatprep.mubr.bf16.mxu0 0
    %495 = vmatmul.mubr.bf16.gmra.mxu0 %v247
    %v496 = vpop.f32.mrf.mxu0
    %v497 = vadd.f32 0.0, %v496
    %v498 = vpop.f32.mrf.mxu0
    %v499 = vadd.f32 0.0, %v498
    %v500 = vpop.f32.mrf.mxu0
    %v501 = vadd.f32 0.0, %v500
    %v502 = vpop.f32.mrf.mxu0
    %v503 = vadd.f32 0.0, %v502
    %504 = vmatprep.mubr.bf16.mxu0 0
    %505 = vmatmul.mubr.bf16.gmra.mxu0 %v250
    %v506 = vpop.f32.mrf.mxu0
    %v507 = vadd.f32 0.0, %v506
    %v508 = vpop.f32.mrf.mxu0
    %v509 = vadd.f32 0.0, %v508
    %v510 = vpop.f32.mrf.mxu0
    %v511 = vadd.f32 0.0, %v510
    %v512 = vpop.f32.mrf.mxu0
    %v513 = vadd.f32 0.0, %v512
    %514 = vmatprep.mubr.bf16.mxu0 0
    %515 = vmatmul.mubr.bf16.gmra.mxu0 %v253
    %v516 = vpop.f32.mrf.mxu0
    %v517 = vadd.f32 0.0, %v516
    %v518 = vpop.f32.mrf.mxu0
    %v519 = vadd.f32 0.0, %v518
    %v520 = vpop.f32.mrf.mxu0
    %v521 = vadd.f32 0.0, %v520
    %v522 = vpop.f32.mrf.mxu0
    %v523 = vadd.f32 0.0, %v522
    %524 = vmatprep.mubr.bf16.mxu0 0
    %525 = vmatmul.mubr.bf16.gmra.mxu0 %v256
    %v526 = vpop.f32.mrf.mxu0
    %v527 = vadd.f32 0.0, %v526
    %v528 = vpop.f32.mrf.mxu0
    %v529 = vadd.f32 0.0, %v528
    %v530 = vpop.f32.mrf.mxu0
    %v531 = vadd.f32 0.0, %v530
    %v532 = vpop.f32.mrf.mxu0
    %v533 = vadd.f32 0.0, %v532
    %534 = vmatprep.mubr.bf16.mxu0 0
    %535 = vmatmul.mubr.bf16.gmra.mxu0 %v259
    %v536 = vpop.f32.mrf.mxu0
    %v537 = vadd.f32 0.0, %v536
    %v538 = vpop.f32.mrf.mxu0
    %v539 = vadd.f32 0.0, %v538
    %v540 = vpop.f32.mrf.mxu0
    %v541 = vadd.f32 0.0, %v540
    %v542 = vpop.f32.mrf.mxu0
    %v543 = vadd.f32 0.0, %v542
    %544 = vmatprep.mubr.bf16.mxu0 0
    %545 = vmatmul.mubr.bf16.gmra.mxu0 %v262
    %v546 = vpop.f32.mrf.mxu0
    %v547 = vadd.f32 0.0, %v546
    %v548 = vpop.f32.mrf.mxu0
    %v549 = vadd.f32 0.0, %v548
    %v550 = vpop.f32.mrf.mxu0
    %v551 = vadd.f32 0.0, %v550
    %v552 = vpop.f32.mrf.mxu0
    %v553 = vadd.f32 0.0, %v552
    %554 = vmatprep.mubr.bf16.mxu0 0
    %555 = vmatmul.mubr.bf16.gmra.mxu0 %v265
    %v556 = vpop.f32.mrf.mxu0
    %v557 = vadd.f32 0.0, %v556
    %v558 = vpop.f32.mrf.mxu0
    %v559 = vadd.f32 0.0, %v558
    %v560 = vpop.f32.mrf.mxu0
    %v561 = vadd.f32 0.0, %v560
    %v562 = vpop.f32.mrf.mxu0
    %v563 = vadd.f32 0.0, %v562
    %564 = vmatprep.mubr.bf16.mxu0 0
    %565 = vmatmul.mubr.bf16.gmra.mxu0 %v268
    %v566 = vpop.f32.mrf.mxu0
    %v567 = vadd.f32 0.0, %v566
    %v568 = vpop.f32.mrf.mxu0
    %v569 = vadd.f32 0.0, %v568
    %v570 = vpop.f32.mrf.mxu0
    %v571 = vadd.f32 0.0, %v570
    %v572 = vpop.f32.mrf.mxu0
    %v573 = vadd.f32 0.0, %v572
    %574 = vmatprep.mubr.bf16.mxu0 0
    %575 = vmatmul.mubr.bf16.gmra.mxu0 %v271
    %v576 = vpop.f32.mrf.mxu0
    %v577 = vadd.f32 0.0, %v576
    %v578 = vpop.f32.mrf.mxu0
    %v579 = vadd.f32 0.0, %v578
    %v580 = vpop.f32.mrf.mxu0
    %v581 = vadd.f32 0.0, %v580
    %v582 = vpop.f32.mrf.mxu0
    %v583 = vadd.f32 0.0, %v582
    %584 = vmatprep.mubr.bf16.mxu0 0
    %585 = vmatmul.mubr.bf16.gmra.mxu0 %v274
    %v586 = vpop.f32.mrf.mxu0
    %v587 = vadd.f32 0.0, %v586
    %v588 = vpop.f32.mrf.mxu0
    %v589 = vadd.f32 0.0, %v588
    %v590 = vpop.f32.mrf.mxu0
    %v591 = vadd.f32 0.0, %v590
    %v592 = vpop.f32.mrf.mxu0
    %v593 = vadd.f32 0.0, %v592
    %594 = vdwg.mxu0
    %v603 = vunpack.c.l.b16 %v174
    %v604 = vunpack.c.h.b16 %v174
    %v605 = vunpack.c.l.b16 %v175
    %v606 = vunpack.c.h.b16 %v175
    %v607 = vunpack.c.l.b16 %v176
    %v608 = vunpack.c.h.b16 %v176
    %v609 = vunpack.c.l.b16 %v177
    %v610 = vunpack.c.h.b16 %v177
    %v611 = vunpack.c.l.b16 %v178
    %v612 = vunpack.c.h.b16 %v178
    %v613 = vunpack.c.l.b16 %v179
    %v614 = vunpack.c.h.b16 %v179
    %v615 = vunpack.c.l.b16 %v180
    %v616 = vunpack.c.h.b16 %v180
    %v617 = vunpack.c.l.b16 %v181
    %v618 = vunpack.c.h.b16 %v181
    %v619 = vpack.c.b16 %v607, %v603
    %v620 = vpack.c.b16 %v608, %v604
    %v621 = vpack.c.b16 %v609, %v605
    %v622 = vpack.c.b16 %v610, %v606
    %v623 = vpack.c.b16 %v615, %v611
    %v624 = vpack.c.b16 %v616, %v612
    %v625 = vpack.c.b16 %v617, %v613
    %v626 = vpack.c.b16 %v618, %v614
    %v632 = vsel %vm239, %v162, 0
    %v635 = vsel %vm239, %v163, 0
    %v638 = vsel %vm239, %v164, 0
    %v641 = vsel %vm239, %v165, 0
    %v644 = vsel %vm239, %v166, 0
    %v647 = vsel %vm239, %v167, 0
    %v650 = vsel %vm239, %v168, 0
    %v653 = vsel %vm239, %v169, 0
    %v656 = vsel %vm239, %v170, 0
    %v659 = vsel %vm239, %v171, 0
    %v662 = vsel %vm239, %v172, 0
    %v665 = vsel %vm239, %v173, 0
    %v668 = vsel %vm276, %v623, 0
    %v671 = vsel %vm276, %v624, 0
    %v674 = vsel %vm276, %v625, 0
    %v677 = vsel %vm276, %v626, 0
    %679 = vmatprep.subr.bf16.mxu0 0
    %680 = vmatpush1.bf16.msra.mxu0 0
    %681 = vmatprep.subr.bf16.mxu0 0
    %682 = vmatpush1.bf16.msra.mxu0 0
    %683 = vmatprep.subr.bf16.mxu0 0
    %684 = vmatpush1.bf16.msra.mxu0 0
    %685 = vmatprep.subr.bf16.mxu0 0
    %686 = vmatpush1.bf16.msra.mxu0 0
    %687 = vmatprep.subr.bf16.mxu0 0
    %688 = vmatpush1.bf16.msra.mxu0 0
    %689 = vmatprep.subr.bf16.mxu0 0
    %690 = vmatpush1.bf16.msra.mxu0 0
    %691 = vmatprep.subr.bf16.mxu0 %v671
    %692 = vmatpush1.bf16.msra.mxu0 %v668
    %693 = vmatprep.subr.bf16.mxu0 %v620
    %694 = vmatpush1.bf16.msra.mxu0 %v619
    %695 = vmatprep.subr.bf16.mxu0 0
    %696 = vmatpush2.bf16.msra.mxu0 0
    %697 = vmatprep.subr.bf16.mxu0 0
    %698 = vmatpush2.bf16.msra.mxu0 0
    %699 = vmatprep.subr.bf16.mxu0 0
    %700 = vmatpush2.bf16.msra.mxu0 0
    %701 = vmatprep.subr.bf16.mxu0 0
    %702 = vmatpush2.bf16.msra.mxu0 0
    %703 = vmatprep.subr.bf16.mxu0 0
    %704 = vmatpush2.bf16.msra.mxu0 0
    %705 = vmatprep.subr.bf16.mxu0 0
    %706 = vmatpush2.bf16.msra.mxu0 0
    %707 = vmatprep.subr.bf16.mxu0 0
    %708 = vmatpush2.bf16.msra.mxu0 0
    %709 = vmatprep.subr.bf16.mxu0 0
    %710 = vmatpush2.bf16.msra.mxu0 0
    %711 = vmatprep.mubr.bf16.mxu0 0
    %712 = vmatmul.mubr.bf16.gmra.mxu0 %v632
    %v713 = vpop.f32.mrf.mxu0
    %v714 = vadd.f32 %v324, %v713
    %v715 = vpop.f32.mrf.mxu0
    %v716 = vadd.f32 %v326, %v715
    %v717 = vpop.f32.mrf.mxu0
    %v718 = vadd.f32 %v328, %v717
    %v719 = vpop.f32.mrf.mxu0
    %v720 = vadd.f32 %v330, %v719
    %721 = vmatprep.mubr.bf16.mxu0 0
    %722 = vmatmul.mubr.bf16.gmra.mxu0 %v635
    %v723 = vpop.f32.mrf.mxu0
    %v724 = vadd.f32 %v334, %v723
    %v725 = vpop.f32.mrf.mxu0
    %v726 = vadd.f32 %v336, %v725
    %v727 = vpop.f32.mrf.mxu0
    %v728 = vadd.f32 %v338, %v727
    %v729 = vpop.f32.mrf.mxu0
    %v730 = vadd.f32 %v340, %v729
    %731 = vmatprep.mubr.bf16.mxu0 0
    %732 = vmatmul.mubr.bf16.gmra.mxu0 %v638
    %v733 = vpop.f32.mrf.mxu0
    %v734 = vadd.f32 %v344, %v733
    %v735 = vpop.f32.mrf.mxu0
    %v736 = vadd.f32 %v346, %v735
    %v737 = vpop.f32.mrf.mxu0
    %v738 = vadd.f32 %v348, %v737
    %v739 = vpop.f32.mrf.mxu0
    %v740 = vadd.f32 %v350, %v739
    %741 = vmatprep.mubr.bf16.mxu0 0
    %742 = vmatmul.mubr.bf16.gmra.mxu0 %v641
    %v743 = vpop.f32.mrf.mxu0
    %v744 = vadd.f32 %v354, %v743
    %v745 = vpop.f32.mrf.mxu0
    %v746 = vadd.f32 %v356, %v745
    %v747 = vpop.f32.mrf.mxu0
    %v748 = vadd.f32 %v358, %v747
    %v749 = vpop.f32.mrf.mxu0
    %v750 = vadd.f32 %v360, %v749
    %751 = vmatprep.mubr.bf16.mxu0 0
    %752 = vmatmul.mubr.bf16.gmra.mxu0 %v644
    %v753 = vpop.f32.mrf.mxu0
    %v754 = vadd.f32 %v364, %v753
    %v755 = vpop.f32.mrf.mxu0
    %v756 = vadd.f32 %v366, %v755
    %v757 = vpop.f32.mrf.mxu0
    %v758 = vadd.f32 %v368, %v757
    %v759 = vpop.f32.mrf.mxu0
    %v760 = vadd.f32 %v370, %v759
    %761 = vmatprep.mubr.bf16.mxu0 0
    %762 = vmatmul.mubr.bf16.gmra.mxu0 %v647
    %v763 = vpop.f32.mrf.mxu0
    %v764 = vadd.f32 %v374, %v763
    %v765 = vpop.f32.mrf.mxu0
    %v766 = vadd.f32 %v376, %v765
    %v767 = vpop.f32.mrf.mxu0
    %v768 = vadd.f32 %v378, %v767
    %v769 = vpop.f32.mrf.mxu0
    %v770 = vadd.f32 %v380, %v769
    %771 = vmatprep.mubr.bf16.mxu0 0
    %772 = vmatmul.mubr.bf16.gmra.mxu0 %v650
    %v773 = vpop.f32.mrf.mxu0
    %v774 = vadd.f32 %v384, %v773
    %v775 = vpop.f32.mrf.mxu0
    %v776 = vadd.f32 %v386, %v775
    %v777 = vpop.f32.mrf.mxu0
    %v778 = vadd.f32 %v388, %v777
    %v779 = vpop.f32.mrf.mxu0
    %v780 = vadd.f32 %v390, %v779
    %781 = vmatprep.mubr.bf16.mxu0 0
    %782 = vmatmul.mubr.bf16.gmra.mxu0 %v653
    %v783 = vpop.f32.mrf.mxu0
    %v784 = vadd.f32 %v394, %v783
    %v785 = vpop.f32.mrf.mxu0
    %v786 = vadd.f32 %v396, %v785
    %v787 = vpop.f32.mrf.mxu0
    %v788 = vadd.f32 %v398, %v787
    %v789 = vpop.f32.mrf.mxu0
    %v790 = vadd.f32 %v400, %v789
    %791 = vmatprep.mubr.bf16.mxu0 0
    %792 = vmatmul.mubr.bf16.gmra.mxu0 %v656
    %v793 = vpop.f32.mrf.mxu0
    %v794 = vadd.f32 %v404, %v793
    %v795 = vpop.f32.mrf.mxu0
    %v796 = vadd.f32 %v406, %v795
    %v797 = vpop.f32.mrf.mxu0
    %v798 = vadd.f32 %v408, %v797
    %v799 = vpop.f32.mrf.mxu0
    %v800 = vadd.f32 %v410, %v799
    %801 = vmatprep.mubr.bf16.mxu0 0
    %802 = vmatmul.mubr.bf16.gmra.mxu0 %v659
    %v803 = vpop.f32.mrf.mxu0
    %v804 = vadd.f32 %v414, %v803
    %v805 = vpop.f32.mrf.mxu0
    %v806 = vadd.f32 %v416, %v805
    %v807 = vpop.f32.mrf.mxu0
    %v808 = vadd.f32 %v418, %v807
    %v809 = vpop.f32.mrf.mxu0
    %v810 = vadd.f32 %v420, %v809
    %811 = vmatprep.mubr.bf16.mxu0 0
    %812 = vmatmul.mubr.bf16.gmra.mxu0 %v662
    %v813 = vpop.f32.mrf.mxu0
    %v814 = vadd.f32 %v424, %v813
    %v815 = vpop.f32.mrf.mxu0
    %v816 = vadd.f32 %v426, %v815
    %v817 = vpop.f32.mrf.mxu0
    %v818 = vadd.f32 %v428, %v817
    %v819 = vpop.f32.mrf.mxu0
    %v820 = vadd.f32 %v430, %v819
    %821 = vmatprep.mubr.bf16.mxu0 0
    %822 = vmatmul.mubr.bf16.gmra.mxu0 %v665
    %v823 = vpop.f32.mrf.mxu0
    %v824 = vadd.f32 %v434, %v823
    %v825 = vpop.f32.mrf.mxu0
    %v826 = vadd.f32 %v436, %v825
    %v827 = vpop.f32.mrf.mxu0
    %v828 = vadd.f32 %v438, %v827
    %v829 = vpop.f32.mrf.mxu0
    %v830 = vadd.f32 %v440, %v829
    %831 = vdwg.mxu0
    %832 = vmatprep.subr.bf16.mxu0 0
    %833 = vmatpush1.bf16.msra.mxu0 0
    %834 = vmatprep.subr.bf16.mxu0 0
    %835 = vmatpush1.bf16.msra.mxu0 0
    %836 = vmatprep.subr.bf16.mxu0 0
    %837 = vmatpush1.bf16.msra.mxu0 0
    %838 = vmatprep.subr.bf16.mxu0 0
    %839 = vmatpush1.bf16.msra.mxu0 0
    %840 = vmatprep.subr.bf16.mxu0 0
    %841 = vmatpush1.bf16.msra.mxu0 0
    %842 = vmatprep.subr.bf16.mxu0 0
    %843 = vmatpush1.bf16.msra.mxu0 0
    %844 = vmatprep.subr.bf16.mxu0 %v677
    %845 = vmatpush1.bf16.msra.mxu0 %v674
    %846 = vmatprep.subr.bf16.mxu0 %v622
    %847 = vmatpush1.bf16.msra.mxu0 %v621
    %848 = vmatprep.subr.bf16.mxu0 0
    %849 = vmatpush2.bf16.msra.mxu0 0
    %850 = vmatprep.subr.bf16.mxu0 0
    %851 = vmatpush2.bf16.msra.mxu0 0
    %852 = vmatprep.subr.bf16.mxu0 0
    %853 = vmatpush2.bf16.msra.mxu0 0
    %854 = vmatprep.subr.bf16.mxu0 0
    %855 = vmatpush2.bf16.msra.mxu0 0
    %856 = vmatprep.subr.bf16.mxu0 0
    %857 = vmatpush2.bf16.msra.mxu0 0
    %858 = vmatprep.subr.bf16.mxu0 0
    %859 = vmatpush2.bf16.msra.mxu0 0
    %860 = vmatprep.subr.bf16.mxu0 0
    %861 = vmatpush2.bf16.msra.mxu0 0
    %862 = vmatprep.subr.bf16.mxu0 0
    %863 = vmatpush2.bf16.msra.mxu0 0
    %864 = vmatprep.mubr.bf16.mxu0 0
    %865 = vmatmul.mubr.bf16.gmra.mxu0 %v632
    %v866 = vpop.f32.mrf.mxu0
    %v867 = vadd.f32 %v477, %v866
    %v868 = vpop.f32.mrf.mxu0
    %v869 = vadd.f32 %v479, %v868
    %v870 = vpop.f32.mrf.mxu0
    %v871 = vadd.f32 %v481, %v870
    %v872 = vpop.f32.mrf.mxu0
    %v873 = vadd.f32 %v483, %v872
    %874 = vmatprep.mubr.bf16.mxu0 0
    %875 = vmatmul.mubr.bf16.gmra.mxu0 %v635
    %v876 = vpop.f32.mrf.mxu0
    %v877 = vadd.f32 %v487, %v876
    %v878 = vpop.f32.mrf.mxu0
    %v879 = vadd.f32 %v489, %v878
    %v880 = vpop.f32.mrf.mxu0
    %v881 = vadd.f32 %v491, %v880
    %v882 = vpop.f32.mrf.mxu0
    %v883 = vadd.f32 %v493, %v882
    %884 = vmatprep.mubr.bf16.mxu0 0
    %885 = vmatmul.mubr.bf16.gmra.mxu0 %v638
    %v886 = vpop.f32.mrf.mxu0
    %v887 = vadd.f32 %v497, %v886
    %v888 = vpop.f32.mrf.mxu0
    %v889 = vadd.f32 %v499, %v888
    %v890 = vpop.f32.mrf.mxu0
    %v891 = vadd.f32 %v501, %v890
    %v892 = vpop.f32.mrf.mxu0
    %v893 = vadd.f32 %v503, %v892
    %894 = vmatprep.mubr.bf16.mxu0 0
    %895 = vmatmul.mubr.bf16.gmra.mxu0 %v641
    %v896 = vpop.f32.mrf.mxu0
    %v897 = vadd.f32 %v507, %v896
    %v898 = vpop.f32.mrf.mxu0
    %v899 = vadd.f32 %v509, %v898
    %v900 = vpop.f32.mrf.mxu0
    %v901 = vadd.f32 %v511, %v900
    %v902 = vpop.f32.mrf.mxu0
    %v903 = vadd.f32 %v513, %v902
    %904 = vmatprep.mubr.bf16.mxu0 0
    %905 = vmatmul.mubr.bf16.gmra.mxu0 %v644
    %v906 = vpop.f32.mrf.mxu0
    %v907 = vadd.f32 %v517, %v906
    %v908 = vpop.f32.mrf.mxu0
    %v909 = vadd.f32 %v519, %v908
    %v910 = vpop.f32.mrf.mxu0
    %v911 = vadd.f32 %v521, %v910
    %v912 = vpop.f32.mrf.mxu0
    %v913 = vadd.f32 %v523, %v912
    %914 = vmatprep.mubr.bf16.mxu0 0
    %915 = vmatmul.mubr.bf16.gmra.mxu0 %v647
    %v916 = vpop.f32.mrf.mxu0
    %v917 = vadd.f32 %v527, %v916
    %v918 = vpop.f32.mrf.mxu0
    %v919 = vadd.f32 %v529, %v918
    %v920 = vpop.f32.mrf.mxu0
    %v921 = vadd.f32 %v531, %v920
    %v922 = vpop.f32.mrf.mxu0
    %v923 = vadd.f32 %v533, %v922
    %924 = vmatprep.mubr.bf16.mxu0 0
    %925 = vmatmul.mubr.bf16.gmra.mxu0 %v650
    %v926 = vpop.f32.mrf.mxu0
    %v927 = vadd.f32 %v537, %v926
    %v928 = vpop.f32.mrf.mxu0
    %v929 = vadd.f32 %v539, %v928
    %v930 = vpop.f32.mrf.mxu0
    %v931 = vadd.f32 %v541, %v930
    %v932 = vpop.f32.mrf.mxu0
    %v933 = vadd.f32 %v543, %v932
    %934 = vmatprep.mubr.bf16.mxu0 0
    %935 = vmatmul.mubr.bf16.gmra.mxu0 %v653
    %v936 = vpop.f32.mrf.mxu0
    %v937 = vadd.f32 %v547, %v936
    %v938 = vpop.f32.mrf.mxu0
    %v939 = vadd.f32 %v549, %v938
    %v940 = vpop.f32.mrf.mxu0
    %v941 = vadd.f32 %v551, %v940
    %v942 = vpop.f32.mrf.mxu0
    %v943 = vadd.f32 %v553, %v942
    %944 = vmatprep.mubr.bf16.mxu0 0
    %945 = vmatmul.mubr.bf16.gmra.mxu0 %v656
    %v946 = vpop.f32.mrf.mxu0
    %v947 = vadd.f32 %v557, %v946
    %v948 = vpop.f32.mrf.mxu0
    %v949 = vadd.f32 %v559, %v948
    %v950 = vpop.f32.mrf.mxu0
    %v951 = vadd.f32 %v561, %v950
    %v952 = vpop.f32.mrf.mxu0
    %v953 = vadd.f32 %v563, %v952
    %954 = vmatprep.mubr.bf16.mxu0 0
    %955 = vmatmul.mubr.bf16.gmra.mxu0 %v659
    %v956 = vpop.f32.mrf.mxu0
    %v957 = vadd.f32 %v567, %v956
    %v958 = vpop.f32.mrf.mxu0
    %v959 = vadd.f32 %v569, %v958
    %v960 = vpop.f32.mrf.mxu0
    %v961 = vadd.f32 %v571, %v960
    %v962 = vpop.f32.mrf.mxu0
    %v963 = vadd.f32 %v573, %v962
    %964 = vmatprep.mubr.bf16.mxu0 0
    %965 = vmatmul.mubr.bf16.gmra.mxu0 %v662
    %v966 = vpop.f32.mrf.mxu0
    %v967 = vadd.f32 %v577, %v966
    %v968 = vpop.f32.mrf.mxu0
    %v969 = vadd.f32 %v579, %v968
    %v970 = vpop.f32.mrf.mxu0
    %v971 = vadd.f32 %v581, %v970
    %v972 = vpop.f32.mrf.mxu0
    %v973 = vadd.f32 %v583, %v972
    %974 = vmatprep.mubr.bf16.mxu0 0
    %975 = vmatmul.mubr.bf16.gmra.mxu0 %v665
    %v976 = vpop.f32.mrf.mxu0
    %v977 = vadd.f32 %v587, %v976
    %v978 = vpop.f32.mrf.mxu0
    %v979 = vadd.f32 %v589, %v978
    %v980 = vpop.f32.mrf.mxu0
    %v981 = vadd.f32 %v591, %v980
    %v982 = vpop.f32.mrf.mxu0
    %v983 = vadd.f32 %v593, %v982
    %984 = vdwg.mxu0
    %v985 = vpack.c.bf16 %v159, %v158
    %s986 = scalar_lea.vmem [#allocation2], 128
    %v987 = vld [vmem:[%s986] sm:$0xff]
    %v988 = vld [vmem:[%s986 + $0x8] sm:$0xff]
    %v989 = vld [vmem:[%s986 + $0x10] sm:$0xff]
    %v990 = vld [vmem:[%s986 + $0x18] sm:$0xff]
    %v991 = vld [vmem:[%s986 + $0x20] sm:$0xff]
    %v992 = vld [vmem:[%s986 + $0x28] sm:$0xff]
    %v993 = vld [vmem:[%s986 + $0x30] sm:$0x33]
    %v994 = vld [vmem:[%s986 + $0x38] sm:$0x33]
    %v1003 = vunpack.c.l.b16 %v987
    %v1004 = vunpack.c.h.b16 %v987
    %v1005 = vunpack.c.l.b16 %v988
    %v1006 = vunpack.c.h.b16 %v988
    %v1007 = vunpack.c.l.b16 %v989
    %v1008 = vunpack.c.h.b16 %v989
    %v1009 = vunpack.c.l.b16 %v990
    %v1010 = vunpack.c.h.b16 %v990
    %v1011 = vunpack.c.l.b16 %v991
    %v1012 = vunpack.c.h.b16 %v991
    %v1013 = vunpack.c.l.b16 %v992
    %v1014 = vunpack.c.h.b16 %v992
    %v1015 = vunpack.c.l.b16 %v993
    %v1016 = vunpack.c.h.b16 %v993
    %v1017 = vunpack.c.l.b16 %v994
    %v1018 = vunpack.c.h.b16 %v994
    %v1019 = vpack.c.b16 %v1007, %v1003
    %v1020 = vpack.c.b16 %v1008, %v1004
    %v1021 = vpack.c.b16 %v1009, %v1005
    %v1022 = vpack.c.b16 %v1010, %v1006
    %v1023 = vpack.c.b16 %v1015, %v1011
    %v1024 = vpack.c.b16 %v1016, %v1012
    %v1025 = vpack.c.b16 %v1017, %v1013
    %v1026 = vpack.c.b16 %v1018, %v1014
    %v1032 = vsel %vm239, %v985, 0
    %v1035 = vsel %vm276, %v1023, 0
    %v1038 = vsel %vm276, %v1024, 0
    %v1041 = vsel %vm276, %v1025, 0
    %v1044 = vsel %vm276, %v1026, 0
    %1046 = vmatprep.subr.bf16.mxu0 0
    %1047 = vmatpush1.bf16.msra.mxu0 0
    %1048 = vmatprep.subr.bf16.mxu0 0
    %1049 = vmatpush1.bf16.msra.mxu0 0
    %1050 = vmatprep.subr.bf16.mxu0 0
    %1051 = vmatpush1.bf16.msra.mxu0 0
    %1052 = vmatprep.subr.bf16.mxu0 0
    %1053 = vmatpush1.bf16.msra.mxu0 0
    %1054 = vmatprep.subr.bf16.mxu0 0
    %1055 = vmatpush1.bf16.msra.mxu0 0
    %1056 = vmatprep.subr.bf16.mxu0 0
    %1057 = vmatpush1.bf16.msra.mxu0 0
    %1058 = vmatprep.subr.bf16.mxu0 %v1038
    %1059 = vmatpush1.bf16.msra.mxu0 %v1035
    %1060 = vmatprep.subr.bf16.mxu0 %v1020
    %1061 = vmatpush1.bf16.msra.mxu0 %v1019
    %1062 = vmatprep.subr.bf16.mxu0 0
    %1063 = vmatpush2.bf16.msra.mxu0 0
    %1064 = vmatprep.subr.bf16.mxu0 0
    %1065 = vmatpush2.bf16.msra.mxu0 0
    %1066 = vmatprep.subr.bf16.mxu0 0
    %1067 = vmatpush2.bf16.msra.mxu0 0
    %1068 = vmatprep.subr.bf16.mxu0 0
    %1069 = vmatpush2.bf16.msra.mxu0 0
    %1070 = vmatprep.subr.bf16.mxu0 0
    %1071 = vmatpush2.bf16.msra.mxu0 0
    %1072 = vmatprep.subr.bf16.mxu0 0
    %1073 = vmatpush2.bf16.msra.mxu0 0
    %1074 = vmatprep.subr.bf16.mxu0 0
    %1075 = vmatpush2.bf16.msra.mxu0 0
    %1076 = vmatprep.subr.bf16.mxu0 0
    %1077 = vmatpush2.bf16.msra.mxu0 0
    %1078 = vmatprep.mubr.bf16.mxu0 0
    %1079 = vmatmul.mubr.bf16.gmra.mxu0 %v635
    %v1080 = vpop.f32.mrf.mxu0
    %v1081 = vadd.f32 0.0, %v1080
    %v1082 = vpop.f32.mrf.mxu0
    %v1083 = vadd.f32 0.0, %v1082
    %v1084 = vpop.f32.mrf.mxu0
    %v1085 = vadd.f32 0.0, %v1084
    %v1086 = vpop.f32.mrf.mxu0
    %v1087 = vadd.f32 0.0, %v1086
    %1088 = vmatprep.mubr.bf16.mxu0 0
    %1089 = vmatmul.mubr.bf16.gmra.mxu0 %v638
    %v1090 = vpop.f32.mrf.mxu0
    %v1091 = vadd.f32 0.0, %v1090
    %v1092 = vpop.f32.mrf.mxu0
    %v1093 = vadd.f32 0.0, %v1092
    %v1094 = vpop.f32.mrf.mxu0
    %v1095 = vadd.f32 0.0, %v1094
    %v1096 = vpop.f32.mrf.mxu0
    %v1097 = vadd.f32 0.0, %v1096
    %1098 = vmatprep.mubr.bf16.mxu0 0
    %1099 = vmatmul.mubr.bf16.gmra.mxu0 %v641
    %v1100 = vpop.f32.mrf.mxu0
    %v1101 = vadd.f32 0.0, %v1100
    %v1102 = vpop.f32.mrf.mxu0
    %v1103 = vadd.f32 0.0, %v1102
    %v1104 = vpop.f32.mrf.mxu0
    %v1105 = vadd.f32 0.0, %v1104
    %v1106 = vpop.f32.mrf.mxu0
    %v1107 = vadd.f32 0.0, %v1106
    %1108 = vmatprep.mubr.bf16.mxu0 0
    %1109 = vmatmul.mubr.bf16.gmra.mxu0 %v644
    %v1110 = vpop.f32.mrf.mxu0
    %v1111 = vadd.f32 0.0, %v1110
    %v1112 = vpop.f32.mrf.mxu0
    %v1113 = vadd.f32 0.0, %v1112
    %v1114 = vpop.f32.mrf.mxu0
    %v1115 = vadd.f32 0.0, %v1114
    %v1116 = vpop.f32.mrf.mxu0
    %v1117 = vadd.f32 0.0, %v1116
    %1118 = vmatprep.mubr.bf16.mxu0 0
    %1119 = vmatmul.mubr.bf16.gmra.mxu0 %v647
    %v1120 = vpop.f32.mrf.mxu0
    %v1121 = vadd.f32 0.0, %v1120
    %v1122 = vpop.f32.mrf.mxu0
    %v1123 = vadd.f32 0.0, %v1122
    %v1124 = vpop.f32.mrf.mxu0
    %v1125 = vadd.f32 0.0, %v1124
    %v1126 = vpop.f32.mrf.mxu0
    %v1127 = vadd.f32 0.0, %v1126
    %1128 = vmatprep.mubr.bf16.mxu0 0
    %1129 = vmatmul.mubr.bf16.gmra.mxu0 %v650
    %v1130 = vpop.f32.mrf.mxu0
    %v1131 = vadd.f32 0.0, %v1130
    %v1132 = vpop.f32.mrf.mxu0
    %v1133 = vadd.f32 0.0, %v1132
    %v1134 = vpop.f32.mrf.mxu0
    %v1135 = vadd.f32 0.0, %v1134
    %v1136 = vpop.f32.mrf.mxu0
    %v1137 = vadd.f32 0.0, %v1136
    %1138 = vmatprep.mubr.bf16.mxu0 0
    %1139 = vmatmul.mubr.bf16.gmra.mxu0 %v653
    %v1140 = vpop.f32.mrf.mxu0
    %v1141 = vadd.f32 0.0, %v1140
    %v1142 = vpop.f32.mrf.mxu0
    %v1143 = vadd.f32 0.0, %v1142
    %v1144 = vpop.f32.mrf.mxu0
    %v1145 = vadd.f32 0.0, %v1144
    %v1146 = vpop.f32.mrf.mxu0
    %v1147 = vadd.f32 0.0, %v1146
    %1148 = vmatprep.mubr.bf16.mxu0 0
    %1149 = vmatmul.mubr.bf16.gmra.mxu0 %v656
    %v1150 = vpop.f32.mrf.mxu0
    %v1151 = vadd.f32 0.0, %v1150
    %v1152 = vpop.f32.mrf.mxu0
    %v1153 = vadd.f32 0.0, %v1152
    %v1154 = vpop.f32.mrf.mxu0
    %v1155 = vadd.f32 0.0, %v1154
    %v1156 = vpop.f32.mrf.mxu0
    %v1157 = vadd.f32 0.0, %v1156
    %1158 = vmatprep.mubr.bf16.mxu0 0
    %1159 = vmatmul.mubr.bf16.gmra.mxu0 %v659
    %v1160 = vpop.f32.mrf.mxu0
    %v1161 = vadd.f32 0.0, %v1160
    %v1162 = vpop.f32.mrf.mxu0
    %v1163 = vadd.f32 0.0, %v1162
    %v1164 = vpop.f32.mrf.mxu0
    %v1165 = vadd.f32 0.0, %v1164
    %v1166 = vpop.f32.mrf.mxu0
    %v1167 = vadd.f32 0.0, %v1166
    %1168 = vmatprep.mubr.bf16.mxu0 0
    %1169 = vmatmul.mubr.bf16.gmra.mxu0 %v662
    %v1170 = vpop.f32.mrf.mxu0
    %v1171 = vadd.f32 0.0, %v1170
    %v1172 = vpop.f32.mrf.mxu0
    %v1173 = vadd.f32 0.0, %v1172
    %v1174 = vpop.f32.mrf.mxu0
    %v1175 = vadd.f32 0.0, %v1174
    %v1176 = vpop.f32.mrf.mxu0
    %v1177 = vadd.f32 0.0, %v1176
    %1178 = vmatprep.mubr.bf16.mxu0 0
    %1179 = vmatmul.mubr.bf16.gmra.mxu0 %v665
    %v1180 = vpop.f32.mrf.mxu0
    %v1181 = vadd.f32 0.0, %v1180
    %v1182 = vpop.f32.mrf.mxu0
    %v1183 = vadd.f32 0.0, %v1182
    %v1184 = vpop.f32.mrf.mxu0
    %v1185 = vadd.f32 0.0, %v1184
    %v1186 = vpop.f32.mrf.mxu0
    %v1187 = vadd.f32 0.0, %v1186
    %1188 = vmatprep.mubr.bf16.mxu0 0
    %1189 = vmatmul.mubr.bf16.gmra.mxu0 %v1032
    %v1190 = vpop.f32.mrf.mxu0
    %v1191 = vadd.f32 0.0, %v1190
    %v1192 = vpop.f32.mrf.mxu0
    %v1193 = vadd.f32 0.0, %v1192
    %v1194 = vpop.f32.mrf.mxu0
    %v1195 = vadd.f32 0.0, %v1194
    %v1196 = vpop.f32.mrf.mxu0
    %v1197 = vadd.f32 0.0, %v1196
    %1198 = vdwg.mxu0
    %1199 = vmatprep.subr.bf16.mxu0 0
    %1200 = vmatpush1.bf16.msra.mxu0 0
    %1201 = vmatprep.subr.bf16.mxu0 0
    %1202 = vmatpush1.bf16.msra.mxu0 0
    %1203 = vmatprep.subr.bf16.mxu0 0
    %1204 = vmatpush1.bf16.msra.mxu0 0
    %1205 = vmatprep.subr.bf16.mxu0 0
    %1206 = vmatpush1.bf16.msra.mxu0 0
    %1207 = vmatprep.subr.bf16.mxu0 0
    %1208 = vmatpush1.bf16.msra.mxu0 0
    %1209 = vmatprep.subr.bf16.mxu0 0
    %1210 = vmatpush1.bf16.msra.mxu0 0
    %1211 = vmatprep.subr.bf16.mxu0 %v1044
    %1212 = vmatpush1.bf16.msra.mxu0 %v1041
    %1213 = vmatprep.subr.bf16.mxu0 %v1022
    %1214 = vmatpush1.bf16.msra.mxu0 %v1021
    %1215 = vmatprep.subr.bf16.mxu0 0
    %1216 = vmatpush2.bf16.msra.mxu0 0
    %1217 = vmatprep.subr.bf16.mxu0 0
    %1218 = vmatpush2.bf16.msra.mxu0 0
    %1219 = vmatprep.subr.bf16.mxu0 0
    %1220 = vmatpush2.bf16.msra.mxu0 0
    %1221 = vmatprep.subr.bf16.mxu0 0
    %1222 = vmatpush2.bf16.msra.mxu0 0
    %1223 = vmatprep.subr.bf16.mxu0 0
    %1224 = vmatpush2.bf16.msra.mxu0 0
    %1225 = vmatprep.subr.bf16.mxu0 0
    %1226 = vmatpush2.bf16.msra.mxu0 0
    %1227 = vmatprep.subr.bf16.mxu0 0
    %1228 = vmatpush2.bf16.msra.mxu0 0
    %1229 = vmatprep.subr.bf16.mxu0 0
    %1230 = vmatpush2.bf16.msra.mxu0 0
    %1231 = vmatprep.mubr.bf16.mxu0 0
    %1232 = vmatmul.mubr.bf16.gmra.mxu0 %v635
    %v1233 = vpop.f32.mrf.mxu0
    %v1234 = vadd.f32 0.0, %v1233
    %v1235 = vpop.f32.mrf.mxu0
    %v1236 = vadd.f32 0.0, %v1235
    %v1237 = vpop.f32.mrf.mxu0
    %v1238 = vadd.f32 0.0, %v1237
    %v1239 = vpop.f32.mrf.mxu0
    %v1240 = vadd.f32 0.0, %v1239
    %1241 = vmatprep.mubr.bf16.mxu0 0
    %1242 = vmatmul.mubr.bf16.gmra.mxu0 %v638
    %v1243 = vpop.f32.mrf.mxu0
    %v1244 = vadd.f32 0.0, %v1243
    %v1245 = vpop.f32.mrf.mxu0
    %v1246 = vadd.f32 0.0, %v1245
    %v1247 = vpop.f32.mrf.mxu0
    %v1248 = vadd.f32 0.0, %v1247
    %v1249 = vpop.f32.mrf.mxu0
    %v1250 = vadd.f32 0.0, %v1249
    %1251 = vmatprep.mubr.bf16.mxu0 0
    %1252 = vmatmul.mubr.bf16.gmra.mxu0 %v641
    %v1253 = vpop.f32.mrf.mxu0
    %v1254 = vadd.f32 0.0, %v1253
    %v1255 = vpop.f32.mrf.mxu0
    %v1256 = vadd.f32 0.0, %v1255
    %v1257 = vpop.f32.mrf.mxu0
    %v1258 = vadd.f32 0.0, %v1257
    %v1259 = vpop.f32.mrf.mxu0
    %v1260 = vadd.f32 0.0, %v1259
    %1261 = vmatprep.mubr.bf16.mxu0 0
    %1262 = vmatmul.mubr.bf16.gmra.mxu0 %v644
    %v1263 = vpop.f32.mrf.mxu0
    %v1264 = vadd.f32 0.0, %v1263
    %v1265 = vpop.f32.mrf.mxu0
    %v1266 = vadd.f32 0.0, %v1265
    %v1267 = vpop.f32.mrf.mxu0
    %v1268 = vadd.f32 0.0, %v1267
    %v1269 = vpop.f32.mrf.mxu0
    %v1270 = vadd.f32 0.0, %v1269
    %1271 = vmatprep.mubr.bf16.mxu0 0
    %1272 = vmatmul.mubr.bf16.gmra.mxu0 %v647
    %v1273 = vpop.f32.mrf.mxu0
    %v1274 = vadd.f32 0.0, %v1273
    %v1275 = vpop.f32.mrf.mxu0
    %v1276 = vadd.f32 0.0, %v1275
    %v1277 = vpop.f32.mrf.mxu0
    %v1278 = vadd.f32 0.0, %v1277
    %v1279 = vpop.f32.mrf.mxu0
    %v1280 = vadd.f32 0.0, %v1279
    %1281 = vmatprep.mubr.bf16.mxu0 0
    %1282 = vmatmul.mubr.bf16.gmra.mxu0 %v650
    %v1283 = vpop.f32.mrf.mxu0
    %v1284 = vadd.f32 0.0, %v1283
    %v1285 = vpop.f32.mrf.mxu0
    %v1286 = vadd.f32 0.0, %v1285
    %v1287 = vpop.f32.mrf.mxu0
    %v1288 = vadd.f32 0.0, %v1287
    %v1289 = vpop.f32.mrf.mxu0
    %v1290 = vadd.f32 0.0, %v1289
    %1291 = vmatprep.mubr.bf16.mxu0 0
    %1292 = vmatmul.mubr.bf16.gmra.mxu0 %v653
    %v1293 = vpop.f32.mrf.mxu0
    %v1294 = vadd.f32 0.0, %v1293
    %v1295 = vpop.f32.mrf.mxu0
    %v1296 = vadd.f32 0.0, %v1295
    %v1297 = vpop.f32.mrf.mxu0
    %v1298 = vadd.f32 0.0, %v1297
    %v1299 = vpop.f32.mrf.mxu0
    %v1300 = vadd.f32 0.0, %v1299
    %1301 = vmatprep.mubr.bf16.mxu0 0
    %1302 = vmatmul.mubr.bf16.gmra.mxu0 %v656
    %v1303 = vpop.f32.mrf.mxu0
    %v1304 = vadd.f32 0.0, %v1303
    %v1305 = vpop.f32.mrf.mxu0
    %v1306 = vadd.f32 0.0, %v1305
    %v1307 = vpop.f32.mrf.mxu0
    %v1308 = vadd.f32 0.0, %v1307
    %v1309 = vpop.f32.mrf.mxu0
    %v1310 = vadd.f32 0.0, %v1309
    %1311 = vmatprep.mubr.bf16.mxu0 0
    %1312 = vmatmul.mubr.bf16.gmra.mxu0 %v659
    %v1313 = vpop.f32.mrf.mxu0
    %v1314 = vadd.f32 0.0, %v1313
    %v1315 = vpop.f32.mrf.mxu0
    %v1316 = vadd.f32 0.0, %v1315
    %v1317 = vpop.f32.mrf.mxu0
    %v1318 = vadd.f32 0.0, %v1317
    %v1319 = vpop.f32.mrf.mxu0
    %v1320 = vadd.f32 0.0, %v1319
    %1321 = vmatprep.mubr.bf16.mxu0 0
    %1322 = vmatmul.mubr.bf16.gmra.mxu0 %v662
    %v1323 = vpop.f32.mrf.mxu0
    %v1324 = vadd.f32 0.0, %v1323
    %v1325 = vpop.f32.mrf.mxu0
    %v1326 = vadd.f32 0.0, %v1325
    %v1327 = vpop.f32.mrf.mxu0
    %v1328 = vadd.f32 0.0, %v1327
    %v1329 = vpop.f32.mrf.mxu0
    %v1330 = vadd.f32 0.0, %v1329
    %1331 = vmatprep.mubr.bf16.mxu0 0
    %1332 = vmatmul.mubr.bf16.gmra.mxu0 %v665
    %v1333 = vpop.f32.mrf.mxu0
    %v1334 = vadd.f32 0.0, %v1333
    %v1335 = vpop.f32.mrf.mxu0
    %v1336 = vadd.f32 0.0, %v1335
    %v1337 = vpop.f32.mrf.mxu0
    %v1338 = vadd.f32 0.0, %v1337
    %v1339 = vpop.f32.mrf.mxu0
    %v1340 = vadd.f32 0.0, %v1339
    %1341 = vmatprep.mubr.bf16.mxu0 0
    %1342 = vmatmul.mubr.bf16.gmra.mxu0 %v1032
    %v1343 = vpop.f32.mrf.mxu0
    %v1344 = vadd.f32 0.0, %v1343
    %v1345 = vpop.f32.mrf.mxu0
    %v1346 = vadd.f32 0.0, %v1345
    %v1347 = vpop.f32.mrf.mxu0
    %v1348 = vadd.f32 0.0, %v1347
    %v1349 = vpop.f32.mrf.mxu0
    %v1350 = vadd.f32 0.0, %v1349
    %1351 = vdwg.mxu0
    %v1352 = vadd.f32 %v714, %v1081
    %v1353 = vadd.f32 %v716, %v1083
    %v1354 = vadd.f32 %v867, %v1234
    %v1355 = vadd.f32 %v869, %v1236
    %v1356 = vadd.f32 %v718, %v1085
    %v1357 = vadd.f32 %v720, %v1087
    %v1358 = vadd.f32 %v871, %v1238
    %v1359 = vadd.f32 %v873, %v1240
    %v1360 = vadd.f32 %v724, %v1091
    %v1361 = vadd.f32 %v726, %v1093
    %v1362 = vadd.f32 %v877, %v1244
    %v1363 = vadd.f32 %v879, %v1246
    %v1364 = vadd.f32 %v728, %v1095
    %v1365 = vadd.f32 %v730, %v1097
    %v1366 = vadd.f32 %v881, %v1248
    %v1367 = vadd.f32 %v883, %v1250
    %v1368 = vadd.f32 %v734, %v1101
    %v1369 = vadd.f32 %v736, %v1103
    %v1370 = vadd.f32 %v887, %v1254
    %v1371 = vadd.f32 %v889, %v1256
    %v1372 = vadd.f32 %v738, %v1105
    %v1373 = vadd.f32 %v740, %v1107
    %v1374 = vadd.f32 %v891, %v1258
    %v1375 = vadd.f32 %v893, %v1260
    %v1376 = vadd.f32 %v744, %v1111
    %v1377 = vadd.f32 %v746, %v1113
    %v1378 = vadd.f32 %v897, %v1264
    %v1379 = vadd.f32 %v899, %v1266
    %v1380 = vadd.f32 %v748, %v1115
    %v1381 = vadd.f32 %v750, %v1117
    %v1382 = vadd.f32 %v901, %v1268
    %v1383 = vadd.f32 %v903, %v1270
    %v1384 = vadd.f32 %v754, %v1121
    %v1385 = vadd.f32 %v756, %v1123
    %v1386 = vadd.f32 %v907, %v1274
    %v1387 = vadd.f32 %v909, %v1276
    %v1388 = vadd.f32 %v758, %v1125
    %v1389 = vadd.f32 %v760, %v1127
    %v1390 = vadd.f32 %v911, %v1278
    %v1391 = vadd.f32 %v913, %v1280
    %v1392 = vadd.f32 %v764, %v1131
    %v1393 = vadd.f32 %v766, %v1133
    %v1394 = vadd.f32 %v917, %v1284
    %v1395 = vadd.f32 %v919, %v1286
    %v1396 = vadd.f32 %v768, %v1135
    %v1397 = vadd.f32 %v770, %v1137
    %v1398 = vadd.f32 %v921, %v1288
    %v1399 = vadd.f32 %v923, %v1290
    %v1400 = vadd.f32 %v774, %v1141
    %v1401 = vadd.f32 %v776, %v1143
    %v1402 = vadd.f32 %v927, %v1294
    %v1403 = vadd.f32 %v929, %v1296
    %v1404 = vadd.f32 %v778, %v1145
    %v1405 = vadd.f32 %v780, %v1147
    %v1406 = vadd.f32 %v931, %v1298
    %v1407 = vadd.f32 %v933, %v1300
    %v1408 = vadd.f32 %v784, %v1151
    %v1409 = vadd.f32 %v786, %v1153
    %v1410 = vadd.f32 %v937, %v1304
    %v1411 = vadd.f32 %v939, %v1306
    %v1412 = vadd.f32 %v788, %v1155
    %v1413 = vadd.f32 %v790, %v1157
    %v1414 = vadd.f32 %v941, %v1308
    %v1415 = vadd.f32 %v943, %v1310
    %v1416 = vadd.f32 %v794, %v1161
    %v1417 = vadd.f32 %v796, %v1163
    %v1418 = vadd.f32 %v947, %v1314
    %v1419 = vadd.f32 %v949, %v1316
    %v1420 = vadd.f32 %v798, %v1165
    %v1421 = vadd.f32 %v800, %v1167
    %v1422 = vadd.f32 %v951, %v1318
    %v1423 = vadd.f32 %v953, %v1320
    %v1424 = vadd.f32 %v804, %v1171
    %v1425 = vadd.f32 %v806, %v1173
    %v1426 = vadd.f32 %v957, %v1324
    %v1427 = vadd.f32 %v959, %v1326
    %v1428 = vadd.f32 %v808, %v1175
    %v1429 = vadd.f32 %v810, %v1177
    %v1430 = vadd.f32 %v961, %v1328
    %v1431 = vadd.f32 %v963, %v1330
    %v1432 = vadd.f32 %v814, %v1181
    %v1433 = vadd.f32 %v816, %v1183
    %v1434 = vadd.f32 %v967, %v1334
    %v1435 = vadd.f32 %v969, %v1336
    %v1436 = vadd.f32 %v818, %v1185
    %v1437 = vadd.f32 %v820, %v1187
    %v1438 = vadd.f32 %v971, %v1338
    %v1439 = vadd.f32 %v973, %v1340
    %v1440 = vadd.f32 %v824, %v1191
    %v1441 = vadd.f32 %v826, %v1193
    %v1442 = vadd.f32 %v977, %v1344
    %v1443 = vadd.f32 %v979, %v1346
    %v1444 = vadd.f32 %v828, %v1195
    %v1445 = vadd.f32 %v830, %v1197
    %v1446 = vadd.f32 %v981, %v1348
    %v1447 = vadd.f32 %v983, %v1350
    %v1448 = vpack.c.bf16 %v160, %v159
    %s1449 = scalar_lea.vmem [#allocation2], 192
    %v1450 = vld [vmem:[%s1449] sm:$0xff]
    %v1451 = vld [vmem:[%s1449 + $0x8] sm:$0xff]
    %v1452 = vld [vmem:[%s1449 + $0x10] sm:$0xff]
    %v1453 = vld [vmem:[%s1449 + $0x18] sm:$0xff]
    %v1454 = vld [vmem:[%s1449 + $0x20] sm:$0xff]
    %v1455 = vld [vmem:[%s1449 + $0x28] sm:$0xff]
    %v1456 = vld [vmem:[%s1449 + $0x30] sm:$0x33]
    %v1457 = vld [vmem:[%s1449 + $0x38] sm:$0x33]
    %v1466 = vunpack.c.l.b16 %v1450
    %v1467 = vunpack.c.h.b16 %v1450
    %v1468 = vunpack.c.l.b16 %v1451
    %v1469 = vunpack.c.h.b16 %v1451
    %v1470 = vunpack.c.l.b16 %v1452
    %v1471 = vunpack.c.h.b16 %v1452
    %v1472 = vunpack.c.l.b16 %v1453
    %v1473 = vunpack.c.h.b16 %v1453
    %v1474 = vunpack.c.l.b16 %v1454
    %v1475 = vunpack.c.h.b16 %v1454
    %v1476 = vunpack.c.l.b16 %v1455
    %v1477 = vunpack.c.h.b16 %v1455
    %v1478 = vunpack.c.l.b16 %v1456
    %v1479 = vunpack.c.h.b16 %v1456
    %v1480 = vunpack.c.l.b16 %v1457
    %v1481 = vunpack.c.h.b16 %v1457
    %v1482 = vpack.c.b16 %v1470, %v1466
    %v1483 = vpack.c.b16 %v1471, %v1467
    %v1484 = vpack.c.b16 %v1472, %v1468
    %v1485 = vpack.c.b16 %v1473, %v1469
    %v1486 = vpack.c.b16 %v1478, %v1474
    %v1487 = vpack.c.b16 %v1479, %v1475
    %v1488 = vpack.c.b16 %v1480, %v1476
    %v1489 = vpack.c.b16 %v1481, %v1477
    %v1495 = vsel %vm239, %v1448, 0
    %v1498 = vsel %vm276, %v1486, 0
    %v1501 = vsel %vm276, %v1487, 0
    %v1504 = vsel %vm276, %v1488, 0
    %v1507 = vsel %vm276, %v1489, 0
    %1509 = vmatprep.subr.bf16.mxu0 0
    %1510 = vmatpush1.bf16.msra.mxu0 0
    %1511 = vmatprep.subr.bf16.mxu0 0
    %1512 = vmatpush1.bf16.msra.mxu0 0
    %1513 = vmatprep.subr.bf16.mxu0 0
    %1514 = vmatpush1.bf16.msra.mxu0 0
    %1515 = vmatprep.subr.bf16.mxu0 0
    %1516 = vmatpush1.bf16.msra.mxu0 0
    %1517 = vmatprep.subr.bf16.mxu0 0
    %1518 = vmatpush1.bf16.msra.mxu0 0
    %1519 = vmatprep.subr.bf16.mxu0 0
    %1520 = vmatpush1.bf16.msra.mxu0 0
    %1521 = vmatprep.subr.bf16.mxu0 %v1501
    %1522 = vmatpush1.bf16.msra.mxu0 %v1498
    %1523 = vmatprep.subr.bf16.mxu0 %v1483
    %1524 = vmatpush1.bf16.msra.mxu0 %v1482
    %1525 = vmatprep.subr.bf16.mxu0 0
    %1526 = vmatpush2.bf16.msra.mxu0 0
    %1527 = vmatprep.subr.bf16.mxu0 0
    %1528 = vmatpush2.bf16.msra.mxu0 0
    %1529 = vmatprep.subr.bf16.mxu0 0
    %1530 = vmatpush2.bf16.msra.mxu0 0
    %1531 = vmatprep.subr.bf16.mxu0 0
    %1532 = vmatpush2.bf16.msra.mxu0 0
    %1533 = vmatprep.subr.bf16.mxu0 0
    %1534 = vmatpush2.bf16.msra.mxu0 0
    %1535 = vmatprep.subr.bf16.mxu0 0
    %1536 = vmatpush2.bf16.msra.mxu0 0
    %1537 = vmatprep.subr.bf16.mxu0 0
    %1538 = vmatpush2.bf16.msra.mxu0 0
    %1539 = vmatprep.subr.bf16.mxu0 0
    %1540 = vmatpush2.bf16.msra.mxu0 0
    %1541 = vmatprep.mubr.bf16.mxu0 0
    %1542 = vmatmul.mubr.bf16.gmra.mxu0 %v244
    %v1543 = vpop.f32.mrf.mxu0
    %v1544 = vadd.f32 0.0, %v1543
    %v1545 = vpop.f32.mrf.mxu0
    %v1546 = vadd.f32 0.0, %v1545
    %v1547 = vpop.f32.mrf.mxu0
    %v1548 = vadd.f32 0.0, %v1547
    %v1549 = vpop.f32.mrf.mxu0
    %v1550 = vadd.f32 0.0, %v1549
    %1551 = vmatprep.mubr.bf16.mxu0 0
    %1552 = vmatmul.mubr.bf16.gmra.mxu0 %v247
    %v1553 = vpop.f32.mrf.mxu0
    %v1554 = vadd.f32 0.0, %v1553
    %v1555 = vpop.f32.mrf.mxu0
    %v1556 = vadd.f32 0.0, %v1555
    %v1557 = vpop.f32.mrf.mxu0
    %v1558 = vadd.f32 0.0, %v1557
    %v1559 = vpop.f32.mrf.mxu0
    %v1560 = vadd.f32 0.0, %v1559
    %1561 = vmatprep.mubr.bf16.mxu0 0
    %1562 = vmatmul.mubr.bf16.gmra.mxu0 %v250
    %v1563 = vpop.f32.mrf.mxu0
    %v1564 = vadd.f32 0.0, %v1563
    %v1565 = vpop.f32.mrf.mxu0
    %v1566 = vadd.f32 0.0, %v1565
    %v1567 = vpop.f32.mrf.mxu0
    %v1568 = vadd.f32 0.0, %v1567
    %v1569 = vpop.f32.mrf.mxu0
    %v1570 = vadd.f32 0.0, %v1569
    %1571 = vmatprep.mubr.bf16.mxu0 0
    %1572 = vmatmul.mubr.bf16.gmra.mxu0 %v253
    %v1573 = vpop.f32.mrf.mxu0
    %v1574 = vadd.f32 0.0, %v1573
    %v1575 = vpop.f32.mrf.mxu0
    %v1576 = vadd.f32 0.0, %v1575
    %v1577 = vpop.f32.mrf.mxu0
    %v1578 = vadd.f32 0.0, %v1577
    %v1579 = vpop.f32.mrf.mxu0
    %v1580 = vadd.f32 0.0, %v1579
    %1581 = vmatprep.mubr.bf16.mxu0 0
    %1582 = vmatmul.mubr.bf16.gmra.mxu0 %v256
    %v1583 = vpop.f32.mrf.mxu0
    %v1584 = vadd.f32 0.0, %v1583
    %v1585 = vpop.f32.mrf.mxu0
    %v1586 = vadd.f32 0.0, %v1585
    %v1587 = vpop.f32.mrf.mxu0
    %v1588 = vadd.f32 0.0, %v1587
    %v1589 = vpop.f32.mrf.mxu0
    %v1590 = vadd.f32 0.0, %v1589
    %1591 = vmatprep.mubr.bf16.mxu0 0
    %1592 = vmatmul.mubr.bf16.gmra.mxu0 %v259
    %v1593 = vpop.f32.mrf.mxu0
    %v1594 = vadd.f32 0.0, %v1593
    %v1595 = vpop.f32.mrf.mxu0
    %v1596 = vadd.f32 0.0, %v1595
    %v1597 = vpop.f32.mrf.mxu0
    %v1598 = vadd.f32 0.0, %v1597
    %v1599 = vpop.f32.mrf.mxu0
    %v1600 = vadd.f32 0.0, %v1599
    %1601 = vmatprep.mubr.bf16.mxu0 0
    %1602 = vmatmul.mubr.bf16.gmra.mxu0 %v262
    %v1603 = vpop.f32.mrf.mxu0
    %v1604 = vadd.f32 0.0, %v1603
    %v1605 = vpop.f32.mrf.mxu0
    %v1606 = vadd.f32 0.0, %v1605
    %v1607 = vpop.f32.mrf.mxu0
    %v1608 = vadd.f32 0.0, %v1607
    %v1609 = vpop.f32.mrf.mxu0
    %v1610 = vadd.f32 0.0, %v1609
    %1611 = vmatprep.mubr.bf16.mxu0 0
    %1612 = vmatmul.mubr.bf16.gmra.mxu0 %v265
    %v1613 = vpop.f32.mrf.mxu0
    %v1614 = vadd.f32 0.0, %v1613
    %v1615 = vpop.f32.mrf.mxu0
    %v1616 = vadd.f32 0.0, %v1615
    %v1617 = vpop.f32.mrf.mxu0
    %v1618 = vadd.f32 0.0, %v1617
    %v1619 = vpop.f32.mrf.mxu0
    %v1620 = vadd.f32 0.0, %v1619
    %1621 = vmatprep.mubr.bf16.mxu0 0
    %1622 = vmatmul.mubr.bf16.gmra.mxu0 %v268
    %v1623 = vpop.f32.mrf.mxu0
    %v1624 = vadd.f32 0.0, %v1623
    %v1625 = vpop.f32.mrf.mxu0
    %v1626 = vadd.f32 0.0, %v1625
    %v1627 = vpop.f32.mrf.mxu0
    %v1628 = vadd.f32 0.0, %v1627
    %v1629 = vpop.f32.mrf.mxu0
    %v1630 = vadd.f32 0.0, %v1629
    %1631 = vmatprep.mubr.bf16.mxu0 0
    %1632 = vmatmul.mubr.bf16.gmra.mxu0 %v271
    %v1633 = vpop.f32.mrf.mxu0
    %v1634 = vadd.f32 0.0, %v1633
    %v1635 = vpop.f32.mrf.mxu0
    %v1636 = vadd.f32 0.0, %v1635
    %v1637 = vpop.f32.mrf.mxu0
    %v1638 = vadd.f32 0.0, %v1637
    %v1639 = vpop.f32.mrf.mxu0
    %v1640 = vadd.f32 0.0, %v1639
    %1641 = vmatprep.mubr.bf16.mxu0 0
    %1642 = vmatmul.mubr.bf16.gmra.mxu0 %v274
    %v1643 = vpop.f32.mrf.mxu0
    %v1644 = vadd.f32 0.0, %v1643
    %v1645 = vpop.f32.mrf.mxu0
    %v1646 = vadd.f32 0.0, %v1645
    %v1647 = vpop.f32.mrf.mxu0
    %v1648 = vadd.f32 0.0, %v1647
    %v1649 = vpop.f32.mrf.mxu0
    %v1650 = vadd.f32 0.0, %v1649
    %1651 = vmatprep.mubr.bf16.mxu0 0
    %1652 = vmatmul.mubr.bf16.gmra.mxu0 %v1495
    %v1653 = vpop.f32.mrf.mxu0
    %v1654 = vadd.f32 0.0, %v1653
    %v1655 = vpop.f32.mrf.mxu0
    %v1656 = vadd.f32 0.0, %v1655
    %v1657 = vpop.f32.mrf.mxu0
    %v1658 = vadd.f32 0.0, %v1657
    %v1659 = vpop.f32.mrf.mxu0
    %v1660 = vadd.f32 0.0, %v1659
    %1661 = vdwg.mxu0
    %1662 = vmatprep.subr.bf16.mxu0 0
    %1663 = vmatpush1.bf16.msra.mxu0 0
    %1664 = vmatprep.subr.bf16.mxu0 0
    %1665 = vmatpush1.bf16.msra.mxu0 0
    %1666 = vmatprep.subr.bf16.mxu0 0
    %1667 = vmatpush1.bf16.msra.mxu0 0
    %1668 = vmatprep.subr.bf16.mxu0 0
    %1669 = vmatpush1.bf16.msra.mxu0 0
    %1670 = vmatprep.subr.bf16.mxu0 0
    %1671 = vmatpush1.bf16.msra.mxu0 0
    %1672 = vmatprep.subr.bf16.mxu0 0
    %1673 = vmatpush1.bf16.msra.mxu0 0
    %1674 = vmatprep.subr.bf16.mxu0 %v1507
    %1675 = vmatpush1.bf16.msra.mxu0 %v1504
    %1676 = vmatprep.subr.bf16.mxu0 %v1485
    %1677 = vmatpush1.bf16.msra.mxu0 %v1484
    %1678 = vmatprep.subr.bf16.mxu0 0
    %1679 = vmatpush2.bf16.msra.mxu0 0
    %1680 = vmatprep.subr.bf16.mxu0 0
    %1681 = vmatpush2.bf16.msra.mxu0 0
    %1682 = vmatprep.subr.bf16.mxu0 0
    %1683 = vmatpush2.bf16.msra.mxu0 0
    %1684 = vmatprep.subr.bf16.mxu0 0
    %1685 = vmatpush2.bf16.msra.mxu0 0
    %1686 = vmatprep.subr.bf16.mxu0 0
    %1687 = vmatpush2.bf16.msra.mxu0 0
    %1688 = vmatprep.subr.bf16.mxu0 0
    %1689 = vmatpush2.bf16.msra.mxu0 0
    %1690 = vmatprep.subr.bf16.mxu0 0
    %1691 = vmatpush2.bf16.msra.mxu0 0
    %1692 = vmatprep.subr.bf16.mxu0 0
    %1693 = vmatpush2.bf16.msra.mxu0 0
    %1694 = vmatprep.mubr.bf16.mxu0 0
    %1695 = vmatmul.mubr.bf16.gmra.mxu0 %v244
    %v1696 = vpop.f32.mrf.mxu0
    %v1697 = vadd.f32 0.0, %v1696
    %v1698 = vpop.f32.mrf.mxu0
    %v1699 = vadd.f32 0.0, %v1698
    %v1700 = vpop.f32.mrf.mxu0
    %v1701 = vadd.f32 0.0, %v1700
    %v1702 = vpop.f32.mrf.mxu0
    %v1703 = vadd.f32 0.0, %v1702
    %1704 = vmatprep.mubr.bf16.mxu0 0
    %1705 = vmatmul.mubr.bf16.gmra.mxu0 %v247
    %v1706 = vpop.f32.mrf.mxu0
    %v1707 = vadd.f32 0.0, %v1706
    %v1708 = vpop.f32.mrf.mxu0
    %v1709 = vadd.f32 0.0, %v1708
    %v1710 = vpop.f32.mrf.mxu0
    %v1711 = vadd.f32 0.0, %v1710
    %v1712 = vpop.f32.mrf.mxu0
    %v1713 = vadd.f32 0.0, %v1712
    %1714 = vmatprep.mubr.bf16.mxu0 0
    %1715 = vmatmul.mubr.bf16.gmra.mxu0 %v250
    %v1716 = vpop.f32.mrf.mxu0
    %v1717 = vadd.f32 0.0, %v1716
    %v1718 = vpop.f32.mrf.mxu0
    %v1719 = vadd.f32 0.0, %v1718
    %v1720 = vpop.f32.mrf.mxu0
    %v1721 = vadd.f32 0.0, %v1720
    %v1722 = vpop.f32.mrf.mxu0
    %v1723 = vadd.f32 0.0, %v1722
    %1724 = vmatprep.mubr.bf16.mxu0 0
    %1725 = vmatmul.mubr.bf16.gmra.mxu0 %v253
    %v1726 = vpop.f32.mrf.mxu0
    %v1727 = vadd.f32 0.0, %v1726
    %v1728 = vpop.f32.mrf.mxu0
    %v1729 = vadd.f32 0.0, %v1728
    %v1730 = vpop.f32.mrf.mxu0
    %v1731 = vadd.f32 0.0, %v1730
    %v1732 = vpop.f32.mrf.mxu0
    %v1733 = vadd.f32 0.0, %v1732
    %1734 = vmatprep.mubr.bf16.mxu0 0
    %1735 = vmatmul.mubr.bf16.gmra.mxu0 %v256
    %v1736 = vpop.f32.mrf.mxu0
    %v1737 = vadd.f32 0.0, %v1736
    %v1738 = vpop.f32.mrf.mxu0
    %v1739 = vadd.f32 0.0, %v1738
    %v1740 = vpop.f32.mrf.mxu0
    %v1741 = vadd.f32 0.0, %v1740
    %v1742 = vpop.f32.mrf.mxu0
    %v1743 = vadd.f32 0.0, %v1742
    %1744 = vmatprep.mubr.bf16.mxu0 0
    %1745 = vmatmul.mubr.bf16.gmra.mxu0 %v259
    %v1746 = vpop.f32.mrf.mxu0
    %v1747 = vadd.f32 0.0, %v1746
    %v1748 = vpop.f32.mrf.mxu0
    %v1749 = vadd.f32 0.0, %v1748
    %v1750 = vpop.f32.mrf.mxu0
    %v1751 = vadd.f32 0.0, %v1750
    %v1752 = vpop.f32.mrf.mxu0
    %v1753 = vadd.f32 0.0, %v1752
    %1754 = vmatprep.mubr.bf16.mxu0 0
    %1755 = vmatmul.mubr.bf16.gmra.mxu0 %v262
    %v1756 = vpop.f32.mrf.mxu0
    %v1757 = vadd.f32 0.0, %v1756
    %v1758 = vpop.f32.mrf.mxu0
    %v1759 = vadd.f32 0.0, %v1758
    %v1760 = vpop.f32.mrf.mxu0
    %v1761 = vadd.f32 0.0, %v1760
    %v1762 = vpop.f32.mrf.mxu0
    %v1763 = vadd.f32 0.0, %v1762
    %1764 = vmatprep.mubr.bf16.mxu0 0
    %1765 = vmatmul.mubr.bf16.gmra.mxu0 %v265
    %v1766 = vpop.f32.mrf.mxu0
    %v1767 = vadd.f32 0.0, %v1766
    %v1768 = vpop.f32.mrf.mxu0
    %v1769 = vadd.f32 0.0, %v1768
    %v1770 = vpop.f32.mrf.mxu0
    %v1771 = vadd.f32 0.0, %v1770
    %v1772 = vpop.f32.mrf.mxu0
    %v1773 = vadd.f32 0.0, %v1772
    %1774 = vmatprep.mubr.bf16.mxu0 0
    %1775 = vmatmul.mubr.bf16.gmra.mxu0 %v268
    %v1776 = vpop.f32.mrf.mxu0
    %v1777 = vadd.f32 0.0, %v1776
    %v1778 = vpop.f32.mrf.mxu0
    %v1779 = vadd.f32 0.0, %v1778
    %v1780 = vpop.f32.mrf.mxu0
    %v1781 = vadd.f32 0.0, %v1780
    %v1782 = vpop.f32.mrf.mxu0
    %v1783 = vadd.f32 0.0, %v1782
    %1784 = vmatprep.mubr.bf16.mxu0 0
    %1785 = vmatmul.mubr.bf16.gmra.mxu0 %v271
    %v1786 = vpop.f32.mrf.mxu0
    %v1787 = vadd.f32 0.0, %v1786
    %v1788 = vpop.f32.mrf.mxu0
    %v1789 = vadd.f32 0.0, %v1788
    %v1790 = vpop.f32.mrf.mxu0
    %v1791 = vadd.f32 0.0, %v1790
    %v1792 = vpop.f32.mrf.mxu0
    %v1793 = vadd.f32 0.0, %v1792
    %1794 = vmatprep.mubr.bf16.mxu0 0
    %1795 = vmatmul.mubr.bf16.gmra.mxu0 %v274
    %v1796 = vpop.f32.mrf.mxu0
    %v1797 = vadd.f32 0.0, %v1796
    %v1798 = vpop.f32.mrf.mxu0
    %v1799 = vadd.f32 0.0, %v1798
    %v1800 = vpop.f32.mrf.mxu0
    %v1801 = vadd.f32 0.0, %v1800
    %v1802 = vpop.f32.mrf.mxu0
    %v1803 = vadd.f32 0.0, %v1802
    %1804 = vmatprep.mubr.bf16.mxu0 0
    %1805 = vmatmul.mubr.bf16.gmra.mxu0 %v1495
    %v1806 = vpop.f32.mrf.mxu0
    %v1807 = vadd.f32 0.0, %v1806
    %v1808 = vpop.f32.mrf.mxu0
    %v1809 = vadd.f32 0.0, %v1808
    %v1810 = vpop.f32.mrf.mxu0
    %v1811 = vadd.f32 0.0, %v1810
    %v1812 = vpop.f32.mrf.mxu0
    %v1813 = vadd.f32 0.0, %v1812
    %1814 = vdwg.mxu0
    %v1815 = vadd.f32 %v1352, %v1544
    %v1816 = vadd.f32 %v1353, %v1546
    %v1817 = vadd.f32 %v1354, %v1697
    %v1818 = vadd.f32 %v1355, %v1699
    %v1819 = vadd.f32 %v1356, %v1548
    %v1820 = vadd.f32 %v1357, %v1550
    %v1821 = vadd.f32 %v1358, %v1701
    %v1822 = vadd.f32 %v1359, %v1703
    %v1823 = vadd.f32 %v1360, %v1554
    %v1824 = vadd.f32 %v1361, %v1556
    %v1825 = vadd.f32 %v1362, %v1707
    %v1826 = vadd.f32 %v1363, %v1709
    %v1827 = vadd.f32 %v1364, %v1558
    %v1828 = vadd.f32 %v1365, %v1560
    %v1829 = vadd.f32 %v1366, %v1711
    %v1830 = vadd.f32 %v1367, %v1713
    %v1831 = vadd.f32 %v1368, %v1564
    %v1832 = vadd.f32 %v1369, %v1566
    %v1833 = vadd.f32 %v1370, %v1717
    %v1834 = vadd.f32 %v1371, %v1719
    %v1835 = vadd.f32 %v1372, %v1568
    %v1836 = vadd.f32 %v1373, %v1570
    %v1837 = vadd.f32 %v1374, %v1721
    %v1838 = vadd.f32 %v1375, %v1723
    %v1839 = vadd.f32 %v1376, %v1574
    %v1840 = vadd.f32 %v1377, %v1576
    %v1841 = vadd.f32 %v1378, %v1727
    %v1842 = vadd.f32 %v1379, %v1729
    %v1843 = vadd.f32 %v1380, %v1578
    %v1844 = vadd.f32 %v1381, %v1580
    %v1845 = vadd.f32 %v1382, %v1731
    %v1846 = vadd.f32 %v1383, %v1733
    %v1847 = vadd.f32 %v1384, %v1584
    %v1848 = vadd.f32 %v1385, %v1586
    %v1849 = vadd.f32 %v1386, %v1737
    %v1850 = vadd.f32 %v1387, %v1739
    %v1851 = vadd.f32 %v1388, %v1588
    %v1852 = vadd.f32 %v1389, %v1590
    %v1853 = vadd.f32 %v1390, %v1741
    %v1854 = vadd.f32 %v1391, %v1743
    %v1855 = vadd.f32 %v1392, %v1594
    %v1856 = vadd.f32 %v1393, %v1596
    %v1857 = vadd.f32 %v1394, %v1747
    %v1858 = vadd.f32 %v1395, %v1749
    %v1859 = vadd.f32 %v1396, %v1598
    %v1860 = vadd.f32 %v1397, %v1600
    %v1861 = vadd.f32 %v1398, %v1751
    %v1862 = vadd.f32 %v1399, %v1753
    %v1863 = vadd.f32 %v1400, %v1604
    %v1864 = vadd.f32 %v1401, %v1606
    %v1865 = vadd.f32 %v1402, %v1757
    %v1866 = vadd.f32 %v1403, %v1759
    %v1867 = vadd.f32 %v1404, %v1608
    %v1868 = vadd.f32 %v1405, %v1610
    %v1869 = vadd.f32 %v1406, %v1761
    %v1870 = vadd.f32 %v1407, %v1763
    %v1871 = vadd.f32 %v1408, %v1614
    %v1872 = vadd.f32 %v1409, %v1616
    %v1873 = vadd.f32 %v1410, %v1767
    %v1874 = vadd.f32 %v1411, %v1769
    %v1875 = vadd.f32 %v1412, %v1618
    %v1876 = vadd.f32 %v1413, %v1620
    %v1877 = vadd.f32 %v1414, %v1771
    %v1878 = vadd.f32 %v1415, %v1773
    %v1879 = vadd.f32 %v1416, %v1624
    %v1880 = vadd.f32 %v1417, %v1626
    %v1881 = vadd.f32 %v1418, %v1777
    %v1882 = vadd.f32 %v1419, %v1779
    %v1883 = vadd.f32 %v1420, %v1628
    %v1884 = vadd.f32 %v1421, %v1630
    %v1885 = vadd.f32 %v1422, %v1781
    %v1886 = vadd.f32 %v1423, %v1783
    %v1887 = vadd.f32 %v1424, %v1634
    %v1888 = vadd.f32 %v1425, %v1636
    %v1889 = vadd.f32 %v1426, %v1787
    %v1890 = vadd.f32 %v1427, %v1789
    %v1891 = vadd.f32 %v1428, %v1638
    %v1892 = vadd.f32 %v1429, %v1640
    %v1893 = vadd.f32 %v1430, %v1791
    %v1894 = vadd.f32 %v1431, %v1793
    %v1895 = vadd.f32 %v1432, %v1644
    %v1896 = vadd.f32 %v1433, %v1646
    %v1897 = vadd.f32 %v1434, %v1797
    %v1898 = vadd.f32 %v1435, %v1799
    %v1899 = vadd.f32 %v1436, %v1648
    %v1900 = vadd.f32 %v1437, %v1650
    %v1901 = vadd.f32 %v1438, %v1801
    %v1902 = vadd.f32 %v1439, %v1803
    %v1903 = vadd.f32 %v1440, %v1654
    %v1904 = vadd.f32 %v1441, %v1656
    %v1905 = vadd.f32 %v1442, %v1807
    %v1906 = vadd.f32 %v1443, %v1809
    %v1907 = vadd.f32 %v1444, %v1658
    %v1908 = vadd.f32 %v1445, %v1660
    %v1909 = vadd.f32 %v1446, %v1811
    %v1910 = vadd.f32 %v1447, %v1813
    %v1911 = vpack.c.bf16 %v161, %v160
    %s1912 = scalar_lea.vmem [#allocation2], 256
    %v1913 = vld [vmem:[%s1912] sm:$0xff]
    %v1914 = vld [vmem:[%s1912 + $0x8] sm:$0xff]
    %v1915 = vld [vmem:[%s1912 + $0x10] sm:$0xff]
    %v1916 = vld [vmem:[%s1912 + $0x18] sm:$0xff]
    %v1917 = vld [vmem:[%s1912 + $0x20] sm:$0xff]
    %v1918 = vld [vmem:[%s1912 + $0x28] sm:$0xff]
    %v1919 = vld [vmem:[%s1912 + $0x30] sm:$0x33]
    %v1920 = vld [vmem:[%s1912 + $0x38] sm:$0x33]
    %v1929 = vunpack.c.l.b16 %v1913
    %v1930 = vunpack.c.h.b16 %v1913
    %v1931 = vunpack.c.l.b16 %v1914
    %v1932 = vunpack.c.h.b16 %v1914
    %v1933 = vunpack.c.l.b16 %v1915
    %v1934 = vunpack.c.h.b16 %v1915
    %v1935 = vunpack.c.l.b16 %v1916
    %v1936 = vunpack.c.h.b16 %v1916
    %v1937 = vunpack.c.l.b16 %v1917
    %v1938 = vunpack.c.h.b16 %v1917
    %v1939 = vunpack.c.l.b16 %v1918
    %v1940 = vunpack.c.h.b16 %v1918
    %v1941 = vunpack.c.l.b16 %v1919
    %v1942 = vunpack.c.h.b16 %v1919
    %v1943 = vunpack.c.l.b16 %v1920
    %v1944 = vunpack.c.h.b16 %v1920
    %v1945 = vpack.c.b16 %v1933, %v1929
    %v1946 = vpack.c.b16 %v1934, %v1930
    %v1947 = vpack.c.b16 %v1935, %v1931
    %v1948 = vpack.c.b16 %v1936, %v1932
    %v1949 = vpack.c.b16 %v1941, %v1937
    %v1950 = vpack.c.b16 %v1942, %v1938
    %v1951 = vpack.c.b16 %v1943, %v1939
    %v1952 = vpack.c.b16 %v1944, %v1940
    %v1958 = vsel %vm239, %v1911, 0
    %v1961 = vsel %vm276, %v1949, 0
    %v1964 = vsel %vm276, %v1950, 0
    %v1967 = vsel %vm276, %v1951, 0
    %v1970 = vsel %vm276, %v1952, 0
    %1972 = vmatprep.subr.bf16.mxu0 0
    %1973 = vmatpush1.bf16.msra.mxu0 0
    %1974 = vmatprep.subr.bf16.mxu0 0
    %1975 = vmatpush1.bf16.msra.mxu0 0
    %1976 = vmatprep.subr.bf16.mxu0 0
    %1977 = vmatpush1.bf16.msra.mxu0 0
    %1978 = vmatprep.subr.bf16.mxu0 0
    %1979 = vmatpush1.bf16.msra.mxu0 0
    %1980 = vmatprep.subr.bf16.mxu0 0
    %1981 = vmatpush1.bf16.msra.mxu0 0
    %1982 = vmatprep.subr.bf16.mxu0 0
    %1983 = vmatpush1.bf16.msra.mxu0 0
    %1984 = vmatprep.subr.bf16.mxu0 %v1964
    %1985 = vmatpush1.bf16.msra.mxu0 %v1961
    %1986 = vmatprep.subr.bf16.mxu0 %v1946
    %1987 = vmatpush1.bf16.msra.mxu0 %v1945
    %1988 = vmatprep.subr.bf16.mxu0 0
    %1989 = vmatpush2.bf16.msra.mxu0 0
    %1990 = vmatprep.subr.bf16.mxu0 0
    %1991 = vmatpush2.bf16.msra.mxu0 0
    %1992 = vmatprep.subr.bf16.mxu0 0
    %1993 = vmatpush2.bf16.msra.mxu0 0
    %1994 = vmatprep.subr.bf16.mxu0 0
    %1995 = vmatpush2.bf16.msra.mxu0 0
    %1996 = vmatprep.subr.bf16.mxu0 0
    %1997 = vmatpush2.bf16.msra.mxu0 0
    %1998 = vmatprep.subr.bf16.mxu0 0
    %1999 = vmatpush2.bf16.msra.mxu0 0
    %2000 = vmatprep.subr.bf16.mxu0 0
    %2001 = vmatpush2.bf16.msra.mxu0 0
    %2002 = vmatprep.subr.bf16.mxu0 0
    %2003 = vmatpush2.bf16.msra.mxu0 0
    %2004 = vmatprep.mubr.bf16.mxu0 0
    %2005 = vmatmul.mubr.bf16.gmra.mxu0 %v638
    %v2006 = vpop.f32.mrf.mxu0
    %v2007 = vadd.f32 0.0, %v2006
    %v2008 = vpop.f32.mrf.mxu0
    %v2009 = vadd.f32 0.0, %v2008
    %v2010 = vpop.f32.mrf.mxu0
    %v2011 = vadd.f32 0.0, %v2010
    %v2012 = vpop.f32.mrf.mxu0
    %v2013 = vadd.f32 0.0, %v2012
    %2014 = vmatprep.mubr.bf16.mxu0 0
    %2015 = vmatmul.mubr.bf16.gmra.mxu0 %v641
    %v2016 = vpop.f32.mrf.mxu0
    %v2017 = vadd.f32 0.0, %v2016
    %v2018 = vpop.f32.mrf.mxu0
    %v2019 = vadd.f32 0.0, %v2018
    %v2020 = vpop.f32.mrf.mxu0
    %v2021 = vadd.f32 0.0, %v2020
    %v2022 = vpop.f32.mrf.mxu0
    %v2023 = vadd.f32 0.0, %v2022
    %2024 = vmatprep.mubr.bf16.mxu0 0
    %2025 = vmatmul.mubr.bf16.gmra.mxu0 %v644
    %v2026 = vpop.f32.mrf.mxu0
    %v2027 = vadd.f32 0.0, %v2026
    %v2028 = vpop.f32.mrf.mxu0
    %v2029 = vadd.f32 0.0, %v2028
    %v2030 = vpop.f32.mrf.mxu0
    %v2031 = vadd.f32 0.0, %v2030
    %v2032 = vpop.f32.mrf.mxu0
    %v2033 = vadd.f32 0.0, %v2032
    %2034 = vmatprep.mubr.bf16.mxu0 0
    %2035 = vmatmul.mubr.bf16.gmra.mxu0 %v647
    %v2036 = vpop.f32.mrf.mxu0
    %v2037 = vadd.f32 0.0, %v2036
    %v2038 = vpop.f32.mrf.mxu0
    %v2039 = vadd.f32 0.0, %v2038
    %v2040 = vpop.f32.mrf.mxu0
    %v2041 = vadd.f32 0.0, %v2040
    %v2042 = vpop.f32.mrf.mxu0
    %v2043 = vadd.f32 0.0, %v2042
    %2044 = vmatprep.mubr.bf16.mxu0 0
    %2045 = vmatmul.mubr.bf16.gmra.mxu0 %v650
    %v2046 = vpop.f32.mrf.mxu0
    %v2047 = vadd.f32 0.0, %v2046
    %v2048 = vpop.f32.mrf.mxu0
    %v2049 = vadd.f32 0.0, %v2048
    %v2050 = vpop.f32.mrf.mxu0
    %v2051 = vadd.f32 0.0, %v2050
    %v2052 = vpop.f32.mrf.mxu0
    %v2053 = vadd.f32 0.0, %v2052
    %2054 = vmatprep.mubr.bf16.mxu0 0
    %2055 = vmatmul.mubr.bf16.gmra.mxu0 %v653
    %v2056 = vpop.f32.mrf.mxu0
    %v2057 = vadd.f32 0.0, %v2056
    %v2058 = vpop.f32.mrf.mxu0
    %v2059 = vadd.f32 0.0, %v2058
    %v2060 = vpop.f32.mrf.mxu0
    %v2061 = vadd.f32 0.0, %v2060
    %v2062 = vpop.f32.mrf.mxu0
    %v2063 = vadd.f32 0.0, %v2062
    %2064 = vmatprep.mubr.bf16.mxu0 0
    %2065 = vmatmul.mubr.bf16.gmra.mxu0 %v656
    %v2066 = vpop.f32.mrf.mxu0
    %v2067 = vadd.f32 0.0, %v2066
    %v2068 = vpop.f32.mrf.mxu0
    %v2069 = vadd.f32 0.0, %v2068
    %v2070 = vpop.f32.mrf.mxu0
    %v2071 = vadd.f32 0.0, %v2070
    %v2072 = vpop.f32.mrf.mxu0
    %v2073 = vadd.f32 0.0, %v2072
    %2074 = vmatprep.mubr.bf16.mxu0 0
    %2075 = vmatmul.mubr.bf16.gmra.mxu0 %v659
    %v2076 = vpop.f32.mrf.mxu0
    %v2077 = vadd.f32 0.0, %v2076
    %v2078 = vpop.f32.mrf.mxu0
    %v2079 = vadd.f32 0.0, %v2078
    %v2080 = vpop.f32.mrf.mxu0
    %v2081 = vadd.f32 0.0, %v2080
    %v2082 = vpop.f32.mrf.mxu0
    %v2083 = vadd.f32 0.0, %v2082
    %2084 = vmatprep.mubr.bf16.mxu0 0
    %2085 = vmatmul.mubr.bf16.gmra.mxu0 %v662
    %v2086 = vpop.f32.mrf.mxu0
    %v2087 = vadd.f32 0.0, %v2086
    %v2088 = vpop.f32.mrf.mxu0
    %v2089 = vadd.f32 0.0, %v2088
    %v2090 = vpop.f32.mrf.mxu0
    %v2091 = vadd.f32 0.0, %v2090
    %v2092 = vpop.f32.mrf.mxu0
    %v2093 = vadd.f32 0.0, %v2092
    %2094 = vmatprep.mubr.bf16.mxu0 0
    %2095 = vmatmul.mubr.bf16.gmra.mxu0 %v665
    %v2096 = vpop.f32.mrf.mxu0
    %v2097 = vadd.f32 0.0, %v2096
    %v2098 = vpop.f32.mrf.mxu0
    %v2099 = vadd.f32 0.0, %v2098
    %v2100 = vpop.f32.mrf.mxu0
    %v2101 = vadd.f32 0.0, %v2100
    %v2102 = vpop.f32.mrf.mxu0
    %v2103 = vadd.f32 0.0, %v2102
    %2104 = vmatprep.mubr.bf16.mxu0 0
    %2105 = vmatmul.mubr.bf16.gmra.mxu0 %v1032
    %v2106 = vpop.f32.mrf.mxu0
    %v2107 = vadd.f32 0.0, %v2106
    %v2108 = vpop.f32.mrf.mxu0
    %v2109 = vadd.f32 0.0, %v2108
    %v2110 = vpop.f32.mrf.mxu0
    %v2111 = vadd.f32 0.0, %v2110
    %v2112 = vpop.f32.mrf.mxu0
    %v2113 = vadd.f32 0.0, %v2112
    %2114 = vmatprep.mubr.bf16.mxu0 0
    %2115 = vmatmul.mubr.bf16.gmra.mxu0 %v1958
    %v2116 = vpop.f32.mrf.mxu0
    %v2117 = vadd.f32 0.0, %v2116
    %v2118 = vpop.f32.mrf.mxu0
    %v2119 = vadd.f32 0.0, %v2118
    %v2120 = vpop.f32.mrf.mxu0
    %v2121 = vadd.f32 0.0, %v2120
    %v2122 = vpop.f32.mrf.mxu0
    %v2123 = vadd.f32 0.0, %v2122
    %2124 = vdwg.mxu0
    %2125 = vmatprep.subr.bf16.mxu0 0
    %2126 = vmatpush1.bf16.msra.mxu0 0
    %2127 = vmatprep.subr.bf16.mxu0 0
    %2128 = vmatpush1.bf16.msra.mxu0 0
    %2129 = vmatprep.subr.bf16.mxu0 0
    %2130 = vmatpush1.bf16.msra.mxu0 0
    %2131 = vmatprep.subr.bf16.mxu0 0
    %2132 = vmatpush1.bf16.msra.mxu0 0
    %2133 = vmatprep.subr.bf16.mxu0 0
    %2134 = vmatpush1.bf16.msra.mxu0 0
    %2135 = vmatprep.subr.bf16.mxu0 0
    %2136 = vmatpush1.bf16.msra.mxu0 0
    %2137 = vmatprep.subr.bf16.mxu0 %v1970
    %2138 = vmatpush1.bf16.msra.mxu0 %v1967
    %2139 = vmatprep.subr.bf16.mxu0 %v1948
    %2140 = vmatpush1.bf16.msra.mxu0 %v1947
    %2141 = vmatprep.subr.bf16.mxu0 0
    %2142 = vmatpush2.bf16.msra.mxu0 0
    %2143 = vmatprep.subr.bf16.mxu0 0
    %2144 = vmatpush2.bf16.msra.mxu0 0
    %2145 = vmatprep.subr.bf16.mxu0 0
    %2146 = vmatpush2.bf16.msra.mxu0 0
    %2147 = vmatprep.subr.bf16.mxu0 0
    %2148 = vmatpush2.bf16.msra.mxu0 0
    %2149 = vmatprep.subr.bf16.mxu0 0
    %2150 = vmatpush2.bf16.msra.mxu0 0
    %2151 = vmatprep.subr.bf16.mxu0 0
    %2152 = vmatpush2.bf16.msra.mxu0 0
    %2153 = vmatprep.subr.bf16.mxu0 0
    %2154 = vmatpush2.bf16.msra.mxu0 0
    %2155 = vmatprep.subr.bf16.mxu0 0
    %2156 = vmatpush2.bf16.msra.mxu0 0
    %2157 = vmatprep.mubr.bf16.mxu0 0
    %2158 = vmatmul.mubr.bf16.gmra.mxu0 %v638
    %v2159 = vpop.f32.mrf.mxu0
    %v2160 = vadd.f32 0.0, %v2159
    %v2161 = vpop.f32.mrf.mxu0
    %v2162 = vadd.f32 0.0, %v2161
    %v2163 = vpop.f32.mrf.mxu0
    %v2164 = vadd.f32 0.0, %v2163
    %v2165 = vpop.f32.mrf.mxu0
    %v2166 = vadd.f32 0.0, %v2165
    %2167 = vmatprep.mubr.bf16.mxu0 0
    %2168 = vmatmul.mubr.bf16.gmra.mxu0 %v641
    %v2169 = vpop.f32.mrf.mxu0
    %v2170 = vadd.f32 0.0, %v2169
    %v2171 = vpop.f32.mrf.mxu0
    %v2172 = vadd.f32 0.0, %v2171
    %v2173 = vpop.f32.mrf.mxu0
    %v2174 = vadd.f32 0.0, %v2173
    %v2175 = vpop.f32.mrf.mxu0
    %v2176 = vadd.f32 0.0, %v2175
    %2177 = vmatprep.mubr.bf16.mxu0 0
    %2178 = vmatmul.mubr.bf16.gmra.mxu0 %v644
    %v2179 = vpop.f32.mrf.mxu0
    %v2180 = vadd.f32 0.0, %v2179
    %v2181 = vpop.f32.mrf.mxu0
    %v2182 = vadd.f32 0.0, %v2181
    %v2183 = vpop.f32.mrf.mxu0
    %v2184 = vadd.f32 0.0, %v2183
    %v2185 = vpop.f32.mrf.mxu0
    %v2186 = vadd.f32 0.0, %v2185
    %2187 = vmatprep.mubr.bf16.mxu0 0
    %2188 = vmatmul.mubr.bf16.gmra.mxu0 %v647
    %v2189 = vpop.f32.mrf.mxu0
    %v2190 = vadd.f32 0.0, %v2189
    %v2191 = vpop.f32.mrf.mxu0
    %v2192 = vadd.f32 0.0, %v2191
    %v2193 = vpop.f32.mrf.mxu0
    %v2194 = vadd.f32 0.0, %v2193
    %v2195 = vpop.f32.mrf.mxu0
    %v2196 = vadd.f32 0.0, %v2195
    %2197 = vmatprep.mubr.bf16.mxu0 0
    %2198 = vmatmul.mubr.bf16.gmra.mxu0 %v650
    %v2199 = vpop.f32.mrf.mxu0
    %v2200 = vadd.f32 0.0, %v2199
    %v2201 = vpop.f32.mrf.mxu0
    %v2202 = vadd.f32 0.0, %v2201
    %v2203 = vpop.f32.mrf.mxu0
    %v2204 = vadd.f32 0.0, %v2203
    %v2205 = vpop.f32.mrf.mxu0
    %v2206 = vadd.f32 0.0, %v2205
    %2207 = vmatprep.mubr.bf16.mxu0 0
    %2208 = vmatmul.mubr.bf16.gmra.mxu0 %v653
    %v2209 = vpop.f32.mrf.mxu0
    %v2210 = vadd.f32 0.0, %v2209
    %v2211 = vpop.f32.mrf.mxu0
    %v2212 = vadd.f32 0.0, %v2211
    %v2213 = vpop.f32.mrf.mxu0
    %v2214 = vadd.f32 0.0, %v2213
    %v2215 = vpop.f32.mrf.mxu0
    %v2216 = vadd.f32 0.0, %v2215
    %2217 = vmatprep.mubr.bf16.mxu0 0
    %2218 = vmatmul.mubr.bf16.gmra.mxu0 %v656
    %v2219 = vpop.f32.mrf.mxu0
    %v2220 = vadd.f32 0.0, %v2219
    %v2221 = vpop.f32.mrf.mxu0
    %v2222 = vadd.f32 0.0, %v2221
    %v2223 = vpop.f32.mrf.mxu0
    %v2224 = vadd.f32 0.0, %v2223
    %v2225 = vpop.f32.mrf.mxu0
    %v2226 = vadd.f32 0.0, %v2225
    %2227 = vmatprep.mubr.bf16.mxu0 0
    %2228 = vmatmul.mubr.bf16.gmra.mxu0 %v659
    %v2229 = vpop.f32.mrf.mxu0
    %v2230 = vadd.f32 0.0, %v2229
    %v2231 = vpop.f32.mrf.mxu0
    %v2232 = vadd.f32 0.0, %v2231
    %v2233 = vpop.f32.mrf.mxu0
    %v2234 = vadd.f32 0.0, %v2233
    %v2235 = vpop.f32.mrf.mxu0
    %v2236 = vadd.f32 0.0, %v2235
    %2237 = vmatprep.mubr.bf16.mxu0 0
    %2238 = vmatmul.mubr.bf16.gmra.mxu0 %v662
    %v2239 = vpop.f32.mrf.mxu0
    %v2240 = vadd.f32 0.0, %v2239
    %v2241 = vpop.f32.mrf.mxu0
    %v2242 = vadd.f32 0.0, %v2241
    %v2243 = vpop.f32.mrf.mxu0
    %v2244 = vadd.f32 0.0, %v2243
    %v2245 = vpop.f32.mrf.mxu0
    %v2246 = vadd.f32 0.0, %v2245
    %2247 = vmatprep.mubr.bf16.mxu0 0
    %2248 = vmatmul.mubr.bf16.gmra.mxu0 %v665
    %v2249 = vpop.f32.mrf.mxu0
    %v2250 = vadd.f32 0.0, %v2249
    %v2251 = vpop.f32.mrf.mxu0
    %v2252 = vadd.f32 0.0, %v2251
    %v2253 = vpop.f32.mrf.mxu0
    %v2254 = vadd.f32 0.0, %v2253
    %v2255 = vpop.f32.mrf.mxu0
    %v2256 = vadd.f32 0.0, %v2255
    %2257 = vmatprep.mubr.bf16.mxu0 0
    %2258 = vmatmul.mubr.bf16.gmra.mxu0 %v1032
    %v2259 = vpop.f32.mrf.mxu0
    %v2260 = vadd.f32 0.0, %v2259
    %v2261 = vpop.f32.mrf.mxu0
    %v2262 = vadd.f32 0.0, %v2261
    %v2263 = vpop.f32.mrf.mxu0
    %v2264 = vadd.f32 0.0, %v2263
    %v2265 = vpop.f32.mrf.mxu0
    %v2266 = vadd.f32 0.0, %v2265
    %2267 = vmatprep.mubr.bf16.mxu0 0
    %2268 = vmatmul.mubr.bf16.gmra.mxu0 %v1958
    %v2269 = vpop.f32.mrf.mxu0
    %v2270 = vadd.f32 0.0, %v2269
    %v2271 = vpop.f32.mrf.mxu0
    %v2272 = vadd.f32 0.0, %v2271
    %v2273 = vpop.f32.mrf.mxu0
    %v2274 = vadd.f32 0.0, %v2273
    %v2275 = vpop.f32.mrf.mxu0
    %v2276 = vadd.f32 0.0, %v2275
    %2277 = vdwg.mxu0
    %v2278 = vadd.f32 %v1815, %v2007
    %v2279 = vadd.f32 %v1816, %v2009
    %v2280 = vadd.f32 %v1817, %v2160
    %v2281 = vadd.f32 %v1818, %v2162
    %v2282 = vadd.f32 %v1819, %v2011
    %v2283 = vadd.f32 %v1820, %v2013
    %v2284 = vadd.f32 %v1821, %v2164
    %v2285 = vadd.f32 %v1822, %v2166
    %v2286 = vadd.f32 %v1823, %v2017
    %v2287 = vadd.f32 %v1824, %v2019
    %v2288 = vadd.f32 %v1825, %v2170
    %v2289 = vadd.f32 %v1826, %v2172
    %v2290 = vadd.f32 %v1827, %v2021
    %v2291 = vadd.f32 %v1828, %v2023
    %v2292 = vadd.f32 %v1829, %v2174
    %v2293 = vadd.f32 %v1830, %v2176
    %v2294 = vadd.f32 %v1831, %v2027
    %v2295 = vadd.f32 %v1832, %v2029
    %v2296 = vadd.f32 %v1833, %v2180
    %v2297 = vadd.f32 %v1834, %v2182
    %v2298 = vadd.f32 %v1835, %v2031
    %v2299 = vadd.f32 %v1836, %v2033
    %v2300 = vadd.f32 %v1837, %v2184
    %v2301 = vadd.f32 %v1838, %v2186
    %v2302 = vadd.f32 %v1839, %v2037
    %v2303 = vadd.f32 %v1840, %v2039
    %v2304 = vadd.f32 %v1841, %v2190
    %v2305 = vadd.f32 %v1842, %v2192
    %v2306 = vadd.f32 %v1843, %v2041
    %v2307 = vadd.f32 %v1844, %v2043
    %v2308 = vadd.f32 %v1845, %v2194
    %v2309 = vadd.f32 %v1846, %v2196
    %v2310 = vadd.f32 %v1847, %v2047
    %v2311 = vadd.f32 %v1848, %v2049
    %v2312 = vadd.f32 %v1849, %v2200
    %v2313 = vadd.f32 %v1850, %v2202
    %v2314 = vadd.f32 %v1851, %v2051
    %v2315 = vadd.f32 %v1852, %v2053
    %v2316 = vadd.f32 %v1853, %v2204
    %v2317 = vadd.f32 %v1854, %v2206
    %v2318 = vadd.f32 %v1855, %v2057
    %v2319 = vadd.f32 %v1856, %v2059
    %v2320 = vadd.f32 %v1857, %v2210
    %v2321 = vadd.f32 %v1858, %v2212
    %v2322 = vadd.f32 %v1859, %v2061
    %v2323 = vadd.f32 %v1860, %v2063
    %v2324 = vadd.f32 %v1861, %v2214
    %v2325 = vadd.f32 %v1862, %v2216
    %v2326 = vadd.f32 %v1863, %v2067
    %v2327 = vadd.f32 %v1864, %v2069
    %v2328 = vadd.f32 %v1865, %v2220
    %v2329 = vadd.f32 %v1866, %v2222
    %v2330 = vadd.f32 %v1867, %v2071
    %v2331 = vadd.f32 %v1868, %v2073
    %v2332 = vadd.f32 %v1869, %v2224
    %v2333 = vadd.f32 %v1870, %v2226
    %v2334 = vadd.f32 %v1871, %v2077
    %v2335 = vadd.f32 %v1872, %v2079
    %v2336 = vadd.f32 %v1873, %v2230
    %v2337 = vadd.f32 %v1874, %v2232
    %v2338 = vadd.f32 %v1875, %v2081
    %v2339 = vadd.f32 %v1876, %v2083
    %v2340 = vadd.f32 %v1877, %v2234
    %v2341 = vadd.f32 %v1878, %v2236
    %v2342 = vadd.f32 %v1879, %v2087
    %v2343 = vadd.f32 %v1880, %v2089
    %v2344 = vadd.f32 %v1881, %v2240
    %v2345 = vadd.f32 %v1882, %v2242
    %v2346 = vadd.f32 %v1883, %v2091
    %v2347 = vadd.f32 %v1884, %v2093
    %v2348 = vadd.f32 %v1885, %v2244
    %v2349 = vadd.f32 %v1886, %v2246
    %v2350 = vadd.f32 %v1887, %v2097
    %v2351 = vadd.f32 %v1888, %v2099
    %v2352 = vadd.f32 %v1889, %v2250
    %v2353 = vadd.f32 %v1890, %v2252
    %v2354 = vadd.f32 %v1891, %v2101
    %v2355 = vadd.f32 %v1892, %v2103
    %v2356 = vadd.f32 %v1893, %v2254
    %v2357 = vadd.f32 %v1894, %v2256
    %v2358 = vadd.f32 %v1895, %v2107
    %v2359 = vadd.f32 %v1896, %v2109
    %v2360 = vadd.f32 %v1897, %v2260
    %v2361 = vadd.f32 %v1898, %v2262
    %v2362 = vadd.f32 %v1899, %v2111
    %v2363 = vadd.f32 %v1900, %v2113
    %v2364 = vadd.f32 %v1901, %v2264
    %v2365 = vadd.f32 %v1902, %v2266
    %v2366 = vadd.f32 %v1903, %v2117
    %v2367 = vadd.f32 %v1904, %v2119
    %v2368 = vadd.f32 %v1905, %v2270
    %v2369 = vadd.f32 %v1906, %v2272
    %v2370 = vadd.f32 %v1907, %v2121
    %v2371 = vadd.f32 %v1908, %v2123
    %v2372 = vadd.f32 %v1909, %v2274
    %v2373 = vadd.f32 %v1910, %v2276
    %v2374 = vmax.f32 %v2278, %v2280
    %v2375 = vmax.f32 %v2279, %v2281
    %v2376 = vmax.f32 %v2282, %v2284
    %v2377 = vmax.f32 %v2283, %v2285
    %v2378 = vmax.f32 %v2286, %v2288
    %v2379 = vmax.f32 %v2287, %v2289
    %v2380 = vmax.f32 %v2290, %v2292
    %v2381 = vmax.f32 %v2291, %v2293
    %v2382 = vmax.f32 %v2294, %v2296
    %v2383 = vmax.f32 %v2295, %v2297
    %v2384 = vmax.f32 %v2298, %v2300
    %v2385 = vmax.f32 %v2299, %v2301
    %v2386 = vmax.f32 %v2302, %v2304
    %v2387 = vmax.f32 %v2303, %v2305
    %v2388 = vmax.f32 %v2306, %v2308
    %v2389 = vmax.f32 %v2307, %v2309
    %v2390 = vmax.f32 %v2310, %v2312
    %v2391 = vmax.f32 %v2311, %v2313
    %v2392 = vmax.f32 %v2314, %v2316
    %v2393 = vmax.f32 %v2315, %v2317
    %v2394 = vmax.f32 %v2318, %v2320
    %v2395 = vmax.f32 %v2319, %v2321
    %v2396 = vmax.f32 %v2322, %v2324
    %v2397 = vmax.f32 %v2323, %v2325
    %v2398 = vmax.f32 %v2326, %v2328
    %v2399 = vmax.f32 %v2327, %v2329
    %v2400 = vmax.f32 %v2330, %v2332
    %v2401 = vmax.f32 %v2331, %v2333
    %v2402 = vmax.f32 %v2334, %v2336
    %v2403 = vmax.f32 %v2335, %v2337
    %v2404 = vmax.f32 %v2338, %v2340
    %v2405 = vmax.f32 %v2339, %v2341
    %v2406 = vmax.f32 %v2342, %v2344
    %v2407 = vmax.f32 %v2343, %v2345
    %v2408 = vmax.f32 %v2346, %v2348
    %v2409 = vmax.f32 %v2347, %v2349
    %v2410 = vmax.f32 %v2350, %v2352
    %v2411 = vmax.f32 %v2351, %v2353
    %v2412 = vmax.f32 %v2354, %v2356
    %v2413 = vmax.f32 %v2355, %v2357
    %v2414 = vmax.f32 %v2358, %v2360
    %v2415 = vmax.f32 %v2359, %v2361
    %v2416 = vmax.f32 %v2362, %v2364
    %v2417 = vmax.f32 %v2363, %v2365
    %v2418 = vmax.f32 %v2366, %v2368
    %v2419 = vmax.f32 %v2367, %v2369
    %v2420 = vmax.f32 %v2370, %v2372
    %v2421 = vmax.f32 %v2371, %v2373
    %v2422 = vmax.f32 %v2374, %v2376
    %v2423 = vmax.f32 %v2375, %v2377
    %v2424 = vmax.f32 %v2378, %v2380
    %v2425 = vmax.f32 %v2379, %v2381
    %v2426 = vmax.f32 %v2382, %v2384
    %v2427 = vmax.f32 %v2383, %v2385
    %v2428 = vmax.f32 %v2386, %v2388
    %v2429 = vmax.f32 %v2387, %v2389
    %v2430 = vmax.f32 %v2390, %v2392
    %v2431 = vmax.f32 %v2391, %v2393
    %v2432 = vmax.f32 %v2394, %v2396
    %v2433 = vmax.f32 %v2395, %v2397
    %v2434 = vmax.f32 %v2398, %v2400
    %v2435 = vmax.f32 %v2399, %v2401
    %v2436 = vmax.f32 %v2402, %v2404
    %v2437 = vmax.f32 %v2403, %v2405
    %v2438 = vmax.f32 %v2406, %v2408
    %v2439 = vmax.f32 %v2407, %v2409
    %v2440 = vmax.f32 %v2410, %v2412
    %v2441 = vmax.f32 %v2411, %v2413
    %v2442 = vmax.f32 %v2414, %v2416
    %v2443 = vmax.f32 %v2415, %v2417
    %v2444 = vmax.f32 %v2418, %v2420
    %v2445 = vmax.f32 %v2419, %v2421
    %v2446 = vld [vmem:[#allocation4] sm:$0xff]
    %v2447 = vld [vmem:[#allocation4 + $0x8] sm:$0xff]
    %v2448 = vadd.f32 %v2422, %v2446
    %v2449 = vadd.f32 %v2423, %v2447
    %v2450 = vadd.f32 %v2424, %v2446
    %v2451 = vadd.f32 %v2425, %v2447
    %v2452 = vadd.f32 %v2426, %v2446
    %v2453 = vadd.f32 %v2427, %v2447
    %v2454 = vadd.f32 %v2428, %v2446
    %v2455 = vadd.f32 %v2429, %v2447
    %v2456 = vadd.f32 %v2430, %v2446
    %v2457 = vadd.f32 %v2431, %v2447
    %v2458 = vadd.f32 %v2432, %v2446
    %v2459 = vadd.f32 %v2433, %v2447
    %v2460 = vadd.f32 %v2434, %v2446
    %v2461 = vadd.f32 %v2435, %v2447
    %v2462 = vadd.f32 %v2436, %v2446
    %v2463 = vadd.f32 %v2437, %v2447
    %v2464 = vadd.f32 %v2438, %v2446
    %v2465 = vadd.f32 %v2439, %v2447
    %v2466 = vadd.f32 %v2440, %v2446
    %v2467 = vadd.f32 %v2441, %v2447
    %v2468 = vadd.f32 %v2442, %v2446
    %v2469 = vadd.f32 %v2443, %v2447
    %v2470 = vadd.f32 %v2444, %v2446
    %v2471 = vadd.f32 %v2445, %v2447
    %v2472 = vmax.f32 %v2448, 0.0
    %v2473 = vmax.f32 %v2449, 0.0
    %v2474 = vmax.f32 %v2450, 0.0
    %v2475 = vmax.f32 %v2451, 0.0
    %v2476 = vmax.f32 %v2452, 0.0
    %v2477 = vmax.f32 %v2453, 0.0
    %v2478 = vmax.f32 %v2454, 0.0
    %v2479 = vmax.f32 %v2455, 0.0
    %v2480 = vmax.f32 %v2456, 0.0
    %v2481 = vmax.f32 %v2457, 0.0
    %v2482 = vmax.f32 %v2458, 0.0
    %v2483 = vmax.f32 %v2459, 0.0
    %v2484 = vmax.f32 %v2460, 0.0
    %v2485 = vmax.f32 %v2461, 0.0
    %v2486 = vmax.f32 %v2462, 0.0
    %v2487 = vmax.f32 %v2463, 0.0
    %v2488 = vmax.f32 %v2464, 0.0
    %v2489 = vmax.f32 %v2465, 0.0
    %v2490 = vmax.f32 %v2466, 0.0
    %v2491 = vmax.f32 %v2467, 0.0
    %v2492 = vmax.f32 %v2468, 0.0
    %v2493 = vmax.f32 %v2469, 0.0
    %v2494 = vmax.f32 %v2470, 0.0
    %v2495 = vmax.f32 %v2471, 0.0
    %v2496 = vpack.c.bf16 %v2474, %v2472
    %v2497 = vpack.c.bf16 %v2475, %v2473
    %v2498 = vpack.c.bf16 %v2476, %v2474
    %v2499 = vpack.c.bf16 %v2477, %v2475
    %v2500 = vpack.c.bf16 %v2478, %v2476
    %v2501 = vpack.c.bf16 %v2479, %v2477
    %v2502 = vpack.c.bf16 %v2480, %v2478
    %v2503 = vpack.c.bf16 %v2481, %v2479
    %v2504 = vpack.c.bf16 %v2482, %v2480
    %v2505 = vpack.c.bf16 %v2483, %v2481
    %v2506 = vpack.c.bf16 %v2484, %v2482
    %v2507 = vpack.c.bf16 %v2485, %v2483
    %v2508 = vpack.c.bf16 %v2486, %v2484
    %v2509 = vpack.c.bf16 %v2487, %v2485
    %v2510 = vpack.c.bf16 %v2488, %v2486
    %v2511 = vpack.c.bf16 %v2489, %v2487
    %v2512 = vpack.c.bf16 %v2490, %v2488
    %v2513 = vpack.c.bf16 %v2491, %v2489
    %v2514 = vpack.c.bf16 %v2492, %v2490
    %v2515 = vpack.c.bf16 %v2493, %v2491
    %v2516 = vpack.c.bf16 %v2494, %v2492
    %v2517 = vpack.c.bf16 %v2495, %v2493
    %v2518 = vld [vmem:[#allocation6] sm:$0xff]
    %v2519 = vld [vmem:[#allocation6 + $0x8] sm:$0xff]
    %v2520 = vld [vmem:[#allocation6 + $0x10] sm:$0xff]
    %v2521 = vld [vmem:[#allocation6 + $0x18] sm:$0xff]
    %v2522 = vld [vmem:[#allocation6 + $0x20] sm:$0xff]
    %v2523 = vld [vmem:[#allocation6 + $0x28] sm:$0xff]
    %v2524 = vld [vmem:[#allocation6 + $0x30] sm:$0xff]
    %v2525 = vld [vmem:[#allocation6 + $0x38] sm:$0xff]
    %v2526 = vld [vmem:[#allocation6 + $0x40] sm:$0xff]
    %v2527 = vld [vmem:[#allocation6 + $0x48] sm:$0xff]
    %v2528 = vld [vmem:[#allocation6 + $0x50] sm:$0xff]
    %v2529 = vld [vmem:[#allocation6 + $0x58] sm:$0xff]
    %v2530 = vld [vmem:[#allocation6 + $0x60] sm:$0xff]
    %v2531 = vld [vmem:[#allocation6 + $0x68] sm:$0xff]
    %v2532 = vld [vmem:[#allocation6 + $0x70] sm:$0xff]
    %v2533 = vld [vmem:[#allocation6 + $0x78] sm:$0xff]
    %v2534 = vld [vmem:[#allocation6 + $0x80] sm:$0xff]
    %v2535 = vld [vmem:[#allocation6 + $0x88] sm:$0xff]
    %v2536 = vld [vmem:[#allocation6 + $0x90] sm:$0xff]
    %v2537 = vld [vmem:[#allocation6 + $0x98] sm:$0xff]
    %v2538 = vld [vmem:[#allocation6 + $0xa0] sm:$0xff]
    %v2539 = vld [vmem:[#allocation6 + $0xa8] sm:$0xff]
    %v2540 = vld [vmem:[#allocation6 + $0xb0] sm:$0xff]
    %v2541 = vld [vmem:[#allocation6 + $0xb8] sm:$0xff]
    %v2542 = vld [vmem:[#allocation6 + $0xc0] sm:$0xff]
    %v2543 = vld [vmem:[#allocation6 + $0xc8] sm:$0xff]
    %v2544 = vld [vmem:[#allocation6 + $0xd0] sm:$0xff]
    %v2545 = vld [vmem:[#allocation6 + $0xd8] sm:$0xff]
    %v2546 = vld [vmem:[#allocation6 + $0xe0] sm:$0xff]
    %v2547 = vld [vmem:[#allocation6 + $0xe8] sm:$0xff]
    %v2548 = vld [vmem:[#allocation6 + $0xf0] sm:$0xff]
    %v2549 = vld [vmem:[#allocation6 + $0xf8] sm:$0xff]
    %v2550 = vld [vmem:[#allocation6 + $0x100] sm:$0xff]
    %v2551 = vld [vmem:[#allocation6 + $0x108] sm:$0xff]
    %v2552 = vld [vmem:[#allocation6 + $0x110] sm:$0xff]
    %v2553 = vld [vmem:[#allocation6 + $0x118] sm:$0xff]
    %v2554 = vld [vmem:[#allocation6 + $0x120] sm:$0xff]
    %v2555 = vld [vmem:[#allocation6 + $0x128] sm:$0xff]
    %v2556 = vld [vmem:[#allocation6 + $0x130] sm:$0xff]
    %v2557 = vld [vmem:[#allocation6 + $0x138] sm:$0xff]
    %v2558 = vld [vmem:[#allocation6 + $0x140] sm:$0xff]
    %v2559 = vld [vmem:[#allocation6 + $0x148] sm:$0xff]
    %v2560 = vld [vmem:[#allocation6 + $0x150] sm:$0xff]
    %v2561 = vld [vmem:[#allocation6 + $0x158] sm:$0xff]
    %v2562 = vld [vmem:[#allocation6 + $0x160] sm:$0xff]
    %v2563 = vld [vmem:[#allocation6 + $0x168] sm:$0xff]
    %v2564 = vld [vmem:[#allocation6 + $0x170] sm:$0xff]
    %v2565 = vld [vmem:[#allocation6 + $0x178] sm:$0xff]
    %v2566 = vld [vmem:[#allocation6 + $0x180] sm:$0xff]
    %v2567 = vld [vmem:[#allocation6 + $0x188] sm:$0xff]
    %v2568 = vld [vmem:[#allocation6 + $0x190] sm:$0xff]
    %v2569 = vld [vmem:[#allocation6 + $0x198] sm:$0xff]
    %v2570 = vld [vmem:[#allocation6 + $0x1a0] sm:$0xff]
    %v2571 = vld [vmem:[#allocation6 + $0x1a8] sm:$0xff]
    %v2572 = vld [vmem:[#allocation6 + $0x1b0] sm:$0xff]
    %v2573 = vld [vmem:[#allocation6 + $0x1b8] sm:$0xff]
    %v2574 = vld [vmem:[#allocation6 + $0x1c0] sm:$0xff]
    %v2575 = vld [vmem:[#allocation6 + $0x1c8] sm:$0xff]
    %v2576 = vld [vmem:[#allocation6 + $0x1d0] sm:$0xff]
    %v2577 = vld [vmem:[#allocation6 + $0x1d8] sm:$0xff]
    %v2578 = vld [vmem:[#allocation6 + $0x1e0] sm:$0xff]
    %v2579 = vld [vmem:[#allocation6 + $0x1e8] sm:$0xff]
    %v2580 = vld [vmem:[#allocation6 + $0x1f0] sm:$0xff]
    %v2581 = vld [vmem:[#allocation6 + $0x1f8] sm:$0xff]
    %v2582 = vld [vmem:[#allocation6 + $0x200] sm:$0xff]
    %v2583 = vld [vmem:[#allocation6 + $0x208] sm:$0xff]
    %v2584 = vld [vmem:[#allocation6 + $0x210] sm:$0xff]
    %v2585 = vld [vmem:[#allocation6 + $0x218] sm:$0xff]
    %v2586 = vld [vmem:[#allocation6 + $0x220] sm:$0xff]
    %v2587 = vld [vmem:[#allocation6 + $0x228] sm:$0xff]
    %v2588 = vld [vmem:[#allocation6 + $0x230] sm:$0xff]
    %v2589 = vld [vmem:[#allocation6 + $0x238] sm:$0xff]
    %v2590 = vld [vmem:[#allocation6 + $0x240] sm:$0xff]
    %v2591 = vld [vmem:[#allocation6 + $0x248] sm:$0xff]
    %v2592 = vld [vmem:[#allocation6 + $0x250] sm:$0xff]
    %v2593 = vld [vmem:[#allocation6 + $0x258] sm:$0xff]
    %v2594 = vld [vmem:[#allocation6 + $0x260] sm:$0xff]
    %v2595 = vld [vmem:[#allocation6 + $0x268] sm:$0xff]
    %v2596 = vld [vmem:[#allocation6 + $0x270] sm:$0xff]
    %v2597 = vld [vmem:[#allocation6 + $0x278] sm:$0xff]
    %v2598 = vld [vmem:[#allocation6 + $0x280] sm:$0xff]
    %v2599 = vld [vmem:[#allocation6 + $0x288] sm:$0xff]
    %v2600 = vld [vmem:[#allocation6 + $0x290] sm:$0xff]
    %v2601 = vld [vmem:[#allocation6 + $0x298] sm:$0xff]
    %v2602 = vld [vmem:[#allocation6 + $0x2a0] sm:$0xff]
    %v2603 = vld [vmem:[#allocation6 + $0x2a8] sm:$0xff]
    %v2604 = vld [vmem:[#allocation6 + $0x2b0] sm:$0xff]
    %v2605 = vld [vmem:[#allocation6 + $0x2b8] sm:$0xff]
    %v2606 = vld [vmem:[#allocation6 + $0x2c0] sm:$0xff]
    %v2607 = vld [vmem:[#allocation6 + $0x2c8] sm:$0xff]
    %v2608 = vld [vmem:[#allocation6 + $0x2d0] sm:$0xff]
    %v2609 = vld [vmem:[#allocation6 + $0x2d8] sm:$0xff]
    %v2610 = vld [vmem:[#allocation6 + $0x2e0] sm:$0xff]
    %v2611 = vld [vmem:[#allocation6 + $0x2e8] sm:$0xff]
    %v2612 = vld [vmem:[#allocation6 + $0x2f0] sm:$0xff]
    %v2613 = vld [vmem:[#allocation6 + $0x2f8] sm:$0xff]
    %v2614 = vld [vmem:[#allocation6 + $0x300] sm:$0xff]
    %v2615 = vld [vmem:[#allocation6 + $0x308] sm:$0xff]
    %v2616 = vld [vmem:[#allocation6 + $0x310] sm:$0xff]
    %v2617 = vld [vmem:[#allocation6 + $0x318] sm:$0xff]
    %v2618 = vld [vmem:[#allocation6 + $0x320] sm:$0xff]
    %v2619 = vld [vmem:[#allocation6 + $0x328] sm:$0xff]
    %v2620 = vld [vmem:[#allocation6 + $0x330] sm:$0xff]
    %v2621 = vld [vmem:[#allocation6 + $0x338] sm:$0xff]
    %v2622 = vld [vmem:[#allocation6 + $0x340] sm:$0xff]
    %v2623 = vld [vmem:[#allocation6 + $0x348] sm:$0xff]
    %v2624 = vld [vmem:[#allocation6 + $0x350] sm:$0xff]
    %v2625 = vld [vmem:[#allocation6 + $0x358] sm:$0xff]
    %v2626 = vld [vmem:[#allocation6 + $0x360] sm:$0xff]
    %v2627 = vld [vmem:[#allocation6 + $0x368] sm:$0xff]
    %v2628 = vld [vmem:[#allocation6 + $0x370] sm:$0xff]
    %v2629 = vld [vmem:[#allocation6 + $0x378] sm:$0xff]
    %v2630 = vld [vmem:[#allocation6 + $0x380] sm:$0xff]
    %v2631 = vld [vmem:[#allocation6 + $0x388] sm:$0xff]
    %v2632 = vld [vmem:[#allocation6 + $0x390] sm:$0xff]
    %v2633 = vld [vmem:[#allocation6 + $0x398] sm:$0xff]
    %v2634 = vld [vmem:[#allocation6 + $0x3a0] sm:$0xff]
    %v2635 = vld [vmem:[#allocation6 + $0x3a8] sm:$0xff]
    %v2636 = vld [vmem:[#allocation6 + $0x3b0] sm:$0xff]
    %v2637 = vld [vmem:[#allocation6 + $0x3b8] sm:$0xff]
    %v2638 = vld [vmem:[#allocation6 + $0x3c0] sm:$0xff]
    %v2639 = vld [vmem:[#allocation6 + $0x3c8] sm:$0xff]
    %v2640 = vld [vmem:[#allocation6 + $0x3d0] sm:$0xff]
    %v2641 = vld [vmem:[#allocation6 + $0x3d8] sm:$0xff]
    %v2642 = vld [vmem:[#allocation6 + $0x3e0] sm:$0xff]
    %v2643 = vld [vmem:[#allocation6 + $0x3e8] sm:$0xff]
    %v2644 = vld [vmem:[#allocation6 + $0x3f0] sm:$0xff]
    %v2645 = vld [vmem:[#allocation6 + $0x3f8] sm:$0xff]
    %v2646 = vld [vmem:[#allocation6 + $0x400] sm:$0xff]
    %v2647 = vld [vmem:[#allocation6 + $0x408] sm:$0xff]
    %v2648 = vld [vmem:[#allocation6 + $0x410] sm:$0xff]
    %v2649 = vld [vmem:[#allocation6 + $0x418] sm:$0xff]
    %v2650 = vld [vmem:[#allocation6 + $0x420] sm:$0xff]
    %v2651 = vld [vmem:[#allocation6 + $0x428] sm:$0xff]
    %v2652 = vld [vmem:[#allocation6 + $0x430] sm:$0xff]
    %v2653 = vld [vmem:[#allocation6 + $0x438] sm:$0xff]
    %v2654 = vld [vmem:[#allocation6 + $0x440] sm:$0xff]
    %v2655 = vld [vmem:[#allocation6 + $0x448] sm:$0xff]
    %v2656 = vld [vmem:[#allocation6 + $0x450] sm:$0xff]
    %v2657 = vld [vmem:[#allocation6 + $0x458] sm:$0xff]
    %v2658 = vld [vmem:[#allocation6 + $0x460] sm:$0xff]
    %v2659 = vld [vmem:[#allocation6 + $0x468] sm:$0xff]
    %v2660 = vld [vmem:[#allocation6 + $0x470] sm:$0xff]
    %v2661 = vld [vmem:[#allocation6 + $0x478] sm:$0xff]
    %v2662 = vld [vmem:[#allocation6 + $0x480] sm:$0xff]
    %v2663 = vld [vmem:[#allocation6 + $0x488] sm:$0xff]
    %v2664 = vld [vmem:[#allocation6 + $0x490] sm:$0xff]
    %v2665 = vld [vmem:[#allocation6 + $0x498] sm:$0xff]
    %v2666 = vld [vmem:[#allocation6 + $0x4a0] sm:$0xff]
    %v2667 = vld [vmem:[#allocation6 + $0x4a8] sm:$0xff]
    %v2668 = vld [vmem:[#allocation6 + $0x4b0] sm:$0xff]
    %v2669 = vld [vmem:[#allocation6 + $0x4b8] sm:$0xff]
    %v2670 = vld [vmem:[#allocation6 + $0x4c0] sm:$0xff]
    %v2671 = vld [vmem:[#allocation6 + $0x4c8] sm:$0xff]
    %v2672 = vld [vmem:[#allocation6 + $0x4d0] sm:$0xff]
    %v2673 = vld [vmem:[#allocation6 + $0x4d8] sm:$0xff]
    %v2674 = vld [vmem:[#allocation6 + $0x4e0] sm:$0xff]
    %v2675 = vld [vmem:[#allocation6 + $0x4e8] sm:$0xff]
    %v2676 = vld [vmem:[#allocation6 + $0x4f0] sm:$0xff]
    %v2677 = vld [vmem:[#allocation6 + $0x4f8] sm:$0xff]
    %v2678 = vld [vmem:[#allocation6 + $0x500] sm:$0xff]
    %v2679 = vld [vmem:[#allocation6 + $0x508] sm:$0xff]
    %v2680 = vld [vmem:[#allocation6 + $0x510] sm:$0xff]
    %v2681 = vld [vmem:[#allocation6 + $0x518] sm:$0xff]
    %v2682 = vld [vmem:[#allocation6 + $0x520] sm:$0xff]
    %v2683 = vld [vmem:[#allocation6 + $0x528] sm:$0xff]
    %v2684 = vld [vmem:[#allocation6 + $0x530] sm:$0xff]
    %v2685 = vld [vmem:[#allocation6 + $0x538] sm:$0xff]
    %v2686 = vld [vmem:[#allocation6 + $0x540] sm:$0xff]
    %v2687 = vld [vmem:[#allocation6 + $0x548] sm:$0xff]
    %v2688 = vld [vmem:[#allocation6 + $0x550] sm:$0xff]
    %v2689 = vld [vmem:[#allocation6 + $0x558] sm:$0xff]
    %v2690 = vld [vmem:[#allocation6 + $0x560] sm:$0xff]
    %v2691 = vld [vmem:[#allocation6 + $0x568] sm:$0xff]
    %v2692 = vld [vmem:[#allocation6 + $0x570] sm:$0xff]
    %v2693 = vld [vmem:[#allocation6 + $0x578] sm:$0xff]
    %v2694 = vld [vmem:[#allocation6 + $0x580] sm:$0xff]
    %v2695 = vld [vmem:[#allocation6 + $0x588] sm:$0xff]
    %v2696 = vld [vmem:[#allocation6 + $0x590] sm:$0xff]
    %v2697 = vld [vmem:[#allocation6 + $0x598] sm:$0xff]
    %v2698 = vld [vmem:[#allocation6 + $0x5a0] sm:$0xff]
    %v2699 = vld [vmem:[#allocation6 + $0x5a8] sm:$0xff]
    %v2700 = vld [vmem:[#allocation6 + $0x5b0] sm:$0xff]
    %v2701 = vld [vmem:[#allocation6 + $0x5b8] sm:$0xff]
    %v2702 = vld [vmem:[#allocation6 + $0x5c0] sm:$0xff]
    %v2703 = vld [vmem:[#allocation6 + $0x5c8] sm:$0xff]
    %v2704 = vld [vmem:[#allocation6 + $0x5d0] sm:$0xff]
    %v2705 = vld [vmem:[#allocation6 + $0x5d8] sm:$0xff]
    %v2706 = vld [vmem:[#allocation6 + $0x5e0] sm:$0xff]
    %v2707 = vld [vmem:[#allocation6 + $0x5e8] sm:$0xff]
    %v2708 = vld [vmem:[#allocation6 + $0x5f0] sm:$0xff]
    %v2709 = vld [vmem:[#allocation6 + $0x5f8] sm:$0xff]
    %v2710 = vld [vmem:[#allocation6 + $0x600] sm:$0xff]
    %v2711 = vld [vmem:[#allocation6 + $0x608] sm:$0xff]
    %v2712 = vld [vmem:[#allocation6 + $0x610] sm:$0xff]
    %v2713 = vld [vmem:[#allocation6 + $0x618] sm:$0xff]
    %v2714 = vld [vmem:[#allocation6 + $0x620] sm:$0xff]
    %v2715 = vld [vmem:[#allocation6 + $0x628] sm:$0xff]
    %v2716 = vld [vmem:[#allocation6 + $0x630] sm:$0xff]
    %v2717 = vld [vmem:[#allocation6 + $0x638] sm:$0xff]
    %v2718 = vld [vmem:[#allocation6 + $0x640] sm:$0xff]
    %v2719 = vld [vmem:[#allocation6 + $0x648] sm:$0xff]
    %v2720 = vld [vmem:[#allocation6 + $0x650] sm:$0xff]
    %v2721 = vld [vmem:[#allocation6 + $0x658] sm:$0xff]
    %v2722 = vld [vmem:[#allocation6 + $0x660] sm:$0xff]
    %v2723 = vld [vmem:[#allocation6 + $0x668] sm:$0xff]
    %v2724 = vld [vmem:[#allocation6 + $0x670] sm:$0xff]
    %v2725 = vld [vmem:[#allocation6 + $0x678] sm:$0xff]
    %v2726 = vld [vmem:[#allocation6 + $0x680] sm:$0xff]
    %v2727 = vld [vmem:[#allocation6 + $0x688] sm:$0xff]
    %v2728 = vld [vmem:[#allocation6 + $0x690] sm:$0xff]
    %v2729 = vld [vmem:[#allocation6 + $0x698] sm:$0xff]
    %v2730 = vld [vmem:[#allocation6 + $0x6a0] sm:$0xff]
    %v2731 = vld [vmem:[#allocation6 + $0x6a8] sm:$0xff]
    %v2732 = vld [vmem:[#allocation6 + $0x6b0] sm:$0xff]
    %v2733 = vld [vmem:[#allocation6 + $0x6b8] sm:$0xff]
    %v2734 = vld [vmem:[#allocation6 + $0x6c0] sm:$0xff]
    %v2735 = vld [vmem:[#allocation6 + $0x6c8] sm:$0xff]
    %v2736 = vld [vmem:[#allocation6 + $0x6d0] sm:$0xff]
    %v2737 = vld [vmem:[#allocation6 + $0x6d8] sm:$0xff]
    %v2738 = vld [vmem:[#allocation6 + $0x6e0] sm:$0xff]
    %v2739 = vld [vmem:[#allocation6 + $0x6e8] sm:$0xff]
    %v2740 = vld [vmem:[#allocation6 + $0x6f0] sm:$0xff]
    %v2741 = vld [vmem:[#allocation6 + $0x6f8] sm:$0xff]
    %v2742 = vld [vmem:[#allocation6 + $0x700] sm:$0xff]
    %v2743 = vld [vmem:[#allocation6 + $0x708] sm:$0xff]
    %v2744 = vld [vmem:[#allocation6 + $0x710] sm:$0xff]
    %v2745 = vld [vmem:[#allocation6 + $0x718] sm:$0xff]
    %v2746 = vld [vmem:[#allocation6 + $0x720] sm:$0xff]
    %v2747 = vld [vmem:[#allocation6 + $0x728] sm:$0xff]
    %v2748 = vld [vmem:[#allocation6 + $0x730] sm:$0xff]
    %v2749 = vld [vmem:[#allocation6 + $0x738] sm:$0xff]
    %v2750 = vld [vmem:[#allocation6 + $0x740] sm:$0xff]
    %v2751 = vld [vmem:[#allocation6 + $0x748] sm:$0xff]
    %v2752 = vld [vmem:[#allocation6 + $0x750] sm:$0xff]
    %v2753 = vld [vmem:[#allocation6 + $0x758] sm:$0xff]
    %v2754 = vld [vmem:[#allocation6 + $0x760] sm:$0xff]
    %v2755 = vld [vmem:[#allocation6 + $0x768] sm:$0xff]
    %v2756 = vld [vmem:[#allocation6 + $0x770] sm:$0xff]
    %v2757 = vld [vmem:[#allocation6 + $0x778] sm:$0xff]
    %v2758 = vld [vmem:[#allocation6 + $0x780] sm:$0xff]
    %v2759 = vld [vmem:[#allocation6 + $0x788] sm:$0xff]
    %v2760 = vld [vmem:[#allocation6 + $0x790] sm:$0xff]
    %v2761 = vld [vmem:[#allocation6 + $0x798] sm:$0xff]
    %v2762 = vld [vmem:[#allocation6 + $0x7a0] sm:$0xff]
    %v2763 = vld [vmem:[#allocation6 + $0x7a8] sm:$0xff]
    %v2764 = vld [vmem:[#allocation6 + $0x7b0] sm:$0xff]
    %v2765 = vld [vmem:[#allocation6 + $0x7b8] sm:$0xff]
    %v2766 = vld [vmem:[#allocation6 + $0x7c0] sm:$0xff]
    %v2767 = vld [vmem:[#allocation6 + $0x7c8] sm:$0xff]
    %v2768 = vld [vmem:[#allocation6 + $0x7d0] sm:$0xff]
    %v2769 = vld [vmem:[#allocation6 + $0x7d8] sm:$0xff]
    %v2770 = vld [vmem:[#allocation6 + $0x7e0] sm:$0xff]
    %v2771 = vld [vmem:[#allocation6 + $0x7e8] sm:$0xff]
    %v2772 = vld [vmem:[#allocation6 + $0x7f0] sm:$0xff]
    %v2773 = vld [vmem:[#allocation6 + $0x7f8] sm:$0xff]
    %v2774 = vld [vmem:[#allocation6 + $0x800] sm:$0xff]
    %v2775 = vld [vmem:[#allocation6 + $0x808] sm:$0xff]
    %v2776 = vld [vmem:[#allocation6 + $0x810] sm:$0xff]
    %v2777 = vld [vmem:[#allocation6 + $0x818] sm:$0xff]
    %v2778 = vld [vmem:[#allocation6 + $0x820] sm:$0xff]
    %v2779 = vld [vmem:[#allocation6 + $0x828] sm:$0xff]
    %v2780 = vld [vmem:[#allocation6 + $0x830] sm:$0xff]
    %v2781 = vld [vmem:[#allocation6 + $0x838] sm:$0xff]
    %v2782 = vld [vmem:[#allocation6 + $0x840] sm:$0xff]
    %v2783 = vld [vmem:[#allocation6 + $0x848] sm:$0xff]
    %v2784 = vld [vmem:[#allocation6 + $0x850] sm:$0xff]
    %v2785 = vld [vmem:[#allocation6 + $0x858] sm:$0xff]
    %v2786 = vld [vmem:[#allocation6 + $0x860] sm:$0xff]
    %v2787 = vld [vmem:[#allocation6 + $0x868] sm:$0xff]
    %v2788 = vld [vmem:[#allocation6 + $0x870] sm:$0xff]
    %v2789 = vld [vmem:[#allocation6 + $0x878] sm:$0xff]
    %v2790 = vld [vmem:[#allocation6 + $0x880] sm:$0xff]
    %v2791 = vld [vmem:[#allocation6 + $0x888] sm:$0xff]
    %v2792 = vld [vmem:[#allocation6 + $0x890] sm:$0xff]
    %v2793 = vld [vmem:[#allocation6 + $0x898] sm:$0xff]
    %v2794 = vld [vmem:[#allocation6 + $0x8a0] sm:$0xff]
    %v2795 = vld [vmem:[#allocation6 + $0x8a8] sm:$0xff]
    %v2796 = vld [vmem:[#allocation6 + $0x8b0] sm:$0xff]
    %v2797 = vld [vmem:[#allocation6 + $0x8b8] sm:$0xff]
    %v2798 = vld [vmem:[#allocation6 + $0x8c0] sm:$0xff]
    %v2799 = vld [vmem:[#allocation6 + $0x8c8] sm:$0xff]
    %v2800 = vld [vmem:[#allocation6 + $0x8d0] sm:$0xff]
    %v2801 = vld [vmem:[#allocation6 + $0x8d8] sm:$0xff]
    %v2802 = vld [vmem:[#allocation6 + $0x8e0] sm:$0xff]
    %v2803 = vld [vmem:[#allocation6 + $0x8e8] sm:$0xff]
    %v2804 = vld [vmem:[#allocation6 + $0x8f0] sm:$0xff]
    %v2805 = vld [vmem:[#allocation6 + $0x8f8] sm:$0xff]
    %v2806 = vld [vmem:[#allocation6 + $0x900] sm:$0xff]
    %v2807 = vld [vmem:[#allocation6 + $0x908] sm:$0xff]
    %v2808 = vld [vmem:[#allocation6 + $0x910] sm:$0xff]
    %v2809 = vld [vmem:[#allocation6 + $0x918] sm:$0xff]
    %v2810 = vld [vmem:[#allocation6 + $0x920] sm:$0xff]
    %v2811 = vld [vmem:[#allocation6 + $0x928] sm:$0xff]
    %v2812 = vld [vmem:[#allocation6 + $0x930] sm:$0xff]
    %v2813 = vld [vmem:[#allocation6 + $0x938] sm:$0xff]
    %v2814 = vld [vmem:[#allocation6 + $0x940] sm:$0xff]
    %v2815 = vld [vmem:[#allocation6 + $0x948] sm:$0xff]
    %v2816 = vld [vmem:[#allocation6 + $0x950] sm:$0xff]
    %v2817 = vld [vmem:[#allocation6 + $0x958] sm:$0xff]
    %v2818 = vld [vmem:[#allocation6 + $0x960] sm:$0xff]
    %v2819 = vld [vmem:[#allocation6 + $0x968] sm:$0xff]
    %v2820 = vld [vmem:[#allocation6 + $0x970] sm:$0xff]
    %v2821 = vld [vmem:[#allocation6 + $0x978] sm:$0xff]
    %v2822 = vld [vmem:[#allocation6 + $0x980] sm:$0xff]
    %v2823 = vld [vmem:[#allocation6 + $0x988] sm:$0xff]
    %v2824 = vld [vmem:[#allocation6 + $0x990] sm:$0xff]
    %v2825 = vld [vmem:[#allocation6 + $0x998] sm:$0xff]
    %v2826 = vld [vmem:[#allocation6 + $0x9a0] sm:$0xff]
    %v2827 = vld [vmem:[#allocation6 + $0x9a8] sm:$0xff]
    %v2828 = vld [vmem:[#allocation6 + $0x9b0] sm:$0xff]
    %v2829 = vld [vmem:[#allocation6 + $0x9b8] sm:$0xff]
    %v2830 = vld [vmem:[#allocation6 + $0x9c0] sm:$0xff]
    %v2831 = vld [vmem:[#allocation6 + $0x9c8] sm:$0xff]
    %v2832 = vld [vmem:[#allocation6 + $0x9d0] sm:$0xff]
    %v2833 = vld [vmem:[#allocation6 + $0x9d8] sm:$0xff]
    %v2834 = vld [vmem:[#allocation6 + $0x9e0] sm:$0xff]
    %v2835 = vld [vmem:[#allocation6 + $0x9e8] sm:$0xff]
    %v2836 = vld [vmem:[#allocation6 + $0x9f0] sm:$0xff]
    %v2837 = vld [vmem:[#allocation6 + $0x9f8] sm:$0xff]
    %v3158 = vunpack.c.l.b16 %v2518
    %v3159 = vunpack.c.h.b16 %v2518
    %v3160 = vunpack.c.l.b16 %v2519
    %v3161 = vunpack.c.h.b16 %v2519
    %v3162 = vunpack.c.l.b16 %v2520
    %v3163 = vunpack.c.h.b16 %v2520
    %v3164 = vunpack.c.l.b16 %v2521
    %v3165 = vunpack.c.h.b16 %v2521
    %v3166 = vunpack.c.l.b16 %v2522
    %v3167 = vunpack.c.h.b16 %v2522
    %v3168 = vunpack.c.l.b16 %v2523
    %v3169 = vunpack.c.h.b16 %v2523
    %v3170 = vunpack.c.l.b16 %v2524
    %v3171 = vunpack.c.h.b16 %v2524
    %v3172 = vunpack.c.l.b16 %v2525
    %v3173 = vunpack.c.h.b16 %v2525
    %v3174 = vunpack.c.l.b16 %v2526
    %v3175 = vunpack.c.h.b16 %v2526
    %v3176 = vunpack.c.l.b16 %v2527
    %v3177 = vunpack.c.h.b16 %v2527
    %v3178 = vunpack.c.l.b16 %v2528
    %v3179 = vunpack.c.h.b16 %v2528
    %v3180 = vunpack.c.l.b16 %v2529
    %v3181 = vunpack.c.h.b16 %v2529
    %v3182 = vunpack.c.l.b16 %v2530
    %v3183 = vunpack.c.h.b16 %v2530
    %v3184 = vunpack.c.l.b16 %v2531
    %v3185 = vunpack.c.h.b16 %v2531
    %v3186 = vunpack.c.l.b16 %v2532
    %v3187 = vunpack.c.h.b16 %v2532
    %v3188 = vunpack.c.l.b16 %v2533
    %v3189 = vunpack.c.h.b16 %v2533
    %v3190 = vunpack.c.l.b16 %v2534
    %v3191 = vunpack.c.h.b16 %v2534
    %v3192 = vunpack.c.l.b16 %v2535
    %v3193 = vunpack.c.h.b16 %v2535
    %v3194 = vunpack.c.l.b16 %v2536
    %v3195 = vunpack.c.h.b16 %v2536
    %v3196 = vunpack.c.l.b16 %v2537
    %v3197 = vunpack.c.h.b16 %v2537
    %v3198 = vunpack.c.l.b16 %v2538
    %v3199 = vunpack.c.h.b16 %v2538
    %v3200 = vunpack.c.l.b16 %v2539
    %v3201 = vunpack.c.h.b16 %v2539
    %v3202 = vunpack.c.l.b16 %v2540
    %v3203 = vunpack.c.h.b16 %v2540
    %v3204 = vunpack.c.l.b16 %v2541
    %v3205 = vunpack.c.h.b16 %v2541
    %v3206 = vunpack.c.l.b16 %v2542
    %v3207 = vunpack.c.h.b16 %v2542
    %v3208 = vunpack.c.l.b16 %v2543
    %v3209 = vunpack.c.h.b16 %v2543
    %v3210 = vunpack.c.l.b16 %v2544
    %v3211 = vunpack.c.h.b16 %v2544
    %v3212 = vunpack.c.l.b16 %v2545
    %v3213 = vunpack.c.h.b16 %v2545
    %v3214 = vunpack.c.l.b16 %v2546
    %v3215 = vunpack.c.h.b16 %v2546
    %v3216 = vunpack.c.l.b16 %v2547
    %v3217 = vunpack.c.h.b16 %v2547
    %v3218 = vunpack.c.l.b16 %v2548
    %v3219 = vunpack.c.h.b16 %v2548
    %v3220 = vunpack.c.l.b16 %v2549
    %v3221 = vunpack.c.h.b16 %v2549
    %v3222 = vunpack.c.l.b16 %v2550
    %v3223 = vunpack.c.h.b16 %v2550
    %v3224 = vunpack.c.l.b16 %v2551
    %v3225 = vunpack.c.h.b16 %v2551
    %v3226 = vunpack.c.l.b16 %v2552
    %v3227 = vunpack.c.h.b16 %v2552
    %v3228 = vunpack.c.l.b16 %v2553
    %v3229 = vunpack.c.h.b16 %v2553
    %v3230 = vunpack.c.l.b16 %v2554
    %v3231 = vunpack.c.h.b16 %v2554
    %v3232 = vunpack.c.l.b16 %v2555
    %v3233 = vunpack.c.h.b16 %v2555
    %v3234 = vunpack.c.l.b16 %v2556
    %v3235 = vunpack.c.h.b16 %v2556
    %v3236 = vunpack.c.l.b16 %v2557
    %v3237 = vunpack.c.h.b16 %v2557
    %v3238 = vunpack.c.l.b16 %v2558
    %v3239 = vunpack.c.h.b16 %v2558
    %v3240 = vunpack.c.l.b16 %v2559
    %v3241 = vunpack.c.h.b16 %v2559
    %v3242 = vunpack.c.l.b16 %v2560
    %v3243 = vunpack.c.h.b16 %v2560
    %v3244 = vunpack.c.l.b16 %v2561
    %v3245 = vunpack.c.h.b16 %v2561
    %v3246 = vunpack.c.l.b16 %v2562
    %v3247 = vunpack.c.h.b16 %v2562
    %v3248 = vunpack.c.l.b16 %v2563
    %v3249 = vunpack.c.h.b16 %v2563
    %v3250 = vunpack.c.l.b16 %v2564
    %v3251 = vunpack.c.h.b16 %v2564
    %v3252 = vunpack.c.l.b16 %v2565
    %v3253 = vunpack.c.h.b16 %v2565
    %v3254 = vunpack.c.l.b16 %v2566
    %v3255 = vunpack.c.h.b16 %v2566
    %v3256 = vunpack.c.l.b16 %v2567
    %v3257 = vunpack.c.h.b16 %v2567
    %v3258 = vunpack.c.l.b16 %v2568
    %v3259 = vunpack.c.h.b16 %v2568
    %v3260 = vunpack.c.l.b16 %v2569
    %v3261 = vunpack.c.h.b16 %v2569
    %v3262 = vunpack.c.l.b16 %v2570
    %v3263 = vunpack.c.h.b16 %v2570
    %v3264 = vunpack.c.l.b16 %v2571
    %v3265 = vunpack.c.h.b16 %v2571
    %v3266 = vunpack.c.l.b16 %v2572
    %v3267 = vunpack.c.h.b16 %v2572
    %v3268 = vunpack.c.l.b16 %v2573
    %v3269 = vunpack.c.h.b16 %v2573
    %v3270 = vunpack.c.l.b16 %v2574
    %v3271 = vunpack.c.h.b16 %v2574
    %v3272 = vunpack.c.l.b16 %v2575
    %v3273 = vunpack.c.h.b16 %v2575
    %v3274 = vunpack.c.l.b16 %v2576
    %v3275 = vunpack.c.h.b16 %v2576
    %v3276 = vunpack.c.l.b16 %v2577
    %v3277 = vunpack.c.h.b16 %v2577
    %v3278 = vunpack.c.l.b16 %v2578
    %v3279 = vunpack.c.h.b16 %v2578
    %v3280 = vunpack.c.l.b16 %v2579
    %v3281 = vunpack.c.h.b16 %v2579
    %v3282 = vunpack.c.l.b16 %v2580
    %v3283 = vunpack.c.h.b16 %v2580
    %v3284 = vunpack.c.l.b16 %v2581
    %v3285 = vunpack.c.h.b16 %v2581
    %v3286 = vunpack.c.l.b16 %v2582
    %v3287 = vunpack.c.h.b16 %v2582
    %v3288 = vunpack.c.l.b16 %v2583
    %v3289 = vunpack.c.h.b16 %v2583
    %v3290 = vunpack.c.l.b16 %v2584
    %v3291 = vunpack.c.h.b16 %v2584
    %v3292 = vunpack.c.l.b16 %v2585
    %v3293 = vunpack.c.h.b16 %v2585
    %v3294 = vunpack.c.l.b16 %v2586
    %v3295 = vunpack.c.h.b16 %v2586
    %v3296 = vunpack.c.l.b16 %v2587
    %v3297 = vunpack.c.h.b16 %v2587
    %v3298 = vunpack.c.l.b16 %v2588
    %v3299 = vunpack.c.h.b16 %v2588
    %v3300 = vunpack.c.l.b16 %v2589
    %v3301 = vunpack.c.h.b16 %v2589
    %v3302 = vunpack.c.l.b16 %v2590
    %v3303 = vunpack.c.h.b16 %v2590
    %v3304 = vunpack.c.l.b16 %v2591
    %v3305 = vunpack.c.h.b16 %v2591
    %v3306 = vunpack.c.l.b16 %v2592
    %v3307 = vunpack.c.h.b16 %v2592
    %v3308 = vunpack.c.l.b16 %v2593
    %v3309 = vunpack.c.h.b16 %v2593
    %v3310 = vunpack.c.l.b16 %v2594
    %v3311 = vunpack.c.h.b16 %v2594
    %v3312 = vunpack.c.l.b16 %v2595
    %v3313 = vunpack.c.h.b16 %v2595
    %v3314 = vunpack.c.l.b16 %v2596
    %v3315 = vunpack.c.h.b16 %v2596
    %v3316 = vunpack.c.l.b16 %v2597
    %v3317 = vunpack.c.h.b16 %v2597
    %v3318 = vunpack.c.l.b16 %v2598
    %v3319 = vunpack.c.h.b16 %v2598
    %v3320 = vunpack.c.l.b16 %v2599
    %v3321 = vunpack.c.h.b16 %v2599
    %v3322 = vunpack.c.l.b16 %v2600
    %v3323 = vunpack.c.h.b16 %v2600
    %v3324 = vunpack.c.l.b16 %v2601
    %v3325 = vunpack.c.h.b16 %v2601
    %v3326 = vunpack.c.l.b16 %v2602
    %v3327 = vunpack.c.h.b16 %v2602
    %v3328 = vunpack.c.l.b16 %v2603
    %v3329 = vunpack.c.h.b16 %v2603
    %v3330 = vunpack.c.l.b16 %v2604
    %v3331 = vunpack.c.h.b16 %v2604
    %v3332 = vunpack.c.l.b16 %v2605
    %v3333 = vunpack.c.h.b16 %v2605
    %v3334 = vunpack.c.l.b16 %v2606
    %v3335 = vunpack.c.h.b16 %v2606
    %v3336 = vunpack.c.l.b16 %v2607
    %v3337 = vunpack.c.h.b16 %v2607
    %v3338 = vunpack.c.l.b16 %v2608
    %v3339 = vunpack.c.h.b16 %v2608
    %v3340 = vunpack.c.l.b16 %v2609
    %v3341 = vunpack.c.h.b16 %v2609
    %v3342 = vunpack.c.l.b16 %v2610
    %v3343 = vunpack.c.h.b16 %v2610
    %v3344 = vunpack.c.l.b16 %v2611
    %v3345 = vunpack.c.h.b16 %v2611
    %v3346 = vunpack.c.l.b16 %v2612
    %v3347 = vunpack.c.h.b16 %v2612
    %v3348 = vunpack.c.l.b16 %v2613
    %v3349 = vunpack.c.h.b16 %v2613
    %v3350 = vunpack.c.l.b16 %v2614
    %v3351 = vunpack.c.h.b16 %v2614
    %v3352 = vunpack.c.l.b16 %v2615
    %v3353 = vunpack.c.h.b16 %v2615
    %v3354 = vunpack.c.l.b16 %v2616
    %v3355 = vunpack.c.h.b16 %v2616
    %v3356 = vunpack.c.l.b16 %v2617
    %v3357 = vunpack.c.h.b16 %v2617
    %v3358 = vunpack.c.l.b16 %v2618
    %v3359 = vunpack.c.h.b16 %v2618
    %v3360 = vunpack.c.l.b16 %v2619
    %v3361 = vunpack.c.h.b16 %v2619
    %v3362 = vunpack.c.l.b16 %v2620
    %v3363 = vunpack.c.h.b16 %v2620
    %v3364 = vunpack.c.l.b16 %v2621
    %v3365 = vunpack.c.h.b16 %v2621
    %v3366 = vunpack.c.l.b16 %v2622
    %v3367 = vunpack.c.h.b16 %v2622
    %v3368 = vunpack.c.l.b16 %v2623
    %v3369 = vunpack.c.h.b16 %v2623
    %v3370 = vunpack.c.l.b16 %v2624
    %v3371 = vunpack.c.h.b16 %v2624
    %v3372 = vunpack.c.l.b16 %v2625
    %v3373 = vunpack.c.h.b16 %v2625
    %v3374 = vunpack.c.l.b16 %v2626
    %v3375 = vunpack.c.h.b16 %v2626
    %v3376 = vunpack.c.l.b16 %v2627
    %v3377 = vunpack.c.h.b16 %v2627
    %v3378 = vunpack.c.l.b16 %v2628
    %v3379 = vunpack.c.h.b16 %v2628
    %v3380 = vunpack.c.l.b16 %v2629
    %v3381 = vunpack.c.h.b16 %v2629
    %v3382 = vunpack.c.l.b16 %v2630
    %v3383 = vunpack.c.h.b16 %v2630
    %v3384 = vunpack.c.l.b16 %v2631
    %v3385 = vunpack.c.h.b16 %v2631
    %v3386 = vunpack.c.l.b16 %v2632
    %v3387 = vunpack.c.h.b16 %v2632
    %v3388 = vunpack.c.l.b16 %v2633
    %v3389 = vunpack.c.h.b16 %v2633
    %v3390 = vunpack.c.l.b16 %v2634
    %v3391 = vunpack.c.h.b16 %v2634
    %v3392 = vunpack.c.l.b16 %v2635
    %v3393 = vunpack.c.h.b16 %v2635
    %v3394 = vunpack.c.l.b16 %v2636
    %v3395 = vunpack.c.h.b16 %v2636
    %v3396 = vunpack.c.l.b16 %v2637
    %v3397 = vunpack.c.h.b16 %v2637
    %v3398 = vunpack.c.l.b16 %v2638
    %v3399 = vunpack.c.h.b16 %v2638
    %v3400 = vunpack.c.l.b16 %v2639
    %v3401 = vunpack.c.h.b16 %v2639
    %v3402 = vunpack.c.l.b16 %v2640
    %v3403 = vunpack.c.h.b16 %v2640
    %v3404 = vunpack.c.l.b16 %v2641
    %v3405 = vunpack.c.h.b16 %v2641
    %v3406 = vunpack.c.l.b16 %v2642
    %v3407 = vunpack.c.h.b16 %v2642
    %v3408 = vunpack.c.l.b16 %v2643
    %v3409 = vunpack.c.h.b16 %v2643
    %v3410 = vunpack.c.l.b16 %v2644
    %v3411 = vunpack.c.h.b16 %v2644
    %v3412 = vunpack.c.l.b16 %v2645
    %v3413 = vunpack.c.h.b16 %v2645
    %v3414 = vunpack.c.l.b16 %v2646
    %v3415 = vunpack.c.h.b16 %v2646
    %v3416 = vunpack.c.l.b16 %v2647
    %v3417 = vunpack.c.h.b16 %v2647
    %v3418 = vunpack.c.l.b16 %v2648
    %v3419 = vunpack.c.h.b16 %v2648
    %v3420 = vunpack.c.l.b16 %v2649
    %v3421 = vunpack.c.h.b16 %v2649
    %v3422 = vunpack.c.l.b16 %v2650
    %v3423 = vunpack.c.h.b16 %v2650
    %v3424 = vunpack.c.l.b16 %v2651
    %v3425 = vunpack.c.h.b16 %v2651
    %v3426 = vunpack.c.l.b16 %v2652
    %v3427 = vunpack.c.h.b16 %v2652
    %v3428 = vunpack.c.l.b16 %v2653
    %v3429 = vunpack.c.h.b16 %v2653
    %v3430 = vunpack.c.l.b16 %v2654
    %v3431 = vunpack.c.h.b16 %v2654
    %v3432 = vunpack.c.l.b16 %v2655
    %v3433 = vunpack.c.h.b16 %v2655
    %v3434 = vunpack.c.l.b16 %v2656
    %v3435 = vunpack.c.h.b16 %v2656
    %v3436 = vunpack.c.l.b16 %v2657
    %v3437 = vunpack.c.h.b16 %v2657
    %v3438 = vunpack.c.l.b16 %v2658
    %v3439 = vunpack.c.h.b16 %v2658
    %v3440 = vunpack.c.l.b16 %v2659
    %v3441 = vunpack.c.h.b16 %v2659
    %v3442 = vunpack.c.l.b16 %v2660
    %v3443 = vunpack.c.h.b16 %v2660
    %v3444 = vunpack.c.l.b16 %v2661
    %v3445 = vunpack.c.h.b16 %v2661
    %v3446 = vunpack.c.l.b16 %v2662
    %v3447 = vunpack.c.h.b16 %v2662
    %v3448 = vunpack.c.l.b16 %v2663
    %v3449 = vunpack.c.h.b16 %v2663
    %v3450 = vunpack.c.l.b16 %v2664
    %v3451 = vunpack.c.h.b16 %v2664
    %v3452 = vunpack.c.l.b16 %v2665
    %v3453 = vunpack.c.h.b16 %v2665
    %v3454 = vunpack.c.l.b16 %v2666
    %v3455 = vunpack.c.h.b16 %v2666
    %v3456 = vunpack.c.l.b16 %v2667
    %v3457 = vunpack.c.h.b16 %v2667
    %v3458 = vunpack.c.l.b16 %v2668
    %v3459 = vunpack.c.h.b16 %v2668
    %v3460 = vunpack.c.l.b16 %v2669
    %v3461 = vunpack.c.h.b16 %v2669
    %v3462 = vunpack.c.l.b16 %v2670
    %v3463 = vunpack.c.h.b16 %v2670
    %v3464 = vunpack.c.l.b16 %v2671
    %v3465 = vunpack.c.h.b16 %v2671
    %v3466 = vunpack.c.l.b16 %v2672
    %v3467 = vunpack.c.h.b16 %v2672
    %v3468 = vunpack.c.l.b16 %v2673
    %v3469 = vunpack.c.h.b16 %v2673
    %v3470 = vunpack.c.l.b16 %v2674
    %v3471 = vunpack.c.h.b16 %v2674
    %v3472 = vunpack.c.l.b16 %v2675
    %v3473 = vunpack.c.h.b16 %v2675
    %v3474 = vunpack.c.l.b16 %v2676
    %v3475 = vunpack.c.h.b16 %v2676
    %v3476 = vunpack.c.l.b16 %v2677
    %v3477 = vunpack.c.h.b16 %v2677
    %v3478 = vunpack.c.l.b16 %v2678
    %v3479 = vunpack.c.h.b16 %v2678
    %v3480 = vunpack.c.l.b16 %v2679
    %v3481 = vunpack.c.h.b16 %v2679
    %v3482 = vunpack.c.l.b16 %v2680
    %v3483 = vunpack.c.h.b16 %v2680
    %v3484 = vunpack.c.l.b16 %v2681
    %v3485 = vunpack.c.h.b16 %v2681
    %v3486 = vunpack.c.l.b16 %v2682
    %v3487 = vunpack.c.h.b16 %v2682
    %v3488 = vunpack.c.l.b16 %v2683
    %v3489 = vunpack.c.h.b16 %v2683
    %v3490 = vunpack.c.l.b16 %v2684
    %v3491 = vunpack.c.h.b16 %v2684
    %v3492 = vunpack.c.l.b16 %v2685
    %v3493 = vunpack.c.h.b16 %v2685
    %v3494 = vunpack.c.l.b16 %v2686
    %v3495 = vunpack.c.h.b16 %v2686
    %v3496 = vunpack.c.l.b16 %v2687
    %v3497 = vunpack.c.h.b16 %v2687
    %v3498 = vunpack.c.l.b16 %v2688
    %v3499 = vunpack.c.h.b16 %v2688
    %v3500 = vunpack.c.l.b16 %v2689
    %v3501 = vunpack.c.h.b16 %v2689
    %v3502 = vunpack.c.l.b16 %v2690
    %v3503 = vunpack.c.h.b16 %v2690
    %v3504 = vunpack.c.l.b16 %v2691
    %v3505 = vunpack.c.h.b16 %v2691
    %v3506 = vunpack.c.l.b16 %v2692
    %v3507 = vunpack.c.h.b16 %v2692
    %v3508 = vunpack.c.l.b16 %v2693
    %v3509 = vunpack.c.h.b16 %v2693
    %v3510 = vunpack.c.l.b16 %v2694
    %v3511 = vunpack.c.h.b16 %v2694
    %v3512 = vunpack.c.l.b16 %v2695
    %v3513 = vunpack.c.h.b16 %v2695
    %v3514 = vunpack.c.l.b16 %v2696
    %v3515 = vunpack.c.h.b16 %v2696
    %v3516 = vunpack.c.l.b16 %v2697
    %v3517 = vunpack.c.h.b16 %v2697
    %v3518 = vunpack.c.l.b16 %v2698
    %v3519 = vunpack.c.h.b16 %v2698
    %v3520 = vunpack.c.l.b16 %v2699
    %v3521 = vunpack.c.h.b16 %v2699
    %v3522 = vunpack.c.l.b16 %v2700
    %v3523 = vunpack.c.h.b16 %v2700
    %v3524 = vunpack.c.l.b16 %v2701
    %v3525 = vunpack.c.h.b16 %v2701
    %v3526 = vunpack.c.l.b16 %v2702
    %v3527 = vunpack.c.h.b16 %v2702
    %v3528 = vunpack.c.l.b16 %v2703
    %v3529 = vunpack.c.h.b16 %v2703
    %v3530 = vunpack.c.l.b16 %v2704
    %v3531 = vunpack.c.h.b16 %v2704
    %v3532 = vunpack.c.l.b16 %v2705
    %v3533 = vunpack.c.h.b16 %v2705
    %v3534 = vunpack.c.l.b16 %v2706
    %v3535 = vunpack.c.h.b16 %v2706
    %v3536 = vunpack.c.l.b16 %v2707
    %v3537 = vunpack.c.h.b16 %v2707
    %v3538 = vunpack.c.l.b16 %v2708
    %v3539 = vunpack.c.h.b16 %v2708
    %v3540 = vunpack.c.l.b16 %v2709
    %v3541 = vunpack.c.h.b16 %v2709
    %v3542 = vunpack.c.l.b16 %v2710
    %v3543 = vunpack.c.h.b16 %v2710
    %v3544 = vunpack.c.l.b16 %v2711
    %v3545 = vunpack.c.h.b16 %v2711
    %v3546 = vunpack.c.l.b16 %v2712
    %v3547 = vunpack.c.h.b16 %v2712
    %v3548 = vunpack.c.l.b16 %v2713
    %v3549 = vunpack.c.h.b16 %v2713
    %v3550 = vunpack.c.l.b16 %v2714
    %v3551 = vunpack.c.h.b16 %v2714
    %v3552 = vunpack.c.l.b16 %v2715
    %v3553 = vunpack.c.h.b16 %v2715
    %v3554 = vunpack.c.l.b16 %v2716
    %v3555 = vunpack.c.h.b16 %v2716
    %v3556 = vunpack.c.l.b16 %v2717
    %v3557 = vunpack.c.h.b16 %v2717
    %v3558 = vunpack.c.l.b16 %v2718
    %v3559 = vunpack.c.h.b16 %v2718
    %v3560 = vunpack.c.l.b16 %v2719
    %v3561 = vunpack.c.h.b16 %v2719
    %v3562 = vunpack.c.l.b16 %v2720
    %v3563 = vunpack.c.h.b16 %v2720
    %v3564 = vunpack.c.l.b16 %v2721
    %v3565 = vunpack.c.h.b16 %v2721
    %v3566 = vunpack.c.l.b16 %v2722
    %v3567 = vunpack.c.h.b16 %v2722
    %v3568 = vunpack.c.l.b16 %v2723
    %v3569 = vunpack.c.h.b16 %v2723
    %v3570 = vunpack.c.l.b16 %v2724
    %v3571 = vunpack.c.h.b16 %v2724
    %v3572 = vunpack.c.l.b16 %v2725
    %v3573 = vunpack.c.h.b16 %v2725
    %v3574 = vunpack.c.l.b16 %v2726
    %v3575 = vunpack.c.h.b16 %v2726
    %v3576 = vunpack.c.l.b16 %v2727
    %v3577 = vunpack.c.h.b16 %v2727
    %v3578 = vunpack.c.l.b16 %v2728
    %v3579 = vunpack.c.h.b16 %v2728
    %v3580 = vunpack.c.l.b16 %v2729
    %v3581 = vunpack.c.h.b16 %v2729
    %v3582 = vunpack.c.l.b16 %v2730
    %v3583 = vunpack.c.h.b16 %v2730
    %v3584 = vunpack.c.l.b16 %v2731
    %v3585 = vunpack.c.h.b16 %v2731
    %v3586 = vunpack.c.l.b16 %v2732
    %v3587 = vunpack.c.h.b16 %v2732
    %v3588 = vunpack.c.l.b16 %v2733
    %v3589 = vunpack.c.h.b16 %v2733
    %v3590 = vunpack.c.l.b16 %v2734
    %v3591 = vunpack.c.h.b16 %v2734
    %v3592 = vunpack.c.l.b16 %v2735
    %v3593 = vunpack.c.h.b16 %v2735
    %v3594 = vunpack.c.l.b16 %v2736
    %v3595 = vunpack.c.h.b16 %v2736
    %v3596 = vunpack.c.l.b16 %v2737
    %v3597 = vunpack.c.h.b16 %v2737
    %v3598 = vunpack.c.l.b16 %v2738
    %v3599 = vunpack.c.h.b16 %v2738
    %v3600 = vunpack.c.l.b16 %v2739
    %v3601 = vunpack.c.h.b16 %v2739
    %v3602 = vunpack.c.l.b16 %v2740
    %v3603 = vunpack.c.h.b16 %v2740
    %v3604 = vunpack.c.l.b16 %v2741
    %v3605 = vunpack.c.h.b16 %v2741
    %v3606 = vunpack.c.l.b16 %v2742
    %v3607 = vunpack.c.h.b16 %v2742
    %v3608 = vunpack.c.l.b16 %v2743
    %v3609 = vunpack.c.h.b16 %v2743
    %v3610 = vunpack.c.l.b16 %v2744
    %v3611 = vunpack.c.h.b16 %v2744
    %v3612 = vunpack.c.l.b16 %v2745
    %v3613 = vunpack.c.h.b16 %v2745
    %v3614 = vunpack.c.l.b16 %v2746
    %v3615 = vunpack.c.h.b16 %v2746
    %v3616 = vunpack.c.l.b16 %v2747
    %v3617 = vunpack.c.h.b16 %v2747
    %v3618 = vunpack.c.l.b16 %v2748
    %v3619 = vunpack.c.h.b16 %v2748
    %v3620 = vunpack.c.l.b16 %v2749
    %v3621 = vunpack.c.h.b16 %v2749
    %v3622 = vunpack.c.l.b16 %v2750
    %v3623 = vunpack.c.h.b16 %v2750
    %v3624 = vunpack.c.l.b16 %v2751
    %v3625 = vunpack.c.h.b16 %v2751
    %v3626 = vunpack.c.l.b16 %v2752
    %v3627 = vunpack.c.h.b16 %v2752
    %v3628 = vunpack.c.l.b16 %v2753
    %v3629 = vunpack.c.h.b16 %v2753
    %v3630 = vunpack.c.l.b16 %v2754
    %v3631 = vunpack.c.h.b16 %v2754
    %v3632 = vunpack.c.l.b16 %v2755
    %v3633 = vunpack.c.h.b16 %v2755
    %v3634 = vunpack.c.l.b16 %v2756
    %v3635 = vunpack.c.h.b16 %v2756
    %v3636 = vunpack.c.l.b16 %v2757
    %v3637 = vunpack.c.h.b16 %v2757
    %v3638 = vunpack.c.l.b16 %v2758
    %v3639 = vunpack.c.h.b16 %v2758
    %v3640 = vunpack.c.l.b16 %v2759
    %v3641 = vunpack.c.h.b16 %v2759
    %v3642 = vunpack.c.l.b16 %v2760
    %v3643 = vunpack.c.h.b16 %v2760
    %v3644 = vunpack.c.l.b16 %v2761
    %v3645 = vunpack.c.h.b16 %v2761
    %v3646 = vunpack.c.l.b16 %v2762
    %v3647 = vunpack.c.h.b16 %v2762
    %v3648 = vunpack.c.l.b16 %v2763
    %v3649 = vunpack.c.h.b16 %v2763
    %v3650 = vunpack.c.l.b16 %v2764
    %v3651 = vunpack.c.h.b16 %v2764
    %v3652 = vunpack.c.l.b16 %v2765
    %v3653 = vunpack.c.h.b16 %v2765
    %v3654 = vunpack.c.l.b16 %v2766
    %v3655 = vunpack.c.h.b16 %v2766
    %v3656 = vunpack.c.l.b16 %v2767
    %v3657 = vunpack.c.h.b16 %v2767
    %v3658 = vunpack.c.l.b16 %v2768
    %v3659 = vunpack.c.h.b16 %v2768
    %v3660 = vunpack.c.l.b16 %v2769
    %v3661 = vunpack.c.h.b16 %v2769
    %v3662 = vunpack.c.l.b16 %v2770
    %v3663 = vunpack.c.h.b16 %v2770
    %v3664 = vunpack.c.l.b16 %v2771
    %v3665 = vunpack.c.h.b16 %v2771
    %v3666 = vunpack.c.l.b16 %v2772
    %v3667 = vunpack.c.h.b16 %v2772
    %v3668 = vunpack.c.l.b16 %v2773
    %v3669 = vunpack.c.h.b16 %v2773
    %v3670 = vunpack.c.l.b16 %v2774
    %v3671 = vunpack.c.h.b16 %v2774
    %v3672 = vunpack.c.l.b16 %v2775
    %v3673 = vunpack.c.h.b16 %v2775
    %v3674 = vunpack.c.l.b16 %v2776
    %v3675 = vunpack.c.h.b16 %v2776
    %v3676 = vunpack.c.l.b16 %v2777
    %v3677 = vunpack.c.h.b16 %v2777
    %v3678 = vunpack.c.l.b16 %v2778
    %v3679 = vunpack.c.h.b16 %v2778
    %v3680 = vunpack.c.l.b16 %v2779
    %v3681 = vunpack.c.h.b16 %v2779
    %v3682 = vunpack.c.l.b16 %v2780
    %v3683 = vunpack.c.h.b16 %v2780
    %v3684 = vunpack.c.l.b16 %v2781
    %v3685 = vunpack.c.h.b16 %v2781
    %v3686 = vunpack.c.l.b16 %v2782
    %v3687 = vunpack.c.h.b16 %v2782
    %v3688 = vunpack.c.l.b16 %v2783
    %v3689 = vunpack.c.h.b16 %v2783
    %v3690 = vunpack.c.l.b16 %v2784
    %v3691 = vunpack.c.h.b16 %v2784
    %v3692 = vunpack.c.l.b16 %v2785
    %v3693 = vunpack.c.h.b16 %v2785
    %v3694 = vunpack.c.l.b16 %v2786
    %v3695 = vunpack.c.h.b16 %v2786
    %v3696 = vunpack.c.l.b16 %v2787
    %v3697 = vunpack.c.h.b16 %v2787
    %v3698 = vunpack.c.l.b16 %v2788
    %v3699 = vunpack.c.h.b16 %v2788
    %v3700 = vunpack.c.l.b16 %v2789
    %v3701 = vunpack.c.h.b16 %v2789
    %v3702 = vunpack.c.l.b16 %v2790
    %v3703 = vunpack.c.h.b16 %v2790
    %v3704 = vunpack.c.l.b16 %v2791
    %v3705 = vunpack.c.h.b16 %v2791
    %v3706 = vunpack.c.l.b16 %v2792
    %v3707 = vunpack.c.h.b16 %v2792
    %v3708 = vunpack.c.l.b16 %v2793
    %v3709 = vunpack.c.h.b16 %v2793
    %v3710 = vunpack.c.l.b16 %v2794
    %v3711 = vunpack.c.h.b16 %v2794
    %v3712 = vunpack.c.l.b16 %v2795
    %v3713 = vunpack.c.h.b16 %v2795
    %v3714 = vunpack.c.l.b16 %v2796
    %v3715 = vunpack.c.h.b16 %v2796
    %v3716 = vunpack.c.l.b16 %v2797
    %v3717 = vunpack.c.h.b16 %v2797
    %v3718 = vunpack.c.l.b16 %v2798
    %v3719 = vunpack.c.h.b16 %v2798
    %v3720 = vunpack.c.l.b16 %v2799
    %v3721 = vunpack.c.h.b16 %v2799
    %v3722 = vunpack.c.l.b16 %v2800
    %v3723 = vunpack.c.h.b16 %v2800
    %v3724 = vunpack.c.l.b16 %v2801
    %v3725 = vunpack.c.h.b16 %v2801
    %v3726 = vunpack.c.l.b16 %v2802
    %v3727 = vunpack.c.h.b16 %v2802
    %v3728 = vunpack.c.l.b16 %v2803
    %v3729 = vunpack.c.h.b16 %v2803
    %v3730 = vunpack.c.l.b16 %v2804
    %v3731 = vunpack.c.h.b16 %v2804
    %v3732 = vunpack.c.l.b16 %v2805
    %v3733 = vunpack.c.h.b16 %v2805
    %v3734 = vunpack.c.l.b16 %v2806
    %v3735 = vunpack.c.h.b16 %v2806
    %v3736 = vunpack.c.l.b16 %v2807
    %v3737 = vunpack.c.h.b16 %v2807
    %v3738 = vunpack.c.l.b16 %v2808
    %v3739 = vunpack.c.h.b16 %v2808
    %v3740 = vunpack.c.l.b16 %v2809
    %v3741 = vunpack.c.h.b16 %v2809
    %v3742 = vunpack.c.l.b16 %v2810
    %v3743 = vunpack.c.h.b16 %v2810
    %v3744 = vunpack.c.l.b16 %v2811
    %v3745 = vunpack.c.h.b16 %v2811
    %v3746 = vunpack.c.l.b16 %v2812
    %v3747 = vunpack.c.h.b16 %v2812
    %v3748 = vunpack.c.l.b16 %v2813
    %v3749 = vunpack.c.h.b16 %v2813
    %v3750 = vunpack.c.l.b16 %v2814
    %v3751 = vunpack.c.h.b16 %v2814
    %v3752 = vunpack.c.l.b16 %v2815
    %v3753 = vunpack.c.h.b16 %v2815
    %v3754 = vunpack.c.l.b16 %v2816
    %v3755 = vunpack.c.h.b16 %v2816
    %v3756 = vunpack.c.l.b16 %v2817
    %v3757 = vunpack.c.h.b16 %v2817
    %v3758 = vunpack.c.l.b16 %v2818
    %v3759 = vunpack.c.h.b16 %v2818
    %v3760 = vunpack.c.l.b16 %v2819
    %v3761 = vunpack.c.h.b16 %v2819
    %v3762 = vunpack.c.l.b16 %v2820
    %v3763 = vunpack.c.h.b16 %v2820
    %v3764 = vunpack.c.l.b16 %v2821
    %v3765 = vunpack.c.h.b16 %v2821
    %v3766 = vunpack.c.l.b16 %v2822
    %v3767 = vunpack.c.h.b16 %v2822
    %v3768 = vunpack.c.l.b16 %v2823
    %v3769 = vunpack.c.h.b16 %v2823
    %v3770 = vunpack.c.l.b16 %v2824
    %v3771 = vunpack.c.h.b16 %v2824
    %v3772 = vunpack.c.l.b16 %v2825
    %v3773 = vunpack.c.h.b16 %v2825
    %v3774 = vunpack.c.l.b16 %v2826
    %v3775 = vunpack.c.h.b16 %v2826
    %v3776 = vunpack.c.l.b16 %v2827
    %v3777 = vunpack.c.h.b16 %v2827
    %v3778 = vunpack.c.l.b16 %v2828
    %v3779 = vunpack.c.h.b16 %v2828
    %v3780 = vunpack.c.l.b16 %v2829
    %v3781 = vunpack.c.h.b16 %v2829
    %v3782 = vunpack.c.l.b16 %v2830
    %v3783 = vunpack.c.h.b16 %v2830
    %v3784 = vunpack.c.l.b16 %v2831
    %v3785 = vunpack.c.h.b16 %v2831
    %v3786 = vunpack.c.l.b16 %v2832
    %v3787 = vunpack.c.h.b16 %v2832
    %v3788 = vunpack.c.l.b16 %v2833
    %v3789 = vunpack.c.h.b16 %v2833
    %v3790 = vunpack.c.l.b16 %v2834
    %v3791 = vunpack.c.h.b16 %v2834
    %v3792 = vunpack.c.l.b16 %v2835
    %v3793 = vunpack.c.h.b16 %v2835
    %v3794 = vunpack.c.l.b16 %v2836
    %v3795 = vunpack.c.h.b16 %v2836
    %v3796 = vunpack.c.l.b16 %v2837
    %v3797 = vunpack.c.h.b16 %v2837
    %v3798 = vpack.c.b16 %v3162, %v3158
    %v3799 = vpack.c.b16 %v3163, %v3159
    %v3800 = vpack.c.b16 %v3164, %v3160
    %v3801 = vpack.c.b16 %v3165, %v3161
    %v3802 = vpack.c.b16 %v3170, %v3166
    %v3803 = vpack.c.b16 %v3171, %v3167
    %v3804 = vpack.c.b16 %v3172, %v3168
    %v3805 = vpack.c.b16 %v3173, %v3169
    %v3806 = vpack.c.b16 %v3178, %v3174
    %v3807 = vpack.c.b16 %v3179, %v3175
    %v3808 = vpack.c.b16 %v3180, %v3176
    %v3809 = vpack.c.b16 %v3181, %v3177
    %v3810 = vpack.c.b16 %v3186, %v3182
    %v3811 = vpack.c.b16 %v3187, %v3183
    %v3812 = vpack.c.b16 %v3188, %v3184
    %v3813 = vpack.c.b16 %v3189, %v3185
    %v3814 = vpack.c.b16 %v3194, %v3190
    %v3815 = vpack.c.b16 %v3195, %v3191
    %v3816 = vpack.c.b16 %v3196, %v3192
    %v3817 = vpack.c.b16 %v3197, %v3193
    %v3818 = vpack.c.b16 %v3202, %v3198
    %v3819 = vpack.c.b16 %v3203, %v3199
    %v3820 = vpack.c.b16 %v3204, %v3200
    %v3821 = vpack.c.b16 %v3205, %v3201
    %v3822 = vpack.c.b16 %v3210, %v3206
    %v3823 = vpack.c.b16 %v3211, %v3207
    %v3824 = vpack.c.b16 %v3212, %v3208
    %v3825 = vpack.c.b16 %v3213, %v3209
    %v3826 = vpack.c.b16 %v3218, %v3214
    %v3827 = vpack.c.b16 %v3219, %v3215
    %v3828 = vpack.c.b16 %v3220, %v3216
    %v3829 = vpack.c.b16 %v3221, %v3217
    %v3830 = vpack.c.b16 %v3226, %v3222
    %v3831 = vpack.c.b16 %v3227, %v3223
    %v3832 = vpack.c.b16 %v3228, %v3224
    %v3833 = vpack.c.b16 %v3229, %v3225
    %v3834 = vpack.c.b16 %v3234, %v3230
    %v3835 = vpack.c.b16 %v3235, %v3231
    %v3836 = vpack.c.b16 %v3236, %v3232
    %v3837 = vpack.c.b16 %v3237, %v3233
    %v3838 = vpack.c.b16 %v3242, %v3238
    %v3839 = vpack.c.b16 %v3243, %v3239
    %v3840 = vpack.c.b16 %v3244, %v3240
    %v3841 = vpack.c.b16 %v3245, %v3241
    %v3842 = vpack.c.b16 %v3250, %v3246
    %v3843 = vpack.c.b16 %v3251, %v3247
    %v3844 = vpack.c.b16 %v3252, %v3248
    %v3845 = vpack.c.b16 %v3253, %v3249
    %v3846 = vpack.c.b16 %v3258, %v3254
    %v3847 = vpack.c.b16 %v3259, %v3255
    %v3848 = vpack.c.b16 %v3260, %v3256
    %v3849 = vpack.c.b16 %v3261, %v3257
    %v3850 = vpack.c.b16 %v3266, %v3262
    %v3851 = vpack.c.b16 %v3267, %v3263
    %v3852 = vpack.c.b16 %v3268, %v3264
    %v3853 = vpack.c.b16 %v3269, %v3265
    %v3854 = vpack.c.b16 %v3274, %v3270
    %v3855 = vpack.c.b16 %v3275, %v3271
    %v3856 = vpack.c.b16 %v3276, %v3272
    %v3857 = vpack.c.b16 %v3277, %v3273
    %v3858 = vpack.c.b16 %v3282, %v3278
    %v3859 = vpack.c.b16 %v3283, %v3279
    %v3860 = vpack.c.b16 %v3284, %v3280
    %v3861 = vpack.c.b16 %v3285, %v3281
    %v3862 = vpack.c.b16 %v3290, %v3286
    %v3863 = vpack.c.b16 %v3291, %v3287
    %v3864 = vpack.c.b16 %v3292, %v3288
    %v3865 = vpack.c.b16 %v3293, %v3289
    %v3866 = vpack.c.b16 %v3298, %v3294
    %v3867 = vpack.c.b16 %v3299, %v3295
    %v3868 = vpack.c.b16 %v3300, %v3296
    %v3869 = vpack.c.b16 %v3301, %v3297
    %v3870 = vpack.c.b16 %v3306, %v3302
    %v3871 = vpack.c.b16 %v3307, %v3303
    %v3872 = vpack.c.b16 %v3308, %v3304
    %v3873 = vpack.c.b16 %v3309, %v3305
    %v3874 = vpack.c.b16 %v3314, %v3310
    %v3875 = vpack.c.b16 %v3315, %v3311
    %v3876 = vpack.c.b16 %v3316, %v3312
    %v3877 = vpack.c.b16 %v3317, %v3313
    %v3878 = vpack.c.b16 %v3322, %v3318
    %v3879 = vpack.c.b16 %v3323, %v3319
    %v3880 = vpack.c.b16 %v3324, %v3320
    %v3881 = vpack.c.b16 %v3325, %v3321
    %v3882 = vpack.c.b16 %v3330, %v3326
    %v3883 = vpack.c.b16 %v3331, %v3327
    %v3884 = vpack.c.b16 %v3332, %v3328
    %v3885 = vpack.c.b16 %v3333, %v3329
    %v3886 = vpack.c.b16 %v3338, %v3334
    %v3887 = vpack.c.b16 %v3339, %v3335
    %v3888 = vpack.c.b16 %v3340, %v3336
    %v3889 = vpack.c.b16 %v3341, %v3337
    %v3890 = vpack.c.b16 %v3346, %v3342
    %v3891 = vpack.c.b16 %v3347, %v3343
    %v3892 = vpack.c.b16 %v3348, %v3344
    %v3893 = vpack.c.b16 %v3349, %v3345
    %v3894 = vpack.c.b16 %v3354, %v3350
    %v3895 = vpack.c.b16 %v3355, %v3351
    %v3896 = vpack.c.b16 %v3356, %v3352
    %v3897 = vpack.c.b16 %v3357, %v3353
    %v3898 = vpack.c.b16 %v3362, %v3358
    %v3899 = vpack.c.b16 %v3363, %v3359
    %v3900 = vpack.c.b16 %v3364, %v3360
    %v3901 = vpack.c.b16 %v3365, %v3361
    %v3902 = vpack.c.b16 %v3370, %v3366
    %v3903 = vpack.c.b16 %v3371, %v3367
    %v3904 = vpack.c.b16 %v3372, %v3368
    %v3905 = vpack.c.b16 %v3373, %v3369
    %v3906 = vpack.c.b16 %v3378, %v3374
    %v3907 = vpack.c.b16 %v3379, %v3375
    %v3908 = vpack.c.b16 %v3380, %v3376
    %v3909 = vpack.c.b16 %v3381, %v3377
    %v3910 = vpack.c.b16 %v3386, %v3382
    %v3911 = vpack.c.b16 %v3387, %v3383
    %v3912 = vpack.c.b16 %v3388, %v3384
    %v3913 = vpack.c.b16 %v3389, %v3385
    %v3914 = vpack.c.b16 %v3394, %v3390
    %v3915 = vpack.c.b16 %v3395, %v3391
    %v3916 = vpack.c.b16 %v3396, %v3392
    %v3917 = vpack.c.b16 %v3397, %v3393
    %v3918 = vpack.c.b16 %v3402, %v3398
    %v3919 = vpack.c.b16 %v3403, %v3399
    %v3920 = vpack.c.b16 %v3404, %v3400
    %v3921 = vpack.c.b16 %v3405, %v3401
    %v3922 = vpack.c.b16 %v3410, %v3406
    %v3923 = vpack.c.b16 %v3411, %v3407
    %v3924 = vpack.c.b16 %v3412, %v3408
    %v3925 = vpack.c.b16 %v3413, %v3409
    %v3926 = vpack.c.b16 %v3418, %v3414
    %v3927 = vpack.c.b16 %v3419, %v3415
    %v3928 = vpack.c.b16 %v3420, %v3416
    %v3929 = vpack.c.b16 %v3421, %v3417
    %v3930 = vpack.c.b16 %v3426, %v3422
    %v3931 = vpack.c.b16 %v3427, %v3423
    %v3932 = vpack.c.b16 %v3428, %v3424
    %v3933 = vpack.c.b16 %v3429, %v3425
    %v3934 = vpack.c.b16 %v3434, %v3430
    %v3935 = vpack.c.b16 %v3435, %v3431
    %v3936 = vpack.c.b16 %v3436, %v3432
    %v3937 = vpack.c.b16 %v3437, %v3433
    %v3938 = vpack.c.b16 %v3442, %v3438
    %v3939 = vpack.c.b16 %v3443, %v3439
    %v3940 = vpack.c.b16 %v3444, %v3440
    %v3941 = vpack.c.b16 %v3445, %v3441
    %v3942 = vpack.c.b16 %v3450, %v3446
    %v3943 = vpack.c.b16 %v3451, %v3447
    %v3944 = vpack.c.b16 %v3452, %v3448
    %v3945 = vpack.c.b16 %v3453, %v3449
    %v3946 = vpack.c.b16 %v3458, %v3454
    %v3947 = vpack.c.b16 %v3459, %v3455
    %v3948 = vpack.c.b16 %v3460, %v3456
    %v3949 = vpack.c.b16 %v3461, %v3457
    %v3950 = vpack.c.b16 %v3466, %v3462
    %v3951 = vpack.c.b16 %v3467, %v3463
    %v3952 = vpack.c.b16 %v3468, %v3464
    %v3953 = vpack.c.b16 %v3469, %v3465
    %v3954 = vpack.c.b16 %v3474, %v3470
    %v3955 = vpack.c.b16 %v3475, %v3471
    %v3956 = vpack.c.b16 %v3476, %v3472
    %v3957 = vpack.c.b16 %v3477, %v3473
    %v3958 = vpack.c.b16 %v3482, %v3478
    %v3959 = vpack.c.b16 %v3483, %v3479
    %v3960 = vpack.c.b16 %v3484, %v3480
    %v3961 = vpack.c.b16 %v3485, %v3481
    %v3962 = vpack.c.b16 %v3490, %v3486
    %v3963 = vpack.c.b16 %v3491, %v3487
    %v3964 = vpack.c.b16 %v3492, %v3488
    %v3965 = vpack.c.b16 %v3493, %v3489
    %v3966 = vpack.c.b16 %v3498, %v3494
    %v3967 = vpack.c.b16 %v3499, %v3495
    %v3968 = vpack.c.b16 %v3500, %v3496
    %v3969 = vpack.c.b16 %v3501, %v3497
    %v3970 = vpack.c.b16 %v3506, %v3502
    %v3971 = vpack.c.b16 %v3507, %v3503
    %v3972 = vpack.c.b16 %v3508, %v3504
    %v3973 = vpack.c.b16 %v3509, %v3505
    %v3974 = vpack.c.b16 %v3514, %v3510
    %v3975 = vpack.c.b16 %v3515, %v3511
    %v3976 = vpack.c.b16 %v3516, %v3512
    %v3977 = vpack.c.b16 %v3517, %v3513
    %v3978 = vpack.c.b16 %v3522, %v3518
    %v3979 = vpack.c.b16 %v3523, %v3519
    %v3980 = vpack.c.b16 %v3524, %v3520
    %v3981 = vpack.c.b16 %v3525, %v3521
    %v3982 = vpack.c.b16 %v3530, %v3526
    %v3983 = vpack.c.b16 %v3531, %v3527
    %v3984 = vpack.c.b16 %v3532, %v3528
    %v3985 = vpack.c.b16 %v3533, %v3529
    %v3986 = vpack.c.b16 %v3538, %v3534
    %v3987 = vpack.c.b16 %v3539, %v3535
    %v3988 = vpack.c.b16 %v3540, %v3536
    %v3989 = vpack.c.b16 %v3541, %v3537
    %v3990 = vpack.c.b16 %v3546, %v3542
    %v3991 = vpack.c.b16 %v3547, %v3543
    %v3992 = vpack.c.b16 %v3548, %v3544
    %v3993 = vpack.c.b16 %v3549, %v3545
    %v3994 = vpack.c.b16 %v3554, %v3550
    %v3995 = vpack.c.b16 %v3555, %v3551
    %v3996 = vpack.c.b16 %v3556, %v3552
    %v3997 = vpack.c.b16 %v3557, %v3553
    %v3998 = vpack.c.b16 %v3562, %v3558
    %v3999 = vpack.c.b16 %v3563, %v3559
    %v4000 = vpack.c.b16 %v3564, %v3560
    %v4001 = vpack.c.b16 %v3565, %v3561
    %v4002 = vpack.c.b16 %v3570, %v3566
    %v4003 = vpack.c.b16 %v3571, %v3567
    %v4004 = vpack.c.b16 %v3572, %v3568
    %v4005 = vpack.c.b16 %v3573, %v3569
    %v4006 = vpack.c.b16 %v3578, %v3574
    %v4007 = vpack.c.b16 %v3579, %v3575
    %v4008 = vpack.c.b16 %v3580, %v3576
    %v4009 = vpack.c.b16 %v3581, %v3577
    %v4010 = vpack.c.b16 %v3586, %v3582
    %v4011 = vpack.c.b16 %v3587, %v3583
    %v4012 = vpack.c.b16 %v3588, %v3584
    %v4013 = vpack.c.b16 %v3589, %v3585
    %v4014 = vpack.c.b16 %v3594, %v3590
    %v4015 = vpack.c.b16 %v3595, %v3591
    %v4016 = vpack.c.b16 %v3596, %v3592
    %v4017 = vpack.c.b16 %v3597, %v3593
    %v4018 = vpack.c.b16 %v3602, %v3598
    %v4019 = vpack.c.b16 %v3603, %v3599
    %v4020 = vpack.c.b16 %v3604, %v3600
    %v4021 = vpack.c.b16 %v3605, %v3601
    %v4022 = vpack.c.b16 %v3610, %v3606
    %v4023 = vpack.c.b16 %v3611, %v3607
    %v4024 = vpack.c.b16 %v3612, %v3608
    %v4025 = vpack.c.b16 %v3613, %v3609
    %v4026 = vpack.c.b16 %v3618, %v3614
    %v4027 = vpack.c.b16 %v3619, %v3615
    %v4028 = vpack.c.b16 %v3620, %v3616
    %v4029 = vpack.c.b16 %v3621, %v3617
    %v4030 = vpack.c.b16 %v3626, %v3622
    %v4031 = vpack.c.b16 %v3627, %v3623
    %v4032 = vpack.c.b16 %v3628, %v3624
    %v4033 = vpack.c.b16 %v3629, %v3625
    %v4034 = vpack.c.b16 %v3634, %v3630
    %v4035 = vpack.c.b16 %v3635, %v3631
    %v4036 = vpack.c.b16 %v3636, %v3632
    %v4037 = vpack.c.b16 %v3637, %v3633
    %v4038 = vpack.c.b16 %v3642, %v3638
    %v4039 = vpack.c.b16 %v3643, %v3639
    %v4040 = vpack.c.b16 %v3644, %v3640
    %v4041 = vpack.c.b16 %v3645, %v3641
    %v4042 = vpack.c.b16 %v3650, %v3646
    %v4043 = vpack.c.b16 %v3651, %v3647
    %v4044 = vpack.c.b16 %v3652, %v3648
    %v4045 = vpack.c.b16 %v3653, %v3649
    %v4046 = vpack.c.b16 %v3658, %v3654
    %v4047 = vpack.c.b16 %v3659, %v3655
    %v4048 = vpack.c.b16 %v3660, %v3656
    %v4049 = vpack.c.b16 %v3661, %v3657
    %v4050 = vpack.c.b16 %v3666, %v3662
    %v4051 = vpack.c.b16 %v3667, %v3663
    %v4052 = vpack.c.b16 %v3668, %v3664
    %v4053 = vpack.c.b16 %v3669, %v3665
    %v4054 = vpack.c.b16 %v3674, %v3670
    %v4055 = vpack.c.b16 %v3675, %v3671
    %v4056 = vpack.c.b16 %v3676, %v3672
    %v4057 = vpack.c.b16 %v3677, %v3673
    %v4058 = vpack.c.b16 %v3682, %v3678
    %v4059 = vpack.c.b16 %v3683, %v3679
    %v4060 = vpack.c.b16 %v3684, %v3680
    %v4061 = vpack.c.b16 %v3685, %v3681
    %v4062 = vpack.c.b16 %v3690, %v3686
    %v4063 = vpack.c.b16 %v3691, %v3687
    %v4064 = vpack.c.b16 %v3692, %v3688
    %v4065 = vpack.c.b16 %v3693, %v3689
    %v4066 = vpack.c.b16 %v3698, %v3694
    %v4067 = vpack.c.b16 %v3699, %v3695
    %v4068 = vpack.c.b16 %v3700, %v3696
    %v4069 = vpack.c.b16 %v3701, %v3697
    %v4070 = vpack.c.b16 %v3706, %v3702
    %v4071 = vpack.c.b16 %v3707, %v3703
    %v4072 = vpack.c.b16 %v3708, %v3704
    %v4073 = vpack.c.b16 %v3709, %v3705
    %v4074 = vpack.c.b16 %v3714, %v3710
    %v4075 = vpack.c.b16 %v3715, %v3711
    %v4076 = vpack.c.b16 %v3716, %v3712
    %v4077 = vpack.c.b16 %v3717, %v3713
    %v4078 = vpack.c.b16 %v3722, %v3718
    %v4079 = vpack.c.b16 %v3723, %v3719
    %v4080 = vpack.c.b16 %v3724, %v3720
    %v4081 = vpack.c.b16 %v3725, %v3721
    %v4082 = vpack.c.b16 %v3730, %v3726
    %v4083 = vpack.c.b16 %v3731, %v3727
    %v4084 = vpack.c.b16 %v3732, %v3728
    %v4085 = vpack.c.b16 %v3733, %v3729
    %v4086 = vpack.c.b16 %v3738, %v3734
    %v4087 = vpack.c.b16 %v3739, %v3735
    %v4088 = vpack.c.b16 %v3740, %v3736
    %v4089 = vpack.c.b16 %v3741, %v3737
    %v4090 = vpack.c.b16 %v3746, %v3742
    %v4091 = vpack.c.b16 %v3747, %v3743
    %v4092 = vpack.c.b16 %v3748, %v3744
    %v4093 = vpack.c.b16 %v3749, %v3745
    %v4094 = vpack.c.b16 %v3754, %v3750
    %v4095 = vpack.c.b16 %v3755, %v3751
    %v4096 = vpack.c.b16 %v3756, %v3752
    %v4097 = vpack.c.b16 %v3757, %v3753
    %v4098 = vpack.c.b16 %v3762, %v3758
    %v4099 = vpack.c.b16 %v3763, %v3759
    %v4100 = vpack.c.b16 %v3764, %v3760
    %v4101 = vpack.c.b16 %v3765, %v3761
    %v4102 = vpack.c.b16 %v3770, %v3766
    %v4103 = vpack.c.b16 %v3771, %v3767
    %v4104 = vpack.c.b16 %v3772, %v3768
    %v4105 = vpack.c.b16 %v3773, %v3769
    %v4106 = vpack.c.b16 %v3778, %v3774
    %v4107 = vpack.c.b16 %v3779, %v3775
    %v4108 = vpack.c.b16 %v3780, %v3776
    %v4109 = vpack.c.b16 %v3781, %v3777
    %v4110 = vpack.c.b16 %v3786, %v3782
    %v4111 = vpack.c.b16 %v3787, %v3783
    %v4112 = vpack.c.b16 %v3788, %v3784
    %v4113 = vpack.c.b16 %v3789, %v3785
    %v4114 = vpack.c.b16 %v3794, %v3790
    %v4115 = vpack.c.b16 %v3795, %v3791
    %v4116 = vpack.c.b16 %v3796, %v3792
    %v4117 = vpack.c.b16 %v3797, %v3793
    %4438 = vmatprep.subr.bf16.mxu0 %v3827
    %4439 = vmatpush1.bf16.msra.mxu0 %v3826
    %4440 = vmatprep.subr.bf16.mxu0 %v3823
    %4441 = vmatpush1.bf16.msra.mxu0 %v3822
    %4442 = vmatprep.subr.bf16.mxu0 %v3819
    %4443 = vmatpush1.bf16.msra.mxu0 %v3818
    %4444 = vmatprep.subr.bf16.mxu0 %v3815
    %4445 = vmatpush1.bf16.msra.mxu0 %v3814
    %4446 = vmatprep.subr.bf16.mxu0 %v3811
    %4447 = vmatpush1.bf16.msra.mxu0 %v3810
    %4448 = vmatprep.subr.bf16.mxu0 %v3807
    %4449 = vmatpush1.bf16.msra.mxu0 %v3806
    %4450 = vmatprep.subr.bf16.mxu0 %v3803
    %4451 = vmatpush1.bf16.msra.mxu0 %v3802
    %4452 = vmatprep.subr.bf16.mxu0 %v3799
    %4453 = vmatpush1.bf16.msra.mxu0 %v3798
    %4454 = vmatprep.subr.bf16.mxu0 %v3859
    %4455 = vmatpush2.bf16.msra.mxu0 %v3858
    %4456 = vmatprep.subr.bf16.mxu0 %v3855
    %4457 = vmatpush2.bf16.msra.mxu0 %v3854
    %4458 = vmatprep.subr.bf16.mxu0 %v3851
    %4459 = vmatpush2.bf16.msra.mxu0 %v3850
    %4460 = vmatprep.subr.bf16.mxu0 %v3847
    %4461 = vmatpush2.bf16.msra.mxu0 %v3846
    %4462 = vmatprep.subr.bf16.mxu0 %v3843
    %4463 = vmatpush2.bf16.msra.mxu0 %v3842
    %4464 = vmatprep.subr.bf16.mxu0 %v3839
    %4465 = vmatpush2.bf16.msra.mxu0 %v3838
    %4466 = vmatprep.subr.bf16.mxu0 %v3835
    %4467 = vmatpush2.bf16.msra.mxu0 %v3834
    %4468 = vmatprep.subr.bf16.mxu0 %v3831
    %4469 = vmatpush2.bf16.msra.mxu0 %v3830
    %4470 = vmatprep.mubr.bf16.mxu0 %v2497
    %4471 = vmatmul.mubr.bf16.gmra.mxu0 %v2496
    %v4472 = vpop.f32.mrf.mxu0
    %v4473 = vadd.f32 0.0, %v4472
    %v4474 = vpop.f32.mrf.mxu0
    %v4475 = vadd.f32 0.0, %v4474
    %v4476 = vpop.f32.mrf.mxu0
    %v4477 = vadd.f32 0.0, %v4476
    %v4478 = vpop.f32.mrf.mxu0
    %v4479 = vadd.f32 0.0, %v4478
    %4480 = vmatprep.mubr.bf16.mxu0 %v2501
    %4481 = vmatmul.mubr.bf16.gmra.mxu0 %v2500
    %v4482 = vpop.f32.mrf.mxu0
    %v4483 = vadd.f32 0.0, %v4482
    %v4484 = vpop.f32.mrf.mxu0
    %v4485 = vadd.f32 0.0, %v4484
    %v4486 = vpop.f32.mrf.mxu0
    %v4487 = vadd.f32 0.0, %v4486
    %v4488 = vpop.f32.mrf.mxu0
    %v4489 = vadd.f32 0.0, %v4488
    %4490 = vmatprep.mubr.bf16.mxu0 %v2505
    %4491 = vmatmul.mubr.bf16.gmra.mxu0 %v2504
    %v4492 = vpop.f32.mrf.mxu0
    %v4493 = vadd.f32 0.0, %v4492
    %v4494 = vpop.f32.mrf.mxu0
    %v4495 = vadd.f32 0.0, %v4494
    %v4496 = vpop.f32.mrf.mxu0
    %v4497 = vadd.f32 0.0, %v4496
    %v4498 = vpop.f32.mrf.mxu0
    %v4499 = vadd.f32 0.0, %v4498
    %4500 = vmatprep.mubr.bf16.mxu0 %v2509
    %4501 = vmatmul.mubr.bf16.gmra.mxu0 %v2508
    %v4502 = vpop.f32.mrf.mxu0
    %v4503 = vadd.f32 0.0, %v4502
    %v4504 = vpop.f32.mrf.mxu0
    %v4505 = vadd.f32 0.0, %v4504
    %v4506 = vpop.f32.mrf.mxu0
    %v4507 = vadd.f32 0.0, %v4506
    %v4508 = vpop.f32.mrf.mxu0
    %v4509 = vadd.f32 0.0, %v4508
    %4510 = vdwg.mxu0
    %4511 = vmatprep.subr.bf16.mxu0 %v3891
    %4512 = vmatpush1.bf16.msra.mxu0 %v3890
    %4513 = vmatprep.subr.bf16.mxu0 %v3887
    %4514 = vmatpush1.bf16.msra.mxu0 %v3886
    %4515 = vmatprep.subr.bf16.mxu0 %v3883
    %4516 = vmatpush1.bf16.msra.mxu0 %v3882
    %4517 = vmatprep.subr.bf16.mxu0 %v3879
    %4518 = vmatpush1.bf16.msra.mxu0 %v3878
    %4519 = vmatprep.subr.bf16.mxu0 %v3875
    %4520 = vmatpush1.bf16.msra.mxu0 %v3874
    %4521 = vmatprep.subr.bf16.mxu0 %v3871
    %4522 = vmatpush1.bf16.msra.mxu0 %v3870
    %4523 = vmatprep.subr.bf16.mxu0 %v3867
    %4524 = vmatpush1.bf16.msra.mxu0 %v3866
    %4525 = vmatprep.subr.bf16.mxu0 %v3863
    %4526 = vmatpush1.bf16.msra.mxu0 %v3862
    %4527 = vmatprep.subr.bf16.mxu0 %v3923
    %4528 = vmatpush2.bf16.msra.mxu0 %v3922
    %4529 = vmatprep.subr.bf16.mxu0 %v3919
    %4530 = vmatpush2.bf16.msra.mxu0 %v3918
    %4531 = vmatprep.subr.bf16.mxu0 %v3915
    %4532 = vmatpush2.bf16.msra.mxu0 %v3914
    %4533 = vmatprep.subr.bf16.mxu0 %v3911
    %4534 = vmatpush2.bf16.msra.mxu0 %v3910
    %4535 = vmatprep.subr.bf16.mxu0 %v3907
    %4536 = vmatpush2.bf16.msra.mxu0 %v3906
    %4537 = vmatprep.subr.bf16.mxu0 %v3903
    %4538 = vmatpush2.bf16.msra.mxu0 %v3902
    %4539 = vmatprep.subr.bf16.mxu0 %v3899
    %4540 = vmatpush2.bf16.msra.mxu0 %v3898
    %4541 = vmatprep.subr.bf16.mxu0 %v3895
    %4542 = vmatpush2.bf16.msra.mxu0 %v3894
    %4543 = vmatprep.mubr.bf16.mxu0 %v2499
    %4544 = vmatmul.mubr.bf16.gmra.mxu0 %v2498
    %v4545 = vpop.f32.mrf.mxu0
    %v4546 = vadd.f32 %v4473, %v4545
    %v4547 = vpop.f32.mrf.mxu0
    %v4548 = vadd.f32 %v4475, %v4547
    %v4549 = vpop.f32.mrf.mxu0
    %v4550 = vadd.f32 %v4477, %v4549
    %v4551 = vpop.f32.mrf.mxu0
    %v4552 = vadd.f32 %v4479, %v4551
    %4553 = vmatprep.mubr.bf16.mxu0 %v2503
    %4554 = vmatmul.mubr.bf16.gmra.mxu0 %v2502
    %v4555 = vpop.f32.mrf.mxu0
    %v4556 = vadd.f32 %v4483, %v4555
    %v4557 = vpop.f32.mrf.mxu0
    %v4558 = vadd.f32 %v4485, %v4557
    %v4559 = vpop.f32.mrf.mxu0
    %v4560 = vadd.f32 %v4487, %v4559
    %v4561 = vpop.f32.mrf.mxu0
    %v4562 = vadd.f32 %v4489, %v4561
    %4563 = vmatprep.mubr.bf16.mxu0 %v2507
    %4564 = vmatmul.mubr.bf16.gmra.mxu0 %v2506
    %v4565 = vpop.f32.mrf.mxu0
    %v4566 = vadd.f32 %v4493, %v4565
    %v4567 = vpop.f32.mrf.mxu0
    %v4568 = vadd.f32 %v4495, %v4567
    %v4569 = vpop.f32.mrf.mxu0
    %v4570 = vadd.f32 %v4497, %v4569
    %v4571 = vpop.f32.mrf.mxu0
    %v4572 = vadd.f32 %v4499, %v4571
    %4573 = vmatprep.mubr.bf16.mxu0 %v2511
    %4574 = vmatmul.mubr.bf16.gmra.mxu0 %v2510
    %v4575 = vpop.f32.mrf.mxu0
    %v4576 = vadd.f32 %v4503, %v4575
    %v4577 = vpop.f32.mrf.mxu0
    %v4578 = vadd.f32 %v4505, %v4577
    %v4579 = vpop.f32.mrf.mxu0
    %v4580 = vadd.f32 %v4507, %v4579
    %v4581 = vpop.f32.mrf.mxu0
    %v4582 = vadd.f32 %v4509, %v4581
    %4583 = vdwg.mxu0
    %4584 = vmatprep.subr.bf16.mxu0 %v3955
    %4585 = vmatpush1.bf16.msra.mxu0 %v3954
    %4586 = vmatprep.subr.bf16.mxu0 %v3951
    %4587 = vmatpush1.bf16.msra.mxu0 %v3950
    %4588 = vmatprep.subr.bf16.mxu0 %v3947
    %4589 = vmatpush1.bf16.msra.mxu0 %v3946
    %4590 = vmatprep.subr.bf16.mxu0 %v3943
    %4591 = vmatpush1.bf16.msra.mxu0 %v3942
    %4592 = vmatprep.subr.bf16.mxu0 %v3939
    %4593 = vmatpush1.bf16.msra.mxu0 %v3938
    %4594 = vmatprep.subr.bf16.mxu0 %v3935
    %4595 = vmatpush1.bf16.msra.mxu0 %v3934
    %4596 = vmatprep.subr.bf16.mxu0 %v3931
    %4597 = vmatpush1.bf16.msra.mxu0 %v3930
    %4598 = vmatprep.subr.bf16.mxu0 %v3927
    %4599 = vmatpush1.bf16.msra.mxu0 %v3926
    %4600 = vmatprep.subr.bf16.mxu0 %v3987
    %4601 = vmatpush2.bf16.msra.mxu0 %v3986
    %4602 = vmatprep.subr.bf16.mxu0 %v3983
    %4603 = vmatpush2.bf16.msra.mxu0 %v3982
    %4604 = vmatprep.subr.bf16.mxu0 %v3979
    %4605 = vmatpush2.bf16.msra.mxu0 %v3978
    %4606 = vmatprep.subr.bf16.mxu0 %v3975
    %4607 = vmatpush2.bf16.msra.mxu0 %v3974
    %4608 = vmatprep.subr.bf16.mxu0 %v3971
    %4609 = vmatpush2.bf16.msra.mxu0 %v3970
    %4610 = vmatprep.subr.bf16.mxu0 %v3967
    %4611 = vmatpush2.bf16.msra.mxu0 %v3966
    %4612 = vmatprep.subr.bf16.mxu0 %v3963
    %4613 = vmatpush2.bf16.msra.mxu0 %v3962
    %4614 = vmatprep.subr.bf16.mxu0 %v3959
    %4615 = vmatpush2.bf16.msra.mxu0 %v3958
    %4616 = vmatprep.mubr.bf16.mxu0 %v2501
    %4617 = vmatmul.mubr.bf16.gmra.mxu0 %v2500
    %v4618 = vpop.f32.mrf.mxu0
    %v4619 = vadd.f32 %v4546, %v4618
    %v4620 = vpop.f32.mrf.mxu0
    %v4621 = vadd.f32 %v4548, %v4620
    %v4622 = vpop.f32.mrf.mxu0
    %v4623 = vadd.f32 %v4550, %v4622
    %v4624 = vpop.f32.mrf.mxu0
    %v4625 = vadd.f32 %v4552, %v4624
    %4626 = vmatprep.mubr.bf16.mxu0 %v2505
    %4627 = vmatmul.mubr.bf16.gmra.mxu0 %v2504
    %v4628 = vpop.f32.mrf.mxu0
    %v4629 = vadd.f32 %v4556, %v4628
    %v4630 = vpop.f32.mrf.mxu0
    %v4631 = vadd.f32 %v4558, %v4630
    %v4632 = vpop.f32.mrf.mxu0
    %v4633 = vadd.f32 %v4560, %v4632
    %v4634 = vpop.f32.mrf.mxu0
    %v4635 = vadd.f32 %v4562, %v4634
    %4636 = vmatprep.mubr.bf16.mxu0 %v2509
    %4637 = vmatmul.mubr.bf16.gmra.mxu0 %v2508
    %v4638 = vpop.f32.mrf.mxu0
    %v4639 = vadd.f32 %v4566, %v4638
    %v4640 = vpop.f32.mrf.mxu0
    %v4641 = vadd.f32 %v4568, %v4640
    %v4642 = vpop.f32.mrf.mxu0
    %v4643 = vadd.f32 %v4570, %v4642
    %v4644 = vpop.f32.mrf.mxu0
    %v4645 = vadd.f32 %v4572, %v4644
    %4646 = vmatprep.mubr.bf16.mxu0 %v2513
    %4647 = vmatmul.mubr.bf16.gmra.mxu0 %v2512
    %v4648 = vpop.f32.mrf.mxu0
    %v4649 = vadd.f32 %v4576, %v4648
    %v4650 = vpop.f32.mrf.mxu0
    %v4651 = vadd.f32 %v4578, %v4650
    %v4652 = vpop.f32.mrf.mxu0
    %v4653 = vadd.f32 %v4580, %v4652
    %v4654 = vpop.f32.mrf.mxu0
    %v4655 = vadd.f32 %v4582, %v4654
    %4656 = vdwg.mxu0
    %4657 = vmatprep.subr.bf16.mxu0 %v4019
    %4658 = vmatpush1.bf16.msra.mxu0 %v4018
    %4659 = vmatprep.subr.bf16.mxu0 %v4015
    %4660 = vmatpush1.bf16.msra.mxu0 %v4014
    %4661 = vmatprep.subr.bf16.mxu0 %v4011
    %4662 = vmatpush1.bf16.msra.mxu0 %v4010
    %4663 = vmatprep.subr.bf16.mxu0 %v4007
    %4664 = vmatpush1.bf16.msra.mxu0 %v4006
    %4665 = vmatprep.subr.bf16.mxu0 %v4003
    %4666 = vmatpush1.bf16.msra.mxu0 %v4002
    %4667 = vmatprep.subr.bf16.mxu0 %v3999
    %4668 = vmatpush1.bf16.msra.mxu0 %v3998
    %4669 = vmatprep.subr.bf16.mxu0 %v3995
    %4670 = vmatpush1.bf16.msra.mxu0 %v3994
    %4671 = vmatprep.subr.bf16.mxu0 %v3991
    %4672 = vmatpush1.bf16.msra.mxu0 %v3990
    %4673 = vmatprep.subr.bf16.mxu0 %v4051
    %4674 = vmatpush2.bf16.msra.mxu0 %v4050
    %4675 = vmatprep.subr.bf16.mxu0 %v4047
    %4676 = vmatpush2.bf16.msra.mxu0 %v4046
    %4677 = vmatprep.subr.bf16.mxu0 %v4043
    %4678 = vmatpush2.bf16.msra.mxu0 %v4042
    %4679 = vmatprep.subr.bf16.mxu0 %v4039
    %4680 = vmatpush2.bf16.msra.mxu0 %v4038
    %4681 = vmatprep.subr.bf16.mxu0 %v4035
    %4682 = vmatpush2.bf16.msra.mxu0 %v4034
    %4683 = vmatprep.subr.bf16.mxu0 %v4031
    %4684 = vmatpush2.bf16.msra.mxu0 %v4030
    %4685 = vmatprep.subr.bf16.mxu0 %v4027
    %4686 = vmatpush2.bf16.msra.mxu0 %v4026
    %4687 = vmatprep.subr.bf16.mxu0 %v4023
    %4688 = vmatpush2.bf16.msra.mxu0 %v4022
    %4689 = vmatprep.mubr.bf16.mxu0 %v2503
    %4690 = vmatmul.mubr.bf16.gmra.mxu0 %v2502
    %v4691 = vpop.f32.mrf.mxu0
    %v4692 = vadd.f32 %v4619, %v4691
    %v4693 = vpop.f32.mrf.mxu0
    %v4694 = vadd.f32 %v4621, %v4693
    %v4695 = vpop.f32.mrf.mxu0
    %v4696 = vadd.f32 %v4623, %v4695
    %v4697 = vpop.f32.mrf.mxu0
    %v4698 = vadd.f32 %v4625, %v4697
    %4699 = vmatprep.mubr.bf16.mxu0 %v2507
    %4700 = vmatmul.mubr.bf16.gmra.mxu0 %v2506
    %v4701 = vpop.f32.mrf.mxu0
    %v4702 = vadd.f32 %v4629, %v4701
    %v4703 = vpop.f32.mrf.mxu0
    %v4704 = vadd.f32 %v4631, %v4703
    %v4705 = vpop.f32.mrf.mxu0
    %v4706 = vadd.f32 %v4633, %v4705
    %v4707 = vpop.f32.mrf.mxu0
    %v4708 = vadd.f32 %v4635, %v4707
    %4709 = vmatprep.mubr.bf16.mxu0 %v2511
    %4710 = vmatmul.mubr.bf16.gmra.mxu0 %v2510
    %v4711 = vpop.f32.mrf.mxu0
    %v4712 = vadd.f32 %v4639, %v4711
    %v4713 = vpop.f32.mrf.mxu0
    %v4714 = vadd.f32 %v4641, %v4713
    %v4715 = vpop.f32.mrf.mxu0
    %v4716 = vadd.f32 %v4643, %v4715
    %v4717 = vpop.f32.mrf.mxu0
    %v4718 = vadd.f32 %v4645, %v4717
    %4719 = vmatprep.mubr.bf16.mxu0 %v2515
    %4720 = vmatmul.mubr.bf16.gmra.mxu0 %v2514
    %v4721 = vpop.f32.mrf.mxu0
    %v4722 = vadd.f32 %v4649, %v4721
    %v4723 = vpop.f32.mrf.mxu0
    %v4724 = vadd.f32 %v4651, %v4723
    %v4725 = vpop.f32.mrf.mxu0
    %v4726 = vadd.f32 %v4653, %v4725
    %v4727 = vpop.f32.mrf.mxu0
    %v4728 = vadd.f32 %v4655, %v4727
    %4729 = vdwg.mxu0
    %4730 = vmatprep.subr.bf16.mxu0 %v4083
    %4731 = vmatpush1.bf16.msra.mxu0 %v4082
    %4732 = vmatprep.subr.bf16.mxu0 %v4079
    %4733 = vmatpush1.bf16.msra.mxu0 %v4078
    %4734 = vmatprep.subr.bf16.mxu0 %v4075
    %4735 = vmatpush1.bf16.msra.mxu0 %v4074
    %4736 = vmatprep.subr.bf16.mxu0 %v4071
    %4737 = vmatpush1.bf16.msra.mxu0 %v4070
    %4738 = vmatprep.subr.bf16.mxu0 %v4067
    %4739 = vmatpush1.bf16.msra.mxu0 %v4066
    %4740 = vmatprep.subr.bf16.mxu0 %v4063
    %4741 = vmatpush1.bf16.msra.mxu0 %v4062
    %4742 = vmatprep.subr.bf16.mxu0 %v4059
    %4743 = vmatpush1.bf16.msra.mxu0 %v4058
    %4744 = vmatprep.subr.bf16.mxu0 %v4055
    %4745 = vmatpush1.bf16.msra.mxu0 %v4054
    %4746 = vmatprep.subr.bf16.mxu0 %v4115
    %4747 = vmatpush2.bf16.msra.mxu0 %v4114
    %4748 = vmatprep.subr.bf16.mxu0 %v4111
    %4749 = vmatpush2.bf16.msra.mxu0 %v4110
    %4750 = vmatprep.subr.bf16.mxu0 %v4107
    %4751 = vmatpush2.bf16.msra.mxu0 %v4106
    %4752 = vmatprep.subr.bf16.mxu0 %v4103
    %4753 = vmatpush2.bf16.msra.mxu0 %v4102
    %4754 = vmatprep.subr.bf16.mxu0 %v4099
    %4755 = vmatpush2.bf16.msra.mxu0 %v4098
    %4756 = vmatprep.subr.bf16.mxu0 %v4095
    %4757 = vmatpush2.bf16.msra.mxu0 %v4094
    %4758 = vmatprep.subr.bf16.mxu0 %v4091
    %4759 = vmatpush2.bf16.msra.mxu0 %v4090
    %4760 = vmatprep.subr.bf16.mxu0 %v4087
    %4761 = vmatpush2.bf16.msra.mxu0 %v4086
    %4762 = vmatprep.mubr.bf16.mxu0 %v2505
    %4763 = vmatmul.mubr.bf16.gmra.mxu0 %v2504
    %v4764 = vpop.f32.mrf.mxu0
    %v4765 = vadd.f32 %v4692, %v4764
    %v4766 = vpop.f32.mrf.mxu0
    %v4767 = vadd.f32 %v4694, %v4766
    %v4768 = vpop.f32.mrf.mxu0
    %v4769 = vadd.f32 %v4696, %v4768
    %v4770 = vpop.f32.mrf.mxu0
    %v4771 = vadd.f32 %v4698, %v4770
    %4772 = vmatprep.mubr.bf16.mxu0 %v2509
    %4773 = vmatmul.mubr.bf16.gmra.mxu0 %v2508
    %v4774 = vpop.f32.mrf.mxu0
    %v4775 = vadd.f32 %v4702, %v4774
    %v4776 = vpop.f32.mrf.mxu0
    %v4777 = vadd.f32 %v4704, %v4776
    %v4778 = vpop.f32.mrf.mxu0
    %v4779 = vadd.f32 %v4706, %v4778
    %v4780 = vpop.f32.mrf.mxu0
    %v4781 = vadd.f32 %v4708, %v4780
    %4782 = vmatprep.mubr.bf16.mxu0 %v2513
    %4783 = vmatmul.mubr.bf16.gmra.mxu0 %v2512
    %v4784 = vpop.f32.mrf.mxu0
    %v4785 = vadd.f32 %v4712, %v4784
    %v4786 = vpop.f32.mrf.mxu0
    %v4787 = vadd.f32 %v4714, %v4786
    %v4788 = vpop.f32.mrf.mxu0
    %v4789 = vadd.f32 %v4716, %v4788
    %v4790 = vpop.f32.mrf.mxu0
    %v4791 = vadd.f32 %v4718, %v4790
    %4792 = vmatprep.mubr.bf16.mxu0 %v2517
    %4793 = vmatmul.mubr.bf16.gmra.mxu0 %v2516
    %v4794 = vpop.f32.mrf.mxu0
    %v4795 = vadd.f32 %v4722, %v4794
    %v4796 = vpop.f32.mrf.mxu0
    %v4797 = vadd.f32 %v4724, %v4796
    %v4798 = vpop.f32.mrf.mxu0
    %v4799 = vadd.f32 %v4726, %v4798
    %v4800 = vpop.f32.mrf.mxu0
    %v4801 = vadd.f32 %v4728, %v4800
    %4802 = vdwg.mxu0
    %4803 = vmatprep.subr.bf16.mxu0 %v3829
    %4804 = vmatpush1.bf16.msra.mxu0 %v3828
    %4805 = vmatprep.subr.bf16.mxu0 %v3825
    %4806 = vmatpush1.bf16.msra.mxu0 %v3824
    %4807 = vmatprep.subr.bf16.mxu0 %v3821
    %4808 = vmatpush1.bf16.msra.mxu0 %v3820
    %4809 = vmatprep.subr.bf16.mxu0 %v3817
    %4810 = vmatpush1.bf16.msra.mxu0 %v3816
    %4811 = vmatprep.subr.bf16.mxu0 %v3813
    %4812 = vmatpush1.bf16.msra.mxu0 %v3812
    %4813 = vmatprep.subr.bf16.mxu0 %v3809
    %4814 = vmatpush1.bf16.msra.mxu0 %v3808
    %4815 = vmatprep.subr.bf16.mxu0 %v3805
    %4816 = vmatpush1.bf16.msra.mxu0 %v3804
    %4817 = vmatprep.subr.bf16.mxu0 %v3801
    %4818 = vmatpush1.bf16.msra.mxu0 %v3800
    %4819 = vmatprep.subr.bf16.mxu0 %v3861
    %4820 = vmatpush2.bf16.msra.mxu0 %v3860
    %4821 = vmatprep.subr.bf16.mxu0 %v3857
    %4822 = vmatpush2.bf16.msra.mxu0 %v3856
    %4823 = vmatprep.subr.bf16.mxu0 %v3853
    %4824 = vmatpush2.bf16.msra.mxu0 %v3852
    %4825 = vmatprep.subr.bf16.mxu0 %v3849
    %4826 = vmatpush2.bf16.msra.mxu0 %v3848
    %4827 = vmatprep.subr.bf16.mxu0 %v3845
    %4828 = vmatpush2.bf16.msra.mxu0 %v3844
    %4829 = vmatprep.subr.bf16.mxu0 %v3841
    %4830 = vmatpush2.bf16.msra.mxu0 %v3840
    %4831 = vmatprep.subr.bf16.mxu0 %v3837
    %4832 = vmatpush2.bf16.msra.mxu0 %v3836
    %4833 = vmatprep.subr.bf16.mxu0 %v3833
    %4834 = vmatpush2.bf16.msra.mxu0 %v3832
    %4835 = vmatprep.mubr.bf16.mxu0 %v2497
    %4836 = vmatmul.mubr.bf16.gmra.mxu0 %v2496
    %v4837 = vpop.f32.mrf.mxu0
    %v4838 = vadd.f32 0.0, %v4837
    %v4839 = vpop.f32.mrf.mxu0
    %v4840 = vadd.f32 0.0, %v4839
    %v4841 = vpop.f32.mrf.mxu0
    %v4842 = vadd.f32 0.0, %v4841
    %v4843 = vpop.f32.mrf.mxu0
    %v4844 = vadd.f32 0.0, %v4843
    %4845 = vmatprep.mubr.bf16.mxu0 %v2501
    %4846 = vmatmul.mubr.bf16.gmra.mxu0 %v2500
    %v4847 = vpop.f32.mrf.mxu0
    %v4848 = vadd.f32 0.0, %v4847
    %v4849 = vpop.f32.mrf.mxu0
    %v4850 = vadd.f32 0.0, %v4849
    %v4851 = vpop.f32.mrf.mxu0
    %v4852 = vadd.f32 0.0, %v4851
    %v4853 = vpop.f32.mrf.mxu0
    %v4854 = vadd.f32 0.0, %v4853
    %4855 = vmatprep.mubr.bf16.mxu0 %v2505
    %4856 = vmatmul.mubr.bf16.gmra.mxu0 %v2504
    %v4857 = vpop.f32.mrf.mxu0
    %v4858 = vadd.f32 0.0, %v4857
    %v4859 = vpop.f32.mrf.mxu0
    %v4860 = vadd.f32 0.0, %v4859
    %v4861 = vpop.f32.mrf.mxu0
    %v4862 = vadd.f32 0.0, %v4861
    %v4863 = vpop.f32.mrf.mxu0
    %v4864 = vadd.f32 0.0, %v4863
    %4865 = vmatprep.mubr.bf16.mxu0 %v2509
    %4866 = vmatmul.mubr.bf16.gmra.mxu0 %v2508
    %v4867 = vpop.f32.mrf.mxu0
    %v4868 = vadd.f32 0.0, %v4867
    %v4869 = vpop.f32.mrf.mxu0
    %v4870 = vadd.f32 0.0, %v4869
    %v4871 = vpop.f32.mrf.mxu0
    %v4872 = vadd.f32 0.0, %v4871
    %v4873 = vpop.f32.mrf.mxu0
    %v4874 = vadd.f32 0.0, %v4873
    %4875 = vdwg.mxu0
    %4876 = vmatprep.subr.bf16.mxu0 %v3893
    %4877 = vmatpush1.bf16.msra.mxu0 %v3892
    %4878 = vmatprep.subr.bf16.mxu0 %v3889
    %4879 = vmatpush1.bf16.msra.mxu0 %v3888
    %4880 = vmatprep.subr.bf16.mxu0 %v3885
    %4881 = vmatpush1.bf16.msra.mxu0 %v3884
    %4882 = vmatprep.subr.bf16.mxu0 %v3881
    %4883 = vmatpush1.bf16.msra.mxu0 %v3880
    %4884 = vmatprep.subr.bf16.mxu0 %v3877
    %4885 = vmatpush1.bf16.msra.mxu0 %v3876
    %4886 = vmatprep.subr.bf16.mxu0 %v3873
    %4887 = vmatpush1.bf16.msra.mxu0 %v3872
    %4888 = vmatprep.subr.bf16.mxu0 %v3869
    %4889 = vmatpush1.bf16.msra.mxu0 %v3868
    %4890 = vmatprep.subr.bf16.mxu0 %v3865
    %4891 = vmatpush1.bf16.msra.mxu0 %v3864
    %4892 = vmatprep.subr.bf16.mxu0 %v3925
    %4893 = vmatpush2.bf16.msra.mxu0 %v3924
    %4894 = vmatprep.subr.bf16.mxu0 %v3921
    %4895 = vmatpush2.bf16.msra.mxu0 %v3920
    %4896 = vmatprep.subr.bf16.mxu0 %v3917
    %4897 = vmatpush2.bf16.msra.mxu0 %v3916
    %4898 = vmatprep.subr.bf16.mxu0 %v3913
    %4899 = vmatpush2.bf16.msra.mxu0 %v3912
    %4900 = vmatprep.subr.bf16.mxu0 %v3909
    %4901 = vmatpush2.bf16.msra.mxu0 %v3908
    %4902 = vmatprep.subr.bf16.mxu0 %v3905
    %4903 = vmatpush2.bf16.msra.mxu0 %v3904
    %4904 = vmatprep.subr.bf16.mxu0 %v3901
    %4905 = vmatpush2.bf16.msra.mxu0 %v3900
    %4906 = vmatprep.subr.bf16.mxu0 %v3897
    %4907 = vmatpush2.bf16.msra.mxu0 %v3896
    %4908 = vmatprep.mubr.bf16.mxu0 %v2499
    %4909 = vmatmul.mubr.bf16.gmra.mxu0 %v2498
    %v4910 = vpop.f32.mrf.mxu0
    %v4911 = vadd.f32 %v4838, %v4910
    %v4912 = vpop.f32.mrf.mxu0
    %v4913 = vadd.f32 %v4840, %v4912
    %v4914 = vpop.f32.mrf.mxu0
    %v4915 = vadd.f32 %v4842, %v4914
    %v4916 = vpop.f32.mrf.mxu0
    %v4917 = vadd.f32 %v4844, %v4916
    %4918 = vmatprep.mubr.bf16.mxu0 %v2503
    %4919 = vmatmul.mubr.bf16.gmra.mxu0 %v2502
    %v4920 = vpop.f32.mrf.mxu0
    %v4921 = vadd.f32 %v4848, %v4920
    %v4922 = vpop.f32.mrf.mxu0
    %v4923 = vadd.f32 %v4850, %v4922
    %v4924 = vpop.f32.mrf.mxu0
    %v4925 = vadd.f32 %v4852, %v4924
    %v4926 = vpop.f32.mrf.mxu0
    %v4927 = vadd.f32 %v4854, %v4926
    %4928 = vmatprep.mubr.bf16.mxu0 %v2507
    %4929 = vmatmul.mubr.bf16.gmra.mxu0 %v2506
    %v4930 = vpop.f32.mrf.mxu0
    %v4931 = vadd.f32 %v4858, %v4930
    %v4932 = vpop.f32.mrf.mxu0
    %v4933 = vadd.f32 %v4860, %v4932
    %v4934 = vpop.f32.mrf.mxu0
    %v4935 = vadd.f32 %v4862, %v4934
    %v4936 = vpop.f32.mrf.mxu0
    %v4937 = vadd.f32 %v4864, %v4936
    %4938 = vmatprep.mubr.bf16.mxu0 %v2511
    %4939 = vmatmul.mubr.bf16.gmra.mxu0 %v2510
    %v4940 = vpop.f32.mrf.mxu0
    %v4941 = vadd.f32 %v4868, %v4940
    %v4942 = vpop.f32.mrf.mxu0
    %v4943 = vadd.f32 %v4870, %v4942
    %v4944 = vpop.f32.mrf.mxu0
    %v4945 = vadd.f32 %v4872, %v4944
    %v4946 = vpop.f32.mrf.mxu0
    %v4947 = vadd.f32 %v4874, %v4946
    %4948 = vdwg.mxu0
    %4949 = vmatprep.subr.bf16.mxu0 %v3957
    %4950 = vmatpush1.bf16.msra.mxu0 %v3956
    %4951 = vmatprep.subr.bf16.mxu0 %v3953
    %4952 = vmatpush1.bf16.msra.mxu0 %v3952
    %4953 = vmatprep.subr.bf16.mxu0 %v3949
    %4954 = vmatpush1.bf16.msra.mxu0 %v3948
    %4955 = vmatprep.subr.bf16.mxu0 %v3945
    %4956 = vmatpush1.bf16.msra.mxu0 %v3944
    %4957 = vmatprep.subr.bf16.mxu0 %v3941
    %4958 = vmatpush1.bf16.msra.mxu0 %v3940
    %4959 = vmatprep.subr.bf16.mxu0 %v3937
    %4960 = vmatpush1.bf16.msra.mxu0 %v3936
    %4961 = vmatprep.subr.bf16.mxu0 %v3933
    %4962 = vmatpush1.bf16.msra.mxu0 %v3932
    %4963 = vmatprep.subr.bf16.mxu0 %v3929
    %4964 = vmatpush1.bf16.msra.mxu0 %v3928
    %4965 = vmatprep.subr.bf16.mxu0 %v3989
    %4966 = vmatpush2.bf16.msra.mxu0 %v3988
    %4967 = vmatprep.subr.bf16.mxu0 %v3985
    %4968 = vmatpush2.bf16.msra.mxu0 %v3984
    %4969 = vmatprep.subr.bf16.mxu0 %v3981
    %4970 = vmatpush2.bf16.msra.mxu0 %v3980
    %4971 = vmatprep.subr.bf16.mxu0 %v3977
    %4972 = vmatpush2.bf16.msra.mxu0 %v3976
    %4973 = vmatprep.subr.bf16.mxu0 %v3973
    %4974 = vmatpush2.bf16.msra.mxu0 %v3972
    %4975 = vmatprep.subr.bf16.mxu0 %v3969
    %4976 = vmatpush2.bf16.msra.mxu0 %v3968
    %4977 = vmatprep.subr.bf16.mxu0 %v3965
    %4978 = vmatpush2.bf16.msra.mxu0 %v3964
    %4979 = vmatprep.subr.bf16.mxu0 %v3961
    %4980 = vmatpush2.bf16.msra.mxu0 %v3960
    %4981 = vmatprep.mubr.bf16.mxu0 %v2501
    %4982 = vmatmul.mubr.bf16.gmra.mxu0 %v2500
    %v4983 = vpop.f32.mrf.mxu0
    %v4984 = vadd.f32 %v4911, %v4983
    %v4985 = vpop.f32.mrf.mxu0
    %v4986 = vadd.f32 %v4913, %v4985
    %v4987 = vpop.f32.mrf.mxu0
    %v4988 = vadd.f32 %v4915, %v4987
    %v4989 = vpop.f32.mrf.mxu0
    %v4990 = vadd.f32 %v4917, %v4989
    %4991 = vmatprep.mubr.bf16.mxu0 %v2505
    %4992 = vmatmul.mubr.bf16.gmra.mxu0 %v2504
    %v4993 = vpop.f32.mrf.mxu0
    %v4994 = vadd.f32 %v4921, %v4993
    %v4995 = vpop.f32.mrf.mxu0
    %v4996 = vadd.f32 %v4923, %v4995
    %v4997 = vpop.f32.mrf.mxu0
    %v4998 = vadd.f32 %v4925, %v4997
    %v4999 = vpop.f32.mrf.mxu0
    %v5000 = vadd.f32 %v4927, %v4999
    %5001 = vmatprep.mubr.bf16.mxu0 %v2509
    %5002 = vmatmul.mubr.bf16.gmra.mxu0 %v2508
    %v5003 = vpop.f32.mrf.mxu0
    %v5004 = vadd.f32 %v4931, %v5003
    %v5005 = vpop.f32.mrf.mxu0
    %v5006 = vadd.f32 %v4933, %v5005
    %v5007 = vpop.f32.mrf.mxu0
    %v5008 = vadd.f32 %v4935, %v5007
    %v5009 = vpop.f32.mrf.mxu0
    %v5010 = vadd.f32 %v4937, %v5009
    %5011 = vmatprep.mubr.bf16.mxu0 %v2513
    %5012 = vmatmul.mubr.bf16.gmra.mxu0 %v2512
    %v5013 = vpop.f32.mrf.mxu0
    %v5014 = vadd.f32 %v4941, %v5013
    %v5015 = vpop.f32.mrf.mxu0
    %v5016 = vadd.f32 %v4943, %v5015
    %v5017 = vpop.f32.mrf.mxu0
    %v5018 = vadd.f32 %v4945, %v5017
    %v5019 = vpop.f32.mrf.mxu0
    %v5020 = vadd.f32 %v4947, %v5019
    %5021 = vdwg.mxu0
    %5022 = vmatprep.subr.bf16.mxu0 %v4021
    %5023 = vmatpush1.bf16.msra.mxu0 %v4020
    %5024 = vmatprep.subr.bf16.mxu0 %v4017
    %5025 = vmatpush1.bf16.msra.mxu0 %v4016
    %5026 = vmatprep.subr.bf16.mxu0 %v4013
    %5027 = vmatpush1.bf16.msra.mxu0 %v4012
    %5028 = vmatprep.subr.bf16.mxu0 %v4009
    %5029 = vmatpush1.bf16.msra.mxu0 %v4008
    %5030 = vmatprep.subr.bf16.mxu0 %v4005
    %5031 = vmatpush1.bf16.msra.mxu0 %v4004
    %5032 = vmatprep.subr.bf16.mxu0 %v4001
    %5033 = vmatpush1.bf16.msra.mxu0 %v4000
    %5034 = vmatprep.subr.bf16.mxu0 %v3997
    %5035 = vmatpush1.bf16.msra.mxu0 %v3996
    %5036 = vmatprep.subr.bf16.mxu0 %v3993
    %5037 = vmatpush1.bf16.msra.mxu0 %v3992
    %5038 = vmatprep.subr.bf16.mxu0 %v4053
    %5039 = vmatpush2.bf16.msra.mxu0 %v4052
    %5040 = vmatprep.subr.bf16.mxu0 %v4049
    %5041 = vmatpush2.bf16.msra.mxu0 %v4048
    %5042 = vmatprep.subr.bf16.mxu0 %v4045
    %5043 = vmatpush2.bf16.msra.mxu0 %v4044
    %5044 = vmatprep.subr.bf16.mxu0 %v4041
    %5045 = vmatpush2.bf16.msra.mxu0 %v4040
    %5046 = vmatprep.subr.bf16.mxu0 %v4037
    %5047 = vmatpush2.bf16.msra.mxu0 %v4036
    %5048 = vmatprep.subr.bf16.mxu0 %v4033
    %5049 = vmatpush2.bf16.msra.mxu0 %v4032
    %5050 = vmatprep.subr.bf16.mxu0 %v4029
    %5051 = vmatpush2.bf16.msra.mxu0 %v4028
    %5052 = vmatprep.subr.bf16.mxu0 %v4025
    %5053 = vmatpush2.bf16.msra.mxu0 %v4024
    %5054 = vmatprep.mubr.bf16.mxu0 %v2503
    %5055 = vmatmul.mubr.bf16.gmra.mxu0 %v2502
    %v5056 = vpop.f32.mrf.mxu0
    %v5057 = vadd.f32 %v4984, %v5056
    %v5058 = vpop.f32.mrf.mxu0
    %v5059 = vadd.f32 %v4986, %v5058
    %v5060 = vpop.f32.mrf.mxu0
    %v5061 = vadd.f32 %v4988, %v5060
    %v5062 = vpop.f32.mrf.mxu0
    %v5063 = vadd.f32 %v4990, %v5062
    %5064 = vmatprep.mubr.bf16.mxu0 %v2507
    %5065 = vmatmul.mubr.bf16.gmra.mxu0 %v2506
    %v5066 = vpop.f32.mrf.mxu0
    %v5067 = vadd.f32 %v4994, %v5066
    %v5068 = vpop.f32.mrf.mxu0
    %v5069 = vadd.f32 %v4996, %v5068
    %v5070 = vpop.f32.mrf.mxu0
    %v5071 = vadd.f32 %v4998, %v5070
    %v5072 = vpop.f32.mrf.mxu0
    %v5073 = vadd.f32 %v5000, %v5072
    %5074 = vmatprep.mubr.bf16.mxu0 %v2511
    %5075 = vmatmul.mubr.bf16.gmra.mxu0 %v2510
    %v5076 = vpop.f32.mrf.mxu0
    %v5077 = vadd.f32 %v5004, %v5076
    %v5078 = vpop.f32.mrf.mxu0
    %v5079 = vadd.f32 %v5006, %v5078
    %v5080 = vpop.f32.mrf.mxu0
    %v5081 = vadd.f32 %v5008, %v5080
    %v5082 = vpop.f32.mrf.mxu0
    %v5083 = vadd.f32 %v5010, %v5082
    %5084 = vmatprep.mubr.bf16.mxu0 %v2515
    %5085 = vmatmul.mubr.bf16.gmra.mxu0 %v2514
    %v5086 = vpop.f32.mrf.mxu0
    %v5087 = vadd.f32 %v5014, %v5086
    %v5088 = vpop.f32.mrf.mxu0
    %v5089 = vadd.f32 %v5016, %v5088
    %v5090 = vpop.f32.mrf.mxu0
    %v5091 = vadd.f32 %v5018, %v5090
    %v5092 = vpop.f32.mrf.mxu0
    %v5093 = vadd.f32 %v5020, %v5092
    %5094 = vdwg.mxu0
    %5095 = vmatprep.subr.bf16.mxu0 %v4085
    %5096 = vmatpush1.bf16.msra.mxu0 %v4084
    %5097 = vmatprep.subr.bf16.mxu0 %v4081
    %5098 = vmatpush1.bf16.msra.mxu0 %v4080
    %5099 = vmatprep.subr.bf16.mxu0 %v4077
    %5100 = vmatpush1.bf16.msra.mxu0 %v4076
    %5101 = vmatprep.subr.bf16.mxu0 %v4073
    %5102 = vmatpush1.bf16.msra.mxu0 %v4072
    %5103 = vmatprep.subr.bf16.mxu0 %v4069
    %5104 = vmatpush1.bf16.msra.mxu0 %v4068
    %5105 = vmatprep.subr.bf16.mxu0 %v4065
    %5106 = vmatpush1.bf16.msra.mxu0 %v4064
    %5107 = vmatprep.subr.bf16.mxu0 %v4061
    %5108 = vmatpush1.bf16.msra.mxu0 %v4060
    %5109 = vmatprep.subr.bf16.mxu0 %v4057
    %5110 = vmatpush1.bf16.msra.mxu0 %v4056
    %5111 = vmatprep.subr.bf16.mxu0 %v4117
    %5112 = vmatpush2.bf16.msra.mxu0 %v4116
    %5113 = vmatprep.subr.bf16.mxu0 %v4113
    %5114 = vmatpush2.bf16.msra.mxu0 %v4112
    %5115 = vmatprep.subr.bf16.mxu0 %v4109
    %5116 = vmatpush2.bf16.msra.mxu0 %v4108
    %5117 = vmatprep.subr.bf16.mxu0 %v4105
    %5118 = vmatpush2.bf16.msra.mxu0 %v4104
    %5119 = vmatprep.subr.bf16.mxu0 %v4101
    %5120 = vmatpush2.bf16.msra.mxu0 %v4100
    %5121 = vmatprep.subr.bf16.mxu0 %v4097
    %5122 = vmatpush2.bf16.msra.mxu0 %v4096
    %5123 = vmatprep.subr.bf16.mxu0 %v4093
    %5124 = vmatpush2.bf16.msra.mxu0 %v4092
    %5125 = vmatprep.subr.bf16.mxu0 %v4089
    %5126 = vmatpush2.bf16.msra.mxu0 %v4088
    %5127 = vmatprep.mubr.bf16.mxu0 %v2505
    %5128 = vmatmul.mubr.bf16.gmra.mxu0 %v2504
    %v5129 = vpop.f32.mrf.mxu0
    %v5130 = vadd.f32 %v5057, %v5129
    %v5131 = vpop.f32.mrf.mxu0
    %v5132 = vadd.f32 %v5059, %v5131
    %v5133 = vpop.f32.mrf.mxu0
    %v5134 = vadd.f32 %v5061, %v5133
    %v5135 = vpop.f32.mrf.mxu0
    %v5136 = vadd.f32 %v5063, %v5135
    %5137 = vmatprep.mubr.bf16.mxu0 %v2509
    %5138 = vmatmul.mubr.bf16.gmra.mxu0 %v2508
    %v5139 = vpop.f32.mrf.mxu0
    %v5140 = vadd.f32 %v5067, %v5139
    %v5141 = vpop.f32.mrf.mxu0
    %v5142 = vadd.f32 %v5069, %v5141
    %v5143 = vpop.f32.mrf.mxu0
    %v5144 = vadd.f32 %v5071, %v5143
    %v5145 = vpop.f32.mrf.mxu0
    %v5146 = vadd.f32 %v5073, %v5145
    %5147 = vmatprep.mubr.bf16.mxu0 %v2513
    %5148 = vmatmul.mubr.bf16.gmra.mxu0 %v2512
    %v5149 = vpop.f32.mrf.mxu0
    %v5150 = vadd.f32 %v5077, %v5149
    %v5151 = vpop.f32.mrf.mxu0
    %v5152 = vadd.f32 %v5079, %v5151
    %v5153 = vpop.f32.mrf.mxu0
    %v5154 = vadd.f32 %v5081, %v5153
    %v5155 = vpop.f32.mrf.mxu0
    %v5156 = vadd.f32 %v5083, %v5155
    %5157 = vmatprep.mubr.bf16.mxu0 %v2517
    %5158 = vmatmul.mubr.bf16.gmra.mxu0 %v2516
    %v5159 = vpop.f32.mrf.mxu0
    %v5160 = vadd.f32 %v5087, %v5159
    %v5161 = vpop.f32.mrf.mxu0
    %v5162 = vadd.f32 %v5089, %v5161
    %v5163 = vpop.f32.mrf.mxu0
    %v5164 = vadd.f32 %v5091, %v5163
    %v5165 = vpop.f32.mrf.mxu0
    %v5166 = vadd.f32 %v5093, %v5165
    %5167 = vdwg.mxu0
    %v5168 = vmax.f32 %v4765, %v5130
    %v5169 = vmax.f32 %v4767, %v5132
    %v5170 = vmax.f32 %v4769, %v5134
    %v5171 = vmax.f32 %v4771, %v5136
    %v5172 = vmax.f32 %v4775, %v5140
    %v5173 = vmax.f32 %v4777, %v5142
    %v5174 = vmax.f32 %v4779, %v5144
    %v5175 = vmax.f32 %v4781, %v5146
    %v5176 = vmax.f32 %v4785, %v5150
    %v5177 = vmax.f32 %v4787, %v5152
    %v5178 = vmax.f32 %v4789, %v5154
    %v5179 = vmax.f32 %v4791, %v5156
    %v5180 = vmax.f32 %v4795, %v5160
    %v5181 = vmax.f32 %v4797, %v5162
    %v5182 = vmax.f32 %v4799, %v5164
    %v5183 = vmax.f32 %v4801, %v5166
    %v5184 = vmax.f32 %v5168, %v5170
    %v5185 = vmax.f32 %v5169, %v5171
    %v5186 = vmax.f32 %v5172, %v5174
    %v5187 = vmax.f32 %v5173, %v5175
    %v5188 = vmax.f32 %v5176, %v5178
    %v5189 = vmax.f32 %v5177, %v5179
    %v5190 = vmax.f32 %v5180, %v5182
    %v5191 = vmax.f32 %v5181, %v5183
    %v5192 = vld [vmem:[#allocation7] sm:$0xff]
    %v5193 = vld [vmem:[#allocation7 + $0x8] sm:$0xff]
    %v5194 = vadd.f32 %v5184, %v5192
    %v5195 = vadd.f32 %v5185, %v5193
    %v5196 = vadd.f32 %v5186, %v5192
    %v5197 = vadd.f32 %v5187, %v5193
    %v5198 = vadd.f32 %v5188, %v5192
    %v5199 = vadd.f32 %v5189, %v5193
    %v5200 = vadd.f32 %v5190, %v5192
    %v5201 = vadd.f32 %v5191, %v5193
    %v5202 = vmax.f32 %v5194, 0.0
    %v5203 = vmax.f32 %v5195, 0.0
    %v5204 = vmax.f32 %v5196, 0.0
    %v5205 = vmax.f32 %v5197, 0.0
    %v5206 = vmax.f32 %v5198, 0.0
    %v5207 = vmax.f32 %v5199, 0.0
    %v5208 = vmax.f32 %v5200, 0.0
    %v5209 = vmax.f32 %v5201, 0.0
    %v5210 = vpack.c.bf16 %v5202, %v5202
    %v5211 = vpack.c.bf16 %v5203, %v5203
    %v5212 = vpack.c.bf16 %v5204, %v5204
    %v5213 = vpack.c.bf16 %v5205, %v5205
    %v5214 = vpack.c.bf16 %v5206, %v5206
    %v5215 = vpack.c.bf16 %v5207, %v5207
    %v5216 = vpack.c.bf16 %v5208, %v5208
    %v5217 = vpack.c.bf16 %v5209, %v5209
    %v5218 = vld [vmem:[#allocation9] sm:$0xff]
    %v5219 = vld [vmem:[#allocation9 + $0x8] sm:$0xff]
    %v5220 = vld [vmem:[#allocation9 + $0x10] sm:$0xff]
    %v5221 = vld [vmem:[#allocation9 + $0x18] sm:$0xff]
    %v5222 = vld [vmem:[#allocation9 + $0x20] sm:$0xff]
    %v5223 = vld [vmem:[#allocation9 + $0x28] sm:$0xff]
    %v5224 = vld [vmem:[#allocation9 + $0x30] sm:$0xff]
    %v5225 = vld [vmem:[#allocation9 + $0x38] sm:$0xff]
    %v5226 = vld [vmem:[#allocation9 + $0x40] sm:$0xff]
    %v5227 = vld [vmem:[#allocation9 + $0x48] sm:$0xff]
    %v5228 = vld [vmem:[#allocation9 + $0x50] sm:$0xff]
    %v5229 = vld [vmem:[#allocation9 + $0x58] sm:$0xff]
    %v5230 = vld [vmem:[#allocation9 + $0x60] sm:$0xff]
    %v5231 = vld [vmem:[#allocation9 + $0x68] sm:$0xff]
    %v5232 = vld [vmem:[#allocation9 + $0x70] sm:$0xff]
    %v5233 = vld [vmem:[#allocation9 + $0x78] sm:$0xff]
    %v5234 = vld [vmem:[#allocation9 + $0x80] sm:$0xff]
    %v5235 = vld [vmem:[#allocation9 + $0x88] sm:$0xff]
    %v5236 = vld [vmem:[#allocation9 + $0x90] sm:$0xff]
    %v5237 = vld [vmem:[#allocation9 + $0x98] sm:$0xff]
    %v5238 = vld [vmem:[#allocation9 + $0xa0] sm:$0xff]
    %v5239 = vld [vmem:[#allocation9 + $0xa8] sm:$0xff]
    %v5240 = vld [vmem:[#allocation9 + $0xb0] sm:$0xff]
    %v5241 = vld [vmem:[#allocation9 + $0xb8] sm:$0xff]
    %v5242 = vld [vmem:[#allocation9 + $0xc0] sm:$0xff]
    %v5243 = vld [vmem:[#allocation9 + $0xc8] sm:$0xff]
    %v5244 = vld [vmem:[#allocation9 + $0xd0] sm:$0xff]
    %v5245 = vld [vmem:[#allocation9 + $0xd8] sm:$0xff]
    %v5246 = vld [vmem:[#allocation9 + $0xe0] sm:$0xff]
    %v5247 = vld [vmem:[#allocation9 + $0xe8] sm:$0xff]
    %v5248 = vld [vmem:[#allocation9 + $0xf0] sm:$0xff]
    %v5249 = vld [vmem:[#allocation9 + $0xf8] sm:$0xff]
    %v5250 = vld [vmem:[#allocation9 + $0x100] sm:$0xff]
    %v5251 = vld [vmem:[#allocation9 + $0x108] sm:$0xff]
    %v5252 = vld [vmem:[#allocation9 + $0x110] sm:$0xff]
    %v5253 = vld [vmem:[#allocation9 + $0x118] sm:$0xff]
    %v5254 = vld [vmem:[#allocation9 + $0x120] sm:$0xff]
    %v5255 = vld [vmem:[#allocation9 + $0x128] sm:$0xff]
    %v5256 = vld [vmem:[#allocation9 + $0x130] sm:$0xff]
    %v5257 = vld [vmem:[#allocation9 + $0x138] sm:$0xff]
    %v5258 = vld [vmem:[#allocation9 + $0x140] sm:$0xff]
    %v5259 = vld [vmem:[#allocation9 + $0x148] sm:$0xff]
    %v5260 = vld [vmem:[#allocation9 + $0x150] sm:$0xff]
    %v5261 = vld [vmem:[#allocation9 + $0x158] sm:$0xff]
    %v5262 = vld [vmem:[#allocation9 + $0x160] sm:$0xff]
    %v5263 = vld [vmem:[#allocation9 + $0x168] sm:$0xff]
    %v5264 = vld [vmem:[#allocation9 + $0x170] sm:$0xff]
    %v5265 = vld [vmem:[#allocation9 + $0x178] sm:$0xff]
    %v5266 = vld [vmem:[#allocation9 + $0x180] sm:$0xff]
    %v5267 = vld [vmem:[#allocation9 + $0x188] sm:$0xff]
    %v5268 = vld [vmem:[#allocation9 + $0x190] sm:$0xff]
    %v5269 = vld [vmem:[#allocation9 + $0x198] sm:$0xff]
    %v5270 = vld [vmem:[#allocation9 + $0x1a0] sm:$0xff]
    %v5271 = vld [vmem:[#allocation9 + $0x1a8] sm:$0xff]
    %v5272 = vld [vmem:[#allocation9 + $0x1b0] sm:$0xff]
    %v5273 = vld [vmem:[#allocation9 + $0x1b8] sm:$0xff]
    %v5274 = vld [vmem:[#allocation9 + $0x1c0] sm:$0xff]
    %v5275 = vld [vmem:[#allocation9 + $0x1c8] sm:$0xff]
    %v5276 = vld [vmem:[#allocation9 + $0x1d0] sm:$0xff]
    %v5277 = vld [vmem:[#allocation9 + $0x1d8] sm:$0xff]
    %v5278 = vld [vmem:[#allocation9 + $0x1e0] sm:$0xff]
    %v5279 = vld [vmem:[#allocation9 + $0x1e8] sm:$0xff]
    %v5280 = vld [vmem:[#allocation9 + $0x1f0] sm:$0xff]
    %v5281 = vld [vmem:[#allocation9 + $0x1f8] sm:$0xff]
    %v5282 = vld [vmem:[#allocation9 + $0x200] sm:$0xff]
    %v5283 = vld [vmem:[#allocation9 + $0x208] sm:$0xff]
    %v5284 = vld [vmem:[#allocation9 + $0x210] sm:$0xff]
    %v5285 = vld [vmem:[#allocation9 + $0x218] sm:$0xff]
    %v5286 = vld [vmem:[#allocation9 + $0x220] sm:$0xff]
    %v5287 = vld [vmem:[#allocation9 + $0x228] sm:$0xff]
    %v5288 = vld [vmem:[#allocation9 + $0x230] sm:$0xff]
    %v5289 = vld [vmem:[#allocation9 + $0x238] sm:$0xff]
    %v5290 = vld [vmem:[#allocation9 + $0x240] sm:$0xff]
    %v5291 = vld [vmem:[#allocation9 + $0x248] sm:$0xff]
    %v5292 = vld [vmem:[#allocation9 + $0x250] sm:$0xff]
    %v5293 = vld [vmem:[#allocation9 + $0x258] sm:$0xff]
    %v5294 = vld [vmem:[#allocation9 + $0x260] sm:$0xff]
    %v5295 = vld [vmem:[#allocation9 + $0x268] sm:$0xff]
    %v5296 = vld [vmem:[#allocation9 + $0x270] sm:$0xff]
    %v5297 = vld [vmem:[#allocation9 + $0x278] sm:$0xff]
    %v5298 = vld [vmem:[#allocation9 + $0x280] sm:$0xff]
    %v5299 = vld [vmem:[#allocation9 + $0x288] sm:$0xff]
    %v5300 = vld [vmem:[#allocation9 + $0x290] sm:$0xff]
    %v5301 = vld [vmem:[#allocation9 + $0x298] sm:$0xff]
    %v5302 = vld [vmem:[#allocation9 + $0x2a0] sm:$0xff]
    %v5303 = vld [vmem:[#allocation9 + $0x2a8] sm:$0xff]
    %v5304 = vld [vmem:[#allocation9 + $0x2b0] sm:$0xff]
    %v5305 = vld [vmem:[#allocation9 + $0x2b8] sm:$0xff]
    %v5306 = vld [vmem:[#allocation9 + $0x2c0] sm:$0xff]
    %v5307 = vld [vmem:[#allocation9 + $0x2c8] sm:$0xff]
    %v5308 = vld [vmem:[#allocation9 + $0x2d0] sm:$0xff]
    %v5309 = vld [vmem:[#allocation9 + $0x2d8] sm:$0xff]
    %v5310 = vld [vmem:[#allocation9 + $0x2e0] sm:$0xff]
    %v5311 = vld [vmem:[#allocation9 + $0x2e8] sm:$0xff]
    %v5312 = vld [vmem:[#allocation9 + $0x2f0] sm:$0xff]
    %v5313 = vld [vmem:[#allocation9 + $0x2f8] sm:$0xff]
    %v5314 = vld [vmem:[#allocation9 + $0x300] sm:$0xff]
    %v5315 = vld [vmem:[#allocation9 + $0x308] sm:$0xff]
    %v5316 = vld [vmem:[#allocation9 + $0x310] sm:$0xff]
    %v5317 = vld [vmem:[#allocation9 + $0x318] sm:$0xff]
    %v5318 = vld [vmem:[#allocation9 + $0x320] sm:$0xff]
    %v5319 = vld [vmem:[#allocation9 + $0x328] sm:$0xff]
    %v5320 = vld [vmem:[#allocation9 + $0x330] sm:$0xff]
    %v5321 = vld [vmem:[#allocation9 + $0x338] sm:$0xff]
    %v5322 = vld [vmem:[#allocation9 + $0x340] sm:$0xff]
    %v5323 = vld [vmem:[#allocation9 + $0x348] sm:$0xff]
    %v5324 = vld [vmem:[#allocation9 + $0x350] sm:$0xff]
    %v5325 = vld [vmem:[#allocation9 + $0x358] sm:$0xff]
    %v5326 = vld [vmem:[#allocation9 + $0x360] sm:$0xff]
    %v5327 = vld [vmem:[#allocation9 + $0x368] sm:$0xff]
    %v5328 = vld [vmem:[#allocation9 + $0x370] sm:$0xff]
    %v5329 = vld [vmem:[#allocation9 + $0x378] sm:$0xff]
    %v5330 = vld [vmem:[#allocation9 + $0x380] sm:$0xff]
    %v5331 = vld [vmem:[#allocation9 + $0x388] sm:$0xff]
    %v5332 = vld [vmem:[#allocation9 + $0x390] sm:$0xff]
    %v5333 = vld [vmem:[#allocation9 + $0x398] sm:$0xff]
    %v5334 = vld [vmem:[#allocation9 + $0x3a0] sm:$0xff]
    %v5335 = vld [vmem:[#allocation9 + $0x3a8] sm:$0xff]
    %v5336 = vld [vmem:[#allocation9 + $0x3b0] sm:$0xff]
    %v5337 = vld [vmem:[#allocation9 + $0x3b8] sm:$0xff]
    %v5338 = vld [vmem:[#allocation9 + $0x3c0] sm:$0xff]
    %v5339 = vld [vmem:[#allocation9 + $0x3c8] sm:$0xff]
    %v5340 = vld [vmem:[#allocation9 + $0x3d0] sm:$0xff]
    %v5341 = vld [vmem:[#allocation9 + $0x3d8] sm:$0xff]
    %v5342 = vld [vmem:[#allocation9 + $0x3e0] sm:$0xff]
    %v5343 = vld [vmem:[#allocation9 + $0x3e8] sm:$0xff]
    %v5344 = vld [vmem:[#allocation9 + $0x3f0] sm:$0xff]
    %v5345 = vld [vmem:[#allocation9 + $0x3f8] sm:$0xff]
    %v5346 = vld [vmem:[#allocation9 + $0x400] sm:$0xff]
    %v5347 = vld [vmem:[#allocation9 + $0x408] sm:$0xff]
    %v5348 = vld [vmem:[#allocation9 + $0x410] sm:$0xff]
    %v5349 = vld [vmem:[#allocation9 + $0x418] sm:$0xff]
    %v5350 = vld [vmem:[#allocation9 + $0x420] sm:$0xff]
    %v5351 = vld [vmem:[#allocation9 + $0x428] sm:$0xff]
    %v5352 = vld [vmem:[#allocation9 + $0x430] sm:$0xff]
    %v5353 = vld [vmem:[#allocation9 + $0x438] sm:$0xff]
    %v5354 = vld [vmem:[#allocation9 + $0x440] sm:$0xff]
    %v5355 = vld [vmem:[#allocation9 + $0x448] sm:$0xff]
    %v5356 = vld [vmem:[#allocation9 + $0x450] sm:$0xff]
    %v5357 = vld [vmem:[#allocation9 + $0x458] sm:$0xff]
    %v5358 = vld [vmem:[#allocation9 + $0x460] sm:$0xff]
    %v5359 = vld [vmem:[#allocation9 + $0x468] sm:$0xff]
    %v5360 = vld [vmem:[#allocation9 + $0x470] sm:$0xff]
    %v5361 = vld [vmem:[#allocation9 + $0x478] sm:$0xff]
    %v5362 = vld [vmem:[#allocation9 + $0x480] sm:$0xff]
    %v5363 = vld [vmem:[#allocation9 + $0x488] sm:$0xff]
    %v5364 = vld [vmem:[#allocation9 + $0x490] sm:$0xff]
    %v5365 = vld [vmem:[#allocation9 + $0x498] sm:$0xff]
    %v5366 = vld [vmem:[#allocation9 + $0x4a0] sm:$0xff]
    %v5367 = vld [vmem:[#allocation9 + $0x4a8] sm:$0xff]
    %v5368 = vld [vmem:[#allocation9 + $0x4b0] sm:$0xff]
    %v5369 = vld [vmem:[#allocation9 + $0x4b8] sm:$0xff]
    %v5370 = vld [vmem:[#allocation9 + $0x4c0] sm:$0xff]
    %v5371 = vld [vmem:[#allocation9 + $0x4c8] sm:$0xff]
    %v5372 = vld [vmem:[#allocation9 + $0x4d0] sm:$0xff]
    %v5373 = vld [vmem:[#allocation9 + $0x4d8] sm:$0xff]
    %v5374 = vld [vmem:[#allocation9 + $0x4e0] sm:$0xff]
    %v5375 = vld [vmem:[#allocation9 + $0x4e8] sm:$0xff]
    %v5376 = vld [vmem:[#allocation9 + $0x4f0] sm:$0xff]
    %v5377 = vld [vmem:[#allocation9 + $0x4f8] sm:$0xff]
    %v5378 = vld [vmem:[#allocation9 + $0x500] sm:$0xff]
    %v5379 = vld [vmem:[#allocation9 + $0x508] sm:$0xff]
    %v5380 = vld [vmem:[#allocation9 + $0x510] sm:$0xff]
    %v5381 = vld [vmem:[#allocation9 + $0x518] sm:$0xff]
    %v5382 = vld [vmem:[#allocation9 + $0x520] sm:$0xff]
    %v5383 = vld [vmem:[#allocation9 + $0x528] sm:$0xff]
    %v5384 = vld [vmem:[#allocation9 + $0x530] sm:$0xff]
    %v5385 = vld [vmem:[#allocation9 + $0x538] sm:$0xff]
    %v5386 = vld [vmem:[#allocation9 + $0x540] sm:$0xff]
    %v5387 = vld [vmem:[#allocation9 + $0x548] sm:$0xff]
    %v5388 = vld [vmem:[#allocation9 + $0x550] sm:$0xff]
    %v5389 = vld [vmem:[#allocation9 + $0x558] sm:$0xff]
    %v5390 = vld [vmem:[#allocation9 + $0x560] sm:$0xff]
    %v5391 = vld [vmem:[#allocation9 + $0x568] sm:$0xff]
    %v5392 = vld [vmem:[#allocation9 + $0x570] sm:$0xff]
    %v5393 = vld [vmem:[#allocation9 + $0x578] sm:$0xff]
    %v5394 = vld [vmem:[#allocation9 + $0x580] sm:$0xff]
    %v5395 = vld [vmem:[#allocation9 + $0x588] sm:$0xff]
    %v5396 = vld [vmem:[#allocation9 + $0x590] sm:$0xff]
    %v5397 = vld [vmem:[#allocation9 + $0x598] sm:$0xff]
    %v5398 = vld [vmem:[#allocation9 + $0x5a0] sm:$0xff]
    %v5399 = vld [vmem:[#allocation9 + $0x5a8] sm:$0xff]
    %v5400 = vld [vmem:[#allocation9 + $0x5b0] sm:$0xff]
    %v5401 = vld [vmem:[#allocation9 + $0x5b8] sm:$0xff]
    %v5402 = vld [vmem:[#allocation9 + $0x5c0] sm:$0xff]
    %v5403 = vld [vmem:[#allocation9 + $0x5c8] sm:$0xff]
    %v5404 = vld [vmem:[#allocation9 + $0x5d0] sm:$0xff]
    %v5405 = vld [vmem:[#allocation9 + $0x5d8] sm:$0xff]
    %v5406 = vld [vmem:[#allocation9 + $0x5e0] sm:$0xff]
    %v5407 = vld [vmem:[#allocation9 + $0x5e8] sm:$0xff]
    %v5408 = vld [vmem:[#allocation9 + $0x5f0] sm:$0xff]
    %v5409 = vld [vmem:[#allocation9 + $0x5f8] sm:$0xff]
    %v5410 = vld [vmem:[#allocation9 + $0x600] sm:$0xff]
    %v5411 = vld [vmem:[#allocation9 + $0x608] sm:$0xff]
    %v5412 = vld [vmem:[#allocation9 + $0x610] sm:$0xff]
    %v5413 = vld [vmem:[#allocation9 + $0x618] sm:$0xff]
    %v5414 = vld [vmem:[#allocation9 + $0x620] sm:$0xff]
    %v5415 = vld [vmem:[#allocation9 + $0x628] sm:$0xff]
    %v5416 = vld [vmem:[#allocation9 + $0x630] sm:$0xff]
    %v5417 = vld [vmem:[#allocation9 + $0x638] sm:$0xff]
    %v5418 = vld [vmem:[#allocation9 + $0x640] sm:$0xff]
    %v5419 = vld [vmem:[#allocation9 + $0x648] sm:$0xff]
    %v5420 = vld [vmem:[#allocation9 + $0x650] sm:$0xff]
    %v5421 = vld [vmem:[#allocation9 + $0x658] sm:$0xff]
    %v5422 = vld [vmem:[#allocation9 + $0x660] sm:$0xff]
    %v5423 = vld [vmem:[#allocation9 + $0x668] sm:$0xff]
    %v5424 = vld [vmem:[#allocation9 + $0x670] sm:$0xff]
    %v5425 = vld [vmem:[#allocation9 + $0x678] sm:$0xff]
    %v5426 = vld [vmem:[#allocation9 + $0x680] sm:$0xff]
    %v5427 = vld [vmem:[#allocation9 + $0x688] sm:$0xff]
    %v5428 = vld [vmem:[#allocation9 + $0x690] sm:$0xff]
    %v5429 = vld [vmem:[#allocation9 + $0x698] sm:$0xff]
    %v5430 = vld [vmem:[#allocation9 + $0x6a0] sm:$0xff]
    %v5431 = vld [vmem:[#allocation9 + $0x6a8] sm:$0xff]
    %v5432 = vld [vmem:[#allocation9 + $0x6b0] sm:$0xff]
    %v5433 = vld [vmem:[#allocation9 + $0x6b8] sm:$0xff]
    %v5434 = vld [vmem:[#allocation9 + $0x6c0] sm:$0xff]
    %v5435 = vld [vmem:[#allocation9 + $0x6c8] sm:$0xff]
    %v5436 = vld [vmem:[#allocation9 + $0x6d0] sm:$0xff]
    %v5437 = vld [vmem:[#allocation9 + $0x6d8] sm:$0xff]
    %v5438 = vld [vmem:[#allocation9 + $0x6e0] sm:$0xff]
    %v5439 = vld [vmem:[#allocation9 + $0x6e8] sm:$0xff]
    %v5440 = vld [vmem:[#allocation9 + $0x6f0] sm:$0xff]
    %v5441 = vld [vmem:[#allocation9 + $0x6f8] sm:$0xff]
    %v5442 = vld [vmem:[#allocation9 + $0x700] sm:$0xff]
    %v5443 = vld [vmem:[#allocation9 + $0x708] sm:$0xff]
    %v5444 = vld [vmem:[#allocation9 + $0x710] sm:$0xff]
    %v5445 = vld [vmem:[#allocation9 + $0x718] sm:$0xff]
    %v5446 = vld [vmem:[#allocation9 + $0x720] sm:$0xff]
    %v5447 = vld [vmem:[#allocation9 + $0x728] sm:$0xff]
    %v5448 = vld [vmem:[#allocation9 + $0x730] sm:$0xff]
    %v5449 = vld [vmem:[#allocation9 + $0x738] sm:$0xff]
    %v5450 = vld [vmem:[#allocation9 + $0x740] sm:$0xff]
    %v5451 = vld [vmem:[#allocation9 + $0x748] sm:$0xff]
    %v5452 = vld [vmem:[#allocation9 + $0x750] sm:$0xff]
    %v5453 = vld [vmem:[#allocation9 + $0x758] sm:$0xff]
    %v5454 = vld [vmem:[#allocation9 + $0x760] sm:$0xff]
    %v5455 = vld [vmem:[#allocation9 + $0x768] sm:$0xff]
    %v5456 = vld [vmem:[#allocation9 + $0x770] sm:$0xff]
    %v5457 = vld [vmem:[#allocation9 + $0x778] sm:$0xff]
    %v5458 = vld [vmem:[#allocation9 + $0x780] sm:$0xff]
    %v5459 = vld [vmem:[#allocation9 + $0x788] sm:$0xff]
    %v5460 = vld [vmem:[#allocation9 + $0x790] sm:$0xff]
    %v5461 = vld [vmem:[#allocation9 + $0x798] sm:$0xff]
    %v5462 = vld [vmem:[#allocation9 + $0x7a0] sm:$0xff]
    %v5463 = vld [vmem:[#allocation9 + $0x7a8] sm:$0xff]
    %v5464 = vld [vmem:[#allocation9 + $0x7b0] sm:$0xff]
    %v5465 = vld [vmem:[#allocation9 + $0x7b8] sm:$0xff]
    %v5466 = vld [vmem:[#allocation9 + $0x7c0] sm:$0xff]
    %v5467 = vld [vmem:[#allocation9 + $0x7c8] sm:$0xff]
    %v5468 = vld [vmem:[#allocation9 + $0x7d0] sm:$0xff]
    %v5469 = vld [vmem:[#allocation9 + $0x7d8] sm:$0xff]
    %v5470 = vld [vmem:[#allocation9 + $0x7e0] sm:$0xff]
    %v5471 = vld [vmem:[#allocation9 + $0x7e8] sm:$0xff]
    %v5472 = vld [vmem:[#allocation9 + $0x7f0] sm:$0xff]
    %v5473 = vld [vmem:[#allocation9 + $0x7f8] sm:$0xff]
    %v5474 = vld [vmem:[#allocation10] sm:$0xff]
    %v5475 = vld [vmem:[#allocation10 + $0x8] sm:$0xff]
    %v5476 = vld [vmem:[#allocation10 + $0x10] sm:$0xff]
    %v5477 = vld [vmem:[#allocation10 + $0x18] sm:$0xff]
    %v5734 = vunpack.c.l.b16 %v5218
    %v5735 = vunpack.c.h.b16 %v5218
    %v5736 = vunpack.c.l.b16 %v5219
    %v5737 = vunpack.c.h.b16 %v5219
    %v5738 = vunpack.c.l.b16 %v5220
    %v5739 = vunpack.c.h.b16 %v5220
    %v5740 = vunpack.c.l.b16 %v5221
    %v5741 = vunpack.c.h.b16 %v5221
    %v5742 = vunpack.c.l.b16 %v5222
    %v5743 = vunpack.c.h.b16 %v5222
    %v5744 = vunpack.c.l.b16 %v5223
    %v5745 = vunpack.c.h.b16 %v5223
    %v5746 = vunpack.c.l.b16 %v5224
    %v5747 = vunpack.c.h.b16 %v5224
    %v5748 = vunpack.c.l.b16 %v5225
    %v5749 = vunpack.c.h.b16 %v5225
    %v5750 = vunpack.c.l.b16 %v5226
    %v5751 = vunpack.c.h.b16 %v5226
    %v5752 = vunpack.c.l.b16 %v5227
    %v5753 = vunpack.c.h.b16 %v5227
    %v5754 = vunpack.c.l.b16 %v5228
    %v5755 = vunpack.c.h.b16 %v5228
    %v5756 = vunpack.c.l.b16 %v5229
    %v5757 = vunpack.c.h.b16 %v5229
    %v5758 = vunpack.c.l.b16 %v5230
    %v5759 = vunpack.c.h.b16 %v5230
    %v5760 = vunpack.c.l.b16 %v5231
    %v5761 = vunpack.c.h.b16 %v5231
    %v5762 = vunpack.c.l.b16 %v5232
    %v5763 = vunpack.c.h.b16 %v5232
    %v5764 = vunpack.c.l.b16 %v5233
    %v5765 = vunpack.c.h.b16 %v5233
    %v5766 = vunpack.c.l.b16 %v5234
    %v5767 = vunpack.c.h.b16 %v5234
    %v5768 = vunpack.c.l.b16 %v5235
    %v5769 = vunpack.c.h.b16 %v5235
    %v5770 = vunpack.c.l.b16 %v5236
    %v5771 = vunpack.c.h.b16 %v5236
    %v5772 = vunpack.c.l.b16 %v5237
    %v5773 = vunpack.c.h.b16 %v5237
    %v5774 = vunpack.c.l.b16 %v5238
    %v5775 = vunpack.c.h.b16 %v5238
    %v5776 = vunpack.c.l.b16 %v5239
    %v5777 = vunpack.c.h.b16 %v5239
    %v5778 = vunpack.c.l.b16 %v5240
    %v5779 = vunpack.c.h.b16 %v5240
    %v5780 = vunpack.c.l.b16 %v5241
    %v5781 = vunpack.c.h.b16 %v5241
    %v5782 = vunpack.c.l.b16 %v5242
    %v5783 = vunpack.c.h.b16 %v5242
    %v5784 = vunpack.c.l.b16 %v5243
    %v5785 = vunpack.c.h.b16 %v5243
    %v5786 = vunpack.c.l.b16 %v5244
    %v5787 = vunpack.c.h.b16 %v5244
    %v5788 = vunpack.c.l.b16 %v5245
    %v5789 = vunpack.c.h.b16 %v5245
    %v5790 = vunpack.c.l.b16 %v5246
    %v5791 = vunpack.c.h.b16 %v5246
    %v5792 = vunpack.c.l.b16 %v5247
    %v5793 = vunpack.c.h.b16 %v5247
    %v5794 = vunpack.c.l.b16 %v5248
    %v5795 = vunpack.c.h.b16 %v5248
    %v5796 = vunpack.c.l.b16 %v5249
    %v5797 = vunpack.c.h.b16 %v5249
    %v5798 = vunpack.c.l.b16 %v5250
    %v5799 = vunpack.c.h.b16 %v5250
    %v5800 = vunpack.c.l.b16 %v5251
    %v5801 = vunpack.c.h.b16 %v5251
    %v5802 = vunpack.c.l.b16 %v5252
    %v5803 = vunpack.c.h.b16 %v5252
    %v5804 = vunpack.c.l.b16 %v5253
    %v5805 = vunpack.c.h.b16 %v5253
    %v5806 = vunpack.c.l.b16 %v5254
    %v5807 = vunpack.c.h.b16 %v5254
    %v5808 = vunpack.c.l.b16 %v5255
    %v5809 = vunpack.c.h.b16 %v5255
    %v5810 = vunpack.c.l.b16 %v5256
    %v5811 = vunpack.c.h.b16 %v5256
    %v5812 = vunpack.c.l.b16 %v5257
    %v5813 = vunpack.c.h.b16 %v5257
    %v5814 = vunpack.c.l.b16 %v5258
    %v5815 = vunpack.c.h.b16 %v5258
    %v5816 = vunpack.c.l.b16 %v5259
    %v5817 = vunpack.c.h.b16 %v5259
    %v5818 = vunpack.c.l.b16 %v5260
    %v5819 = vunpack.c.h.b16 %v5260
    %v5820 = vunpack.c.l.b16 %v5261
    %v5821 = vunpack.c.h.b16 %v5261
    %v5822 = vunpack.c.l.b16 %v5262
    %v5823 = vunpack.c.h.b16 %v5262
    %v5824 = vunpack.c.l.b16 %v5263
    %v5825 = vunpack.c.h.b16 %v5263
    %v5826 = vunpack.c.l.b16 %v5264
    %v5827 = vunpack.c.h.b16 %v5264
    %v5828 = vunpack.c.l.b16 %v5265
    %v5829 = vunpack.c.h.b16 %v5265
    %v5830 = vunpack.c.l.b16 %v5266
    %v5831 = vunpack.c.h.b16 %v5266
    %v5832 = vunpack.c.l.b16 %v5267
    %v5833 = vunpack.c.h.b16 %v5267
    %v5834 = vunpack.c.l.b16 %v5268
    %v5835 = vunpack.c.h.b16 %v5268
    %v5836 = vunpack.c.l.b16 %v5269
    %v5837 = vunpack.c.h.b16 %v5269
    %v5838 = vunpack.c.l.b16 %v5270
    %v5839 = vunpack.c.h.b16 %v5270
    %v5840 = vunpack.c.l.b16 %v5271
    %v5841 = vunpack.c.h.b16 %v5271
    %v5842 = vunpack.c.l.b16 %v5272
    %v5843 = vunpack.c.h.b16 %v5272
    %v5844 = vunpack.c.l.b16 %v5273
    %v5845 = vunpack.c.h.b16 %v5273
    %v5846 = vunpack.c.l.b16 %v5274
    %v5847 = vunpack.c.h.b16 %v5274
    %v5848 = vunpack.c.l.b16 %v5275
    %v5849 = vunpack.c.h.b16 %v5275
    %v5850 = vunpack.c.l.b16 %v5276
    %v5851 = vunpack.c.h.b16 %v5276
    %v5852 = vunpack.c.l.b16 %v5277
    %v5853 = vunpack.c.h.b16 %v5277
    %v5854 = vunpack.c.l.b16 %v5278
    %v5855 = vunpack.c.h.b16 %v5278
    %v5856 = vunpack.c.l.b16 %v5279
    %v5857 = vunpack.c.h.b16 %v5279
    %v5858 = vunpack.c.l.b16 %v5280
    %v5859 = vunpack.c.h.b16 %v5280
    %v5860 = vunpack.c.l.b16 %v5281
    %v5861 = vunpack.c.h.b16 %v5281
    %v5862 = vunpack.c.l.b16 %v5282
    %v5863 = vunpack.c.h.b16 %v5282
    %v5864 = vunpack.c.l.b16 %v5283
    %v5865 = vunpack.c.h.b16 %v5283
    %v5866 = vunpack.c.l.b16 %v5284
    %v5867 = vunpack.c.h.b16 %v5284
    %v5868 = vunpack.c.l.b16 %v5285
    %v5869 = vunpack.c.h.b16 %v5285
    %v5870 = vunpack.c.l.b16 %v5286
    %v5871 = vunpack.c.h.b16 %v5286
    %v5872 = vunpack.c.l.b16 %v5287
    %v5873 = vunpack.c.h.b16 %v5287
    %v5874 = vunpack.c.l.b16 %v5288
    %v5875 = vunpack.c.h.b16 %v5288
    %v5876 = vunpack.c.l.b16 %v5289
    %v5877 = vunpack.c.h.b16 %v5289
    %v5878 = vunpack.c.l.b16 %v5290
    %v5879 = vunpack.c.h.b16 %v5290
    %v5880 = vunpack.c.l.b16 %v5291
    %v5881 = vunpack.c.h.b16 %v5291
    %v5882 = vunpack.c.l.b16 %v5292
    %v5883 = vunpack.c.h.b16 %v5292
    %v5884 = vunpack.c.l.b16 %v5293
    %v5885 = vunpack.c.h.b16 %v5293
    %v5886 = vunpack.c.l.b16 %v5294
    %v5887 = vunpack.c.h.b16 %v5294
    %v5888 = vunpack.c.l.b16 %v5295
    %v5889 = vunpack.c.h.b16 %v5295
    %v5890 = vunpack.c.l.b16 %v5296
    %v5891 = vunpack.c.h.b16 %v5296
    %v5892 = vunpack.c.l.b16 %v5297
    %v5893 = vunpack.c.h.b16 %v5297
    %v5894 = vunpack.c.l.b16 %v5298
    %v5895 = vunpack.c.h.b16 %v5298
    %v5896 = vunpack.c.l.b16 %v5299
    %v5897 = vunpack.c.h.b16 %v5299
    %v5898 = vunpack.c.l.b16 %v5300
    %v5899 = vunpack.c.h.b16 %v5300
    %v5900 = vunpack.c.l.b16 %v5301
    %v5901 = vunpack.c.h.b16 %v5301
    %v5902 = vunpack.c.l.b16 %v5302
    %v5903 = vunpack.c.h.b16 %v5302
    %v5904 = vunpack.c.l.b16 %v5303
    %v5905 = vunpack.c.h.b16 %v5303
    %v5906 = vunpack.c.l.b16 %v5304
    %v5907 = vunpack.c.h.b16 %v5304
    %v5908 = vunpack.c.l.b16 %v5305
    %v5909 = vunpack.c.h.b16 %v5305
    %v5910 = vunpack.c.l.b16 %v5306
    %v5911 = vunpack.c.h.b16 %v5306
    %v5912 = vunpack.c.l.b16 %v5307
    %v5913 = vunpack.c.h.b16 %v5307
    %v5914 = vunpack.c.l.b16 %v5308
    %v5915 = vunpack.c.h.b16 %v5308
    %v5916 = vunpack.c.l.b16 %v5309
    %v5917 = vunpack.c.h.b16 %v5309
    %v5918 = vunpack.c.l.b16 %v5310
    %v5919 = vunpack.c.h.b16 %v5310
    %v5920 = vunpack.c.l.b16 %v5311
    %v5921 = vunpack.c.h.b16 %v5311
    %v5922 = vunpack.c.l.b16 %v5312
    %v5923 = vunpack.c.h.b16 %v5312
    %v5924 = vunpack.c.l.b16 %v5313
    %v5925 = vunpack.c.h.b16 %v5313
    %v5926 = vunpack.c.l.b16 %v5314
    %v5927 = vunpack.c.h.b16 %v5314
    %v5928 = vunpack.c.l.b16 %v5315
    %v5929 = vunpack.c.h.b16 %v5315
    %v5930 = vunpack.c.l.b16 %v5316
    %v5931 = vunpack.c.h.b16 %v5316
    %v5932 = vunpack.c.l.b16 %v5317
    %v5933 = vunpack.c.h.b16 %v5317
    %v5934 = vunpack.c.l.b16 %v5318
    %v5935 = vunpack.c.h.b16 %v5318
    %v5936 = vunpack.c.l.b16 %v5319
    %v5937 = vunpack.c.h.b16 %v5319
    %v5938 = vunpack.c.l.b16 %v5320
    %v5939 = vunpack.c.h.b16 %v5320
    %v5940 = vunpack.c.l.b16 %v5321
    %v5941 = vunpack.c.h.b16 %v5321
    %v5942 = vunpack.c.l.b16 %v5322
    %v5943 = vunpack.c.h.b16 %v5322
    %v5944 = vunpack.c.l.b16 %v5323
    %v5945 = vunpack.c.h.b16 %v5323
    %v5946 = vunpack.c.l.b16 %v5324
    %v5947 = vunpack.c.h.b16 %v5324
    %v5948 = vunpack.c.l.b16 %v5325
    %v5949 = vunpack.c.h.b16 %v5325
    %v5950 = vunpack.c.l.b16 %v5326
    %v5951 = vunpack.c.h.b16 %v5326
    %v5952 = vunpack.c.l.b16 %v5327
    %v5953 = vunpack.c.h.b16 %v5327
    %v5954 = vunpack.c.l.b16 %v5328
    %v5955 = vunpack.c.h.b16 %v5328
    %v5956 = vunpack.c.l.b16 %v5329
    %v5957 = vunpack.c.h.b16 %v5329
    %v5958 = vunpack.c.l.b16 %v5330
    %v5959 = vunpack.c.h.b16 %v5330
    %v5960 = vunpack.c.l.b16 %v5331
    %v5961 = vunpack.c.h.b16 %v5331
    %v5962 = vunpack.c.l.b16 %v5332
    %v5963 = vunpack.c.h.b16 %v5332
    %v5964 = vunpack.c.l.b16 %v5333
    %v5965 = vunpack.c.h.b16 %v5333
    %v5966 = vunpack.c.l.b16 %v5334
    %v5967 = vunpack.c.h.b16 %v5334
    %v5968 = vunpack.c.l.b16 %v5335
    %v5969 = vunpack.c.h.b16 %v5335
    %v5970 = vunpack.c.l.b16 %v5336
    %v5971 = vunpack.c.h.b16 %v5336
    %v5972 = vunpack.c.l.b16 %v5337
    %v5973 = vunpack.c.h.b16 %v5337
    %v5974 = vunpack.c.l.b16 %v5338
    %v5975 = vunpack.c.h.b16 %v5338
    %v5976 = vunpack.c.l.b16 %v5339
    %v5977 = vunpack.c.h.b16 %v5339
    %v5978 = vunpack.c.l.b16 %v5340
    %v5979 = vunpack.c.h.b16 %v5340
    %v5980 = vunpack.c.l.b16 %v5341
    %v5981 = vunpack.c.h.b16 %v5341
    %v5982 = vunpack.c.l.b16 %v5342
    %v5983 = vunpack.c.h.b16 %v5342
    %v5984 = vunpack.c.l.b16 %v5343
    %v5985 = vunpack.c.h.b16 %v5343
    %v5986 = vunpack.c.l.b16 %v5344
    %v5987 = vunpack.c.h.b16 %v5344
    %v5988 = vunpack.c.l.b16 %v5345
    %v5989 = vunpack.c.h.b16 %v5345
    %v5990 = vunpack.c.l.b16 %v5346
    %v5991 = vunpack.c.h.b16 %v5346
    %v5992 = vunpack.c.l.b16 %v5347
    %v5993 = vunpack.c.h.b16 %v5347
    %v5994 = vunpack.c.l.b16 %v5348
    %v5995 = vunpack.c.h.b16 %v5348
    %v5996 = vunpack.c.l.b16 %v5349
    %v5997 = vunpack.c.h.b16 %v5349
    %v5998 = vunpack.c.l.b16 %v5350
    %v5999 = vunpack.c.h.b16 %v5350
    %v6000 = vunpack.c.l.b16 %v5351
    %v6001 = vunpack.c.h.b16 %v5351
    %v6002 = vunpack.c.l.b16 %v5352
    %v6003 = vunpack.c.h.b16 %v5352
    %v6004 = vunpack.c.l.b16 %v5353
    %v6005 = vunpack.c.h.b16 %v5353
    %v6006 = vunpack.c.l.b16 %v5354
    %v6007 = vunpack.c.h.b16 %v5354
    %v6008 = vunpack.c.l.b16 %v5355
    %v6009 = vunpack.c.h.b16 %v5355
    %v6010 = vunpack.c.l.b16 %v5356
    %v6011 = vunpack.c.h.b16 %v5356
    %v6012 = vunpack.c.l.b16 %v5357
    %v6013 = vunpack.c.h.b16 %v5357
    %v6014 = vunpack.c.l.b16 %v5358
    %v6015 = vunpack.c.h.b16 %v5358
    %v6016 = vunpack.c.l.b16 %v5359
    %v6017 = vunpack.c.h.b16 %v5359
    %v6018 = vunpack.c.l.b16 %v5360
    %v6019 = vunpack.c.h.b16 %v5360
    %v6020 = vunpack.c.l.b16 %v5361
    %v6021 = vunpack.c.h.b16 %v5361
    %v6022 = vunpack.c.l.b16 %v5362
    %v6023 = vunpack.c.h.b16 %v5362
    %v6024 = vunpack.c.l.b16 %v5363
    %v6025 = vunpack.c.h.b16 %v5363
    %v6026 = vunpack.c.l.b16 %v5364
    %v6027 = vunpack.c.h.b16 %v5364
    %v6028 = vunpack.c.l.b16 %v5365
    %v6029 = vunpack.c.h.b16 %v5365
    %v6030 = vunpack.c.l.b16 %v5366
    %v6031 = vunpack.c.h.b16 %v5366
    %v6032 = vunpack.c.l.b16 %v5367
    %v6033 = vunpack.c.h.b16 %v5367
    %v6034 = vunpack.c.l.b16 %v5368
    %v6035 = vunpack.c.h.b16 %v5368
    %v6036 = vunpack.c.l.b16 %v5369
    %v6037 = vunpack.c.h.b16 %v5369
    %v6038 = vunpack.c.l.b16 %v5370
    %v6039 = vunpack.c.h.b16 %v5370
    %v6040 = vunpack.c.l.b16 %v5371
    %v6041 = vunpack.c.h.b16 %v5371
    %v6042 = vunpack.c.l.b16 %v5372
    %v6043 = vunpack.c.h.b16 %v5372
    %v6044 = vunpack.c.l.b16 %v5373
    %v6045 = vunpack.c.h.b16 %v5373
    %v6046 = vunpack.c.l.b16 %v5374
    %v6047 = vunpack.c.h.b16 %v5374
    %v6048 = vunpack.c.l.b16 %v5375
    %v6049 = vunpack.c.h.b16 %v5375
    %v6050 = vunpack.c.l.b16 %v5376
    %v6051 = vunpack.c.h.b16 %v5376
    %v6052 = vunpack.c.l.b16 %v5377
    %v6053 = vunpack.c.h.b16 %v5377
    %v6054 = vunpack.c.l.b16 %v5378
    %v6055 = vunpack.c.h.b16 %v5378
    %v6056 = vunpack.c.l.b16 %v5379
    %v6057 = vunpack.c.h.b16 %v5379
    %v6058 = vunpack.c.l.b16 %v5380
    %v6059 = vunpack.c.h.b16 %v5380
    %v6060 = vunpack.c.l.b16 %v5381
    %v6061 = vunpack.c.h.b16 %v5381
    %v6062 = vunpack.c.l.b16 %v5382
    %v6063 = vunpack.c.h.b16 %v5382
    %v6064 = vunpack.c.l.b16 %v5383
    %v6065 = vunpack.c.h.b16 %v5383
    %v6066 = vunpack.c.l.b16 %v5384
    %v6067 = vunpack.c.h.b16 %v5384
    %v6068 = vunpack.c.l.b16 %v5385
    %v6069 = vunpack.c.h.b16 %v5385
    %v6070 = vunpack.c.l.b16 %v5386
    %v6071 = vunpack.c.h.b16 %v5386
    %v6072 = vunpack.c.l.b16 %v5387
    %v6073 = vunpack.c.h.b16 %v5387
    %v6074 = vunpack.c.l.b16 %v5388
    %v6075 = vunpack.c.h.b16 %v5388
    %v6076 = vunpack.c.l.b16 %v5389
    %v6077 = vunpack.c.h.b16 %v5389
    %v6078 = vunpack.c.l.b16 %v5390
    %v6079 = vunpack.c.h.b16 %v5390
    %v6080 = vunpack.c.l.b16 %v5391
    %v6081 = vunpack.c.h.b16 %v5391
    %v6082 = vunpack.c.l.b16 %v5392
    %v6083 = vunpack.c.h.b16 %v5392
    %v6084 = vunpack.c.l.b16 %v5393
    %v6085 = vunpack.c.h.b16 %v5393
    %v6086 = vunpack.c.l.b16 %v5394
    %v6087 = vunpack.c.h.b16 %v5394
    %v6088 = vunpack.c.l.b16 %v5395
    %v6089 = vunpack.c.h.b16 %v5395
    %v6090 = vunpack.c.l.b16 %v5396
    %v6091 = vunpack.c.h.b16 %v5396
    %v6092 = vunpack.c.l.b16 %v5397
    %v6093 = vunpack.c.h.b16 %v5397
    %v6094 = vunpack.c.l.b16 %v5398
    %v6095 = vunpack.c.h.b16 %v5398
    %v6096 = vunpack.c.l.b16 %v5399
    %v6097 = vunpack.c.h.b16 %v5399
    %v6098 = vunpack.c.l.b16 %v5400
    %v6099 = vunpack.c.h.b16 %v5400
    %v6100 = vunpack.c.l.b16 %v5401
    %v6101 = vunpack.c.h.b16 %v5401
    %v6102 = vunpack.c.l.b16 %v5402
    %v6103 = vunpack.c.h.b16 %v5402
    %v6104 = vunpack.c.l.b16 %v5403
    %v6105 = vunpack.c.h.b16 %v5403
    %v6106 = vunpack.c.l.b16 %v5404
    %v6107 = vunpack.c.h.b16 %v5404
    %v6108 = vunpack.c.l.b16 %v5405
    %v6109 = vunpack.c.h.b16 %v5405
    %v6110 = vunpack.c.l.b16 %v5406
    %v6111 = vunpack.c.h.b16 %v5406
    %v6112 = vunpack.c.l.b16 %v5407
    %v6113 = vunpack.c.h.b16 %v5407
    %v6114 = vunpack.c.l.b16 %v5408
    %v6115 = vunpack.c.h.b16 %v5408
    %v6116 = vunpack.c.l.b16 %v5409
    %v6117 = vunpack.c.h.b16 %v5409
    %v6118 = vunpack.c.l.b16 %v5410
    %v6119 = vunpack.c.h.b16 %v5410
    %v6120 = vunpack.c.l.b16 %v5411
    %v6121 = vunpack.c.h.b16 %v5411
    %v6122 = vunpack.c.l.b16 %v5412
    %v6123 = vunpack.c.h.b16 %v5412
    %v6124 = vunpack.c.l.b16 %v5413
    %v6125 = vunpack.c.h.b16 %v5413
    %v6126 = vunpack.c.l.b16 %v5414
    %v6127 = vunpack.c.h.b16 %v5414
    %v6128 = vunpack.c.l.b16 %v5415
    %v6129 = vunpack.c.h.b16 %v5415
    %v6130 = vunpack.c.l.b16 %v5416
    %v6131 = vunpack.c.h.b16 %v5416
    %v6132 = vunpack.c.l.b16 %v5417
    %v6133 = vunpack.c.h.b16 %v5417
    %v6134 = vunpack.c.l.b16 %v5418
    %v6135 = vunpack.c.h.b16 %v5418
    %v6136 = vunpack.c.l.b16 %v5419
    %v6137 = vunpack.c.h.b16 %v5419
    %v6138 = vunpack.c.l.b16 %v5420
    %v6139 = vunpack.c.h.b16 %v5420
    %v6140 = vunpack.c.l.b16 %v5421
    %v6141 = vunpack.c.h.b16 %v5421
    %v6142 = vunpack.c.l.b16 %v5422
    %v6143 = vunpack.c.h.b16 %v5422
    %v6144 = vunpack.c.l.b16 %v5423
    %v6145 = vunpack.c.h.b16 %v5423
    %v6146 = vunpack.c.l.b16 %v5424
    %v6147 = vunpack.c.h.b16 %v5424
    %v6148 = vunpack.c.l.b16 %v5425
    %v6149 = vunpack.c.h.b16 %v5425
    %v6150 = vunpack.c.l.b16 %v5426
    %v6151 = vunpack.c.h.b16 %v5426
    %v6152 = vunpack.c.l.b16 %v5427
    %v6153 = vunpack.c.h.b16 %v5427
    %v6154 = vunpack.c.l.b16 %v5428
    %v6155 = vunpack.c.h.b16 %v5428
    %v6156 = vunpack.c.l.b16 %v5429
    %v6157 = vunpack.c.h.b16 %v5429
    %v6158 = vunpack.c.l.b16 %v5430
    %v6159 = vunpack.c.h.b16 %v5430
    %v6160 = vunpack.c.l.b16 %v5431
    %v6161 = vunpack.c.h.b16 %v5431
    %v6162 = vunpack.c.l.b16 %v5432
    %v6163 = vunpack.c.h.b16 %v5432
    %v6164 = vunpack.c.l.b16 %v5433
    %v6165 = vunpack.c.h.b16 %v5433
    %v6166 = vunpack.c.l.b16 %v5434
    %v6167 = vunpack.c.h.b16 %v5434
    %v6168 = vunpack.c.l.b16 %v5435
    %v6169 = vunpack.c.h.b16 %v5435
    %v6170 = vunpack.c.l.b16 %v5436
    %v6171 = vunpack.c.h.b16 %v5436
    %v6172 = vunpack.c.l.b16 %v5437
    %v6173 = vunpack.c.h.b16 %v5437
    %v6174 = vunpack.c.l.b16 %v5438
    %v6175 = vunpack.c.h.b16 %v5438
    %v6176 = vunpack.c.l.b16 %v5439
    %v6177 = vunpack.c.h.b16 %v5439
    %v6178 = vunpack.c.l.b16 %v5440
    %v6179 = vunpack.c.h.b16 %v5440
    %v6180 = vunpack.c.l.b16 %v5441
    %v6181 = vunpack.c.h.b16 %v5441
    %v6182 = vunpack.c.l.b16 %v5442
    %v6183 = vunpack.c.h.b16 %v5442
    %v6184 = vunpack.c.l.b16 %v5443
    %v6185 = vunpack.c.h.b16 %v5443
    %v6186 = vunpack.c.l.b16 %v5444
    %v6187 = vunpack.c.h.b16 %v5444
    %v6188 = vunpack.c.l.b16 %v5445
    %v6189 = vunpack.c.h.b16 %v5445
    %v6190 = vunpack.c.l.b16 %v5446
    %v6191 = vunpack.c.h.b16 %v5446
    %v6192 = vunpack.c.l.b16 %v5447
    %v6193 = vunpack.c.h.b16 %v5447
    %v6194 = vunpack.c.l.b16 %v5448
    %v6195 = vunpack.c.h.b16 %v5448
    %v6196 = vunpack.c.l.b16 %v5449
    %v6197 = vunpack.c.h.b16 %v5449
    %v6198 = vunpack.c.l.b16 %v5450
    %v6199 = vunpack.c.h.b16 %v5450
    %v6200 = vunpack.c.l.b16 %v5451
    %v6201 = vunpack.c.h.b16 %v5451
    %v6202 = vunpack.c.l.b16 %v5452
    %v6203 = vunpack.c.h.b16 %v5452
    %v6204 = vunpack.c.l.b16 %v5453
    %v6205 = vunpack.c.h.b16 %v5453
    %v6206 = vunpack.c.l.b16 %v5454
    %v6207 = vunpack.c.h.b16 %v5454
    %v6208 = vunpack.c.l.b16 %v5455
    %v6209 = vunpack.c.h.b16 %v5455
    %v6210 = vunpack.c.l.b16 %v5456
    %v6211 = vunpack.c.h.b16 %v5456
    %v6212 = vunpack.c.l.b16 %v5457
    %v6213 = vunpack.c.h.b16 %v5457
    %v6214 = vunpack.c.l.b16 %v5458
    %v6215 = vunpack.c.h.b16 %v5458
    %v6216 = vunpack.c.l.b16 %v5459
    %v6217 = vunpack.c.h.b16 %v5459
    %v6218 = vunpack.c.l.b16 %v5460
    %v6219 = vunpack.c.h.b16 %v5460
    %v6220 = vunpack.c.l.b16 %v5461
    %v6221 = vunpack.c.h.b16 %v5461
    %v6222 = vunpack.c.l.b16 %v5462
    %v6223 = vunpack.c.h.b16 %v5462
    %v6224 = vunpack.c.l.b16 %v5463
    %v6225 = vunpack.c.h.b16 %v5463
    %v6226 = vunpack.c.l.b16 %v5464
    %v6227 = vunpack.c.h.b16 %v5464
    %v6228 = vunpack.c.l.b16 %v5465
    %v6229 = vunpack.c.h.b16 %v5465
    %v6230 = vunpack.c.l.b16 %v5466
    %v6231 = vunpack.c.h.b16 %v5466
    %v6232 = vunpack.c.l.b16 %v5467
    %v6233 = vunpack.c.h.b16 %v5467
    %v6234 = vunpack.c.l.b16 %v5468
    %v6235 = vunpack.c.h.b16 %v5468
    %v6236 = vunpack.c.l.b16 %v5469
    %v6237 = vunpack.c.h.b16 %v5469
    %v6238 = vunpack.c.l.b16 %v5470
    %v6239 = vunpack.c.h.b16 %v5470
    %v6240 = vunpack.c.l.b16 %v5471
    %v6241 = vunpack.c.h.b16 %v5471
    %v6242 = vunpack.c.l.b16 %v5472
    %v6243 = vunpack.c.h.b16 %v5472
    %v6244 = vunpack.c.l.b16 %v5473
    %v6245 = vunpack.c.h.b16 %v5473
    %v6246 = vpack.c.b16 %v5738, %v5734
    %v6247 = vpack.c.b16 %v5739, %v5735
    %v6248 = vpack.c.b16 %v5740, %v5736
    %v6249 = vpack.c.b16 %v5741, %v5737
    %v6250 = vpack.c.b16 %v5746, %v5742
    %v6251 = vpack.c.b16 %v5747, %v5743
    %v6252 = vpack.c.b16 %v5748, %v5744
    %v6253 = vpack.c.b16 %v5749, %v5745
    %v6254 = vpack.c.b16 %v5754, %v5750
    %v6255 = vpack.c.b16 %v5755, %v5751
    %v6256 = vpack.c.b16 %v5756, %v5752
    %v6257 = vpack.c.b16 %v5757, %v5753
    %v6258 = vpack.c.b16 %v5762, %v5758
    %v6259 = vpack.c.b16 %v5763, %v5759
    %v6260 = vpack.c.b16 %v5764, %v5760
    %v6261 = vpack.c.b16 %v5765, %v5761
    %v6262 = vpack.c.b16 %v5770, %v5766
    %v6263 = vpack.c.b16 %v5771, %v5767
    %v6264 = vpack.c.b16 %v5772, %v5768
    %v6265 = vpack.c.b16 %v5773, %v5769
    %v6266 = vpack.c.b16 %v5778, %v5774
    %v6267 = vpack.c.b16 %v5779, %v5775
    %v6268 = vpack.c.b16 %v5780, %v5776
    %v6269 = vpack.c.b16 %v5781, %v5777
    %v6270 = vpack.c.b16 %v5786, %v5782
    %v6271 = vpack.c.b16 %v5787, %v5783
    %v6272 = vpack.c.b16 %v5788, %v5784
    %v6273 = vpack.c.b16 %v5789, %v5785
    %v6274 = vpack.c.b16 %v5794, %v5790
    %v6275 = vpack.c.b16 %v5795, %v5791
    %v6276 = vpack.c.b16 %v5796, %v5792
    %v6277 = vpack.c.b16 %v5797, %v5793
    %v6278 = vpack.c.b16 %v5802, %v5798
    %v6279 = vpack.c.b16 %v5803, %v5799
    %v6280 = vpack.c.b16 %v5804, %v5800
    %v6281 = vpack.c.b16 %v5805, %v5801
    %v6282 = vpack.c.b16 %v5810, %v5806
    %v6283 = vpack.c.b16 %v5811, %v5807
    %v6284 = vpack.c.b16 %v5812, %v5808
    %v6285 = vpack.c.b16 %v5813, %v5809
    %v6286 = vpack.c.b16 %v5818, %v5814
    %v6287 = vpack.c.b16 %v5819, %v5815
    %v6288 = vpack.c.b16 %v5820, %v5816
    %v6289 = vpack.c.b16 %v5821, %v5817
    %v6290 = vpack.c.b16 %v5826, %v5822
    %v6291 = vpack.c.b16 %v5827, %v5823
    %v6292 = vpack.c.b16 %v5828, %v5824
    %v6293 = vpack.c.b16 %v5829, %v5825
    %v6294 = vpack.c.b16 %v5834, %v5830
    %v6295 = vpack.c.b16 %v5835, %v5831
    %v6296 = vpack.c.b16 %v5836, %v5832
    %v6297 = vpack.c.b16 %v5837, %v5833
    %v6298 = vpack.c.b16 %v5842, %v5838
    %v6299 = vpack.c.b16 %v5843, %v5839
    %v6300 = vpack.c.b16 %v5844, %v5840
    %v6301 = vpack.c.b16 %v5845, %v5841
    %v6302 = vpack.c.b16 %v5850, %v5846
    %v6303 = vpack.c.b16 %v5851, %v5847
    %v6304 = vpack.c.b16 %v5852, %v5848
    %v6305 = vpack.c.b16 %v5853, %v5849
    %v6306 = vpack.c.b16 %v5858, %v5854
    %v6307 = vpack.c.b16 %v5859, %v5855
    %v6308 = vpack.c.b16 %v5860, %v5856
    %v6309 = vpack.c.b16 %v5861, %v5857
    %v6310 = vpack.c.b16 %v5866, %v5862
    %v6311 = vpack.c.b16 %v5867, %v5863
    %v6312 = vpack.c.b16 %v5868, %v5864
    %v6313 = vpack.c.b16 %v5869, %v5865
    %v6314 = vpack.c.b16 %v5874, %v5870
    %v6315 = vpack.c.b16 %v5875, %v5871
    %v6316 = vpack.c.b16 %v5876, %v5872
    %v6317 = vpack.c.b16 %v5877, %v5873
    %v6318 = vpack.c.b16 %v5882, %v5878
    %v6319 = vpack.c.b16 %v5883, %v5879
    %v6320 = vpack.c.b16 %v5884, %v5880
    %v6321 = vpack.c.b16 %v5885, %v5881
    %v6322 = vpack.c.b16 %v5890, %v5886
    %v6323 = vpack.c.b16 %v5891, %v5887
    %v6324 = vpack.c.b16 %v5892, %v5888
    %v6325 = vpack.c.b16 %v5893, %v5889
    %v6326 = vpack.c.b16 %v5898, %v5894
    %v6327 = vpack.c.b16 %v5899, %v5895
    %v6328 = vpack.c.b16 %v5900, %v5896
    %v6329 = vpack.c.b16 %v5901, %v5897
    %v6330 = vpack.c.b16 %v5906, %v5902
    %v6331 = vpack.c.b16 %v5907, %v5903
    %v6332 = vpack.c.b16 %v5908, %v5904
    %v6333 = vpack.c.b16 %v5909, %v5905
    %v6334 = vpack.c.b16 %v5914, %v5910
    %v6335 = vpack.c.b16 %v5915, %v5911
    %v6336 = vpack.c.b16 %v5916, %v5912
    %v6337 = vpack.c.b16 %v5917, %v5913
    %v6338 = vpack.c.b16 %v5922, %v5918
    %v6339 = vpack.c.b16 %v5923, %v5919
    %v6340 = vpack.c.b16 %v5924, %v5920
    %v6341 = vpack.c.b16 %v5925, %v5921
    %v6342 = vpack.c.b16 %v5930, %v5926
    %v6343 = vpack.c.b16 %v5931, %v5927
    %v6344 = vpack.c.b16 %v5932, %v5928
    %v6345 = vpack.c.b16 %v5933, %v5929
    %v6346 = vpack.c.b16 %v5938, %v5934
    %v6347 = vpack.c.b16 %v5939, %v5935
    %v6348 = vpack.c.b16 %v5940, %v5936
    %v6349 = vpack.c.b16 %v5941, %v5937
    %v6350 = vpack.c.b16 %v5946, %v5942
    %v6351 = vpack.c.b16 %v5947, %v5943
    %v6352 = vpack.c.b16 %v5948, %v5944
    %v6353 = vpack.c.b16 %v5949, %v5945
    %v6354 = vpack.c.b16 %v5954, %v5950
    %v6355 = vpack.c.b16 %v5955, %v5951
    %v6356 = vpack.c.b16 %v5956, %v5952
    %v6357 = vpack.c.b16 %v5957, %v5953
    %v6358 = vpack.c.b16 %v5962, %v5958
    %v6359 = vpack.c.b16 %v5963, %v5959
    %v6360 = vpack.c.b16 %v5964, %v5960
    %v6361 = vpack.c.b16 %v5965, %v5961
    %v6362 = vpack.c.b16 %v5970, %v5966
    %v6363 = vpack.c.b16 %v5971, %v5967
    %v6364 = vpack.c.b16 %v5972, %v5968
    %v6365 = vpack.c.b16 %v5973, %v5969
    %v6366 = vpack.c.b16 %v5978, %v5974
    %v6367 = vpack.c.b16 %v5979, %v5975
    %v6368 = vpack.c.b16 %v5980, %v5976
    %v6369 = vpack.c.b16 %v5981, %v5977
    %v6370 = vpack.c.b16 %v5986, %v5982
    %v6371 = vpack.c.b16 %v5987, %v5983
    %v6372 = vpack.c.b16 %v5988, %v5984
    %v6373 = vpack.c.b16 %v5989, %v5985
    %v6374 = vpack.c.b16 %v5994, %v5990
    %v6375 = vpack.c.b16 %v5995, %v5991
    %v6376 = vpack.c.b16 %v5996, %v5992
    %v6377 = vpack.c.b16 %v5997, %v5993
    %v6378 = vpack.c.b16 %v6002, %v5998
    %v6379 = vpack.c.b16 %v6003, %v5999
    %v6380 = vpack.c.b16 %v6004, %v6000
    %v6381 = vpack.c.b16 %v6005, %v6001
    %v6382 = vpack.c.b16 %v6010, %v6006
    %v6383 = vpack.c.b16 %v6011, %v6007
    %v6384 = vpack.c.b16 %v6012, %v6008
    %v6385 = vpack.c.b16 %v6013, %v6009
    %v6386 = vpack.c.b16 %v6018, %v6014
    %v6387 = vpack.c.b16 %v6019, %v6015
    %v6388 = vpack.c.b16 %v6020, %v6016
    %v6389 = vpack.c.b16 %v6021, %v6017
    %v6390 = vpack.c.b16 %v6026, %v6022
    %v6391 = vpack.c.b16 %v6027, %v6023
    %v6392 = vpack.c.b16 %v6028, %v6024
    %v6393 = vpack.c.b16 %v6029, %v6025
    %v6394 = vpack.c.b16 %v6034, %v6030
    %v6395 = vpack.c.b16 %v6035, %v6031
    %v6396 = vpack.c.b16 %v6036, %v6032
    %v6397 = vpack.c.b16 %v6037, %v6033
    %v6398 = vpack.c.b16 %v6042, %v6038
    %v6399 = vpack.c.b16 %v6043, %v6039
    %v6400 = vpack.c.b16 %v6044, %v6040
    %v6401 = vpack.c.b16 %v6045, %v6041
    %v6402 = vpack.c.b16 %v6050, %v6046
    %v6403 = vpack.c.b16 %v6051, %v6047
    %v6404 = vpack.c.b16 %v6052, %v6048
    %v6405 = vpack.c.b16 %v6053, %v6049
    %v6406 = vpack.c.b16 %v6058, %v6054
    %v6407 = vpack.c.b16 %v6059, %v6055
    %v6408 = vpack.c.b16 %v6060, %v6056
    %v6409 = vpack.c.b16 %v6061, %v6057
    %v6410 = vpack.c.b16 %v6066, %v6062
    %v6411 = vpack.c.b16 %v6067, %v6063
    %v6412 = vpack.c.b16 %v6068, %v6064
    %v6413 = vpack.c.b16 %v6069, %v6065
    %v6414 = vpack.c.b16 %v6074, %v6070
    %v6415 = vpack.c.b16 %v6075, %v6071
    %v6416 = vpack.c.b16 %v6076, %v6072
    %v6417 = vpack.c.b16 %v6077, %v6073
    %v6418 = vpack.c.b16 %v6082, %v6078
    %v6419 = vpack.c.b16 %v6083, %v6079
    %v6420 = vpack.c.b16 %v6084, %v6080
    %v6421 = vpack.c.b16 %v6085, %v6081
    %v6422 = vpack.c.b16 %v6090, %v6086
    %v6423 = vpack.c.b16 %v6091, %v6087
    %v6424 = vpack.c.b16 %v6092, %v6088
    %v6425 = vpack.c.b16 %v6093, %v6089
    %v6426 = vpack.c.b16 %v6098, %v6094
    %v6427 = vpack.c.b16 %v6099, %v6095
    %v6428 = vpack.c.b16 %v6100, %v6096
    %v6429 = vpack.c.b16 %v6101, %v6097
    %v6430 = vpack.c.b16 %v6106, %v6102
    %v6431 = vpack.c.b16 %v6107, %v6103
    %v6432 = vpack.c.b16 %v6108, %v6104
    %v6433 = vpack.c.b16 %v6109, %v6105
    %v6434 = vpack.c.b16 %v6114, %v6110
    %v6435 = vpack.c.b16 %v6115, %v6111
    %v6436 = vpack.c.b16 %v6116, %v6112
    %v6437 = vpack.c.b16 %v6117, %v6113
    %v6438 = vpack.c.b16 %v6122, %v6118
    %v6439 = vpack.c.b16 %v6123, %v6119
    %v6440 = vpack.c.b16 %v6124, %v6120
    %v6441 = vpack.c.b16 %v6125, %v6121
    %v6442 = vpack.c.b16 %v6130, %v6126
    %v6443 = vpack.c.b16 %v6131, %v6127
    %v6444 = vpack.c.b16 %v6132, %v6128
    %v6445 = vpack.c.b16 %v6133, %v6129
    %v6446 = vpack.c.b16 %v6138, %v6134
    %v6447 = vpack.c.b16 %v6139, %v6135
    %v6448 = vpack.c.b16 %v6140, %v6136
    %v6449 = vpack.c.b16 %v6141, %v6137
    %v6450 = vpack.c.b16 %v6146, %v6142
    %v6451 = vpack.c.b16 %v6147, %v6143
    %v6452 = vpack.c.b16 %v6148, %v6144
    %v6453 = vpack.c.b16 %v6149, %v6145
    %v6454 = vpack.c.b16 %v6154, %v6150
    %v6455 = vpack.c.b16 %v6155, %v6151
    %v6456 = vpack.c.b16 %v6156, %v6152
    %v6457 = vpack.c.b16 %v6157, %v6153
    %v6458 = vpack.c.b16 %v6162, %v6158
    %v6459 = vpack.c.b16 %v6163, %v6159
    %v6460 = vpack.c.b16 %v6164, %v6160
    %v6461 = vpack.c.b16 %v6165, %v6161
    %v6462 = vpack.c.b16 %v6170, %v6166
    %v6463 = vpack.c.b16 %v6171, %v6167
    %v6464 = vpack.c.b16 %v6172, %v6168
    %v6465 = vpack.c.b16 %v6173, %v6169
    %v6466 = vpack.c.b16 %v6178, %v6174
    %v6467 = vpack.c.b16 %v6179, %v6175
    %v6468 = vpack.c.b16 %v6180, %v6176
    %v6469 = vpack.c.b16 %v6181, %v6177
    %v6470 = vpack.c.b16 %v6186, %v6182
    %v6471 = vpack.c.b16 %v6187, %v6183
    %v6472 = vpack.c.b16 %v6188, %v6184
    %v6473 = vpack.c.b16 %v6189, %v6185
    %v6474 = vpack.c.b16 %v6194, %v6190
    %v6475 = vpack.c.b16 %v6195, %v6191
    %v6476 = vpack.c.b16 %v6196, %v6192
    %v6477 = vpack.c.b16 %v6197, %v6193
    %v6478 = vpack.c.b16 %v6202, %v6198
    %v6479 = vpack.c.b16 %v6203, %v6199
    %v6480 = vpack.c.b16 %v6204, %v6200
    %v6481 = vpack.c.b16 %v6205, %v6201
    %v6482 = vpack.c.b16 %v6210, %v6206
    %v6483 = vpack.c.b16 %v6211, %v6207
    %v6484 = vpack.c.b16 %v6212, %v6208
    %v6485 = vpack.c.b16 %v6213, %v6209
    %v6486 = vpack.c.b16 %v6218, %v6214
    %v6487 = vpack.c.b16 %v6219, %v6215
    %v6488 = vpack.c.b16 %v6220, %v6216
    %v6489 = vpack.c.b16 %v6221, %v6217
    %v6490 = vpack.c.b16 %v6226, %v6222
    %v6491 = vpack.c.b16 %v6227, %v6223
    %v6492 = vpack.c.b16 %v6228, %v6224
    %v6493 = vpack.c.b16 %v6229, %v6225
    %v6494 = vpack.c.b16 %v6234, %v6230
    %v6495 = vpack.c.b16 %v6235, %v6231
    %v6496 = vpack.c.b16 %v6236, %v6232
    %v6497 = vpack.c.b16 %v6237, %v6233
    %v6498 = vpack.c.b16 %v6242, %v6238
    %v6499 = vpack.c.b16 %v6243, %v6239
    %v6500 = vpack.c.b16 %v6244, %v6240
    %v6501 = vpack.c.b16 %v6245, %v6241
    %6758 = vmatprep.subr.bf16.mxu0 %v6275
    %6759 = vmatpush1.bf16.msra.mxu0 %v6274
    %6760 = vmatprep.subr.bf16.mxu0 %v6271
    %6761 = vmatpush1.bf16.msra.mxu0 %v6270
    %6762 = vmatprep.subr.bf16.mxu0 %v6267
    %6763 = vmatpush1.bf16.msra.mxu0 %v6266
    %6764 = vmatprep.subr.bf16.mxu0 %v6263
    %6765 = vmatpush1.bf16.msra.mxu0 %v6262
    %6766 = vmatprep.subr.bf16.mxu0 %v6259
    %6767 = vmatpush1.bf16.msra.mxu0 %v6258
    %6768 = vmatprep.subr.bf16.mxu0 %v6255
    %6769 = vmatpush1.bf16.msra.mxu0 %v6254
    %6770 = vmatprep.subr.bf16.mxu0 %v6251
    %6771 = vmatpush1.bf16.msra.mxu0 %v6250
    %6772 = vmatprep.subr.bf16.mxu0 %v6247
    %6773 = vmatpush1.bf16.msra.mxu0 %v6246
    %6774 = vmatprep.subr.bf16.mxu0 %v6307
    %6775 = vmatpush2.bf16.msra.mxu0 %v6306
    %6776 = vmatprep.subr.bf16.mxu0 %v6303
    %6777 = vmatpush2.bf16.msra.mxu0 %v6302
    %6778 = vmatprep.subr.bf16.mxu0 %v6299
    %6779 = vmatpush2.bf16.msra.mxu0 %v6298
    %6780 = vmatprep.subr.bf16.mxu0 %v6295
    %6781 = vmatpush2.bf16.msra.mxu0 %v6294
    %6782 = vmatprep.subr.bf16.mxu0 %v6291
    %6783 = vmatpush2.bf16.msra.mxu0 %v6290
    %6784 = vmatprep.subr.bf16.mxu0 %v6287
    %6785 = vmatpush2.bf16.msra.mxu0 %v6286
    %6786 = vmatprep.subr.bf16.mxu0 %v6283
    %6787 = vmatpush2.bf16.msra.mxu0 %v6282
    %6788 = vmatprep.subr.bf16.mxu0 %v6279
    %6789 = vmatpush2.bf16.msra.mxu0 %v6278
    %6790 = vmatprep.mubr.bf16.mxu0 %v5211
    %6791 = vmatmul.mubr.bf16.gmra.mxu0 %v5210
    %v6792 = vpop.f32.mrf.mxu0
    %v6793 = vadd.f32 %v5474, %v6792
    %v6794 = vpop.f32.mrf.mxu0
    %v6795 = vadd.f32 %v5475, %v6794
    %v6796 = vpop.f32.mrf.mxu0
    %v6797 = vpop.f32.mrf.mxu0
    %6798 = vdwg.mxu0
    %6799 = vmatprep.subr.bf16.mxu0 %v6339
    %6800 = vmatpush1.bf16.msra.mxu0 %v6338
    %6801 = vmatprep.subr.bf16.mxu0 %v6335
    %6802 = vmatpush1.bf16.msra.mxu0 %v6334
    %6803 = vmatprep.subr.bf16.mxu0 %v6331
    %6804 = vmatpush1.bf16.msra.mxu0 %v6330
    %6805 = vmatprep.subr.bf16.mxu0 %v6327
    %6806 = vmatpush1.bf16.msra.mxu0 %v6326
    %6807 = vmatprep.subr.bf16.mxu0 %v6323
    %6808 = vmatpush1.bf16.msra.mxu0 %v6322
    %6809 = vmatprep.subr.bf16.mxu0 %v6319
    %6810 = vmatpush1.bf16.msra.mxu0 %v6318
    %6811 = vmatprep.subr.bf16.mxu0 %v6315
    %6812 = vmatpush1.bf16.msra.mxu0 %v6314
    %6813 = vmatprep.subr.bf16.mxu0 %v6311
    %6814 = vmatpush1.bf16.msra.mxu0 %v6310
    %6815 = vmatprep.subr.bf16.mxu0 %v6371
    %6816 = vmatpush2.bf16.msra.mxu0 %v6370
    %6817 = vmatprep.subr.bf16.mxu0 %v6367
    %6818 = vmatpush2.bf16.msra.mxu0 %v6366
    %6819 = vmatprep.subr.bf16.mxu0 %v6363
    %6820 = vmatpush2.bf16.msra.mxu0 %v6362
    %6821 = vmatprep.subr.bf16.mxu0 %v6359
    %6822 = vmatpush2.bf16.msra.mxu0 %v6358
    %6823 = vmatprep.subr.bf16.mxu0 %v6355
    %6824 = vmatpush2.bf16.msra.mxu0 %v6354
    %6825 = vmatprep.subr.bf16.mxu0 %v6351
    %6826 = vmatpush2.bf16.msra.mxu0 %v6350
    %6827 = vmatprep.subr.bf16.mxu0 %v6347
    %6828 = vmatpush2.bf16.msra.mxu0 %v6346
    %6829 = vmatprep.subr.bf16.mxu0 %v6343
    %6830 = vmatpush2.bf16.msra.mxu0 %v6342
    %6831 = vmatprep.mubr.bf16.mxu0 %v5213
    %6832 = vmatmul.mubr.bf16.gmra.mxu0 %v5212
    %v6833 = vpop.f32.mrf.mxu0
    %v6834 = vadd.f32 %v6793, %v6833
    %v6835 = vpop.f32.mrf.mxu0
    %v6836 = vadd.f32 %v6795, %v6835
    %v6837 = vpop.f32.mrf.mxu0
    %v6838 = vpop.f32.mrf.mxu0
    %6839 = vdwg.mxu0
    %6840 = vmatprep.subr.bf16.mxu0 %v6403
    %6841 = vmatpush1.bf16.msra.mxu0 %v6402
    %6842 = vmatprep.subr.bf16.mxu0 %v6399
    %6843 = vmatpush1.bf16.msra.mxu0 %v6398
    %6844 = vmatprep.subr.bf16.mxu0 %v6395
    %6845 = vmatpush1.bf16.msra.mxu0 %v6394
    %6846 = vmatprep.subr.bf16.mxu0 %v6391
    %6847 = vmatpush1.bf16.msra.mxu0 %v6390
    %6848 = vmatprep.subr.bf16.mxu0 %v6387
    %6849 = vmatpush1.bf16.msra.mxu0 %v6386
    %6850 = vmatprep.subr.bf16.mxu0 %v6383
    %6851 = vmatpush1.bf16.msra.mxu0 %v6382
    %6852 = vmatprep.subr.bf16.mxu0 %v6379
    %6853 = vmatpush1.bf16.msra.mxu0 %v6378
    %6854 = vmatprep.subr.bf16.mxu0 %v6375
    %6855 = vmatpush1.bf16.msra.mxu0 %v6374
    %6856 = vmatprep.subr.bf16.mxu0 %v6435
    %6857 = vmatpush2.bf16.msra.mxu0 %v6434
    %6858 = vmatprep.subr.bf16.mxu0 %v6431
    %6859 = vmatpush2.bf16.msra.mxu0 %v6430
    %6860 = vmatprep.subr.bf16.mxu0 %v6427
    %6861 = vmatpush2.bf16.msra.mxu0 %v6426
    %6862 = vmatprep.subr.bf16.mxu0 %v6423
    %6863 = vmatpush2.bf16.msra.mxu0 %v6422
    %6864 = vmatprep.subr.bf16.mxu0 %v6419
    %6865 = vmatpush2.bf16.msra.mxu0 %v6418
    %6866 = vmatprep.subr.bf16.mxu0 %v6415
    %6867 = vmatpush2.bf16.msra.mxu0 %v6414
    %6868 = vmatprep.subr.bf16.mxu0 %v6411
    %6869 = vmatpush2.bf16.msra.mxu0 %v6410
    %6870 = vmatprep.subr.bf16.mxu0 %v6407
    %6871 = vmatpush2.bf16.msra.mxu0 %v6406
    %6872 = vmatprep.mubr.bf16.mxu0 %v5215
    %6873 = vmatmul.mubr.bf16.gmra.mxu0 %v5214
    %v6874 = vpop.f32.mrf.mxu0
    %v6875 = vadd.f32 %v6834, %v6874
    %v6876 = vpop.f32.mrf.mxu0
    %v6877 = vadd.f32 %v6836, %v6876
    %v6878 = vpop.f32.mrf.mxu0
    %v6879 = vpop.f32.mrf.mxu0
    %6880 = vdwg.mxu0
    %6881 = vmatprep.subr.bf16.mxu0 %v6467
    %6882 = vmatpush1.bf16.msra.mxu0 %v6466
    %6883 = vmatprep.subr.bf16.mxu0 %v6463
    %6884 = vmatpush1.bf16.msra.mxu0 %v6462
    %6885 = vmatprep.subr.bf16.mxu0 %v6459
    %6886 = vmatpush1.bf16.msra.mxu0 %v6458
    %6887 = vmatprep.subr.bf16.mxu0 %v6455
    %6888 = vmatpush1.bf16.msra.mxu0 %v6454
    %6889 = vmatprep.subr.bf16.mxu0 %v6451
    %6890 = vmatpush1.bf16.msra.mxu0 %v6450
    %6891 = vmatprep.subr.bf16.mxu0 %v6447
    %6892 = vmatpush1.bf16.msra.mxu0 %v6446
    %6893 = vmatprep.subr.bf16.mxu0 %v6443
    %6894 = vmatpush1.bf16.msra.mxu0 %v6442
    %6895 = vmatprep.subr.bf16.mxu0 %v6439
    %6896 = vmatpush1.bf16.msra.mxu0 %v6438
    %6897 = vmatprep.subr.bf16.mxu0 %v6499
    %6898 = vmatpush2.bf16.msra.mxu0 %v6498
    %6899 = vmatprep.subr.bf16.mxu0 %v6495
    %6900 = vmatpush2.bf16.msra.mxu0 %v6494
    %6901 = vmatprep.subr.bf16.mxu0 %v6491
    %6902 = vmatpush2.bf16.msra.mxu0 %v6490
    %6903 = vmatprep.subr.bf16.mxu0 %v6487
    %6904 = vmatpush2.bf16.msra.mxu0 %v6486
    %6905 = vmatprep.subr.bf16.mxu0 %v6483
    %6906 = vmatpush2.bf16.msra.mxu0 %v6482
    %6907 = vmatprep.subr.bf16.mxu0 %v6479
    %6908 = vmatpush2.bf16.msra.mxu0 %v6478
    %6909 = vmatprep.subr.bf16.mxu0 %v6475
    %6910 = vmatpush2.bf16.msra.mxu0 %v6474
    %6911 = vmatprep.subr.bf16.mxu0 %v6471
    %6912 = vmatpush2.bf16.msra.mxu0 %v6470
    %6913 = vmatprep.mubr.bf16.mxu0 %v5217
    %6914 = vmatmul.mubr.bf16.gmra.mxu0 %v5216
    %v6915 = vpop.f32.mrf.mxu0
    %v6916 = vadd.f32 %v6875, %v6915
    %v6917 = vpop.f32.mrf.mxu0
    %v6918 = vadd.f32 %v6877, %v6917
    %v6919 = vpop.f32.mrf.mxu0
    %v6920 = vpop.f32.mrf.mxu0
    %6921 = vdwg.mxu0
    %6922 = vmatprep.subr.bf16.mxu0 %v6277
    %6923 = vmatpush1.bf16.msra.mxu0 %v6276
    %6924 = vmatprep.subr.bf16.mxu0 %v6273
    %6925 = vmatpush1.bf16.msra.mxu0 %v6272
    %6926 = vmatprep.subr.bf16.mxu0 %v6269
    %6927 = vmatpush1.bf16.msra.mxu0 %v6268
    %6928 = vmatprep.subr.bf16.mxu0 %v6265
    %6929 = vmatpush1.bf16.msra.mxu0 %v6264
    %6930 = vmatprep.subr.bf16.mxu0 %v6261
    %6931 = vmatpush1.bf16.msra.mxu0 %v6260
    %6932 = vmatprep.subr.bf16.mxu0 %v6257
    %6933 = vmatpush1.bf16.msra.mxu0 %v6256
    %6934 = vmatprep.subr.bf16.mxu0 %v6253
    %6935 = vmatpush1.bf16.msra.mxu0 %v6252
    %6936 = vmatprep.subr.bf16.mxu0 %v6249
    %6937 = vmatpush1.bf16.msra.mxu0 %v6248
    %6938 = vmatprep.subr.bf16.mxu0 %v6309
    %6939 = vmatpush2.bf16.msra.mxu0 %v6308
    %6940 = vmatprep.subr.bf16.mxu0 %v6305
    %6941 = vmatpush2.bf16.msra.mxu0 %v6304
    %6942 = vmatprep.subr.bf16.mxu0 %v6301
    %6943 = vmatpush2.bf16.msra.mxu0 %v6300
    %6944 = vmatprep.subr.bf16.mxu0 %v6297
    %6945 = vmatpush2.bf16.msra.mxu0 %v6296
    %6946 = vmatprep.subr.bf16.mxu0 %v6293
    %6947 = vmatpush2.bf16.msra.mxu0 %v6292
    %6948 = vmatprep.subr.bf16.mxu0 %v6289
    %6949 = vmatpush2.bf16.msra.mxu0 %v6288
    %6950 = vmatprep.subr.bf16.mxu0 %v6285
    %6951 = vmatpush2.bf16.msra.mxu0 %v6284
    %6952 = vmatprep.subr.bf16.mxu0 %v6281
    %6953 = vmatpush2.bf16.msra.mxu0 %v6280
    %6954 = vmatprep.mubr.bf16.mxu0 %v5211
    %6955 = vmatmul.mubr.bf16.gmra.mxu0 %v5210
    %v6956 = vpop.f32.mrf.mxu0
    %v6957 = vadd.f32 %v5476, %v6956
    %v6958 = vpop.f32.mrf.mxu0
    %v6959 = vadd.f32 %v5477, %v6958
    %v6960 = vpop.f32.mrf.mxu0
    %v6961 = vpop.f32.mrf.mxu0
    %6962 = vdwg.mxu0
    %6963 = vmatprep.subr.bf16.mxu0 %v6341
    %6964 = vmatpush1.bf16.msra.mxu0 %v6340
    %6965 = vmatprep.subr.bf16.mxu0 %v6337
    %6966 = vmatpush1.bf16.msra.mxu0 %v6336
    %6967 = vmatprep.subr.bf16.mxu0 %v6333
    %6968 = vmatpush1.bf16.msra.mxu0 %v6332
    %6969 = vmatprep.subr.bf16.mxu0 %v6329
    %6970 = vmatpush1.bf16.msra.mxu0 %v6328
    %6971 = vmatprep.subr.bf16.mxu0 %v6325
    %6972 = vmatpush1.bf16.msra.mxu0 %v6324
    %6973 = vmatprep.subr.bf16.mxu0 %v6321
    %6974 = vmatpush1.bf16.msra.mxu0 %v6320
    %6975 = vmatprep.subr.bf16.mxu0 %v6317
    %6976 = vmatpush1.bf16.msra.mxu0 %v6316
    %6977 = vmatprep.subr.bf16.mxu0 %v6313
    %6978 = vmatpush1.bf16.msra.mxu0 %v6312
    %6979 = vmatprep.subr.bf16.mxu0 %v6373
    %6980 = vmatpush2.bf16.msra.mxu0 %v6372
    %6981 = vmatprep.subr.bf16.mxu0 %v6369
    %6982 = vmatpush2.bf16.msra.mxu0 %v6368
    %6983 = vmatprep.subr.bf16.mxu0 %v6365
    %6984 = vmatpush2.bf16.msra.mxu0 %v6364
    %6985 = vmatprep.subr.bf16.mxu0 %v6361
    %6986 = vmatpush2.bf16.msra.mxu0 %v6360
    %6987 = vmatprep.subr.bf16.mxu0 %v6357
    %6988 = vmatpush2.bf16.msra.mxu0 %v6356
    %6989 = vmatprep.subr.bf16.mxu0 %v6353
    %6990 = vmatpush2.bf16.msra.mxu0 %v6352
    %6991 = vmatprep.subr.bf16.mxu0 %v6349
    %6992 = vmatpush2.bf16.msra.mxu0 %v6348
    %6993 = vmatprep.subr.bf16.mxu0 %v6345
    %6994 = vmatpush2.bf16.msra.mxu0 %v6344
    %6995 = vmatprep.mubr.bf16.mxu0 %v5213
    %6996 = vmatmul.mubr.bf16.gmra.mxu0 %v5212
    %v6997 = vpop.f32.mrf.mxu0
    %v6998 = vadd.f32 %v6957, %v6997
    %v6999 = vpop.f32.mrf.mxu0
    %v7000 = vadd.f32 %v6959, %v6999
    %v7001 = vpop.f32.mrf.mxu0
    %v7002 = vpop.f32.mrf.mxu0
    %7003 = vdwg.mxu0
    %7004 = vmatprep.subr.bf16.mxu0 %v6405
    %7005 = vmatpush1.bf16.msra.mxu0 %v6404
    %7006 = vmatprep.subr.bf16.mxu0 %v6401
    %7007 = vmatpush1.bf16.msra.mxu0 %v6400
    %7008 = vmatprep.subr.bf16.mxu0 %v6397
    %7009 = vmatpush1.bf16.msra.mxu0 %v6396
    %7010 = vmatprep.subr.bf16.mxu0 %v6393
    %7011 = vmatpush1.bf16.msra.mxu0 %v6392
    %7012 = vmatprep.subr.bf16.mxu0 %v6389
    %7013 = vmatpush1.bf16.msra.mxu0 %v6388
    %7014 = vmatprep.subr.bf16.mxu0 %v6385
    %7015 = vmatpush1.bf16.msra.mxu0 %v6384
    %7016 = vmatprep.subr.bf16.mxu0 %v6381
    %7017 = vmatpush1.bf16.msra.mxu0 %v6380
    %7018 = vmatprep.subr.bf16.mxu0 %v6377
    %7019 = vmatpush1.bf16.msra.mxu0 %v6376
    %7020 = vmatprep.subr.bf16.mxu0 %v6437
    %7021 = vmatpush2.bf16.msra.mxu0 %v6436
    %7022 = vmatprep.subr.bf16.mxu0 %v6433
    %7023 = vmatpush2.bf16.msra.mxu0 %v6432
    %7024 = vmatprep.subr.bf16.mxu0 %v6429
    %7025 = vmatpush2.bf16.msra.mxu0 %v6428
    %7026 = vmatprep.subr.bf16.mxu0 %v6425
    %7027 = vmatpush2.bf16.msra.mxu0 %v6424
    %7028 = vmatprep.subr.bf16.mxu0 %v6421
    %7029 = vmatpush2.bf16.msra.mxu0 %v6420
    %7030 = vmatprep.subr.bf16.mxu0 %v6417
    %7031 = vmatpush2.bf16.msra.mxu0 %v6416
    %7032 = vmatprep.subr.bf16.mxu0 %v6413
    %7033 = vmatpush2.bf16.msra.mxu0 %v6412
    %7034 = vmatprep.subr.bf16.mxu0 %v6409
    %7035 = vmatpush2.bf16.msra.mxu0 %v6408
    %7036 = vmatprep.mubr.bf16.mxu0 %v5215
    %7037 = vmatmul.mubr.bf16.gmra.mxu0 %v5214
    %v7038 = vpop.f32.mrf.mxu0
    %v7039 = vadd.f32 %v6998, %v7038
    %v7040 = vpop.f32.mrf.mxu0
    %v7041 = vadd.f32 %v7000, %v7040
    %v7042 = vpop.f32.mrf.mxu0
    %v7043 = vpop.f32.mrf.mxu0
    %7044 = vdwg.mxu0
    %7045 = vmatprep.subr.bf16.mxu0 %v6469
    %7046 = vmatpush1.bf16.msra.mxu0 %v6468
    %7047 = vmatprep.subr.bf16.mxu0 %v6465
    %7048 = vmatpush1.bf16.msra.mxu0 %v6464
    %7049 = vmatprep.subr.bf16.mxu0 %v6461
    %7050 = vmatpush1.bf16.msra.mxu0 %v6460
    %7051 = vmatprep.subr.bf16.mxu0 %v6457
    %7052 = vmatpush1.bf16.msra.mxu0 %v6456
    %7053 = vmatprep.subr.bf16.mxu0 %v6453
    %7054 = vmatpush1.bf16.msra.mxu0 %v6452
    %7055 = vmatprep.subr.bf16.mxu0 %v6449
    %7056 = vmatpush1.bf16.msra.mxu0 %v6448
    %7057 = vmatprep.subr.bf16.mxu0 %v6445
    %7058 = vmatpush1.bf16.msra.mxu0 %v6444
    %7059 = vmatprep.subr.bf16.mxu0 %v6441
    %7060 = vmatpush1.bf16.msra.mxu0 %v6440
    %7061 = vmatprep.subr.bf16.mxu0 %v6501
    %7062 = vmatpush2.bf16.msra.mxu0 %v6500
    %7063 = vmatprep.subr.bf16.mxu0 %v6497
    %7064 = vmatpush2.bf16.msra.mxu0 %v6496
    %7065 = vmatprep.subr.bf16.mxu0 %v6493
    %7066 = vmatpush2.bf16.msra.mxu0 %v6492
    %7067 = vmatprep.subr.bf16.mxu0 %v6489
    %7068 = vmatpush2.bf16.msra.mxu0 %v6488
    %7069 = vmatprep.subr.bf16.mxu0 %v6485
    %7070 = vmatpush2.bf16.msra.mxu0 %v6484
    %7071 = vmatprep.subr.bf16.mxu0 %v6481
    %7072 = vmatpush2.bf16.msra.mxu0 %v6480
    %7073 = vmatprep.subr.bf16.mxu0 %v6477
    %7074 = vmatpush2.bf16.msra.mxu0 %v6476
    %7075 = vmatprep.subr.bf16.mxu0 %v6473
    %7076 = vmatpush2.bf16.msra.mxu0 %v6472
    %7077 = vmatprep.mubr.bf16.mxu0 %v5217
    %7078 = vmatmul.mubr.bf16.gmra.mxu0 %v5216
    %v7079 = vpop.f32.mrf.mxu0
    %v7080 = vadd.f32 %v7039, %v7079
    %v7081 = vpop.f32.mrf.mxu0
    %v7082 = vadd.f32 %v7041, %v7081
    %v7083 = vpop.f32.mrf.mxu0
    %v7084 = vpop.f32.mrf.mxu0
    %7085 = vdwg.mxu0
    %v7086 = vpack.c.bf16 %v6916, %v6916
    %v7087 = vpack.c.bf16 %v6918, %v6918
    %v7088 = vpack.c.bf16 %v7080, %v7080
    %v7089 = vpack.c.bf16 %v7082, %v7082
    %v7090 = vld [vmem:[#allocation12] sm:$0xf]
    %v7091 = vld [vmem:[#allocation12 + $0x4] sm:$0xf]
    %v7092 = vld [vmem:[#allocation12 + $0x8] sm:$0xf]
    %v7093 = vld [vmem:[#allocation12 + $0xc] sm:$0xf]
    %v7094 = vld [vmem:[#allocation12 + $0x10] sm:$0xf]
    %v7095 = vld [vmem:[#allocation12 + $0x14] sm:$0xf]
    %v7096 = vld [vmem:[#allocation12 + $0x18] sm:$0xf]
    %v7097 = vld [vmem:[#allocation12 + $0x1c] sm:$0xf]
    %v7098 = vld [vmem:[#allocation12 + $0x20] sm:$0xf]
    %v7099 = vld [vmem:[#allocation12 + $0x24] sm:$0xf]
    %v7100 = vld [vmem:[#allocation12 + $0x28] sm:$0xf]
    %v7101 = vld [vmem:[#allocation12 + $0x2c] sm:$0xf]
    %v7102 = vld [vmem:[#allocation12 + $0x30] sm:$0xf]
    %v7103 = vld [vmem:[#allocation12 + $0x34] sm:$0xf]
    %v7104 = vld [vmem:[#allocation12 + $0x38] sm:$0xf]
    %v7105 = vld [vmem:[#allocation12 + $0x3c] sm:$0xf]
    %v7106 = vld [vmem:[#allocation12 + $0x40] sm:$0xf]
    %v7107 = vld [vmem:[#allocation12 + $0x44] sm:$0xf]
    %v7108 = vld [vmem:[#allocation12 + $0x48] sm:$0xf]
    %v7109 = vld [vmem:[#allocation12 + $0x4c] sm:$0xf]
    %v7110 = vld [vmem:[#allocation12 + $0x50] sm:$0xf]
    %v7111 = vld [vmem:[#allocation12 + $0x54] sm:$0xf]
    %v7112 = vld [vmem:[#allocation12 + $0x58] sm:$0xf]
    %v7113 = vld [vmem:[#allocation12 + $0x5c] sm:$0xf]
    %v7114 = vld [vmem:[#allocation12 + $0x60] sm:$0xf]
    %v7115 = vld [vmem:[#allocation12 + $0x64] sm:$0xf]
    %v7116 = vld [vmem:[#allocation12 + $0x68] sm:$0xf]
    %v7117 = vld [vmem:[#allocation12 + $0x6c] sm:$0xf]
    %v7118 = vld [vmem:[#allocation12 + $0x70] sm:$0xf]
    %v7119 = vld [vmem:[#allocation12 + $0x74] sm:$0xf]
    %v7120 = vld [vmem:[#allocation12 + $0x78] sm:$0xf]
    %v7121 = vld [vmem:[#allocation12 + $0x7c] sm:$0xf]
    %v7122 = vld [vmem:[#allocation12 + $0x80] sm:$0xf]
    %v7123 = vld [vmem:[#allocation12 + $0x84] sm:$0xf]
    %v7124 = vld [vmem:[#allocation12 + $0x88] sm:$0xf]
    %v7125 = vld [vmem:[#allocation12 + $0x8c] sm:$0xf]
    %v7126 = vld [vmem:[#allocation12 + $0x90] sm:$0xf]
    %v7127 = vld [vmem:[#allocation12 + $0x94] sm:$0xf]
    %v7128 = vld [vmem:[#allocation12 + $0x98] sm:$0xf]
    %v7129 = vld [vmem:[#allocation12 + $0x9c] sm:$0xf]
    %v7130 = vld [vmem:[#allocation12 + $0xa0] sm:$0xf]
    %v7131 = vld [vmem:[#allocation12 + $0xa4] sm:$0xf]
    %v7132 = vld [vmem:[#allocation12 + $0xa8] sm:$0xf]
    %v7133 = vld [vmem:[#allocation12 + $0xac] sm:$0xf]
    %v7134 = vld [vmem:[#allocation12 + $0xb0] sm:$0xf]
    %v7135 = vld [vmem:[#allocation12 + $0xb4] sm:$0xf]
    %v7136 = vld [vmem:[#allocation12 + $0xb8] sm:$0xf]
    %v7137 = vld [vmem:[#allocation12 + $0xbc] sm:$0xf]
    %v7138 = vld [vmem:[#allocation12 + $0xc0] sm:$0xf]
    %v7139 = vld [vmem:[#allocation12 + $0xc4] sm:$0xf]
    %v7140 = vld [vmem:[#allocation12 + $0xc8] sm:$0xf]
    %v7141 = vld [vmem:[#allocation12 + $0xcc] sm:$0xf]
    %v7142 = vld [vmem:[#allocation12 + $0xd0] sm:$0xf]
    %v7143 = vld [vmem:[#allocation12 + $0xd4] sm:$0xf]
    %v7144 = vld [vmem:[#allocation12 + $0xd8] sm:$0xf]
    %v7145 = vld [vmem:[#allocation12 + $0xdc] sm:$0xf]
    %v7146 = vld [vmem:[#allocation12 + $0xe0] sm:$0xf]
    %v7147 = vld [vmem:[#allocation12 + $0xe4] sm:$0xf]
    %v7148 = vld [vmem:[#allocation12 + $0xe8] sm:$0xf]
    %v7149 = vld [vmem:[#allocation12 + $0xec] sm:$0xf]
    %v7150 = vld [vmem:[#allocation12 + $0xf0] sm:$0xf]
    %v7151 = vld [vmem:[#allocation12 + $0xf4] sm:$0xf]
    %v7152 = vld [vmem:[#allocation12 + $0xf8] sm:$0xf]
    %v7153 = vld [vmem:[#allocation12 + $0xfc] sm:$0xf]
    %v7154 = vld [vmem:[#allocation13] sm:$0xff]
    %v7219 = vunpack.c.l.b16 %v7090
    %v7220 = vunpack.c.l.b16 %v7091
    %v7221 = vunpack.c.l.b16 %v7092
    %v7222 = vunpack.c.l.b16 %v7093
    %v7223 = vunpack.c.l.b16 %v7094
    %v7224 = vunpack.c.l.b16 %v7095
    %v7225 = vunpack.c.l.b16 %v7096
    %v7226 = vunpack.c.l.b16 %v7097
    %v7227 = vunpack.c.l.b16 %v7098
    %v7228 = vunpack.c.l.b16 %v7099
    %v7229 = vunpack.c.l.b16 %v7100
    %v7230 = vunpack.c.l.b16 %v7101
    %v7231 = vunpack.c.l.b16 %v7102
    %v7232 = vunpack.c.l.b16 %v7103
    %v7233 = vunpack.c.l.b16 %v7104
    %v7234 = vunpack.c.l.b16 %v7105
    %v7235 = vunpack.c.l.b16 %v7106
    %v7236 = vunpack.c.l.b16 %v7107
    %v7237 = vunpack.c.l.b16 %v7108
    %v7238 = vunpack.c.l.b16 %v7109
    %v7239 = vunpack.c.l.b16 %v7110
    %v7240 = vunpack.c.l.b16 %v7111
    %v7241 = vunpack.c.l.b16 %v7112
    %v7242 = vunpack.c.l.b16 %v7113
    %v7243 = vunpack.c.l.b16 %v7114
    %v7244 = vunpack.c.l.b16 %v7115
    %v7245 = vunpack.c.l.b16 %v7116
    %v7246 = vunpack.c.l.b16 %v7117
    %v7247 = vunpack.c.l.b16 %v7118
    %v7248 = vunpack.c.l.b16 %v7119
    %v7249 = vunpack.c.l.b16 %v7120
    %v7250 = vunpack.c.l.b16 %v7121
    %v7251 = vunpack.c.l.b16 %v7122
    %v7252 = vunpack.c.l.b16 %v7123
    %v7253 = vunpack.c.l.b16 %v7124
    %v7254 = vunpack.c.l.b16 %v7125
    %v7255 = vunpack.c.l.b16 %v7126
    %v7256 = vunpack.c.l.b16 %v7127
    %v7257 = vunpack.c.l.b16 %v7128
    %v7258 = vunpack.c.l.b16 %v7129
    %v7259 = vunpack.c.l.b16 %v7130
    %v7260 = vunpack.c.l.b16 %v7131
    %v7261 = vunpack.c.l.b16 %v7132
    %v7262 = vunpack.c.l.b16 %v7133
    %v7263 = vunpack.c.l.b16 %v7134
    %v7264 = vunpack.c.l.b16 %v7135
    %v7265 = vunpack.c.l.b16 %v7136
    %v7266 = vunpack.c.l.b16 %v7137
    %v7267 = vunpack.c.l.b16 %v7138
    %v7268 = vunpack.c.l.b16 %v7139
    %v7269 = vunpack.c.l.b16 %v7140
    %v7270 = vunpack.c.l.b16 %v7141
    %v7271 = vunpack.c.l.b16 %v7142
    %v7272 = vunpack.c.l.b16 %v7143
    %v7273 = vunpack.c.l.b16 %v7144
    %v7274 = vunpack.c.l.b16 %v7145
    %v7275 = vunpack.c.l.b16 %v7146
    %v7276 = vunpack.c.l.b16 %v7147
    %v7277 = vunpack.c.l.b16 %v7148
    %v7278 = vunpack.c.l.b16 %v7149
    %v7279 = vunpack.c.l.b16 %v7150
    %v7280 = vunpack.c.l.b16 %v7151
    %v7281 = vunpack.c.l.b16 %v7152
    %v7282 = vunpack.c.l.b16 %v7153
    %v7283 = vpack.c.b16 %v7220, %v7219
    %v7284 = vpack.c.b16 %v7222, %v7221
    %v7285 = vpack.c.b16 %v7224, %v7223
    %v7286 = vpack.c.b16 %v7226, %v7225
    %v7287 = vpack.c.b16 %v7228, %v7227
    %v7288 = vpack.c.b16 %v7230, %v7229
    %v7289 = vpack.c.b16 %v7232, %v7231
    %v7290 = vpack.c.b16 %v7234, %v7233
    %v7291 = vpack.c.b16 %v7236, %v7235
    %v7292 = vpack.c.b16 %v7238, %v7237
    %v7293 = vpack.c.b16 %v7240, %v7239
    %v7294 = vpack.c.b16 %v7242, %v7241
    %v7295 = vpack.c.b16 %v7244, %v7243
    %v7296 = vpack.c.b16 %v7246, %v7245
    %v7297 = vpack.c.b16 %v7248, %v7247
    %v7298 = vpack.c.b16 %v7250, %v7249
    %v7299 = vpack.c.b16 %v7252, %v7251
    %v7300 = vpack.c.b16 %v7254, %v7253
    %v7301 = vpack.c.b16 %v7256, %v7255
    %v7302 = vpack.c.b16 %v7258, %v7257
    %v7303 = vpack.c.b16 %v7260, %v7259
    %v7304 = vpack.c.b16 %v7262, %v7261
    %v7305 = vpack.c.b16 %v7264, %v7263
    %v7306 = vpack.c.b16 %v7266, %v7265
    %v7307 = vpack.c.b16 %v7268, %v7267
    %v7308 = vpack.c.b16 %v7270, %v7269
    %v7309 = vpack.c.b16 %v7272, %v7271
    %v7310 = vpack.c.b16 %v7274, %v7273
    %v7311 = vpack.c.b16 %v7276, %v7275
    %v7312 = vpack.c.b16 %v7278, %v7277
    %v7313 = vpack.c.b16 %v7280, %v7279
    %v7314 = vpack.c.b16 %v7282, %v7281
    %7347 = vmatprep.subr.bf16.mxu0 0
    %7348 = vmatpush1.bf16.msra.mxu0 %v7290
    %7349 = vmatprep.subr.bf16.mxu0 0
    %7350 = vmatpush1.bf16.msra.mxu0 %v7289
    %7351 = vmatprep.subr.bf16.mxu0 0
    %7352 = vmatpush1.bf16.msra.mxu0 %v7288
    %7353 = vmatprep.subr.bf16.mxu0 0
    %7354 = vmatpush1.bf16.msra.mxu0 %v7287
    %7355 = vmatprep.subr.bf16.mxu0 0
    %7356 = vmatpush1.bf16.msra.mxu0 %v7286
    %7357 = vmatprep.subr.bf16.mxu0 0
    %7358 = vmatpush1.bf16.msra.mxu0 %v7285
    %7359 = vmatprep.subr.bf16.mxu0 0
    %7360 = vmatpush1.bf16.msra.mxu0 %v7284
    %7361 = vmatprep.subr.bf16.mxu0 0
    %7362 = vmatpush1.bf16.msra.mxu0 %v7283
    %7363 = vmatprep.subr.bf16.mxu0 0
    %7364 = vmatpush2.bf16.msra.mxu0 %v7298
    %7365 = vmatprep.subr.bf16.mxu0 0
    %7366 = vmatpush2.bf16.msra.mxu0 %v7297
    %7367 = vmatprep.subr.bf16.mxu0 0
    %7368 = vmatpush2.bf16.msra.mxu0 %v7296
    %7369 = vmatprep.subr.bf16.mxu0 0
    %7370 = vmatpush2.bf16.msra.mxu0 %v7295
    %7371 = vmatprep.subr.bf16.mxu0 0
    %7372 = vmatpush2.bf16.msra.mxu0 %v7294
    %7373 = vmatprep.subr.bf16.mxu0 0
    %7374 = vmatpush2.bf16.msra.mxu0 %v7293
    %7375 = vmatprep.subr.bf16.mxu0 0
    %7376 = vmatpush2.bf16.msra.mxu0 %v7292
    %7377 = vmatprep.subr.bf16.mxu0 0
    %7378 = vmatpush2.bf16.msra.mxu0 %v7291
    %7379 = vmatprep.mubr.bf16.mxu0 %v7087
    %7380 = vmatmul.mubr.bf16.gmra.mxu0 %v7086
    %v7381 = vpop.f32.mrf.mxu0
    %v7382 = vadd.f32 %v7154, %v7381
    %v7383 = vpop.f32.mrf.mxu0
    %v7384 = vpop.f32.mrf.mxu0
    %v7385 = vpop.f32.mrf.mxu0
    %7386 = vdwg.mxu0
    %7387 = vmatprep.subr.bf16.mxu0 0
    %7388 = vmatpush1.bf16.msra.mxu0 %v7306
    %7389 = vmatprep.subr.bf16.mxu0 0
    %7390 = vmatpush1.bf16.msra.mxu0 %v7305
    %7391 = vmatprep.subr.bf16.mxu0 0
    %7392 = vmatpush1.bf16.msra.mxu0 %v7304
    %7393 = vmatprep.subr.bf16.mxu0 0
    %7394 = vmatpush1.bf16.msra.mxu0 %v7303
    %7395 = vmatprep.subr.bf16.mxu0 0
    %7396 = vmatpush1.bf16.msra.mxu0 %v7302
    %7397 = vmatprep.subr.bf16.mxu0 0
    %7398 = vmatpush1.bf16.msra.mxu0 %v7301
    %7399 = vmatprep.subr.bf16.mxu0 0
    %7400 = vmatpush1.bf16.msra.mxu0 %v7300
    %7401 = vmatprep.subr.bf16.mxu0 0
    %7402 = vmatpush1.bf16.msra.mxu0 %v7299
    %7403 = vmatprep.subr.bf16.mxu0 0
    %7404 = vmatpush2.bf16.msra.mxu0 %v7314
    %7405 = vmatprep.subr.bf16.mxu0 0
    %7406 = vmatpush2.bf16.msra.mxu0 %v7313
    %7407 = vmatprep.subr.bf16.mxu0 0
    %7408 = vmatpush2.bf16.msra.mxu0 %v7312
    %7409 = vmatprep.subr.bf16.mxu0 0
    %7410 = vmatpush2.bf16.msra.mxu0 %v7311
    %7411 = vmatprep.subr.bf16.mxu0 0
    %7412 = vmatpush2.bf16.msra.mxu0 %v7310
    %7413 = vmatprep.subr.bf16.mxu0 0
    %7414 = vmatpush2.bf16.msra.mxu0 %v7309
    %7415 = vmatprep.subr.bf16.mxu0 0
    %7416 = vmatpush2.bf16.msra.mxu0 %v7308
    %7417 = vmatprep.subr.bf16.mxu0 0
    %7418 = vmatpush2.bf16.msra.mxu0 %v7307
    %7419 = vmatprep.mubr.bf16.mxu0 %v7089
    %7420 = vmatmul.mubr.bf16.gmra.mxu0 %v7088
    %v7421 = vpop.f32.mrf.mxu0
    %v7422 = vadd.f32 %v7382, %v7421
    %v7423 = vpop.f32.mrf.mxu0
    %v7424 = vpop.f32.mrf.mxu0
    %v7425 = vpop.f32.mrf.mxu0
    %7426 = vdwg.mxu0
    %7427 = vst [vmem:[%s9] sm:$0xff] %v7422
    // Predicated region
    $region70: #{example_net_forward.1} parent=1 // pred_check
      _
    $region71: #{example_net_forward.1} parent=1 // pred_check_branch
      %7429 = sbr.rel (0) target = $region73
    $region72: #{example_net_forward.1} parent=1 // pred_region
      _
    $region73: #{example_net_forward.1} parent=1 // pred_fallthru
      _
    // Predicated region
    $region74: #{example_net_forward.1} parent=1 // pred_check
      _
    $region75: #{example_net_forward.1} parent=1 // pred_check_branch
      %7431 = sbr.rel (0) target = $region77
    $region76: #{example_net_forward.1} parent=1 // pred_region
      _
    $region77: #{example_net_forward.1} parent=1 // pred_fallthru
      _
    %7432 = vsyncpa [#allocation3], 1
    %7433 = vsyncpa [#allocation5], 1
    %7434 = vsyncpa [#allocation8], 1
    %7435 = vsyncpa [#allocation11], 1
    %7436 = vsyncpa [#allocation14], 1

</llo_original>
